<compile_context>
chip_gen: v5e
topology: v5e:2x2
jax: 0.10.0
libtpu: 0.0.40
codegen_flags: <defaults>
</compile_context>

<pallas_src>
import math
import functools
import numpy as np

import jax
import jax.numpy as jnp
from jax.experimental import pallas as pl
from jax.experimental.pallas import tpu as pltpu

# ---------------------------------------------------------------------------
# Model hyper-parameters (small synthetic config of VQVAEBase)
# ---------------------------------------------------------------------------
BETA = 0.25
VQ_LOSS_WEIGHT = 1.0
DATA_VARIANCE = 0.06327039811675479
PIXEL_RANGE = 256
NUM_EMBED = 64        # (512 in the reference; shrunk for a small test)
EMBED_DIM = 16        # (64 in the reference)
N_HIDDEN = 32         # (128 in the reference)
RES_HIDDEN = 16       # (32 in the reference)

C_PAD = 128           # channel / lane grain used end-to-end

_COMPILER_MM = pltpu.CompilerParams(
    dimension_semantics=("parallel", "parallel", "arbitrary"),
    vmem_limit_bytes=32 * 1024 * 1024)


def _round_up(x, m):
    return (x + m - 1) // m * m


def _pick_tile(dim, cap, grain):
    """Largest multiple of `grain` that divides `dim` and is <= cap (else full dim)."""
    best = None
    t = grain
    while t <= min(dim, cap):
        if dim % t == 0:
            best = t
        t += grain
    return best if best is not None else dim


# ---------------------------------------------------------------------------
# Tiled matmul kernel: C = A @ B + bias, fused relu_in / relu_out / residual
# ---------------------------------------------------------------------------
def _mm_kernel(a_ref, b_ref, bias_ref, *rest, relu_in, relu_out, has_res):
    if has_res:
        res_ref, o_ref, acc_ref = rest
    else:
        res_ref = None
        o_ref, acc_ref = rest
    k = pl.program_id(2)

    @pl.when(k == 0)
    def _init():
        acc_ref[...] = jnp.zeros_like(acc_ref)

    a = a_ref[...]
    if relu_in:
        a = jnp.maximum(a, 0)
    acc_ref[...] += jnp.dot(a, b_ref[...], preferred_element_type=jnp.float32)

    @pl.when(k == pl.num_programs(2) - 1)
    def _finalize():
        out = acc_ref[...] + bias_ref[...]
        if relu_out:
            out = jnp.maximum(out, 0.0)
        if has_res:
            out = out + res_ref[...]
        o_ref[...] = out.astype(o_ref.dtype)


def pallas_matmul_bias(a, b, bias, *, relu_in=False, relu_out=False, residual=None):
    """(M,K) @ (K,N) + bias(N,) with fused epilogue. bf16 MXU, f32 accumulate."""
    M, K = a.shape
    K2, N = b.shape
    assert K == K2
    tm = _pick_tile(M, 256, 8)
    tn = _pick_tile(N, 256, 128)
    tk = _pick_tile(K, 512, 128)
    grid = (M // tm, N // tn, K // tk)

    in_specs = [
        pl.BlockSpec((tm, tk), lambda i, j, k: (i, k)),
        pl.BlockSpec((tk, tn), lambda i, j, k: (k, j)),
        pl.BlockSpec((1, tn), lambda i, j, k: (0, j)),
    ]
    inputs = [a.astype(jnp.bfloat16), b.astype(jnp.bfloat16),
              bias.reshape(1, N).astype(jnp.float32)]
    if residual is not None:
        in_specs.append(pl.BlockSpec((tm, tn), lambda i, j, k: (i, j)))
        inputs.append(residual.astype(jnp.float32))

    bytes_accessed = (M * K + K * N) * 2 + M * N * 4 + N * 4
    if residual is not None:
        bytes_accessed += M * N * 4

    return pl.pallas_call(
        functools.partial(_mm_kernel, relu_in=relu_in, relu_out=relu_out,
                          has_res=residual is not None),
        grid=grid,
        in_specs=in_specs,
        out_specs=pl.BlockSpec((tm, tn), lambda i, j, k: (i, j)),
        out_shape=jax.ShapeDtypeStruct((M, N), jnp.float32),
        scratch_shapes=[pltpu.VMEM((tm, tn), jnp.float32)],
        compiler_params=_COMPILER_MM,
        cost_estimate=pl.CostEstimate(flops=2 * M * N * K, transcendentals=0,
                                      bytes_accessed=bytes_accessed),
    )(*inputs)


# ---------------------------------------------------------------------------
# VQ nearest-codebook kernel (tiled over rows, codebook resident, norms hoisted)
# ---------------------------------------------------------------------------
def _vq_kernel(enc_ref, cb_ref, cbsq_ref, idx_ref, emb_ref, *, num_embed):
    enc = enc_ref[...]                                     # (tr, Dp) f32
    cb = cb_ref[...]                                       # (Kp, Dp) f32
    prod = jax.lax.dot_general(enc, cb, (((1,), (1,)), ((), ())),
                               preferred_element_type=jnp.float32)   # (tr, Kp)
    d = (jnp.sum(enc * enc, axis=1, keepdims=True) + cbsq_ref[...] - 2.0 * prod)
    col = jax.lax.broadcasted_iota(jnp.int32, d.shape, 1)
    d = jnp.where(col < num_embed, d, jnp.inf)             # mask padded codewords
    min_d = jnp.min(d, axis=1, keepdims=True)
    idx = jnp.min(jnp.where(d <= min_d, col, num_embed), axis=1, keepdims=True)
    idx_ref[...] = idx.astype(jnp.int32)
    one_hot = (col == idx).astype(jnp.float32)
    emb_ref[...] = jnp.dot(one_hot, cb, preferred_element_type=jnp.float32)


def pallas_vq(enc_flat, cb_pad, cb_sq, num_embed):
    N, Dp = enc_flat.shape
    Kp = cb_pad.shape[0]
    tr = _pick_tile(N, 512, 8)
    grid = (N // tr,)
    return pl.pallas_call(
        functools.partial(_vq_kernel, num_embed=num_embed),
        grid=grid,
        in_specs=[pl.BlockSpec((tr, Dp), lambda i: (i, 0)),
                  pl.BlockSpec((Kp, Dp), lambda i: (0, 0)),
                  pl.BlockSpec((1, Kp), lambda i: (0, 0))],
        out_specs=(pl.BlockSpec((tr, 1), lambda i: (i, 0)),
                   pl.BlockSpec((tr, Dp), lambda i: (i, 0))),
        out_shape=(jax.ShapeDtypeStruct((N, 1), jnp.int32),
                   jax.ShapeDtypeStruct((N, Dp), jnp.float32)),
        compiler_params=pltpu.CompilerParams(dimension_semantics=("parallel",)),
    )(enc_flat.astype(jnp.float32), cb_pad, cb_sq)


# ---------------------------------------------------------------------------
# Tiled MSE reduction kernel (partial sums in VMEM scratch, scaled at the end)
# ---------------------------------------------------------------------------
def _mse_kernel(a_ref, b_ref, o_ref, acc_ref, *, inv_count):
    i = pl.program_id(0)

    @pl.when(i == 0)
    def _init():
        acc_ref[...] = jnp.zeros_like(acc_ref)

    diff = a_ref[...] - b_ref[...]
    acc_ref[...] += jnp.sum(diff * diff)

    @pl.when(i == pl.num_programs(0) - 1)
    def _finalize():
        o_ref[...] = acc_ref[...] * inv_count


def pallas_mse(a, b, count):
    """Mean of (a-b)^2 over `count` true elements (padded entries are zero)."""
    a2 = a.reshape(-1, a.shape[-1]).astype(jnp.float32)
    b2 = b.reshape(-1, b.shape[-1]).astype(jnp.float32)
    R, C = a2.shape
    tr = _pick_tile(R, 1024, 8)
    out = pl.pallas_call(
        functools.partial(_mse_kernel, inv_count=1.0 / float(count)),
        grid=(R // tr,),
        in_specs=[pl.BlockSpec((tr, C), lambda i: (i, 0)),
                  pl.BlockSpec((tr, C), lambda i: (i, 0))],
        out_specs=pl.BlockSpec((1, 1), lambda i: (0, 0)),
        out_shape=jax.ShapeDtypeStruct((1, 1), jnp.float32),
        scratch_shapes=[pltpu.VMEM((1, 1), jnp.float32)],
        compiler_params=pltpu.CompilerParams(dimension_semantics=("arbitrary",)),
    )(a2, b2)
    return out[0, 0]


# ---------------------------------------------------------------------------
# Weight packing (PyTorch layout -> padded (K, N) bf16 matmul matrices)
# ---------------------------------------------------------------------------
def conv_weight_matrix(w, cin_pad=C_PAD, cout_pad=C_PAD):
    """w: (Cout, Cin, kh, kw) -> (kh*kw*cin_pad, cout_pad) with K order (i,j,cin)."""
    Cout, Cin, kh, kw = w.shape
    wm = jnp.transpose(w, (2, 3, 1, 0))                    # (kh, kw, Cin, Cout)
    wm = jnp.pad(wm, ((0, 0), (0, 0), (0, cin_pad - Cin), (0, cout_pad - Cout)))
    return wm.reshape(kh * kw * cin_pad, cout_pad).astype(jnp.bfloat16)


def convT_weight_matrix(w):
    """ConvTranspose2d(k=4, s=2, p=1) weight (Cin,Cout,4,4) -> sub-pixel
    equivalent (3*3*C_PAD, 4*C_PAD): one 3x3/s1/p1 conv producing all 4 output
    parities (r,c) at once; unused taps are zero."""
    Cin, Cout = w.shape[0], w.shape[1]
    W = jnp.zeros((3, 3, C_PAD, 2, 2, C_PAD), jnp.float32)
    for r in range(2):
        for c in range(2):
            for dh in (-1, 0, 1):
                kh = r + 1 - 2 * dh
                if not 0 <= kh < 4:
                    continue
                for dw in (-1, 0, 1):
                    kw = c + 1 - 2 * dw
                    if not 0 <= kw < 4:
                        continue
                    W = W.at[dh + 1, dw + 1, :Cin, r, c, :Cout].set(w[:, :, kh, kw])
    return W.reshape(3 * 3 * C_PAD, 4 * C_PAD).astype(jnp.bfloat16)


def _pad_bias(b, n=C_PAD):
    return jnp.pad(b, (0, n - b.shape[0])).astype(jnp.float32)


# ---------------------------------------------------------------------------
# Conv / ConvTranspose wrappers (NHWC, channel-padded activations)
# ---------------------------------------------------------------------------
def conv2d_nhwc(x, w_mat, bias, *, kh, kw, stride, padding,
                relu_in=False, relu_out=False, residual=None):
    """x: (B,H,W,C), w_mat: (kh*kw*C, N), bias: (N,).  Fused epilogue options."""
    B, H, W, C = x.shape
    Ho = (H + 2 * padding - kh) // stride + 1
    Wo = (W + 2 * padding - kw) // stride + 1
    xb = x.astype(jnp.bfloat16)
    if kh == 1 and kw == 1 and stride == 1 and padding == 0:
        patches = xb.reshape(B * H * W, C)
    else:
        xp = jnp.pad(xb, ((0, 0), (padding, padding), (padding, padding), (0, 0)))
        cols = []
        for i in range(kh):
            for j in range(kw):
                cols.append(xp[:, i:i + stride * Ho:stride, j:j + stride * Wo:stride, :])
        patches = jnp.stack(cols, axis=3).reshape(B * Ho * Wo, kh * kw * C)
    res = None if residual is None else residual.reshape(B * Ho * Wo, -1)
    out = pallas_matmul_bias(patches, w_mat, bias,
                             relu_in=relu_in, relu_out=relu_out, residual=res)
    return out.reshape(B, Ho, Wo, w_mat.shape[1])


def conv_transpose2d_nhwc(x, w, b, *, relu_in=False, relu_out=False):
    """PyTorch ConvTranspose2d(k=4, s=2, p=1) via sub-pixel decomposition."""
    B, H, W, _ = x.shape
    w_mat = convT_weight_matrix(w)                         # (9*C_PAD, 4*C_PAD)
    bias4 = jnp.tile(_pad_bias(b), 4)                      # (4*C_PAD,)
    y = conv2d_nhwc(x, w_mat, bias4, kh=3, kw=3, stride=1, padding=1,
                    relu_in=relu_in, relu_out=relu_out)    # (B,H,W,4*C_PAD)
    y = y.reshape(B, H, W, 2, 2, C_PAD)
    y = jnp.transpose(y, (0, 1, 3, 2, 4, 5)).reshape(B, 2 * H, 2 * W, C_PAD)
    return y


# ---------------------------------------------------------------------------
# VQ-VAE forward (mse loss path, matching VQVAEBase.forward semantics)
# ---------------------------------------------------------------------------
def res_block(x, prm):
    # x -> relu -> conv3x3 -> relu -> conv1x1 -> (+ x)   (ReLUs/residual fused)
    h = conv2d_nhwc(x, conv_weight_matrix(prm["c1_w"]), _pad_bias(prm["c1_b"]),
                    kh=3, kw=3, stride=1, padding=1, relu_in=True, relu_out=True)
    return conv2d_nhwc(h, conv_weight_matrix(prm["c2_w"]), _pad_bias(prm["c2_b"]),
                       kh=1, kw=1, stride=1, padding=0, residual=x)


def encoder(p, x):
    h = conv2d_nhwc(x, conv_weight_matrix(p["c1_w"], cin_pad=3), _pad_bias(p["c1_b"]),
                    kh=4, kw=4, stride=2, padding=1, relu_out=True)
    h = conv2d_nhwc(h, conv_weight_matrix(p["c2_w"]), _pad_bias(p["c2_b"]),
                    kh=4, kw=4, stride=2, padding=1, relu_out=True)
    h = conv2d_nhwc(h, conv_weight_matrix(p["c3_w"]), _pad_bias(p["c3_b"]),
                    kh=3, kw=3, stride=1, padding=1)
    h = res_block(h, p["rb1"])
    h = res_block(h, p["rb2"])
    # trailing ReLU fused into the 1x1 projection
    return conv2d_nhwc(h, conv_weight_matrix(p["c4_w"]), _pad_bias(p["c4_b"]),
                       kh=1, kw=1, stride=1, padding=0, relu_in=True)


def decoder(p, z):
    h = conv2d_nhwc(z, conv_weight_matrix(p["c1_w"]), _pad_bias(p["c1_b"]),
                    kh=3, kw=3, stride=1, padding=1)
    h = res_block(h, p["rb1"])
    h = res_block(h, p["rb2"])
    h = conv_transpose2d_nhwc(h, p["t1_w"], p["t1_b"], relu_in=True, relu_out=True)
    return conv_transpose2d_nhwc(h, p["t2_w"], p["t2_b"])


def quantize(codebook, encoded):
    """encoded: (B, H, W, C_PAD) with true channels = EMBED_DIM (rest zero)."""
    B, H, W, Cp = encoded.shape
    K, D = codebook.shape
    Kp = _round_up(K, 128)
    cb_pad = jnp.pad(codebook.astype(jnp.float32), ((0, Kp - K), (0, Cp - D)))
    cb_sq = jnp.sum(cb_pad * cb_pad, axis=1).reshape(1, Kp)
    idx, emb = pallas_vq(encoded.reshape(B * H * W, Cp), cb_pad, cb_sq, K)
    return idx.reshape(B, H, W), emb.reshape(B, H, W, Cp)


def vqvae_forward(params, x):
    """x: (B,3,H,W) float in [0,255].  Returns (loss, log) like VQVAEBase.forward."""
    B, _, H, W = x.shape
    xn = jnp.transpose(x / 255.0 - 0.5, (0, 2, 3, 1))      # NHWC (B,H,W,3)

    encoded = encoder(params["encoder"], xn)               # (B, H/4, W/4, C_PAD)
    indices, embeddings = quantize(params["codebook"], encoded)

    lat_count = encoded.shape[0] * encoded.shape[1] * encoded.shape[2] * EMBED_DIM
    codebook_loss = pallas_mse(embeddings, jax.lax.stop_gradient(encoded), lat_count)
    commitment_loss = pallas_mse(encoded, jax.lax.stop_gradient(embeddings), lat_count)

    dec_in = encoded + jax.lax.stop_gradient(embeddings - encoded)   # straight-through
    recon = decoder(params["decoder"], dec_in)             # (B, H, W, C_PAD), ch>=3 are 0
    xn_pad = jnp.pad(xn, ((0, 0), (0, 0), (0, 0), (0, C_PAD - 3)))
    recon_loss = pallas_mse(recon, xn_pad, B * 3 * H * W)

    loss = recon_loss / DATA_VARIANCE + VQ_LOSS_WEIGHT * (
        codebook_loss + BETA * commitment_loss)
    nll_output = recon_loss / DATA_VARIANCE + math.log(2 * math.pi * DATA_VARIANCE)
    latent_dims = float(np.prod(indices.shape[1:]))
    data_dims = float(np.prod(x.shape[1:]))
    nll_lb = nll_output + latent_dims * math.log(NUM_EMBED) / data_dims
    bits_per_dim = nll_lb / math.log(2)

    log = dict(codebook_loss=codebook_loss, commitment_loss=commitment_loss,
               loss=loss, recon_loss=recon_loss,
               recon_loss_scaled=recon_loss / DATA_VARIANCE,
               nll_output=nll_output, nll_lb=nll_lb, bits_per_dim=bits_per_dim)
    return loss, log


# ---------------------------------------------------------------------------
# Deterministic parameter initialization (shapes follow VQVAEBase.__init__)
# ---------------------------------------------------------------------------
def init_params(key):
    keys = iter(jax.random.split(key, 64))

    def conv_init(cout, cin, kh, kw):
        std = math.sqrt(2.0 / (cout * kh * kw))            # kaiming_normal fan_out/relu
        w = std * jax.random.normal(next(keys), (cout, cin, kh, kw), jnp.float32)
        bound = 1.0 / math.sqrt(cin * kh * kw)
        b = jax.random.uniform(next(keys), (cout,), jnp.float32, -bound, bound)
        return w, b

    def convT_init(cin, cout, kh, kw):
        bound = 1.0 / math.sqrt(cout * kh * kw)
        w = jax.random.uniform(next(keys), (cin, cout, kh, kw), jnp.float32, -bound, bound)
        b = jax.random.uniform(next(keys), (cout,), jnp.float32, -bound, bound)
        return w, b

    def resblock_init(nin, nhid, nout):
        c1_w, c1_b = conv_init(nhid, nin, 3, 3)
        c2_w, c2_b = conv_init(nout, nhid, 1, 1)
        return dict(c1_w=c1_w, c1_b=c1_b, c2_w=c2_w, c2_b=c2_b)

    nh, rh, D = N_HIDDEN, RES_HIDDEN, EMBED_DIM
    enc = {}
    enc["c1_w"], enc["c1_b"] = conv_init(nh // 2, 3, 4, 4)
    enc["c2_w"], enc["c2_b"] = conv_init(nh, nh // 2, 4, 4)
    enc["c3_w"], enc["c3_b"] = conv_init(nh, nh, 3, 3)
    enc["rb1"] = resblock_init(nh, rh, nh)
    enc["rb2"] = resblock_init(nh, rh, nh)
    enc["c4_w"], enc["c4_b"] = conv_init(D, nh, 1, 1)

    dec = {}
    dec["c1_w"], dec["c1_b"] = conv_init(nh, D, 3, 3)
    dec["rb1"] = resblock_init(nh, rh, nh)
    dec["rb2"] = resblock_init(nh, rh, nh)
    dec["t1_w"], dec["t1_b"] = convT_init(nh, nh // 2, 4, 4)
    dec["t2_w"], dec["t2_b"] = convT_init(nh // 2, 3, 4, 4)   # mse -> 3 output channels

    cb_bound = math.sqrt(3.0 / D)
    codebook = jax.random.uniform(next(keys), (NUM_EMBED, D), jnp.float32,
                                  -cb_bound, cb_bound)
    return dict(encoder=enc, decoder=dec, codebook=codebook)


# ---------------------------------------------------------------------------
if __name__ == "__main__":
    key = jax.random.PRNGKey(0)
    pkey, xkey = jax.random.split(key)
    params = init_params(pkey)

    # x in [0, 255], NCHW, small shape consistent with the module (3-channel image)
    x = jnp.floor(jax.random.uniform(xkey, (2, 3, 16, 16), jnp.float32, 0.0, 256.0))
    x = jnp.clip(x, 0.0, 255.0)

    fwd = jax.jit(vqvae_forward)
    loss, log = fwd(params, x)
    loss = jax.block_until_ready(loss)
    jax.block_until_ready(log)

    assert np.isfinite(float(loss)), "non-finite loss"
    print("KERNEL_OK")
</pallas_src>

<mosaic_0001>
module attributes {stable_mosaic.version = 11 : i64} {
  func.func @_mm_kernel(%arg0: i32, %arg1: i32, %arg2: i32, %arg3: memref<128x48xbf16, #tpu.memory_space<vmem>>, %arg4: memref<48x128xbf16, #tpu.memory_space<vmem>>, %arg5: memref<1x128xf32, #tpu.memory_space<vmem>>, %arg6: memref<128x128xf32, #tpu.memory_space<vmem>>, %arg7: memref<128x128xf32, #tpu.memory_space<vmem>>) attributes {dimension_semantics = [#tpu.dimension_semantics<parallel>, #tpu.dimension_semantics<parallel>, #tpu.dimension_semantics<arbitrary>], iteration_bounds = array<i64: 1, 1, 1>, scalar_prefetch = 0 : i64, scratch_operands = 1 : i64, tpu.core_type = #tpu.core_type<tc>, window_params = [{transform_indices = @transform_0, window_bounds = array<i64: 128, 48>}, {transform_indices = @transform_1, window_bounds = array<i64: 48, 128>}, {transform_indices = @transform_2, window_bounds = array<i64: 1, 128>}, {transform_indices = @transform_3, window_bounds = array<i64: 128, 128>}]} {
    %c0_i32 = arith.constant 0 : i32
    %0 = arith.cmpi eq, %arg2, %c0_i32 : i32
    %1 = arith.extui %0 : i1 to i32
    %c0_i32_0 = arith.constant 0 : i32
    %2 = arith.cmpi ne, %1, %c0_i32_0 : i32
    scf.if %2 {
      %cst_10 = arith.constant 0.000000e+00 : f32
      %12 = vector.broadcast %cst_10 : f32 to vector<128x128xf32>
      %c0_11 = arith.constant 0 : index
      %c0_12 = arith.constant 0 : index
      %13 = vector.load %arg7[%c0_11, %c0_12] : memref<128x128xf32, #tpu.memory_space<vmem>>, vector<128x128xf32>
      tpu.vector_store %arg7[%c0_11, %c0_12], %12 {strides = array<i32>} : memref<128x128xf32, #tpu.memory_space<vmem>>, vector<128x128xf32>,
    } else {
    }
    %c0 = arith.constant 0 : index
    %c0_1 = arith.constant 0 : index
    %3 = vector.load %arg3[%c0, %c0_1] : memref<128x48xbf16, #tpu.memory_space<vmem>>, vector<128x48xbf16>
    %c0_2 = arith.constant 0 : index
    %c0_3 = arith.constant 0 : index
    %4 = vector.load %arg7[%c0_2, %c0_3] : memref<128x128xf32, #tpu.memory_space<vmem>>, vector<128x128xf32>
    %c0_4 = arith.constant 0 : index
    %c0_5 = arith.constant 0 : index
    %5 = vector.load %arg4[%c0_4, %c0_5] : memref<48x128xbf16, #tpu.memory_space<vmem>>, vector<48x128xbf16>
    %cst = arith.constant dense<0.000000e+00> : vector<128x128xf32>
    %6 = tpu.matmul %3, %5, %cst {dimension_numbers = #tpu.dot_dimension_numbers<[1], [0], [0], [1], [0, 0, 1, 1], [], []>} : vector<128x48xbf16>, vector<48x128xbf16>, vector<128x128xf32> -> vector<128x128xf32>
    %7 = arith.addf %4, %6 : vector<128x128xf32>
    %c0_6 = arith.constant 0 : index
    %c0_7 = arith.constant 0 : index
    %8 = vector.load %arg7[%c0_6, %c0_7] : memref<128x128xf32, #tpu.memory_space<vmem>>, vector<128x128xf32>
    tpu.vector_store %arg7[%c0_6, %c0_7], %7 {strides = array<i32>} : memref<128x128xf32, #tpu.memory_space<vmem>>, vector<128x128xf32>,
    %c0_i32_8 = arith.constant 0 : i32
    %9 = arith.cmpi eq, %arg2, %c0_i32_8 : i32
    %10 = arith.extui %9 : i1 to i32
    %c0_i32_9 = arith.constant 0 : i32
    %11 = arith.cmpi ne, %10, %c0_i32_9 : i32
    scf.if %11 {
      %c0_10 = arith.constant 0 : index
      %c0_11 = arith.constant 0 : index
      %12 = vector.load %arg7[%c0_10, %c0_11] : memref<128x128xf32, #tpu.memory_space<vmem>>, vector<128x128xf32>
      %c0_12 = arith.constant 0 : index
      %c0_13 = arith.constant 0 : index
      %13 = vector.load %arg5[%c0_12, %c0_13] : memref<1x128xf32, #tpu.memory_space<vmem>>, vector<1x128xf32>
      %14 = vector.broadcast %13 : vector<1x128xf32> to vector<128x128xf32>
      %15 = arith.addf %12, %14 : vector<128x128xf32>
      %cst_14 = arith.constant 0.000000e+00 : f32
      %16 = vector.broadcast %cst_14 : f32 to vector<128x128xf32>
      %17 = arith.maximumf %15, %16 : vector<128x128xf32>
      %c0_15 = arith.constant 0 : index
      %c0_16 = arith.constant 0 : index
      %18 = vector.load %arg6[%c0_15, %c0_16] : memref<128x128xf32, #tpu.memory_space<vmem>>, vector<128x128xf32>
      tpu.vector_store %arg6[%c0_15, %c0_16], %17 {strides = array<i32>} : memref<128x128xf32, #tpu.memory_space<vmem>>, vector<128x128xf32>,
    } else {
    }
    return
  }
  func.func @transform_0(%arg0: i32, %arg1: i32, %arg2: i32) -> (i32, i32) {
    %c0_i32 = arith.constant 0 : i32
    return %arg0, %arg2 : i32, i32
  }
  func.func @transform_1(%arg0: i32, %arg1: i32, %arg2: i32) -> (i32, i32) {
    %c0_i32 = arith.constant 0 : i32
    return %arg2, %arg1 : i32, i32
  }
  func.func @transform_2(%arg0: i32, %arg1: i32, %arg2: i32) -> (i32, i32) {
    %c0_i32 = arith.constant 0 : i32
    %c0_i32_0 = arith.constant 0 : i32
    return %c0_i32, %arg1 : i32, i32
  }
  func.func @transform_3(%arg0: i32, %arg1: i32, %arg2: i32) -> (i32, i32) {
    %c0_i32 = arith.constant 0 : i32
    return %arg0, %arg1 : i32, i32
  }
}

module attributes {stable_mosaic.version = 11 : i64} {
  func.func @_mm_kernel(%arg0: i32, %arg1: i32, %arg2: i32, %arg3: memref<32x512xbf16, #tpu.memory_space<vmem>>, %arg4: memref<512x128xbf16, #tpu.memory_space<vmem>>, %arg5: memref<1x128xf32, #tpu.memory_space<vmem>>, %arg6: memref<32x128xf32, #tpu.memory_space<vmem>>, %arg7: memref<32x128xf32, #tpu.memory_space<vmem>>) attributes {dimension_semantics = [#tpu.dimension_semantics<parallel>, #tpu.dimension_semantics<parallel>, #tpu.dimension_semantics<arbitrary>], iteration_bounds = array<i64: 1, 1, 4>, scalar_prefetch = 0 : i64, scratch_operands = 1 : i64, tpu.core_type = #tpu.core_type<tc>, window_params = [{transform_indices = @transform_0, window_bounds = array<i64: 32, 512>}, {transform_indices = @transform_1, window_bounds = array<i64: 512, 128>}, {transform_indices = @transform_2, window_bounds = array<i64: 1, 128>}, {transform_indices = @transform_3, window_bounds = array<i64: 32, 128>}]} {
    %c0_i32 = arith.constant 0 : i32
    %0 = arith.cmpi eq, %arg2, %c0_i32 : i32
    %1 = arith.extui %0 : i1 to i32
    %c0_i32_0 = arith.constant 0 : i32
    %2 = arith.cmpi ne, %1, %c0_i32_0 : i32
    scf.if %2 {
      %cst_9 = arith.constant 0.000000e+00 : f32
      %12 = vector.broadcast %cst_9 : f32 to vector<32x128xf32>
      %c0_10 = arith.constant 0 : index
      %c0_11 = arith.constant 0 : index
      %13 = vector.load %arg7[%c0_10, %c0_11] : memref<32x128xf32, #tpu.memory_space<vmem>>, vector<32x128xf32>
      tpu.vector_store %arg7[%c0_10, %c0_11], %12 {strides = array<i32>} : memref<32x128xf32, #tpu.memory_space<vmem>>, vector<32x128xf32>,
    } else {
    }
    %c0 = arith.constant 0 : index
    %c0_1 = arith.constant 0 : index
    %3 = vector.load %arg3[%c0, %c0_1] : memref<32x512xbf16, #tpu.memory_space<vmem>>, vector<32x512xbf16>
    %c0_2 = arith.constant 0 : index
    %c0_3 = arith.constant 0 : index
    %4 = vector.load %arg7[%c0_2, %c0_3] : memref<32x128xf32, #tpu.memory_space<vmem>>, vector<32x128xf32>
    %c0_4 = arith.constant 0 : index
    %c0_5 = arith.constant 0 : index
    %5 = vector.load %arg4[%c0_4, %c0_5] : memref<512x128xbf16, #tpu.memory_space<vmem>>, vector<512x128xbf16>
    %cst = arith.constant dense<0.000000e+00> : vector<32x128xf32>
    %6 = tpu.matmul %3, %5, %cst {dimension_numbers = #tpu.dot_dimension_numbers<[1], [0], [0], [1], [0, 0, 1, 1], [], []>} : vector<32x512xbf16>, vector<512x128xbf16>, vector<32x128xf32> -> vector<32x128xf32>
    %7 = arith.addf %4, %6 : vector<32x128xf32>
    %c0_6 = arith.constant 0 : index
    %c0_7 = arith.constant 0 : index
    %8 = vector.load %arg7[%c0_6, %c0_7] : memref<32x128xf32, #tpu.memory_space<vmem>>, vector<32x128xf32>
    tpu.vector_store %arg7[%c0_6, %c0_7], %7 {strides = array<i32>} : memref<32x128xf32, #tpu.memory_space<vmem>>, vector<32x128xf32>,
    %c3_i32 = arith.constant 3 : i32
    %9 = arith.cmpi eq, %arg2, %c3_i32 : i32
    %10 = arith.extui %9 : i1 to i32
    %c0_i32_8 = arith.constant 0 : i32
    %11 = arith.cmpi ne, %10, %c0_i32_8 : i32
    scf.if %11 {
      %c0_9 = arith.constant 0 : index
      %c0_10 = arith.constant 0 : index
      %12 = vector.load %arg7[%c0_9, %c0_10] : memref<32x128xf32, #tpu.memory_space<vmem>>, vector<32x128xf32>
      %c0_11 = arith.constant 0 : index
      %c0_12 = arith.constant 0 : index
      %13 = vector.load %arg5[%c0_11, %c0_12] : memref<1x128xf32, #tpu.memory_space<vmem>>, vector<1x128xf32>
      %14 = vector.broadcast %13 : vector<1x128xf32> to vector<32x128xf32>
      %15 = arith.addf %12, %14 : vector<32x128xf32>
      %cst_13 = arith.constant 0.000000e+00 : f32
      %16 = vector.broadcast %cst_13 : f32 to vector<32x128xf32>
      %17 = arith.maximumf %15, %16 : vector<32x128xf32>
      %c0_14 = arith.constant 0 : index
      %c0_15 = arith.constant 0 : index
      %18 = vector.load %arg6[%c0_14, %c0_15] : memref<32x128xf32, #tpu.memory_space<vmem>>, vector<32x128xf32>
      tpu.vector_store %arg6[%c0_14, %c0_15], %17 {strides = array<i32>} : memref<32x128xf32, #tpu.memory_space<vmem>>, vector<32x128xf32>,
    } else {
    }
    return
  }
  func.func @transform_0(%arg0: i32, %arg1: i32, %arg2: i32) -> (i32, i32) {
    %c0_i32 = arith.constant 0 : i32
    return %arg0, %arg2 : i32, i32
  }
  func.func @transform_1(%arg0: i32, %arg1: i32, %arg2: i32) -> (i32, i32) {
    %c0_i32 = arith.constant 0 : i32
    return %arg2, %arg1 : i32, i32
  }
  func.func @transform_2(%arg0: i32, %arg1: i32, %arg2: i32) -> (i32, i32) {
    %c0_i32 = arith.constant 0 : i32
    %c0_i32_0 = arith.constant 0 : i32
    return %c0_i32, %arg1 : i32, i32
  }
  func.func @transform_3(%arg0: i32, %arg1: i32, %arg2: i32) -> (i32, i32) {
    %c0_i32 = arith.constant 0 : i32
    return %arg0, %arg1 : i32, i32
  }
}

module attributes {stable_mosaic.version = 11 : i64} {
  func.func @_mm_kernel(%arg0: i32, %arg1: i32, %arg2: i32, %arg3: memref<32x384xbf16, #tpu.memory_space<vmem>>, %arg4: memref<384x128xbf16, #tpu.memory_space<vmem>>, %arg5: memref<1x128xf32, #tpu.memory_space<vmem>>, %arg6: memref<32x128xf32, #tpu.memory_space<vmem>>, %arg7: memref<32x128xf32, #tpu.memory_space<vmem>>) attributes {dimension_semantics = [#tpu.dimension_semantics<parallel>, #tpu.dimension_semantics<parallel>, #tpu.dimension_semantics<arbitrary>], iteration_bounds = array<i64: 1, 1, 3>, scalar_prefetch = 0 : i64, scratch_operands = 1 : i64, tpu.core_type = #tpu.core_type<tc>, window_params = [{transform_indices = @transform_0, window_bounds = array<i64: 32, 384>}, {transform_indices = @transform_1, window_bounds = array<i64: 384, 128>}, {transform_indices = @transform_2, window_bounds = array<i64: 1, 128>}, {transform_indices = @transform_3, window_bounds = array<i64: 32, 128>}]} {
    %c0_i32 = arith.constant 0 : i32
    %0 = arith.cmpi eq, %arg2, %c0_i32 : i32
    %1 = arith.extui %0 : i1 to i32
    %c0_i32_0 = arith.constant 0 : i32
    %2 = arith.cmpi ne, %1, %c0_i32_0 : i32
    scf.if %2 {
      %cst_9 = arith.constant 0.000000e+00 : f32
      %12 = vector.broadcast %cst_9 : f32 to vector<32x128xf32>
      %c0_10 = arith.constant 0 : index
      %c0_11 = arith.constant 0 : index
      %13 = vector.load %arg7[%c0_10, %c0_11] : memref<32x128xf32, #tpu.memory_space<vmem>>, vector<32x128xf32>
      tpu.vector_store %arg7[%c0_10, %c0_11], %12 {strides = array<i32>} : memref<32x128xf32, #tpu.memory_space<vmem>>, vector<32x128xf32>,
    } else {
    }
    %c0 = arith.constant 0 : index
    %c0_1 = arith.constant 0 : index
    %3 = vector.load %arg3[%c0, %c0_1] : memref<32x384xbf16, #tpu.memory_space<vmem>>, vector<32x384xbf16>
    %c0_2 = arith.constant 0 : index
    %c0_3 = arith.constant 0 : index
    %4 = vector.load %arg7[%c0_2, %c0_3] : memref<32x128xf32, #tpu.memory_space<vmem>>, vector<32x128xf32>
    %c0_4 = arith.constant 0 : index
    %c0_5 = arith.constant 0 : index
    %5 = vector.load %arg4[%c0_4, %c0_5] : memref<384x128xbf16, #tpu.memory_space<vmem>>, vector<384x128xbf16>
    %cst = arith.constant dense<0.000000e+00> : vector<32x128xf32>
    %6 = tpu.matmul %3, %5, %cst {dimension_numbers = #tpu.dot_dimension_numbers<[1], [0], [0], [1], [0, 0, 1, 1], [], []>} : vector<32x384xbf16>, vector<384x128xbf16>, vector<32x128xf32> -> vector<32x128xf32>
    %7 = arith.addf %4, %6 : vector<32x128xf32>
    %c0_6 = arith.constant 0 : index
    %c0_7 = arith.constant 0 : index
    %8 = vector.load %arg7[%c0_6, %c0_7] : memref<32x128xf32, #tpu.memory_space<vmem>>, vector<32x128xf32>
    tpu.vector_store %arg7[%c0_6, %c0_7], %7 {strides = array<i32>} : memref<32x128xf32, #tpu.memory_space<vmem>>, vector<32x128xf32>,
    %c2_i32 = arith.constant 2 : i32
    %9 = arith.cmpi eq, %arg2, %c2_i32 : i32
    %10 = arith.extui %9 : i1 to i32
    %c0_i32_8 = arith.constant 0 : i32
    %11 = arith.cmpi ne, %10, %c0_i32_8 : i32
    scf.if %11 {
      %c0_9 = arith.constant 0 : index
      %c0_10 = arith.constant 0 : index
      %12 = vector.load %arg7[%c0_9, %c0_10] : memref<32x128xf32, #tpu.memory_space<vmem>>, vector<32x128xf32>
      %c0_11 = arith.constant 0 : index
      %c0_12 = arith.constant 0 : index
      %13 = vector.load %arg5[%c0_11, %c0_12] : memref<1x128xf32, #tpu.memory_space<vmem>>, vector<1x128xf32>
      %14 = vector.broadcast %13 : vector<1x128xf32> to vector<32x128xf32>
      %15 = arith.addf %12, %14 : vector<32x128xf32>
      %c0_13 = arith.constant 0 : index
      %c0_14 = arith.constant 0 : index
      %16 = vector.load %arg6[%c0_13, %c0_14] : memref<32x128xf32, #tpu.memory_space<vmem>>, vector<32x128xf32>
      tpu.vector_store %arg6[%c0_13, %c0_14], %15 {strides = array<i32>} : memref<32x128xf32, #tpu.memory_space<vmem>>, vector<32x128xf32>,
    } else {
    }
    return
  }
  func.func @transform_0(%arg0: i32, %arg1: i32, %arg2: i32) -> (i32, i32) {
    %c0_i32 = arith.constant 0 : i32
    return %arg0, %arg2 : i32, i32
  }
  func.func @transform_1(%arg0: i32, %arg1: i32, %arg2: i32) -> (i32, i32) {
    %c0_i32 = arith.constant 0 : i32
    return %arg2, %arg1 : i32, i32
  }
  func.func @transform_2(%arg0: i32, %arg1: i32, %arg2: i32) -> (i32, i32) {
    %c0_i32 = arith.constant 0 : i32
    %c0_i32_0 = arith.constant 0 : i32
    return %c0_i32, %arg1 : i32, i32
  }
  func.func @transform_3(%arg0: i32, %arg1: i32, %arg2: i32) -> (i32, i32) {
    %c0_i32 = arith.constant 0 : i32
    return %arg0, %arg1 : i32, i32
  }
}

module attributes {stable_mosaic.version = 11 : i64} {
  func.func @_mm_kernel(%arg0: i32, %arg1: i32, %arg2: i32, %arg3: memref<32x384xbf16, #tpu.memory_space<vmem>>, %arg4: memref<384x128xbf16, #tpu.memory_space<vmem>>, %arg5: memref<1x128xf32, #tpu.memory_space<vmem>>, %arg6: memref<32x128xf32, #tpu.memory_space<vmem>>, %arg7: memref<32x128xf32, #tpu.memory_space<vmem>>) attributes {dimension_semantics = [#tpu.dimension_semantics<parallel>, #tpu.dimension_semantics<parallel>, #tpu.dimension_semantics<arbitrary>], iteration_bounds = array<i64: 1, 1, 3>, scalar_prefetch = 0 : i64, scratch_operands = 1 : i64, tpu.core_type = #tpu.core_type<tc>, window_params = [{transform_indices = @transform_0, window_bounds = array<i64: 32, 384>}, {transform_indices = @transform_1, window_bounds = array<i64: 384, 128>}, {transform_indices = @transform_2, window_bounds = array<i64: 1, 128>}, {transform_indices = @transform_3, window_bounds = array<i64: 32, 128>}]} {
    %c0_i32 = arith.constant 0 : i32
    %0 = arith.cmpi eq, %arg2, %c0_i32 : i32
    %1 = arith.extui %0 : i1 to i32
    %c0_i32_0 = arith.constant 0 : i32
    %2 = arith.cmpi ne, %1, %c0_i32_0 : i32
    scf.if %2 {
      %cst_10 = arith.constant 0.000000e+00 : f32
      %14 = vector.broadcast %cst_10 : f32 to vector<32x128xf32>
      %c0_11 = arith.constant 0 : index
      %c0_12 = arith.constant 0 : index
      %15 = vector.load %arg7[%c0_11, %c0_12] : memref<32x128xf32, #tpu.memory_space<vmem>>, vector<32x128xf32>
      tpu.vector_store %arg7[%c0_11, %c0_12], %14 {strides = array<i32>} : memref<32x128xf32, #tpu.memory_space<vmem>>, vector<32x128xf32>,
    } else {
    }
    %c0 = arith.constant 0 : index
    %c0_1 = arith.constant 0 : index
    %3 = vector.load %arg3[%c0, %c0_1] : memref<32x384xbf16, #tpu.memory_space<vmem>>, vector<32x384xbf16>
    %cst = arith.constant 0.000000e+00 : bf16
    %4 = vector.broadcast %cst : bf16 to vector<32x384xbf16>
    %5 = arith.maximumf %3, %4 : vector<32x384xbf16>
    %c0_2 = arith.constant 0 : index
    %c0_3 = arith.constant 0 : index
    %6 = vector.load %arg7[%c0_2, %c0_3] : memref<32x128xf32, #tpu.memory_space<vmem>>, vector<32x128xf32>
    %c0_4 = arith.constant 0 : index
    %c0_5 = arith.constant 0 : index
    %7 = vector.load %arg4[%c0_4, %c0_5] : memref<384x128xbf16, #tpu.memory_space<vmem>>, vector<384x128xbf16>
    %cst_6 = arith.constant dense<0.000000e+00> : vector<32x128xf32>
    %8 = tpu.matmul %5, %7, %cst_6 {dimension_numbers = #tpu.dot_dimension_numbers<[1], [0], [0], [1], [0, 0, 1, 1], [], []>} : vector<32x384xbf16>, vector<384x128xbf16>, vector<32x128xf32> -> vector<32x128xf32>
    %9 = arith.addf %6, %8 : vector<32x128xf32>
    %c0_7 = arith.constant 0 : index
    %c0_8 = arith.constant 0 : index
    %10 = vector.load %arg7[%c0_7, %c0_8] : memref<32x128xf32, #tpu.memory_space<vmem>>, vector<32x128xf32>
    tpu.vector_store %arg7[%c0_7, %c0_8], %9 {strides = array<i32>} : memref<32x128xf32, #tpu.memory_space<vmem>>, vector<32x128xf32>,
    %c2_i32 = arith.constant 2 : i32
    %11 = arith.cmpi eq, %arg2, %c2_i32 : i32
    %12 = arith.extui %11 : i1 to i32
    %c0_i32_9 = arith.constant 0 : i32
    %13 = arith.cmpi ne, %12, %c0_i32_9 : i32
    scf.if %13 {
      %c0_10 = arith.constant 0 : index
      %c0_11 = arith.constant 0 : index
      %14 = vector.load %arg7[%c0_10, %c0_11] : memref<32x128xf32, #tpu.memory_space<vmem>>, vector<32x128xf32>
      %c0_12 = arith.constant 0 : index
      %c0_13 = arith.constant 0 : index
      %15 = vector.load %arg5[%c0_12, %c0_13] : memref<1x128xf32, #tpu.memory_space<vmem>>, vector<1x128xf32>
      %16 = vector.broadcast %15 : vector<1x128xf32> to vector<32x128xf32>
      %17 = arith.addf %14, %16 : vector<32x128xf32>
      %cst_14 = arith.constant 0.000000e+00 : f32
      %18 = vector.broadcast %cst_14 : f32 to vector<32x128xf32>
      %19 = arith.maximumf %17, %18 : vector<32x128xf32>
      %c0_15 = arith.constant 0 : index
      %c0_16 = arith.constant 0 : index
      %20 = vector.load %arg6[%c0_15, %c0_16] : memref<32x128xf32, #tpu.memory_space<vmem>>, vector<32x128xf32>
      tpu.vector_store %arg6[%c0_15, %c0_16], %19 {strides = array<i32>} : memref<32x128xf32, #tpu.memory_space<vmem>>, vector<32x128xf32>,
    } else {
    }
    return
  }
  func.func @transform_0(%arg0: i32, %arg1: i32, %arg2: i32) -> (i32, i32) {
    %c0_i32 = arith.constant 0 : i32
    return %arg0, %arg2 : i32, i32
  }
  func.func @transform_1(%arg0: i32, %arg1: i32, %arg2: i32) -> (i32, i32) {
    %c0_i32 = arith.constant 0 : i32
    return %arg2, %arg1 : i32, i32
  }
  func.func @transform_2(%arg0: i32, %arg1: i32, %arg2: i32) -> (i32, i32) {
    %c0_i32 = arith.constant 0 : i32
    %c0_i32_0 = arith.constant 0 : i32
    return %c0_i32, %arg1 : i32, i32
  }
  func.func @transform_3(%arg0: i32, %arg1: i32, %arg2: i32) -> (i32, i32) {
    %c0_i32 = arith.constant 0 : i32
    return %arg0, %arg1 : i32, i32
  }
}

module attributes {stable_mosaic.version = 11 : i64} {
  func.func @_mm_kernel(%arg0: i32, %arg1: i32, %arg2: i32, %arg3: memref<32x128xbf16, #tpu.memory_space<vmem>>, %arg4: memref<128x128xbf16, #tpu.memory_space<vmem>>, %arg5: memref<1x128xf32, #tpu.memory_space<vmem>>, %arg6: memref<32x128xf32, #tpu.memory_space<vmem>>, %arg7: memref<32x128xf32, #tpu.memory_space<vmem>>, %arg8: memref<32x128xf32, #tpu.memory_space<vmem>>) attributes {dimension_semantics = [#tpu.dimension_semantics<parallel>, #tpu.dimension_semantics<parallel>, #tpu.dimension_semantics<arbitrary>], iteration_bounds = array<i64: 1, 1, 1>, scalar_prefetch = 0 : i64, scratch_operands = 1 : i64, tpu.core_type = #tpu.core_type<tc>, window_params = [{transform_indices = @transform_0, window_bounds = array<i64: 32, 128>}, {transform_indices = @transform_1, window_bounds = array<i64: 128, 128>}, {transform_indices = @transform_2, window_bounds = array<i64: 1, 128>}, {transform_indices = @transform_3, window_bounds = array<i64: 32, 128>}, {transform_indices = @transform_4, window_bounds = array<i64: 32, 128>}]} {
    %c0_i32 = arith.constant 0 : i32
    %0 = arith.cmpi eq, %arg2, %c0_i32 : i32
    %1 = arith.extui %0 : i1 to i32
    %c0_i32_0 = arith.constant 0 : i32
    %2 = arith.cmpi ne, %1, %c0_i32_0 : i32
    scf.if %2 {
      %cst_10 = arith.constant 0.000000e+00 : f32
      %12 = vector.broadcast %cst_10 : f32 to vector<32x128xf32>
      %c0_11 = arith.constant 0 : index
      %c0_12 = arith.constant 0 : index
      %13 = vector.load %arg8[%c0_11, %c0_12] : memref<32x128xf32, #tpu.memory_space<vmem>>, vector<32x128xf32>
      tpu.vector_store %arg8[%c0_11, %c0_12], %12 {strides = array<i32>} : memref<32x128xf32, #tpu.memory_space<vmem>>, vector<32x128xf32>,
    } else {
    }
    %c0 = arith.constant 0 : index
    %c0_1 = arith.constant 0 : index
    %3 = vector.load %arg3[%c0, %c0_1] : memref<32x128xbf16, #tpu.memory_space<vmem>>, vector<32x128xbf16>
    %c0_2 = arith.constant 0 : index
    %c0_3 = arith.constant 0 : index
    %4 = vector.load %arg8[%c0_2, %c0_3] : memref<32x128xf32, #tpu.memory_space<vmem>>, vector<32x128xf32>
    %c0_4 = arith.constant 0 : index
    %c0_5 = arith.constant 0 : index
    %5 = vector.load %arg4[%c0_4, %c0_5] : memref<128x128xbf16, #tpu.memory_space<vmem>>, vector<128x128xbf16>
    %cst = arith.constant dense<0.000000e+00> : vector<32x128xf32>
    %6 = tpu.matmul %3, %5, %cst {dimension_numbers = #tpu.dot_dimension_numbers<[1], [0], [0], [1], [0, 0, 1, 1], [], []>} : vector<32x128xbf16>, vector<128x128xbf16>, vector<32x128xf32> -> vector<32x128xf32>
    %7 = arith.addf %4, %6 : vector<32x128xf32>
    %c0_6 = arith.constant 0 : index
    %c0_7 = arith.constant 0 : index
    %8 = vector.load %arg8[%c0_6, %c0_7] : memref<32x128xf32, #tpu.memory_space<vmem>>, vector<32x128xf32>
    tpu.vector_store %arg8[%c0_6, %c0_7], %7 {strides = array<i32>} : memref<32x128xf32, #tpu.memory_space<vmem>>, vector<32x128xf32>,
    %c0_i32_8 = arith.constant 0 : i32
    %9 = arith.cmpi eq, %arg2, %c0_i32_8 : i32
    %10 = arith.extui %9 : i1 to i32
    %c0_i32_9 = arith.constant 0 : i32
    %11 = arith.cmpi ne, %10, %c0_i32_9 : i32
    scf.if %11 {
      %c0_10 = arith.constant 0 : index
      %c0_11 = arith.constant 0 : index
      %12 = vector.load %arg8[%c0_10, %c0_11] : memref<32x128xf32, #tpu.memory_space<vmem>>, vector<32x128xf32>
      %c0_12 = arith.constant 0 : index
      %c0_13 = arith.constant 0 : index
      %13 = vector.load %arg5[%c0_12, %c0_13] : memref<1x128xf32, #tpu.memory_space<vmem>>, vector<1x128xf32>
      %14 = vector.broadcast %13 : vector<1x128xf32> to vector<32x128xf32>
      %15 = arith.addf %12, %14 : vector<32x128xf32>
      %c0_14 = arith.constant 0 : index
      %c0_15 = arith.constant 0 : index
      %16 = vector.load %arg6[%c0_14, %c0_15] : memref<32x128xf32, #tpu.memory_space<vmem>>, vector<32x128xf32>
      %17 = arith.addf %15, %16 : vector<32x128xf32>
      %c0_16 = arith.constant 0 : index
      %c0_17 = arith.constant 0 : index
      %18 = vector.load %arg7[%c0_16, %c0_17] : memref<32x128xf32, #tpu.memory_space<vmem>>, vector<32x128xf32>
      tpu.vector_store %arg7[%c0_16, %c0_17], %17 {strides = array<i32>} : memref<32x128xf32, #tpu.memory_space<vmem>>, vector<32x128xf32>,
    } else {
    }
    return
  }
  func.func @transform_0(%arg0: i32, %arg1: i32, %arg2: i32) -> (i32, i32) {
    %c0_i32 = arith.constant 0 : i32
    return %arg0, %arg2 : i32, i32
  }
  func.func @transform_1(%arg0: i32, %arg1: i32, %arg2: i32) -> (i32, i32) {
    %c0_i32 = arith.constant 0 : i32
    return %arg2, %arg1 : i32, i32
  }
  func.func @transform_2(%arg0: i32, %arg1: i32, %arg2: i32) -> (i32, i32) {
    %c0_i32 = arith.constant 0 : i32
    %c0_i32_0 = arith.constant 0 : i32
    return %c0_i32, %arg1 : i32, i32
  }
  func.func @transform_3(%arg0: i32, %arg1: i32, %arg2: i32) -> (i32, i32) {
    %c0_i32 = arith.constant 0 : i32
    return %arg0, %arg1 : i32, i32
  }
  func.func @transform_4(%arg0: i32, %arg1: i32, %arg2: i32) -> (i32, i32) {
    %c0_i32 = arith.constant 0 : i32
    return %arg0, %arg1 : i32, i32
  }
}

module attributes {stable_mosaic.version = 11 : i64} {
  func.func @_mm_kernel(%arg0: i32, %arg1: i32, %arg2: i32, %arg3: memref<32x128xbf16, #tpu.memory_space<vmem>>, %arg4: memref<128x128xbf16, #tpu.memory_space<vmem>>, %arg5: memref<1x128xf32, #tpu.memory_space<vmem>>, %arg6: memref<32x128xf32, #tpu.memory_space<vmem>>, %arg7: memref<32x128xf32, #tpu.memory_space<vmem>>) attributes {dimension_semantics = [#tpu.dimension_semantics<parallel>, #tpu.dimension_semantics<parallel>, #tpu.dimension_semantics<arbitrary>], iteration_bounds = array<i64: 1, 1, 1>, scalar_prefetch = 0 : i64, scratch_operands = 1 : i64, tpu.core_type = #tpu.core_type<tc>, window_params = [{transform_indices = @transform_0, window_bounds = array<i64: 32, 128>}, {transform_indices = @transform_1, window_bounds = array<i64: 128, 128>}, {transform_indices = @transform_2, window_bounds = array<i64: 1, 128>}, {transform_indices = @transform_3, window_bounds = array<i64: 32, 128>}]} {
    %c0_i32 = arith.constant 0 : i32
    %0 = arith.cmpi eq, %arg2, %c0_i32 : i32
    %1 = arith.extui %0 : i1 to i32
    %c0_i32_0 = arith.constant 0 : i32
    %2 = arith.cmpi ne, %1, %c0_i32_0 : i32
    scf.if %2 {
      %cst_11 = arith.constant 0.000000e+00 : f32
      %14 = vector.broadcast %cst_11 : f32 to vector<32x128xf32>
      %c0_12 = arith.constant 0 : index
      %c0_13 = arith.constant 0 : index
      %15 = vector.load %arg7[%c0_12, %c0_13] : memref<32x128xf32, #tpu.memory_space<vmem>>, vector<32x128xf32>
      tpu.vector_store %arg7[%c0_12, %c0_13], %14 {strides = array<i32>} : memref<32x128xf32, #tpu.memory_space<vmem>>, vector<32x128xf32>,
    } else {
    }
    %c0 = arith.constant 0 : index
    %c0_1 = arith.constant 0 : index
    %3 = vector.load %arg3[%c0, %c0_1] : memref<32x128xbf16, #tpu.memory_space<vmem>>, vector<32x128xbf16>
    %cst = arith.constant 0.000000e+00 : bf16
    %4 = vector.broadcast %cst : bf16 to vector<32x128xbf16>
    %5 = arith.maximumf %3, %4 : vector<32x128xbf16>
    %c0_2 = arith.constant 0 : index
    %c0_3 = arith.constant 0 : index
    %6 = vector.load %arg7[%c0_2, %c0_3] : memref<32x128xf32, #tpu.memory_space<vmem>>, vector<32x128xf32>
    %c0_4 = arith.constant 0 : index
    %c0_5 = arith.constant 0 : index
    %7 = vector.load %arg4[%c0_4, %c0_5] : memref<128x128xbf16, #tpu.memory_space<vmem>>, vector<128x128xbf16>
    %cst_6 = arith.constant dense<0.000000e+00> : vector<32x128xf32>
    %8 = tpu.matmul %5, %7, %cst_6 {dimension_numbers = #tpu.dot_dimension_numbers<[1], [0], [0], [1], [0, 0, 1, 1], [], []>} : vector<32x128xbf16>, vector<128x128xbf16>, vector<32x128xf32> -> vector<32x128xf32>
    %9 = arith.addf %6, %8 : vector<32x128xf32>
    %c0_7 = arith.constant 0 : index
    %c0_8 = arith.constant 0 : index
    %10 = vector.load %arg7[%c0_7, %c0_8] : memref<32x128xf32, #tpu.memory_space<vmem>>, vector<32x128xf32>
    tpu.vector_store %arg7[%c0_7, %c0_8], %9 {strides = array<i32>} : memref<32x128xf32, #tpu.memory_space<vmem>>, vector<32x128xf32>,
    %c0_i32_9 = arith.constant 0 : i32
    %11 = arith.cmpi eq, %arg2, %c0_i32_9 : i32
    %12 = arith.extui %11 : i1 to i32
    %c0_i32_10 = arith.constant 0 : i32
    %13 = arith.cmpi ne, %12, %c0_i32_10 : i32
    scf.if %13 {
      %c0_11 = arith.constant 0 : index
      %c0_12 = arith.constant 0 : index
      %14 = vector.load %arg7[%c0_11, %c0_12] : memref<32x128xf32, #tpu.memory_space<vmem>>, vector<32x128xf32>
      %c0_13 = arith.constant 0 : index
      %c0_14 = arith.constant 0 : index
      %15 = vector.load %arg5[%c0_13, %c0_14] : memref<1x128xf32, #tpu.memory_space<vmem>>, vector<1x128xf32>
      %16 = vector.broadcast %15 : vector<1x128xf32> to vector<32x128xf32>
      %17 = arith.addf %14, %16 : vector<32x128xf32>
      %c0_15 = arith.constant 0 : index
      %c0_16 = arith.constant 0 : index
      %18 = vector.load %arg6[%c0_15, %c0_16] : memref<32x128xf32, #tpu.memory_space<vmem>>, vector<32x128xf32>
      tpu.vector_store %arg6[%c0_15, %c0_16], %17 {strides = array<i32>} : memref<32x128xf32, #tpu.memory_space<vmem>>, vector<32x128xf32>,
    } else {
    }
    return
  }
  func.func @transform_0(%arg0: i32, %arg1: i32, %arg2: i32) -> (i32, i32) {
    %c0_i32 = arith.constant 0 : i32
    return %arg0, %arg2 : i32, i32
  }
  func.func @transform_1(%arg0: i32, %arg1: i32, %arg2: i32) -> (i32, i32) {
    %c0_i32 = arith.constant 0 : i32
    return %arg2, %arg1 : i32, i32
  }
  func.func @transform_2(%arg0: i32, %arg1: i32, %arg2: i32) -> (i32, i32) {
    %c0_i32 = arith.constant 0 : i32
    %c0_i32_0 = arith.constant 0 : i32
    return %c0_i32, %arg1 : i32, i32
  }
  func.func @transform_3(%arg0: i32, %arg1: i32, %arg2: i32) -> (i32, i32) {
    %c0_i32 = arith.constant 0 : i32
    return %arg0, %arg1 : i32, i32
  }
}

module attributes {stable_mosaic.version = 11 : i64} {
  func.func @_vq_kernel(%arg0: i32, %arg1: memref<32x128xf32, #tpu.memory_space<vmem>>, %arg2: memref<128x128xf32, #tpu.memory_space<vmem>>, %arg3: memref<1x128xf32, #tpu.memory_space<vmem>>, %arg4: memref<32x1xi32, #tpu.memory_space<vmem>>, %arg5: memref<32x128xf32, #tpu.memory_space<vmem>>) attributes {dimension_semantics = [#tpu.dimension_semantics<parallel>], iteration_bounds = array<i64: 1>, scalar_prefetch = 0 : i64, scratch_operands = 0 : i64, tpu.core_type = #tpu.core_type<tc>, window_params = [{transform_indices = @transform_0, window_bounds = array<i64: 32, 128>}, {pipeline_mode = #tpu.pipeline_mode<synchronous>, transform_indices = @transform_1, window_bounds = array<i64: 128, 128>}, {pipeline_mode = #tpu.pipeline_mode<synchronous>, transform_indices = @transform_2, window_bounds = array<i64: 1, 128>}, {transform_indices = @transform_3, window_bounds = array<i64: 32, 1>}, {transform_indices = @transform_4, window_bounds = array<i64: 32, 128>}]} {
    %c0 = arith.constant 0 : index
    %c0_0 = arith.constant 0 : index
    %0 = vector.load %arg1[%c0, %c0_0] : memref<32x128xf32, #tpu.memory_space<vmem>>, vector<32x128xf32>
    %c0_1 = arith.constant 0 : index
    %c0_2 = arith.constant 0 : index
    %1 = vector.load %arg2[%c0_1, %c0_2] : memref<128x128xf32, #tpu.memory_space<vmem>>, vector<128x128xf32>
    %cst = arith.constant dense<0.000000e+00> : vector<32x128xf32>
    %2 = tpu.matmul %0, %1, %cst {dimension_numbers = #tpu.dot_dimension_numbers<[1], [1], [0], [0], [0, 0, 1, 0], [], []>} : vector<32x128xf32>, vector<128x128xf32>, vector<32x128xf32> -> vector<32x128xf32>
    %3 = arith.mulf %0, %0 : vector<32x128xf32>
    %cst_3 = arith.constant dense<0.000000e+00> : vector<32xf32>
    %4 = vector.multi_reduction <add>, %3, %cst_3 [1] : vector<32x128xf32> to vector<32xf32>
    %5 = vector.shape_cast %4 : vector<32xf32> to vector<32x1xf32>
    %c0_4 = arith.constant 0 : index
    %c0_5 = arith.constant 0 : index
    %6 = vector.load %arg3[%c0_4, %c0_5] : memref<1x128xf32, #tpu.memory_space<vmem>>, vector<1x128xf32>
    %7 = vector.broadcast %5 : vector<32x1xf32> to vector<32x128xf32>
    %8 = vector.broadcast %6 : vector<1x128xf32> to vector<32x128xf32>
    %9 = arith.addf %7, %8 : vector<32x128xf32>
    %cst_6 = arith.constant 2.000000e+00 : f32
    %10 = vector.broadcast %cst_6 : f32 to vector<32x128xf32>
    %11 = arith.mulf %10, %2 : vector<32x128xf32>
    %12 = arith.subf %9, %11 : vector<32x128xf32>
    %13 = tpu.iota {dimensions = array<i32: 1>} : vector<32x128xi32>
    %c64_i32 = arith.constant 64 : i32
    %14 = vector.broadcast %c64_i32 : i32 to vector<32x128xi32>
    %15 = arith.cmpi slt, %13, %14 : vector<32x128xi32>
    %cst_7 = arith.constant 0x7F800000 : f32
    %16 = vector.broadcast %cst_7 : f32 to vector<32x128xf32>
    %17 = arith.select %15, %12, %16 : vector<32x128xi1>, vector<32x128xf32>
    %cst_8 = arith.constant dense<0x7F800000> : vector<32xf32>
    %18 = vector.multi_reduction <minimumf>, %17, %cst_8 [1] : vector<32x128xf32> to vector<32xf32>
    %19 = vector.shape_cast %18 : vector<32xf32> to vector<32x1xf32>
    %20 = vector.broadcast %19 : vector<32x1xf32> to vector<32x128xf32>
    %21 = arith.cmpf ole, %17, %20 : vector<32x128xf32>
    %c64_i32_9 = arith.constant 64 : i32
    %22 = vector.broadcast %c64_i32_9 : i32 to vector<32x128xi32>
    %23 = arith.select %21, %13, %22 : vector<32x128xi1>, vector<32x128xi32>
    %cst_10 = arith.constant dense<2147483647> : vector<32xi32>
    %24 = vector.multi_reduction <minsi>, %23, %cst_10 [1] : vector<32x128xi32> to vector<32xi32>
    %25 = vector.shape_cast %24 : vector<32xi32> to vector<32x1xi32>
    %c0_11 = arith.constant 0 : index
    %c0_12 = arith.constant 0 : index
    %26 = vector.load %arg4[%c0_11, %c0_12] : memref<32x1xi32, #tpu.memory_space<vmem>>, vector<32x1xi32>
    tpu.vector_store %arg4[%c0_11, %c0_12], %25 {strides = array<i32>} : memref<32x1xi32, #tpu.memory_space<vmem>>, vector<32x1xi32>,
    %27 = vector.broadcast %25 : vector<32x1xi32> to vector<32x128xi32>
    %28 = arith.cmpi eq, %13, %27 : vector<32x128xi32>
    %29 = arith.extui %28 : vector<32x128xi1> to vector<32x128xi32>
    %30 = arith.sitofp %29 : vector<32x128xi32> to vector<32x128xf32>
    %cst_13 = arith.constant dense<0.000000e+00> : vector<32x128xf32>
    %31 = tpu.matmul %30, %1, %cst_13 {dimension_numbers = #tpu.dot_dimension_numbers<[1], [0], [0], [1], [0, 0, 1, 1], [], []>} : vector<32x128xf32>, vector<128x128xf32>, vector<32x128xf32> -> vector<32x128xf32>
    %c0_14 = arith.constant 0 : index
    %c0_15 = arith.constant 0 : index
    %32 = vector.load %arg5[%c0_14, %c0_15] : memref<32x128xf32, #tpu.memory_space<vmem>>, vector<32x128xf32>
    tpu.vector_store %arg5[%c0_14, %c0_15], %31 {strides = array<i32>} : memref<32x128xf32, #tpu.memory_space<vmem>>, vector<32x128xf32>,
    return
  }
  func.func @transform_0(%arg0: i32) -> (i32, i32) {
    %c0_i32 = arith.constant 0 : i32
    %c0_i32_0 = arith.constant 0 : i32
    return %arg0, %c0_i32 : i32, i32
  }
  func.func @transform_1(%arg0: i32) -> (i32, i32) {
    %c0_i32 = arith.constant 0 : i32
    %c0_i32_0 = arith.constant 0 : i32
    %c0_i32_1 = arith.constant 0 : i32
    return %c0_i32, %c0_i32_0 : i32, i32
  }
  func.func @transform_2(%arg0: i32) -> (i32, i32) {
    %c0_i32 = arith.constant 0 : i32
    %c0_i32_0 = arith.constant 0 : i32
    %c0_i32_1 = arith.constant 0 : i32
    return %c0_i32, %c0_i32_0 : i32, i32
  }
  func.func @transform_3(%arg0: i32) -> (i32, i32) {
    %c0_i32 = arith.constant 0 : i32
    %c0_i32_0 = arith.constant 0 : i32
    return %arg0, %c0_i32 : i32, i32
  }
  func.func @transform_4(%arg0: i32) -> (i32, i32) {
    %c0_i32 = arith.constant 0 : i32
    %c0_i32_0 = arith.constant 0 : i32
    return %arg0, %c0_i32 : i32, i32
  }
}

module attributes {stable_mosaic.version = 11 : i64} {
  func.func @_mm_kernel(%arg0: i32, %arg1: i32, %arg2: i32, %arg3: memref<32x384xbf16, #tpu.memory_space<vmem>>, %arg4: memref<384x256xbf16, #tpu.memory_space<vmem>>, %arg5: memref<1x256xf32, #tpu.memory_space<vmem>>, %arg6: memref<32x256xf32, #tpu.memory_space<vmem>>, %arg7: memref<32x256xf32, #tpu.memory_space<vmem>>) attributes {dimension_semantics = [#tpu.dimension_semantics<parallel>, #tpu.dimension_semantics<parallel>, #tpu.dimension_semantics<arbitrary>], iteration_bounds = array<i64: 1, 2, 3>, scalar_prefetch = 0 : i64, scratch_operands = 1 : i64, tpu.core_type = #tpu.core_type<tc>, window_params = [{transform_indices = @transform_0, window_bounds = array<i64: 32, 384>}, {transform_indices = @transform_1, window_bounds = array<i64: 384, 256>}, {transform_indices = @transform_2, window_bounds = array<i64: 1, 256>}, {transform_indices = @transform_3, window_bounds = array<i64: 32, 256>}]} {
    %c0_i32 = arith.constant 0 : i32
    %0 = arith.cmpi eq, %arg2, %c0_i32 : i32
    %1 = arith.extui %0 : i1 to i32
    %c0_i32_0 = arith.constant 0 : i32
    %2 = arith.cmpi ne, %1, %c0_i32_0 : i32
    scf.if %2 {
      %cst_10 = arith.constant 0.000000e+00 : f32
      %14 = vector.broadcast %cst_10 : f32 to vector<32x256xf32>
      %c0_11 = arith.constant 0 : index
      %c0_12 = arith.constant 0 : index
      %15 = vector.load %arg7[%c0_11, %c0_12] : memref<32x256xf32, #tpu.memory_space<vmem>>, vector<32x256xf32>
      tpu.vector_store %arg7[%c0_11, %c0_12], %14 {strides = array<i32>} : memref<32x256xf32, #tpu.memory_space<vmem>>, vector<32x256xf32>,
    } else {
    }
    %c0 = arith.constant 0 : index
    %c0_1 = arith.constant 0 : index
    %3 = vector.load %arg3[%c0, %c0_1] : memref<32x384xbf16, #tpu.memory_space<vmem>>, vector<32x384xbf16>
    %cst = arith.constant 0.000000e+00 : bf16
    %4 = vector.broadcast %cst : bf16 to vector<32x384xbf16>
    %5 = arith.maximumf %3, %4 : vector<32x384xbf16>
    %c0_2 = arith.constant 0 : index
    %c0_3 = arith.constant 0 : index
    %6 = vector.load %arg7[%c0_2, %c0_3] : memref<32x256xf32, #tpu.memory_space<vmem>>, vector<32x256xf32>
    %c0_4 = arith.constant 0 : index
    %c0_5 = arith.constant 0 : index
    %7 = vector.load %arg4[%c0_4, %c0_5] : memref<384x256xbf16, #tpu.memory_space<vmem>>, vector<384x256xbf16>
    %cst_6 = arith.constant dense<0.000000e+00> : vector<32x256xf32>
    %8 = tpu.matmul %5, %7, %cst_6 {dimension_numbers = #tpu.dot_dimension_numbers<[1], [0], [0], [1], [0, 0, 1, 1], [], []>} : vector<32x384xbf16>, vector<384x256xbf16>, vector<32x256xf32> -> vector<32x256xf32>
    %9 = arith.addf %6, %8 : vector<32x256xf32>
    %c0_7 = arith.constant 0 : index
    %c0_8 = arith.constant 0 : index
    %10 = vector.load %arg7[%c0_7, %c0_8] : memref<32x256xf32, #tpu.memory_space<vmem>>, vector<32x256xf32>
    tpu.vector_store %arg7[%c0_7, %c0_8], %9 {strides = array<i32>} : memref<32x256xf32, #tpu.memory_space<vmem>>, vector<32x256xf32>,
    %c2_i32 = arith.constant 2 : i32
    %11 = arith.cmpi eq, %arg2, %c2_i32 : i32
    %12 = arith.extui %11 : i1 to i32
    %c0_i32_9 = arith.constant 0 : i32
    %13 = arith.cmpi ne, %12, %c0_i32_9 : i32
    scf.if %13 {
      %c0_10 = arith.constant 0 : index
      %c0_11 = arith.constant 0 : index
      %14 = vector.load %arg7[%c0_10, %c0_11] : memref<32x256xf32, #tpu.memory_space<vmem>>, vector<32x256xf32>
      %c0_12 = arith.constant 0 : index
      %c0_13 = arith.constant 0 : index
      %15 = vector.load %arg5[%c0_12, %c0_13] : memref<1x256xf32, #tpu.memory_space<vmem>>, vector<1x256xf32>
      %16 = vector.broadcast %15 : vector<1x256xf32> to vector<32x256xf32>
      %17 = arith.addf %14, %16 : vector<32x256xf32>
      %cst_14 = arith.constant 0.000000e+00 : f32
      %18 = vector.broadcast %cst_14 : f32 to vector<32x256xf32>
      %19 = arith.maximumf %17, %18 : vector<32x256xf32>
      %c0_15 = arith.constant 0 : index
      %c0_16 = arith.constant 0 : index
      %20 = vector.load %arg6[%c0_15, %c0_16] : memref<32x256xf32, #tpu.memory_space<vmem>>, vector<32x256xf32>
      tpu.vector_store %arg6[%c0_15, %c0_16], %19 {strides = array<i32>} : memref<32x256xf32, #tpu.memory_space<vmem>>, vector<32x256xf32>,
    } else {
    }
    return
  }
  func.func @transform_0(%arg0: i32, %arg1: i32, %arg2: i32) -> (i32, i32) {
    %c0_i32 = arith.constant 0 : i32
    return %arg0, %arg2 : i32, i32
  }
  func.func @transform_1(%arg0: i32, %arg1: i32, %arg2: i32) -> (i32, i32) {
    %c0_i32 = arith.constant 0 : i32
    return %arg2, %arg1 : i32, i32
  }
  func.func @transform_2(%arg0: i32, %arg1: i32, %arg2: i32) -> (i32, i32) {
    %c0_i32 = arith.constant 0 : i32
    %c0_i32_0 = arith.constant 0 : i32
    return %c0_i32, %arg1 : i32, i32
  }
  func.func @transform_3(%arg0: i32, %arg1: i32, %arg2: i32) -> (i32, i32) {
    %c0_i32 = arith.constant 0 : i32
    return %arg0, %arg1 : i32, i32
  }
}

module attributes {stable_mosaic.version = 11 : i64} {
  func.func @_mm_kernel(%arg0: i32, %arg1: i32, %arg2: i32, %arg3: memref<128x384xbf16, #tpu.memory_space<vmem>>, %arg4: memref<384x256xbf16, #tpu.memory_space<vmem>>, %arg5: memref<1x256xf32, #tpu.memory_space<vmem>>, %arg6: memref<128x256xf32, #tpu.memory_space<vmem>>, %arg7: memref<128x256xf32, #tpu.memory_space<vmem>>) attributes {dimension_semantics = [#tpu.dimension_semantics<parallel>, #tpu.dimension_semantics<parallel>, #tpu.dimension_semantics<arbitrary>], iteration_bounds = array<i64: 1, 2, 3>, scalar_prefetch = 0 : i64, scratch_operands = 1 : i64, tpu.core_type = #tpu.core_type<tc>, window_params = [{transform_indices = @transform_0, window_bounds = array<i64: 128, 384>}, {transform_indices = @transform_1, window_bounds = array<i64: 384, 256>}, {transform_indices = @transform_2, window_bounds = array<i64: 1, 256>}, {transform_indices = @transform_3, window_bounds = array<i64: 128, 256>}]} {
    %c0_i32 = arith.constant 0 : i32
    %0 = arith.cmpi eq, %arg2, %c0_i32 : i32
    %1 = arith.extui %0 : i1 to i32
    %c0_i32_0 = arith.constant 0 : i32
    %2 = arith.cmpi ne, %1, %c0_i32_0 : i32
    scf.if %2 {
      %cst_9 = arith.constant 0.000000e+00 : f32
      %12 = vector.broadcast %cst_9 : f32 to vector<128x256xf32>
      %c0_10 = arith.constant 0 : index
      %c0_11 = arith.constant 0 : index
      %13 = vector.load %arg7[%c0_10, %c0_11] : memref<128x256xf32, #tpu.memory_space<vmem>>, vector<128x256xf32>
      tpu.vector_store %arg7[%c0_10, %c0_11], %12 {strides = array<i32>} : memref<128x256xf32, #tpu.memory_space<vmem>>, vector<128x256xf32>,
    } else {
    }
    %c0 = arith.constant 0 : index
    %c0_1 = arith.constant 0 : index
    %3 = vector.load %arg3[%c0, %c0_1] : memref<128x384xbf16, #tpu.memory_space<vmem>>, vector<128x384xbf16>
    %c0_2 = arith.constant 0 : index
    %c0_3 = arith.constant 0 : index
    %4 = vector.load %arg7[%c0_2, %c0_3] : memref<128x256xf32, #tpu.memory_space<vmem>>, vector<128x256xf32>
    %c0_4 = arith.constant 0 : index
    %c0_5 = arith.constant 0 : index
    %5 = vector.load %arg4[%c0_4, %c0_5] : memref<384x256xbf16, #tpu.memory_space<vmem>>, vector<384x256xbf16>
    %cst = arith.constant dense<0.000000e+00> : vector<128x256xf32>
    %6 = tpu.matmul %3, %5, %cst {dimension_numbers = #tpu.dot_dimension_numbers<[1], [0], [0], [1], [0, 0, 1, 1], [], []>} : vector<128x384xbf16>, vector<384x256xbf16>, vector<128x256xf32> -> vector<128x256xf32>
    %7 = arith.addf %4, %6 : vector<128x256xf32>
    %c0_6 = arith.constant 0 : index
    %c0_7 = arith.constant 0 : index
    %8 = vector.load %arg7[%c0_6, %c0_7] : memref<128x256xf32, #tpu.memory_space<vmem>>, vector<128x256xf32>
    tpu.vector_store %arg7[%c0_6, %c0_7], %7 {strides = array<i32>} : memref<128x256xf32, #tpu.memory_space<vmem>>, vector<128x256xf32>,
    %c2_i32 = arith.constant 2 : i32
    %9 = arith.cmpi eq, %arg2, %c2_i32 : i32
    %10 = arith.extui %9 : i1 to i32
    %c0_i32_8 = arith.constant 0 : i32
    %11 = arith.cmpi ne, %10, %c0_i32_8 : i32
    scf.if %11 {
      %c0_9 = arith.constant 0 : index
      %c0_10 = arith.constant 0 : index
      %12 = vector.load %arg7[%c0_9, %c0_10] : memref<128x256xf32, #tpu.memory_space<vmem>>, vector<128x256xf32>
      %c0_11 = arith.constant 0 : index
      %c0_12 = arith.constant 0 : index
      %13 = vector.load %arg5[%c0_11, %c0_12] : memref<1x256xf32, #tpu.memory_space<vmem>>, vector<1x256xf32>
      %14 = vector.broadcast %13 : vector<1x256xf32> to vector<128x256xf32>
      %15 = arith.addf %12, %14 : vector<128x256xf32>
      %c0_13 = arith.constant 0 : index
      %c0_14 = arith.constant 0 : index
      %16 = vector.load %arg6[%c0_13, %c0_14] : memref<128x256xf32, #tpu.memory_space<vmem>>, vector<128x256xf32>
      tpu.vector_store %arg6[%c0_13, %c0_14], %15 {strides = array<i32>} : memref<128x256xf32, #tpu.memory_space<vmem>>, vector<128x256xf32>,
    } else {
    }
    return
  }
  func.func @transform_0(%arg0: i32, %arg1: i32, %arg2: i32) -> (i32, i32) {
    %c0_i32 = arith.constant 0 : i32
    return %arg0, %arg2 : i32, i32
  }
  func.func @transform_1(%arg0: i32, %arg1: i32, %arg2: i32) -> (i32, i32) {
    %c0_i32 = arith.constant 0 : i32
    return %arg2, %arg1 : i32, i32
  }
  func.func @transform_2(%arg0: i32, %arg1: i32, %arg2: i32) -> (i32, i32) {
    %c0_i32 = arith.constant 0 : i32
    %c0_i32_0 = arith.constant 0 : i32
    return %c0_i32, %arg1 : i32, i32
  }
  func.func @transform_3(%arg0: i32, %arg1: i32, %arg2: i32) -> (i32, i32) {
    %c0_i32 = arith.constant 0 : i32
    return %arg0, %arg1 : i32, i32
  }
}

module attributes {stable_mosaic.version = 11 : i64} {
  func.func @_mse_kernel(%arg0: i32, %arg1: memref<512x128xf32, #tpu.memory_space<vmem>>, %arg2: memref<512x128xf32, #tpu.memory_space<vmem>>, %arg3: memref<1x1xf32, #tpu.memory_space<vmem>>, %arg4: memref<1x1xf32, #tpu.memory_space<vmem>>) attributes {dimension_semantics = [#tpu.dimension_semantics<arbitrary>], iteration_bounds = array<i64: 1>, scalar_prefetch = 0 : i64, scratch_operands = 1 : i64, tpu.core_type = #tpu.core_type<tc>, window_params = [{transform_indices = @transform_0, window_bounds = array<i64: 512, 128>}, {transform_indices = @transform_1, window_bounds = array<i64: 512, 128>}, {pipeline_mode = #tpu.pipeline_mode<synchronous>, transform_indices = @transform_2, window_bounds = array<i64: 1, 1>}]} {
    %c0_i32 = arith.constant 0 : i32
    %0 = arith.cmpi eq, %arg0, %c0_i32 : i32
    %1 = arith.extui %0 : i1 to i32
    %c0_i32_0 = arith.constant 0 : i32
    %2 = arith.cmpi ne, %1, %c0_i32_0 : i32
    scf.if %2 {
      %cst_10 = arith.constant 0.000000e+00 : f32
      %18 = vector.broadcast %cst_10 : f32 to vector<1x1xf32>
      %c0_11 = arith.constant 0 : index
      %c0_12 = arith.constant 0 : index
      %19 = vector.load %arg4[%c0_11, %c0_12] : memref<1x1xf32, #tpu.memory_space<vmem>>, vector<1x1xf32>
      tpu.vector_store %arg4[%c0_11, %c0_12], %18 {strides = array<i32>} : memref<1x1xf32, #tpu.memory_space<vmem>>, vector<1x1xf32>,
    } else {
    }
    %c0 = arith.constant 0 : index
    %c0_1 = arith.constant 0 : index
    %3 = vector.load %arg1[%c0, %c0_1] : memref<512x128xf32, #tpu.memory_space<vmem>>, vector<512x128xf32>
    %c0_2 = arith.constant 0 : index
    %c0_3 = arith.constant 0 : index
    %4 = vector.load %arg2[%c0_2, %c0_3] : memref<512x128xf32, #tpu.memory_space<vmem>>, vector<512x128xf32>
    %5 = arith.subf %3, %4 : vector<512x128xf32>
    %c0_4 = arith.constant 0 : index
    %c0_5 = arith.constant 0 : index
    %6 = vector.load %arg4[%c0_4, %c0_5] : memref<1x1xf32, #tpu.memory_space<vmem>>, vector<1x1xf32>
    %7 = arith.mulf %5, %5 : vector<512x128xf32>
    %8 = vector.shape_cast %7 : vector<512x128xf32> to vector<1x512x128xf32>
    %cst = arith.constant dense<0.000000e+00> : vector<1xf32>
    %9 = vector.multi_reduction <add>, %8, %cst [1, 2] : vector<1x512x128xf32> to vector<1xf32>
    %10 = vector.shape_cast %9 : vector<1xf32> to vector<1x1x1xf32>
    %11 = vector.extract %10[0, 0, 0] : f32 from vector<1x1x1xf32>
    %12 = vector.broadcast %11 : f32 to vector<1x1xf32>
    %13 = arith.addf %6, %12 : vector<1x1xf32>
    %c0_6 = arith.constant 0 : index
    %c0_7 = arith.constant 0 : index
    %14 = vector.load %arg4[%c0_6, %c0_7] : memref<1x1xf32, #tpu.memory_space<vmem>>, vector<1x1xf32>
    tpu.vector_store %arg4[%c0_6, %c0_7], %13 {strides = array<i32>} : memref<1x1xf32, #tpu.memory_space<vmem>>, vector<1x1xf32>,
    %c0_i32_8 = arith.constant 0 : i32
    %15 = arith.cmpi eq, %arg0, %c0_i32_8 : i32
    %16 = arith.extui %15 : i1 to i32
    %c0_i32_9 = arith.constant 0 : i32
    %17 = arith.cmpi ne, %16, %c0_i32_9 : i32
    scf.if %17 {
      %c0_10 = arith.constant 0 : index
      %c0_11 = arith.constant 0 : index
      %18 = vector.load %arg4[%c0_10, %c0_11] : memref<1x1xf32, #tpu.memory_space<vmem>>, vector<1x1xf32>
      %cst_12 = arith.constant 6.51041686E-4 : f32
      %19 = vector.broadcast %cst_12 : f32 to vector<1x1xf32>
      %20 = arith.mulf %18, %19 : vector<1x1xf32>
      %c0_13 = arith.constant 0 : index
      %c0_14 = arith.constant 0 : index
      %21 = vector.load %arg3[%c0_13, %c0_14] : memref<1x1xf32, #tpu.memory_space<vmem>>, vector<1x1xf32>
      tpu.vector_store %arg3[%c0_13, %c0_14], %20 {strides = array<i32>} : memref<1x1xf32, #tpu.memory_space<vmem>>, vector<1x1xf32>,
    } else {
    }
    return
  }
  func.func @transform_0(%arg0: i32) -> (i32, i32) {
    %c0_i32 = arith.constant 0 : i32
    %c0_i32_0 = arith.constant 0 : i32
    return %arg0, %c0_i32 : i32, i32
  }
  func.func @transform_1(%arg0: i32) -> (i32, i32) {
    %c0_i32 = arith.constant 0 : i32
    %c0_i32_0 = arith.constant 0 : i32
    return %arg0, %c0_i32 : i32, i32
  }
  func.func @transform_2(%arg0: i32) -> (i32, i32) {
    %c0_i32 = arith.constant 0 : i32
    %c0_i32_0 = arith.constant 0 : i32
    %c0_i32_1 = arith.constant 0 : i32
    return %c0_i32, %c0_i32_0 : i32, i32
  }
}

module attributes {stable_mosaic.version = 11 : i64} {
  func.func @_mse_kernel(%arg0: i32, %arg1: memref<32x128xf32, #tpu.memory_space<vmem>>, %arg2: memref<32x128xf32, #tpu.memory_space<vmem>>, %arg3: memref<1x1xf32, #tpu.memory_space<vmem>>, %arg4: memref<1x1xf32, #tpu.memory_space<vmem>>) attributes {dimension_semantics = [#tpu.dimension_semantics<arbitrary>], iteration_bounds = array<i64: 1>, scalar_prefetch = 0 : i64, scratch_operands = 1 : i64, tpu.core_type = #tpu.core_type<tc>, window_params = [{transform_indices = @transform_0, window_bounds = array<i64: 32, 128>}, {transform_indices = @transform_1, window_bounds = array<i64: 32, 128>}, {pipeline_mode = #tpu.pipeline_mode<synchronous>, transform_indices = @transform_2, window_bounds = array<i64: 1, 1>}]} {
    %c0_i32 = arith.constant 0 : i32
    %0 = arith.cmpi eq, %arg0, %c0_i32 : i32
    %1 = arith.extui %0 : i1 to i32
    %c0_i32_0 = arith.constant 0 : i32
    %2 = arith.cmpi ne, %1, %c0_i32_0 : i32
    scf.if %2 {
      %cst_10 = arith.constant 0.000000e+00 : f32
      %18 = vector.broadcast %cst_10 : f32 to vector<1x1xf32>
      %c0_11 = arith.constant 0 : index
      %c0_12 = arith.constant 0 : index
      %19 = vector.load %arg4[%c0_11, %c0_12] : memref<1x1xf32, #tpu.memory_space<vmem>>, vector<1x1xf32>
      tpu.vector_store %arg4[%c0_11, %c0_12], %18 {strides = array<i32>} : memref<1x1xf32, #tpu.memory_space<vmem>>, vector<1x1xf32>,
    } else {
    }
    %c0 = arith.constant 0 : index
    %c0_1 = arith.constant 0 : index
    %3 = vector.load %arg1[%c0, %c0_1] : memref<32x128xf32, #tpu.memory_space<vmem>>, vector<32x128xf32>
    %c0_2 = arith.constant 0 : index
    %c0_3 = arith.constant 0 : index
    %4 = vector.load %arg2[%c0_2, %c0_3] : memref<32x128xf32, #tpu.memory_space<vmem>>, vector<32x128xf32>
    %5 = arith.subf %3, %4 : vector<32x128xf32>
    %c0_4 = arith.constant 0 : index
    %c0_5 = arith.constant 0 : index
    %6 = vector.load %arg4[%c0_4, %c0_5] : memref<1x1xf32, #tpu.memory_space<vmem>>, vector<1x1xf32>
    %7 = arith.mulf %5, %5 : vector<32x128xf32>
    %8 = vector.shape_cast %7 : vector<32x128xf32> to vector<1x32x128xf32>
    %cst = arith.constant dense<0.000000e+00> : vector<1xf32>
    %9 = vector.multi_reduction <add>, %8, %cst [1, 2] : vector<1x32x128xf32> to vector<1xf32>
    %10 = vector.shape_cast %9 : vector<1xf32> to vector<1x1x1xf32>
    %11 = vector.extract %10[0, 0, 0] : f32 from vector<1x1x1xf32>
    %12 = vector.broadcast %11 : f32 to vector<1x1xf32>
    %13 = arith.addf %6, %12 : vector<1x1xf32>
    %c0_6 = arith.constant 0 : index
    %c0_7 = arith.constant 0 : index
    %14 = vector.load %arg4[%c0_6, %c0_7] : memref<1x1xf32, #tpu.memory_space<vmem>>, vector<1x1xf32>
    tpu.vector_store %arg4[%c0_6, %c0_7], %13 {strides = array<i32>} : memref<1x1xf32, #tpu.memory_space<vmem>>, vector<1x1xf32>,
    %c0_i32_8 = arith.constant 0 : i32
    %15 = arith.cmpi eq, %arg0, %c0_i32_8 : i32
    %16 = arith.extui %15 : i1 to i32
    %c0_i32_9 = arith.constant 0 : i32
    %17 = arith.cmpi ne, %16, %c0_i32_9 : i32
    scf.if %17 {
      %c0_10 = arith.constant 0 : index
      %c0_11 = arith.constant 0 : index
      %18 = vector.load %arg4[%c0_10, %c0_11] : memref<1x1xf32, #tpu.memory_space<vmem>>, vector<1x1xf32>
      %cst_12 = arith.constant 0.001953125 : f32
      %19 = vector.broadcast %cst_12 : f32 to vector<1x1xf32>
      %20 = arith.mulf %18, %19 : vector<1x1xf32>
      %c0_13 = arith.constant 0 : index
      %c0_14 = arith.constant 0 : index
      %21 = vector.load %arg3[%c0_13, %c0_14] : memref<1x1xf32, #tpu.memory_space<vmem>>, vector<1x1xf32>
      tpu.vector_store %arg3[%c0_13, %c0_14], %20 {strides = array<i32>} : memref<1x1xf32, #tpu.memory_space<vmem>>, vector<1x1xf32>,
    } else {
    }
    return
  }
  func.func @transform_0(%arg0: i32) -> (i32, i32) {
    %c0_i32 = arith.constant 0 : i32
    %c0_i32_0 = arith.constant 0 : i32
    return %arg0, %c0_i32 : i32, i32
  }
  func.func @transform_1(%arg0: i32) -> (i32, i32) {
    %c0_i32 = arith.constant 0 : i32
    %c0_i32_0 = arith.constant 0 : i32
    return %arg0, %c0_i32 : i32, i32
  }
  func.func @transform_2(%arg0: i32) -> (i32, i32) {
    %c0_i32 = arith.constant 0 : i32
    %c0_i32_0 = arith.constant 0 : i32
    %c0_i32_1 = arith.constant 0 : i32
    return %c0_i32, %c0_i32_0 : i32, i32
  }
}

</mosaic_0001>

<llo_original>
// kernel: vqvae_forward.19
$region0: #{vqvae_forward.19}
  #allocation0 [shape = 'u32[]', space=smem, size = 0x4, offset = 0x4, fixed_abs, tag = 'smem constant byte address 0x4 - core index']
  #allocation1 [shape = 'u32[72,128]{1,0:T(1,128)}', space=vmem, size = 0x9000, scoped, tag = 'internal scratch']
  #allocation2 [shape = 'f32[128,128]{1,0:T(8,128)}', space=vmem, size = 0x10000, scoped, tag = 'scratch operand']
  %s0 = inlined_call_operand.vmem [shape: bf16[128,48], index: 0, kind: input, shape index: {}]
  %s1 = inlined_call_operand.vmem [shape: bf16[48,128], index: 1, kind: input, shape index: {}]
  %s2 = inlined_call_operand.vmem [shape: f32[1,128], index: 2, kind: input, shape index: {}]
  %s3 = inlined_call_operand.vmem [shape: f32[128,128], index: 3, kind: output, shape index: {}]
  %s4 = sld [smem:[#allocation0]]
  $region30: #{vqvae_forward.19} parent=0
    _
  %s6 = ssub.s32 1, %s4
  %s7 = scalar_select 0, %s6, %s4
  // Predicated region
  $region2: #{vqvae_forward.19} parent=0 // pred_check
    _
  $region3: #{vqvae_forward.19} parent=0 // pred_check_branch
    %9 = sbr.rel (0) target = $region5
  $region4: #{vqvae_forward.19} parent=0 // pred_region
    _
  $region5: #{vqvae_forward.19} parent=0 // pred_fallthru
    _
  // Predicated region
  $region6: #{vqvae_forward.19} parent=0 // pred_check
    _
  $region7: #{vqvae_forward.19} parent=0 // pred_check_branch
    %11 = sbr.rel (0) target = $region9
  $region8: #{vqvae_forward.19} parent=0 // pred_region
    _
  $region9: #{vqvae_forward.19} parent=0 // pred_fallthru
    _
  // Predicated region
  $region10: #{vqvae_forward.19} parent=0 // pred_check
    _
  $region11: #{vqvae_forward.19} parent=0 // pred_check_branch
    %13 = sbr.rel (0) target = $region13
  $region12: #{vqvae_forward.19} parent=0 // pred_region
    _
  $region13: #{vqvae_forward.19} parent=0 // pred_fallthru
    _
  %p15 = scmp.eq.s32.totalorder 0, 0
  // Predicated region
  $region14: #{vqvae_forward.19} parent=0 // pred_check
    %p16 = pneg %p15
  $region15: #{vqvae_forward.19} parent=0 // pred_check_branch
    %18 = sbr.rel (%p16) target = $region17
  $region16: #{vqvae_forward.19} parent=0 // pred_region
    %19 = vst [vmem:[#allocation2] sm:$0xff] 0.0
    %20 = vst [vmem:[#allocation2 + $0x8] sm:$0xff] 0.0
    %21 = vst [vmem:[#allocation2 + $0x10] sm:$0xff] 0.0
    %22 = vst [vmem:[#allocation2 + $0x18] sm:$0xff] 0.0
    %23 = vst [vmem:[#allocation2 + $0x20] sm:$0xff] 0.0
    %24 = vst [vmem:[#allocation2 + $0x28] sm:$0xff] 0.0
    %25 = vst [vmem:[#allocation2 + $0x30] sm:$0xff] 0.0
    %26 = vst [vmem:[#allocation2 + $0x38] sm:$0xff] 0.0
    %27 = vst [vmem:[#allocation2 + $0x40] sm:$0xff] 0.0
    %28 = vst [vmem:[#allocation2 + $0x48] sm:$0xff] 0.0
    %29 = vst [vmem:[#allocation2 + $0x50] sm:$0xff] 0.0
    %30 = vst [vmem:[#allocation2 + $0x58] sm:$0xff] 0.0
    %31 = vst [vmem:[#allocation2 + $0x60] sm:$0xff] 0.0
    %32 = vst [vmem:[#allocation2 + $0x68] sm:$0xff] 0.0
    %33 = vst [vmem:[#allocation2 + $0x70] sm:$0xff] 0.0
    %34 = vst [vmem:[#allocation2 + $0x78] sm:$0xff] 0.0
  $region17: #{vqvae_forward.19} parent=0 // pred_fallthru
    _
  %v35 = vld [vmem:[%s0] sm:$0xf]
  %v36 = vld [vmem:[%s0 + $0x4] sm:$0xf]
  %v37 = vld [vmem:[%s0 + $0x8] sm:$0xf]
  %v38 = vld [vmem:[%s0 + $0xc] sm:$0xf]
  %v39 = vld [vmem:[%s0 + $0x10] sm:$0xf]
  %v40 = vld [vmem:[%s0 + $0x14] sm:$0xf]
  %v41 = vld [vmem:[%s0 + $0x18] sm:$0xf]
  %v42 = vld [vmem:[%s0 + $0x1c] sm:$0xf]
  %v43 = vld [vmem:[%s0 + $0x20] sm:$0xf]
  %v44 = vld [vmem:[%s0 + $0x24] sm:$0xf]
  %v45 = vld [vmem:[%s0 + $0x28] sm:$0xf]
  %v46 = vld [vmem:[%s0 + $0x2c] sm:$0xf]
  %v47 = vld [vmem:[%s0 + $0x30] sm:$0xf]
  %v48 = vld [vmem:[%s0 + $0x34] sm:$0xf]
  %v49 = vld [vmem:[%s0 + $0x38] sm:$0xf]
  %v50 = vld [vmem:[%s0 + $0x3c] sm:$0xf]
  %v51 = vld [vmem:[#allocation2] sm:$0xff]
  %v52 = vld [vmem:[#allocation2 + $0x8] sm:$0xff]
  %v53 = vld [vmem:[#allocation2 + $0x10] sm:$0xff]
  %v54 = vld [vmem:[#allocation2 + $0x18] sm:$0xff]
  %v55 = vld [vmem:[#allocation2 + $0x20] sm:$0xff]
  %v56 = vld [vmem:[#allocation2 + $0x28] sm:$0xff]
  %v57 = vld [vmem:[#allocation2 + $0x30] sm:$0xff]
  %v58 = vld [vmem:[#allocation2 + $0x38] sm:$0xff]
  %v59 = vld [vmem:[#allocation2 + $0x40] sm:$0xff]
  %v60 = vld [vmem:[#allocation2 + $0x48] sm:$0xff]
  %v61 = vld [vmem:[#allocation2 + $0x50] sm:$0xff]
  %v62 = vld [vmem:[#allocation2 + $0x58] sm:$0xff]
  %v63 = vld [vmem:[#allocation2 + $0x60] sm:$0xff]
  %v64 = vld [vmem:[#allocation2 + $0x68] sm:$0xff]
  %v65 = vld [vmem:[#allocation2 + $0x70] sm:$0xff]
  %v66 = vld [vmem:[#allocation2 + $0x78] sm:$0xff]
  %v67 = vld [vmem:[%s1] sm:$0xf]
  %v68 = vld [vmem:[%s1 + $0x4] sm:$0xf]
  %v69 = vld [vmem:[%s1 + $0x8] sm:$0xf]
  %v70 = vld [vmem:[%s1 + $0xc] sm:$0xf]
  %v71 = vld [vmem:[%s1 + $0x10] sm:$0xf]
  %v72 = vld [vmem:[%s1 + $0x14] sm:$0xf]
  %v89 = vunpack.c.l.b16 %v35
  %v90 = vunpack.c.l.b16 %v36
  %v91 = vunpack.c.l.b16 %v37
  %v92 = vunpack.c.l.b16 %v38
  %v93 = vunpack.c.l.b16 %v39
  %v94 = vunpack.c.l.b16 %v40
  %v95 = vunpack.c.l.b16 %v41
  %v96 = vunpack.c.l.b16 %v42
  %v97 = vunpack.c.l.b16 %v43
  %v98 = vunpack.c.l.b16 %v44
  %v99 = vunpack.c.l.b16 %v45
  %v100 = vunpack.c.l.b16 %v46
  %v101 = vunpack.c.l.b16 %v47
  %v102 = vunpack.c.l.b16 %v48
  %v103 = vunpack.c.l.b16 %v49
  %v104 = vunpack.c.l.b16 %v50
  %v105 = vpack.c.b16 %v90, %v89
  %v106 = vpack.c.b16 %v92, %v91
  %v107 = vpack.c.b16 %v94, %v93
  %v108 = vpack.c.b16 %v96, %v95
  %v109 = vpack.c.b16 %v98, %v97
  %v110 = vpack.c.b16 %v100, %v99
  %v111 = vpack.c.b16 %v102, %v101
  %v112 = vpack.c.b16 %v104, %v103
  %v119 = vunpack.c.l.b16 %v67
  %v120 = vunpack.c.l.b16 %v68
  %v121 = vunpack.c.l.b16 %v69
  %v122 = vunpack.c.l.b16 %v70
  %v123 = vunpack.c.l.b16 %v71
  %v124 = vunpack.c.l.b16 %v72
  %v125 = vpack.c.b16 %v120, %v119
  %v126 = vpack.c.b16 %v122, %v121
  %v127 = vpack.c.b16 %v124, %v123
  %vm131 = vcmask 392192
  %v133 = vsel %vm131, %v105, 0
  %v136 = vsel %vm131, %v106, 0
  %v139 = vsel %vm131, %v107, 0
  %v142 = vsel %vm131, %v108, 0
  %v145 = vsel %vm131, %v109, 0
  %v148 = vsel %vm131, %v110, 0
  %v151 = vsel %vm131, %v111, 0
  %v154 = vsel %vm131, %v112, 0
  %156 = vmatpush.bf16.msra.mxu0 0
  %157 = vmatpush.bf16.msra.mxu0 0
  %158 = vmatpush.bf16.msra.mxu0 0
  %159 = vmatpush.bf16.msra.mxu0 0
  %160 = vmatpush.bf16.msra.mxu0 0
  %161 = vmatpush.bf16.msra.mxu0 %v127
  %162 = vmatpush.bf16.msra.mxu0 %v126
  %163 = vmatpush.bf16.msra.mxu0 %v125
  %164 = vmatmul.bf16.gmra.mxu0 %v133
  %v165 = vpop.f32.mrf.mxu0
  %v166 = vadd.f32 0.0, %v165
  %v167 = vpop.f32.mrf.mxu0
  %v168 = vadd.f32 0.0, %v167
  %169 = vmatmul.bf16.gmra.mxu0 %v136
  %v170 = vpop.f32.mrf.mxu0
  %v171 = vadd.f32 0.0, %v170
  %v172 = vpop.f32.mrf.mxu0
  %v173 = vadd.f32 0.0, %v172
  %174 = vmatmul.bf16.gmra.mxu0 %v139
  %v175 = vpop.f32.mrf.mxu0
  %v176 = vadd.f32 0.0, %v175
  %v177 = vpop.f32.mrf.mxu0
  %v178 = vadd.f32 0.0, %v177
  %179 = vmatmul.bf16.gmra.mxu0 %v142
  %v180 = vpop.f32.mrf.mxu0
  %v181 = vadd.f32 0.0, %v180
  %v182 = vpop.f32.mrf.mxu0
  %v183 = vadd.f32 0.0, %v182
  %184 = vmatmul.bf16.gmra.mxu0 %v145
  %v185 = vpop.f32.mrf.mxu0
  %v186 = vadd.f32 0.0, %v185
  %v187 = vpop.f32.mrf.mxu0
  %v188 = vadd.f32 0.0, %v187
  %189 = vmatmul.bf16.gmra.mxu0 %v148
  %v190 = vpop.f32.mrf.mxu0
  %v191 = vadd.f32 0.0, %v190
  %v192 = vpop.f32.mrf.mxu0
  %v193 = vadd.f32 0.0, %v192
  %194 = vmatmul.bf16.gmra.mxu0 %v151
  %v195 = vpop.f32.mrf.mxu0
  %v196 = vadd.f32 0.0, %v195
  %v197 = vpop.f32.mrf.mxu0
  %v198 = vadd.f32 0.0, %v197
  %199 = vmatmul.bf16.gmra.mxu0 %v154
  %v200 = vpop.f32.mrf.mxu0
  %v201 = vadd.f32 0.0, %v200
  %v202 = vpop.f32.mrf.mxu0
  %v203 = vadd.f32 0.0, %v202
  %204 = vdwg.mxu0
  %v205 = vadd.f32 %v51, %v166
  %v206 = vadd.f32 %v52, %v168
  %v207 = vadd.f32 %v53, %v171
  %v208 = vadd.f32 %v54, %v173
  %v209 = vadd.f32 %v55, %v176
  %v210 = vadd.f32 %v56, %v178
  %v211 = vadd.f32 %v57, %v181
  %v212 = vadd.f32 %v58, %v183
  %v213 = vadd.f32 %v59, %v186
  %v214 = vadd.f32 %v60, %v188
  %v215 = vadd.f32 %v61, %v191
  %v216 = vadd.f32 %v62, %v193
  %v217 = vadd.f32 %v63, %v196
  %v218 = vadd.f32 %v64, %v198
  %v219 = vadd.f32 %v65, %v201
  %v220 = vadd.f32 %v66, %v203
  %221 = vst [vmem:[#allocation2] sm:$0xff] %v205
  %222 = vst [vmem:[#allocation2 + $0x8] sm:$0xff] %v206
  %223 = vst [vmem:[#allocation2 + $0x10] sm:$0xff] %v207
  %224 = vst [vmem:[#allocation2 + $0x18] sm:$0xff] %v208
  %225 = vst [vmem:[#allocation2 + $0x20] sm:$0xff] %v209
  %226 = vst [vmem:[#allocation2 + $0x28] sm:$0xff] %v210
  %227 = vst [vmem:[#allocation2 + $0x30] sm:$0xff] %v211
  %228 = vst [vmem:[#allocation2 + $0x38] sm:$0xff] %v212
  %229 = vst [vmem:[#allocation2 + $0x40] sm:$0xff] %v213
  %230 = vst [vmem:[#allocation2 + $0x48] sm:$0xff] %v214
  %231 = vst [vmem:[#allocation2 + $0x50] sm:$0xff] %v215
  %232 = vst [vmem:[#allocation2 + $0x58] sm:$0xff] %v216
  %233 = vst [vmem:[#allocation2 + $0x60] sm:$0xff] %v217
  %234 = vst [vmem:[#allocation2 + $0x68] sm:$0xff] %v218
  %235 = vst [vmem:[#allocation2 + $0x70] sm:$0xff] %v219
  %236 = vst [vmem:[#allocation2 + $0x78] sm:$0xff] %v220
  // Predicated region
  $region18: #{vqvae_forward.19} parent=0 // pred_check
    %p237 = pneg %p15
  $region19: #{vqvae_forward.19} parent=0 // pred_check_branch
    %239 = sbr.rel (%p237) target = $region21
  $region20: #{vqvae_forward.19} parent=0 // pred_region
    %v240 = vld [vmem:[#allocation2] sm:$0xff]
    %v241 = vld [vmem:[#allocation2 + $0x8] sm:$0xff]
    %v242 = vld [vmem:[#allocation2 + $0x10] sm:$0xff]
    %v243 = vld [vmem:[#allocation2 + $0x18] sm:$0xff]
    %v244 = vld [vmem:[#allocation2 + $0x20] sm:$0xff]
    %v245 = vld [vmem:[#allocation2 + $0x28] sm:$0xff]
    %v246 = vld [vmem:[#allocation2 + $0x30] sm:$0xff]
    %v247 = vld [vmem:[#allocation2 + $0x38] sm:$0xff]
    %v248 = vld [vmem:[#allocation2 + $0x40] sm:$0xff]
    %v249 = vld [vmem:[#allocation2 + $0x48] sm:$0xff]
    %v250 = vld [vmem:[#allocation2 + $0x50] sm:$0xff]
    %v251 = vld [vmem:[#allocation2 + $0x58] sm:$0xff]
    %v252 = vld [vmem:[#allocation2 + $0x60] sm:$0xff]
    %v253 = vld [vmem:[#allocation2 + $0x68] sm:$0xff]
    %v254 = vld [vmem:[#allocation2 + $0x70] sm:$0xff]
    %v255 = vld [vmem:[#allocation2 + $0x78] sm:$0xff]
    %v256 = vld [vmem:[%s2] sm:$0x1]
    %v258 = vperm.slane %v256, 0
    %v260 = vadd.f32 %v240, %v258
    %v261 = vadd.f32 %v241, %v258
    %v262 = vadd.f32 %v242, %v258
    %v263 = vadd.f32 %v243, %v258
    %v264 = vadd.f32 %v244, %v258
    %v265 = vadd.f32 %v245, %v258
    %v266 = vadd.f32 %v246, %v258
    %v267 = vadd.f32 %v247, %v258
    %v268 = vadd.f32 %v248, %v258
    %v269 = vadd.f32 %v249, %v258
    %v270 = vadd.f32 %v250, %v258
    %v271 = vadd.f32 %v251, %v258
    %v272 = vadd.f32 %v252, %v258
    %v273 = vadd.f32 %v253, %v258
    %v274 = vadd.f32 %v254, %v258
    %v275 = vadd.f32 %v255, %v258
    %v276 = vmax.f32 %v260, 0.0
    %v277 = vmax.f32 %v261, 0.0
    %v278 = vmax.f32 %v262, 0.0
    %v279 = vmax.f32 %v263, 0.0
    %v280 = vmax.f32 %v264, 0.0
    %v281 = vmax.f32 %v265, 0.0
    %v282 = vmax.f32 %v266, 0.0
    %v283 = vmax.f32 %v267, 0.0
    %v284 = vmax.f32 %v268, 0.0
    %v285 = vmax.f32 %v269, 0.0
    %v286 = vmax.f32 %v270, 0.0
    %v287 = vmax.f32 %v271, 0.0
    %v288 = vmax.f32 %v272, 0.0
    %v289 = vmax.f32 %v273, 0.0
    %v290 = vmax.f32 %v274, 0.0
    %v291 = vmax.f32 %v275, 0.0
    %292 = vst [vmem:[%s3] sm:$0xff] %v276
    %293 = vst [vmem:[%s3 + $0x8] sm:$0xff] %v277
    %294 = vst [vmem:[%s3 + $0x10] sm:$0xff] %v278
    %295 = vst [vmem:[%s3 + $0x18] sm:$0xff] %v279
    %296 = vst [vmem:[%s3 + $0x20] sm:$0xff] %v280
    %297 = vst [vmem:[%s3 + $0x28] sm:$0xff] %v281
    %298 = vst [vmem:[%s3 + $0x30] sm:$0xff] %v282
    %299 = vst [vmem:[%s3 + $0x38] sm:$0xff] %v283
    %300 = vst [vmem:[%s3 + $0x40] sm:$0xff] %v284
    %301 = vst [vmem:[%s3 + $0x48] sm:$0xff] %v285
    %302 = vst [vmem:[%s3 + $0x50] sm:$0xff] %v286
    %303 = vst [vmem:[%s3 + $0x58] sm:$0xff] %v287
    %304 = vst [vmem:[%s3 + $0x60] sm:$0xff] %v288
    %305 = vst [vmem:[%s3 + $0x68] sm:$0xff] %v289
    %306 = vst [vmem:[%s3 + $0x70] sm:$0xff] %v290
    %307 = vst [vmem:[%s3 + $0x78] sm:$0xff] %v291
  $region21: #{vqvae_forward.19} parent=0 // pred_fallthru
    _
  // Predicated region
  $region22: #{vqvae_forward.19} parent=0 // pred_check
    _
  $region23: #{vqvae_forward.19} parent=0 // pred_check_branch
    %309 = sbr.rel (0) target = $region25
  $region24: #{vqvae_forward.19} parent=0 // pred_region
    _
  $region25: #{vqvae_forward.19} parent=0 // pred_fallthru
    _
  // Predicated region
  $region26: #{vqvae_forward.19} parent=0 // pred_check
    _
  $region27: #{vqvae_forward.19} parent=0 // pred_check_branch
    %311 = sbr.rel (0) target = $region29
  $region28: #{vqvae_forward.19} parent=0 // pred_region
    _
  $region29: #{vqvae_forward.19} parent=0 // pred_fallthru
    _

// kernel: vqvae_forward.20
$region0: #{vqvae_forward.20}
  #allocation0 [shape = 'u32[]', space=smem, size = 0x4, offset = 0x4, fixed_abs, tag = 'smem constant byte address 0x4 - core index']
  #allocation1 [shape = 'u32[72,128]{1,0:T(1,128)}', space=vmem, size = 0x9000, scoped, tag = 'internal scratch']
  #allocation2 [shape = 'f32[32,128]{1,0:T(8,128)}', space=vmem, size = 0x4000, scoped, tag = 'scratch operand']
  %s0 = inlined_call_operand.vmem [shape: bf16[32,2048], index: 0, kind: input, shape index: {}]
  %s1 = inlined_call_operand.vmem [shape: bf16[2048,128], index: 1, kind: input, shape index: {}]
  %s2 = inlined_call_operand.vmem [shape: f32[1,128], index: 2, kind: input, shape index: {}]
  %s3 = inlined_call_operand.vmem [shape: f32[32,128], index: 3, kind: output, shape index: {}]
  %s4 = sld [smem:[#allocation0]]
  $region76: #{vqvae_forward.20} parent=0
    _
  %s6 = ssub.s32 1, %s4
  %s7 = scalar_select 0, %s6, %s4
  $region1: #{vqvae_forward.20} parent=0
    #allocation3 [shape = 'u8[65536]{0}', space=vmem, size = 0x10000, scoped, tag = 'input window, operand 0']
    loop: start=0, step=1, limit=6
    $region2: #{vqvae_forward.20} parent=1 // loop_pre_header
      _
    $region3: #{vqvae_forward.20} parent=1 // loop_header
      %s9 = sphi 0, %s13
      %p10 = scmp.ge.s32.totalorder %s9, 6
      %s16 = sphi 0, %s35
      %s17 = sphi 0, %s31
      %s18 = sphi 0, %s27
      %s19 = sphi 0, %s16
      %s20 = sphi 0, %s17
      %s21 = sphi 0, %s18
      %s22 = sphi 0, %s19
      %s23 = sphi 0, %s20
      %s24 = sphi 0, %s21
      %s40 = sphi 0, %s42
      %s43 = sphi 0, %s40
      %s44 = sphi 0, %s43
      %s60 = sphi 0, %s44
      %s68 = sphi 0, %s70
      %s71 = sphi 0, %s68
      %s72 = sphi 0, %s71
      %s88 = sphi 0, %s72
      %s94 = sphi 0, %s96
      %s97 = sphi 0, %s94
      %s98 = sphi 0, %s97
      %s114 = sphi 0, %s98
      %s122 = sphi 0, %s124
      %s125 = sphi 0, %s122
      %s126 = sphi 0, %s125
      %s142 = sphi 0, %s126
    $region4: #{vqvae_forward.20} parent=1 // loop_header_branch
      %12 = sbr.rel (%p10) target = $region8
    $region5: #{vqvae_forward.20} parent=1 // loop_body
      %s14 = ssub.s32 %s9, 1
      %s15 = ssub.s32 %s9, 2
      %s25 = sadd.s32 1, %s18
      %p26 = scmp.ge.s32.totalorder %s25, 4
      %s27 = scalar_select %p26, 0, %s25
      %s28 = sadd.s32 1, %s17
      %s29 = scalar_select %p26, %s28, %s17
      %p30 = scmp.ge.s32.totalorder %s29, 1
      %s31 = scalar_select %p30, 0, %s29
      %s32 = sadd.s32 1, %s16
      %s33 = scalar_select %p30, %s32, %s16
      %p34 = scmp.ge.s32.totalorder %s33, 1
      %s35 = scalar_select %p34, 0, %s33
      %s36 = ssub.s32 %s16, %s35
      %s37 = ssub.s32 %s18, %s27
      %s38 = sor.u32 %s36, %s37
      %p39 = scmp.eq.s32.totalorder %s38, 0
      %s41 = sadd.s32 %s40, 1
      %s42 = scalar_select %p39, %s40, %s41
      %p45 = pneg %p39
      %p46 = scmp.eq.s32.totalorder %s9, 3
      %p47 = por %p45, %p46
      %p48 = scmp.ne.s32.totalorder %s40, %s43
      %p49 = scmp.eq.s32.totalorder %s9, 0
      %p50 = por %p48, %p49
      %p51 = scmp.ne.s32.totalorder %s40, %s43
      %p52 = scmp.eq.s32.totalorder %s14, 3
      %p53 = por %p51, %p52
      %p54 = scmp.ne.s32.totalorder %s43, %s44
      %p55 = scmp.eq.s32.totalorder %s14, 0
      %p56 = por %p54, %p55
      %p57 = scmp.ne.s32.totalorder %s43, %s44
      %p58 = scmp.eq.s32.totalorder %s15, 3
      %p59 = por %p57, %p58
      %p61 = scmp.ne.s32.totalorder %s44, %s60
      %p62 = scmp.eq.s32.totalorder %s15, 0
      %p63 = por %p61, %p62
      %s64 = ssub.s32 %s18, %s27
      %s65 = ssub.s32 %s17, %s31
      %s66 = sor.u32 %s64, %s65
      %p67 = scmp.eq.s32.totalorder %s66, 0
      %s69 = sadd.s32 %s68, 1
      %s70 = scalar_select %p67, %s68, %s69
      %p73 = pneg %p67
      %p74 = scmp.eq.s32.totalorder %s9, 3
      %p75 = por %p73, %p74
      %p76 = scmp.ne.s32.totalorder %s68, %s71
      %p77 = scmp.eq.s32.totalorder %s9, 0
      %p78 = por %p76, %p77
      %p79 = scmp.ne.s32.totalorder %s68, %s71
      %p80 = scmp.eq.s32.totalorder %s14, 3
      %p81 = por %p79, %p80
      %p82 = scmp.ne.s32.totalorder %s71, %s72
      %p83 = scmp.eq.s32.totalorder %s14, 0
      %p84 = por %p82, %p83
      %p85 = scmp.ne.s32.totalorder %s71, %s72
      %p86 = scmp.eq.s32.totalorder %s15, 3
      %p87 = por %p85, %p86
      %p89 = scmp.ne.s32.totalorder %s72, %s88
      %p90 = scmp.eq.s32.totalorder %s15, 0
      %p91 = por %p89, %p90
      %s92 = ssub.s32 %s17, %s31
      %p93 = scmp.eq.s32.totalorder %s92, 0
      %s95 = sadd.s32 %s94, 1
      %s96 = scalar_select %p93, %s94, %s95
      %p99 = pneg %p93
      %p100 = scmp.eq.s32.totalorder %s9, 3
      %p101 = por %p99, %p100
      %p102 = scmp.ne.s32.totalorder %s94, %s97
      %p103 = scmp.eq.s32.totalorder %s9, 0
      %p104 = por %p102, %p103
      %p105 = scmp.ne.s32.totalorder %s94, %s97
      %p106 = scmp.eq.s32.totalorder %s14, 3
      %p107 = por %p105, %p106
      %p108 = scmp.ne.s32.totalorder %s97, %s98
      %p109 = scmp.eq.s32.totalorder %s14, 0
      %p110 = por %p108, %p109
      %p111 = scmp.ne.s32.totalorder %s97, %s98
      %p112 = scmp.eq.s32.totalorder %s15, 3
      %p113 = por %p111, %p112
      %p115 = scmp.ne.s32.totalorder %s98, %s114
      %p116 = scmp.eq.s32.totalorder %s15, 0
      %p117 = por %p115, %p116
      %s118 = ssub.s32 %s16, %s35
      %s119 = ssub.s32 %s17, %s31
      %s120 = sor.u32 %s118, %s119
      %p121 = scmp.eq.s32.totalorder %s120, 0
      %s123 = sadd.s32 %s122, 1
      %s124 = scalar_select %p121, %s122, %s123
      %p127 = pneg %p121
      %p128 = scmp.eq.s32.totalorder %s9, 3
      %p129 = por %p127, %p128
      %p130 = scmp.ne.s32.totalorder %s122, %s125
      %p131 = scmp.eq.s32.totalorder %s9, 0
      %p132 = por %p130, %p131
      %p133 = scmp.ne.s32.totalorder %s122, %s125
      %p134 = scmp.eq.s32.totalorder %s14, 3
      %p135 = por %p133, %p134
      %p136 = scmp.ne.s32.totalorder %s125, %s126
      %p137 = scmp.eq.s32.totalorder %s14, 0
      %p138 = por %p136, %p137
      %p139 = scmp.ne.s32.totalorder %s125, %s126
      %p140 = scmp.eq.s32.totalorder %s15, 3
      %p141 = por %p139, %p140
      %p143 = scmp.ne.s32.totalorder %s126, %s142
      %p144 = scmp.eq.s32.totalorder %s15, 0
      %p145 = por %p143, %p144
      %p146 = scmp.le.s32.totalorder 1, %s9
      %p147 = scmp.lt.s32.totalorder %s9, 5
      %p148 = pnand %p146, %p147
      %p149 = pneg %p148
      // Predicated region
      $region9: #{vqvae_forward.20} parent=5 // pred_check
        _
      $region10: #{vqvae_forward.20} parent=5 // pred_check_branch
        %151 = sbr.rel (%p148) target = $region12
      $region11: #{vqvae_forward.20} parent=5 // pred_region
        %s152 = ssub.s32 %s9, 1
        // Predicated region
        $region13: #{vqvae_forward.20} parent=11 // pred_check
          %p153 = pneg %p110
        $region14: #{vqvae_forward.20} parent=11 // pred_check_branch
          %155 = sbr.rel (%p153) target = $region16
        $region15: #{vqvae_forward.20} parent=11 // pred_region
          %p156 = scmp.lt.s32.totalorder %s20, 0
          %s157 = scalar_select %p156, %s20, 0
          %s158 = scalar_lea.vmem %s2, %s157
        $region16: #{vqvae_forward.20} parent=11 // pred_fallthru
          _
      $region12: #{vqvae_forward.20} parent=5 // pred_fallthru
        _
      %p159 = scmp.lt.s32.totalorder %s9, 4
      // Predicated region
      $region17: #{vqvae_forward.20} parent=5 // pred_check
        %p160 = pneg %p159
      $region18: #{vqvae_forward.20} parent=5 // pred_check_branch
        %162 = sbr.rel (%p160) target = $region20
      $region19: #{vqvae_forward.20} parent=5 // pred_region
        // Predicated region
        $region21: #{vqvae_forward.20} parent=19 // pred_check
          %p163 = pneg %p50
        $region22: #{vqvae_forward.20} parent=19 // pred_check_branch
          %165 = sbr.rel (%p163) target = $region24
        $region23: #{vqvae_forward.20} parent=19 // pred_region
          %s166 = sand.u32 %s40, 1
          %s167 = sand.u32 %s40, 1
          %s168 = smul.addr %s167, 64
          %s169 = scalar_lea.vmem [#allocation3], %s168
          %s170 = smul.u32 4, %s16
          %s171 = smul.u32 4, %s18
          %s172 = smul.addr %s170, 16
          %s173 = sadd.s32 %s171, %s172
          %s174 = smul.addr %s173, 4
          %s175 = scalar_lea.vmem %s0, %s174
          // Predicated region
          $region25: #{vqvae_forward.20} parent=23 // pred_check
            _
          $region26: #{vqvae_forward.20} parent=23 // pred_check_branch
            %177 = sbr.rel (0) target = $region28
          $region27: #{vqvae_forward.20} parent=23 // pred_region
            // Predicated region
            $region29: #{vqvae_forward.20} parent=27 // pred_check
              _
            $region30: #{vqvae_forward.20} parent=27 // pred_check_branch
              %179 = sbr.rel (0) target = $region32
            $region31: #{vqvae_forward.20} parent=27 // pred_region
              loop: start=0, step=1, limit=1
              $region33: #{vqvae_forward.20} parent=31 // loop_pre_header
                _
              $region34: #{vqvae_forward.20} parent=31 // loop_header
                %s181 = sphi 0, %s185
                %p182 = scmp.ge.s32.totalorder %s181, 1
                %s186 = sphi %s175, %s175
                %s187 = sphi %s169, %s169
              $region35: #{vqvae_forward.20} parent=31 // loop_header_branch
                %184 = sbr.rel (%p182) target = $region39
              $region36: #{vqvae_forward.20} parent=31 // loop_body
                %v188 = vld [vmem:[%s186] sm:$0xff]
                %189 = vst [vmem:[%s187] sm:$0xff] %v188
                %v190 = vld [vmem:[%s186 + $0x8] sm:$0xff]
                %191 = vst [vmem:[%s187 + $0x8] sm:$0xff] %v190
                %v192 = vld [vmem:[%s186 + $0x40] sm:$0xff]
                %193 = vst [vmem:[%s187 + $0x10] sm:$0xff] %v192
                %v194 = vld [vmem:[%s186 + $0x48] sm:$0xff]
                %195 = vst [vmem:[%s187 + $0x18] sm:$0xff] %v194
                %v196 = vld [vmem:[%s186 + $0x80] sm:$0xff]
                %197 = vst [vmem:[%s187 + $0x20] sm:$0xff] %v196
                %v198 = vld [vmem:[%s186 + $0x88] sm:$0xff]
                %199 = vst [vmem:[%s187 + $0x28] sm:$0xff] %v198
                %v200 = vld [vmem:[%s186 + $0xc0] sm:$0xff]
                %201 = vst [vmem:[%s187 + $0x30] sm:$0xff] %v200
                %v202 = vld [vmem:[%s186 + $0xc8] sm:$0xff]
                %203 = vst [vmem:[%s187 + $0x38] sm:$0xff] %v202
              $region37: #{vqvae_forward.20} parent=31 // loop_footer
                %s185 = sadd.s32 1, %s181
              $region38: #{vqvae_forward.20} parent=31 // loop_footer_branch
                %180 = sbr.rel target = $region34
              $region39: #{vqvae_forward.20} parent=31 // loop_exit
                _
            $region32: #{vqvae_forward.20} parent=27 // pred_fallthru
              _
            // Predicated region
            $region40: #{vqvae_forward.20} parent=27 // pred_check
              _
            $region41: #{vqvae_forward.20} parent=27 // pred_check_branch
              %205 = sbr.rel target = $region43
            $region42: #{vqvae_forward.20} parent=27 // pred_region
              _
            $region43: #{vqvae_forward.20} parent=27 // pred_fallthru
              _
          $region28: #{vqvae_forward.20} parent=23 // pred_fallthru
            _
          %206 = vnop
        $region24: #{vqvae_forward.20} parent=19 // pred_fallthru
          _
        // Predicated region
        $region44: #{vqvae_forward.20} parent=19 // pred_check
          %p207 = pneg %p78
        $region45: #{vqvae_forward.20} parent=19 // pred_check_branch
          %209 = sbr.rel (%p207) target = $region47
        $region46: #{vqvae_forward.20} parent=19 // pred_region
          %s210 = smul.u32 64, %s18
          %p211 = scmp.lt.s32.totalorder %s210, 255
          %s212 = scalar_select %p211, %s210, 255
          %p213 = scmp.lt.s32.totalorder %s17, 0
          %s214 = scalar_select %p213, %s17, 0
          %s215 = sadd.s32 %s214, %s212
          %s216 = smul.addr %s215, 4
          %s217 = scalar_lea.vmem %s1, %s216
          %s218 = smul.u32 64, %s18
        $region47: #{vqvae_forward.20} parent=19 // pred_fallthru
          _
      $region20: #{vqvae_forward.20} parent=5 // pred_fallthru
        _
      %p219 = scmp.le.s32.totalorder 1, %s9
      %p220 = scmp.lt.s32.totalorder %s9, 5
      %p221 = pnand %p219, %p220
      %p222 = pneg %p221
      // Predicated region
      $region48: #{vqvae_forward.20} parent=5 // pred_check
        _
      $region49: #{vqvae_forward.20} parent=5 // pred_check_branch
        %224 = sbr.rel (%p221) target = $region51
      $region50: #{vqvae_forward.20} parent=5 // pred_region
        %s225 = ssub.s32 %s9, 1
        %s226 = sand.u32 %s43, 1
        %s227 = sand.u32 %s43, 1
        %s228 = smul.addr %s227, 64
        %s229 = scalar_lea.vmem [#allocation3], %s228
        // Predicated region
        $region52: #{vqvae_forward.20} parent=50 // pred_check
          %p230 = pneg %p56
        $region53: #{vqvae_forward.20} parent=50 // pred_check_branch
          %232 = sbr.rel (%p230) target = $region55
        $region54: #{vqvae_forward.20} parent=50 // pred_region
          _
        $region55: #{vqvae_forward.20} parent=50 // pred_fallthru
          _
        %s233 = sand.u32 %s43, 1
        %s234 = sand.u32 %s43, 1
        %s235 = smul.addr %s234, 64
        %s236 = scalar_lea.vmem [#allocation3], %s235
        %p237 = pneg %p56
        %p238 = pneg %p53
        %s239 = smul.u32 64, %s21
        %p240 = scmp.lt.s32.totalorder %s239, 255
        %s241 = scalar_select %p240, %s239, 255
        %p242 = scmp.lt.s32.totalorder %s20, 0
        %s243 = scalar_select %p242, %s20, 0
        %s244 = sadd.s32 %s243, %s241
        %s245 = smul.addr %s244, 4
        %s246 = scalar_lea.vmem %s1, %s245
        %p247 = pneg %p84
        %p248 = pneg %p81
        %p249 = scmp.lt.s32.totalorder %s20, 0
        %s250 = scalar_select %p249, %s20, 0
        %s251 = scalar_lea.vmem %s2, %s250
        %p252 = pneg %p110
        %p253 = pneg %p107
        %p254 = pneg %p138
        %p255 = pneg %p135
        %s256 = smul.u32 4, %s19
        %p257 = scmp.lt.s32.totalorder %s256, 3
        %s258 = scalar_select %p257, %s256, 3
        %p259 = scmp.lt.s32.totalorder %s20, 0
        %s260 = scalar_select %p259, %s20, 0
        %s261 = sadd.s32 %s260, %s258
        %s262 = smul.addr %s261, 8
        %s263 = scalar_lea.vmem %s3, %s262
        %s264 = smul.u32 4, %s19
        %s265 = smul.u32 4, %s21
        %s266 = smul.u32 64, %s21
        %p267 = scmp.lt.s32.totalorder %s266, 255
        %s268 = scalar_select %p267, %s266, 255
        %p269 = scmp.lt.s32.totalorder %s20, 0
        %s270 = scalar_select %p269, %s20, 0
        %s271 = sadd.s32 %s270, %s268
        %s272 = smul.addr %s271, 4
        %s273 = scalar_lea.vmem %s1, %s272
        %s274 = smul.u32 64, %s21
        %p275 = scmp.lt.s32.totalorder %s20, 0
        %s276 = scalar_select %p275, %s20, 0
        %s277 = scalar_lea.vmem %s2, %s276
        %s278 = smul.u32 4, %s19
        %p279 = scmp.lt.s32.totalorder %s278, 3
        %s280 = scalar_select %p279, %s278, 3
        %p281 = scmp.lt.s32.totalorder %s20, 0
        %s282 = scalar_select %p281, %s20, 0
        %s283 = sadd.s32 %s282, %s280
        %s284 = smul.addr %s283, 8
        %s285 = scalar_lea.vmem %s3, %s284
        %s286 = smul.u32 4, %s19
        %p287 = scmp.eq.s32.totalorder %s21, 0
        // Predicated region
        $region56: #{vqvae_forward.20} parent=50 // pred_check
          %p288 = pneg %p287
        $region57: #{vqvae_forward.20} parent=50 // pred_check_branch
          %290 = sbr.rel (%p288) target = $region59
        $region58: #{vqvae_forward.20} parent=50 // pred_region
          %291 = vst [vmem:[#allocation2] sm:$0xff] 0.0
          %292 = vst [vmem:[#allocation2 + $0x8] sm:$0xff] 0.0
          %293 = vst [vmem:[#allocation2 + $0x10] sm:$0xff] 0.0
          %294 = vst [vmem:[#allocation2 + $0x18] sm:$0xff] 0.0
        $region59: #{vqvae_forward.20} parent=50 // pred_fallthru
          _
        %v295 = vld [vmem:[%s229] sm:$0xff]
        %v296 = vld [vmem:[%s229 + $0x8] sm:$0xff]
        %v297 = vld [vmem:[%s229 + $0x10] sm:$0xff]
        %v298 = vld [vmem:[%s229 + $0x18] sm:$0xff]
        %v299 = vld [vmem:[%s229 + $0x20] sm:$0xff]
        %v300 = vld [vmem:[%s229 + $0x28] sm:$0xff]
        %v301 = vld [vmem:[%s229 + $0x30] sm:$0xff]
        %v302 = vld [vmem:[%s229 + $0x38] sm:$0xff]
        %v303 = vld [vmem:[#allocation2] sm:$0xff]
        %v304 = vld [vmem:[#allocation2 + $0x8] sm:$0xff]
        %v305 = vld [vmem:[#allocation2 + $0x10] sm:$0xff]
        %v306 = vld [vmem:[#allocation2 + $0x18] sm:$0xff]
        %v307 = vld [vmem:[%s273] sm:$0xf]
        %v308 = vld [vmem:[%s273 + $0x4] sm:$0xf]
        %v309 = vld [vmem:[%s273 + $0x8] sm:$0xf]
        %v310 = vld [vmem:[%s273 + $0xc] sm:$0xf]
        %v311 = vld [vmem:[%s273 + $0x10] sm:$0xf]
        %v312 = vld [vmem:[%s273 + $0x14] sm:$0xf]
        %v313 = vld [vmem:[%s273 + $0x18] sm:$0xf]
        %v314 = vld [vmem:[%s273 + $0x1c] sm:$0xf]
        %v315 = vld [vmem:[%s273 + $0x20] sm:$0xf]
        %v316 = vld [vmem:[%s273 + $0x24] sm:$0xf]
        %v317 = vld [vmem:[%s273 + $0x28] sm:$0xf]
        %v318 = vld [vmem:[%s273 + $0x2c] sm:$0xf]
        %v319 = vld [vmem:[%s273 + $0x30] sm:$0xf]
        %v320 = vld [vmem:[%s273 + $0x34] sm:$0xf]
        %v321 = vld [vmem:[%s273 + $0x38] sm:$0xf]
        %v322 = vld [vmem:[%s273 + $0x3c] sm:$0xf]
        %v323 = vld [vmem:[%s273 + $0x40] sm:$0xf]
        %v324 = vld [vmem:[%s273 + $0x44] sm:$0xf]
        %v325 = vld [vmem:[%s273 + $0x48] sm:$0xf]
        %v326 = vld [vmem:[%s273 + $0x4c] sm:$0xf]
        %v327 = vld [vmem:[%s273 + $0x50] sm:$0xf]
        %v328 = vld [vmem:[%s273 + $0x54] sm:$0xf]
        %v329 = vld [vmem:[%s273 + $0x58] sm:$0xf]
        %v330 = vld [vmem:[%s273 + $0x5c] sm:$0xf]
        %v331 = vld [vmem:[%s273 + $0x60] sm:$0xf]
        %v332 = vld [vmem:[%s273 + $0x64] sm:$0xf]
        %v333 = vld [vmem:[%s273 + $0x68] sm:$0xf]
        %v334 = vld [vmem:[%s273 + $0x6c] sm:$0xf]
        %v335 = vld [vmem:[%s273 + $0x70] sm:$0xf]
        %v336 = vld [vmem:[%s273 + $0x74] sm:$0xf]
        %v337 = vld [vmem:[%s273 + $0x78] sm:$0xf]
        %v338 = vld [vmem:[%s273 + $0x7c] sm:$0xf]
        %v339 = vld [vmem:[%s273 + $0x80] sm:$0xf]
        %v340 = vld [vmem:[%s273 + $0x84] sm:$0xf]
        %v341 = vld [vmem:[%s273 + $0x88] sm:$0xf]
        %v342 = vld [vmem:[%s273 + $0x8c] sm:$0xf]
        %v343 = vld [vmem:[%s273 + $0x90] sm:$0xf]
        %v344 = vld [vmem:[%s273 + $0x94] sm:$0xf]
        %v345 = vld [vmem:[%s273 + $0x98] sm:$0xf]
        %v346 = vld [vmem:[%s273 + $0x9c] sm:$0xf]
        %v347 = vld [vmem:[%s273 + $0xa0] sm:$0xf]
        %v348 = vld [vmem:[%s273 + $0xa4] sm:$0xf]
        %v349 = vld [vmem:[%s273 + $0xa8] sm:$0xf]
        %v350 = vld [vmem:[%s273 + $0xac] sm:$0xf]
        %v351 = vld [vmem:[%s273 + $0xb0] sm:$0xf]
        %v352 = vld [vmem:[%s273 + $0xb4] sm:$0xf]
        %v353 = vld [vmem:[%s273 + $0xb8] sm:$0xf]
        %v354 = vld [vmem:[%s273 + $0xbc] sm:$0xf]
        %v355 = vld [vmem:[%s273 + $0xc0] sm:$0xf]
        %v356 = vld [vmem:[%s273 + $0xc4] sm:$0xf]
        %v357 = vld [vmem:[%s273 + $0xc8] sm:$0xf]
        %v358 = vld [vmem:[%s273 + $0xcc] sm:$0xf]
        %v359 = vld [vmem:[%s273 + $0xd0] sm:$0xf]
        %v360 = vld [vmem:[%s273 + $0xd4] sm:$0xf]
        %v361 = vld [vmem:[%s273 + $0xd8] sm:$0xf]
        %v362 = vld [vmem:[%s273 + $0xdc] sm:$0xf]
        %v363 = vld [vmem:[%s273 + $0xe0] sm:$0xf]
        %v364 = vld [vmem:[%s273 + $0xe4] sm:$0xf]
        %v365 = vld [vmem:[%s273 + $0xe8] sm:$0xf]
        %v366 = vld [vmem:[%s273 + $0xec] sm:$0xf]
        %v367 = vld [vmem:[%s273 + $0xf0] sm:$0xf]
        %v368 = vld [vmem:[%s273 + $0xf4] sm:$0xf]
        %v369 = vld [vmem:[%s273 + $0xf8] sm:$0xf]
        %v370 = vld [vmem:[%s273 + $0xfc] sm:$0xf]
        %v379 = vunpack.c.l.b16 %v295
        %v380 = vunpack.c.h.b16 %v295
        %v381 = vunpack.c.l.b16 %v296
        %v382 = vunpack.c.h.b16 %v296
        %v383 = vunpack.c.l.b16 %v297
        %v384 = vunpack.c.h.b16 %v297
        %v385 = vunpack.c.l.b16 %v298
        %v386 = vunpack.c.h.b16 %v298
        %v387 = vunpack.c.l.b16 %v299
        %v388 = vunpack.c.h.b16 %v299
        %v389 = vunpack.c.l.b16 %v300
        %v390 = vunpack.c.h.b16 %v300
        %v391 = vunpack.c.l.b16 %v301
        %v392 = vunpack.c.h.b16 %v301
        %v393 = vunpack.c.l.b16 %v302
        %v394 = vunpack.c.h.b16 %v302
        %v395 = vpack.c.b16 %v383, %v379
        %v396 = vpack.c.b16 %v384, %v380
        %v397 = vpack.c.b16 %v385, %v381
        %v398 = vpack.c.b16 %v386, %v382
        %v399 = vpack.c.b16 %v391, %v387
        %v400 = vpack.c.b16 %v392, %v388
        %v401 = vpack.c.b16 %v393, %v389
        %v402 = vpack.c.b16 %v394, %v390
        %v475 = vunpack.c.l.b16 %v307
        %v476 = vunpack.c.l.b16 %v308
        %v477 = vunpack.c.l.b16 %v309
        %v478 = vunpack.c.l.b16 %v310
        %v479 = vunpack.c.l.b16 %v311
        %v480 = vunpack.c.l.b16 %v312
        %v481 = vunpack.c.l.b16 %v313
        %v482 = vunpack.c.l.b16 %v314
        %v483 = vunpack.c.l.b16 %v315
        %v484 = vunpack.c.l.b16 %v316
        %v485 = vunpack.c.l.b16 %v317
        %v486 = vunpack.c.l.b16 %v318
        %v487 = vunpack.c.l.b16 %v319
        %v488 = vunpack.c.l.b16 %v320
        %v489 = vunpack.c.l.b16 %v321
        %v490 = vunpack.c.l.b16 %v322
        %v491 = vunpack.c.l.b16 %v323
        %v492 = vunpack.c.l.b16 %v324
        %v493 = vunpack.c.l.b16 %v325
        %v494 = vunpack.c.l.b16 %v326
        %v495 = vunpack.c.l.b16 %v327
        %v496 = vunpack.c.l.b16 %v328
        %v497 = vunpack.c.l.b16 %v329
        %v498 = vunpack.c.l.b16 %v330
        %v499 = vunpack.c.l.b16 %v331
        %v500 = vunpack.c.l.b16 %v332
        %v501 = vunpack.c.l.b16 %v333
        %v502 = vunpack.c.l.b16 %v334
        %v503 = vunpack.c.l.b16 %v335
        %v504 = vunpack.c.l.b16 %v336
        %v505 = vunpack.c.l.b16 %v337
        %v506 = vunpack.c.l.b16 %v338
        %v507 = vunpack.c.l.b16 %v339
        %v508 = vunpack.c.l.b16 %v340
        %v509 = vunpack.c.l.b16 %v341
        %v510 = vunpack.c.l.b16 %v342
        %v511 = vunpack.c.l.b16 %v343
        %v512 = vunpack.c.l.b16 %v344
        %v513 = vunpack.c.l.b16 %v345
        %v514 = vunpack.c.l.b16 %v346
        %v515 = vunpack.c.l.b16 %v347
        %v516 = vunpack.c.l.b16 %v348
        %v517 = vunpack.c.l.b16 %v349
        %v518 = vunpack.c.l.b16 %v350
        %v519 = vunpack.c.l.b16 %v351
        %v520 = vunpack.c.l.b16 %v352
        %v521 = vunpack.c.l.b16 %v353
        %v522 = vunpack.c.l.b16 %v354
        %v523 = vunpack.c.l.b16 %v355
        %v524 = vunpack.c.l.b16 %v356
        %v525 = vunpack.c.l.b16 %v357
        %v526 = vunpack.c.l.b16 %v358
        %v527 = vunpack.c.l.b16 %v359
        %v528 = vunpack.c.l.b16 %v360
        %v529 = vunpack.c.l.b16 %v361
        %v530 = vunpack.c.l.b16 %v362
        %v531 = vunpack.c.l.b16 %v363
        %v532 = vunpack.c.l.b16 %v364
        %v533 = vunpack.c.l.b16 %v365
        %v534 = vunpack.c.l.b16 %v366
        %v535 = vunpack.c.l.b16 %v367
        %v536 = vunpack.c.l.b16 %v368
        %v537 = vunpack.c.l.b16 %v369
        %v538 = vunpack.c.l.b16 %v370
        %v539 = vpack.c.b16 %v476, %v475
        %v540 = vpack.c.b16 %v478, %v477
        %v541 = vpack.c.b16 %v480, %v479
        %v542 = vpack.c.b16 %v482, %v481
        %v543 = vpack.c.b16 %v484, %v483
        %v544 = vpack.c.b16 %v486, %v485
        %v545 = vpack.c.b16 %v488, %v487
        %v546 = vpack.c.b16 %v490, %v489
        %v547 = vpack.c.b16 %v492, %v491
        %v548 = vpack.c.b16 %v494, %v493
        %v549 = vpack.c.b16 %v496, %v495
        %v550 = vpack.c.b16 %v498, %v497
        %v551 = vpack.c.b16 %v500, %v499
        %v552 = vpack.c.b16 %v502, %v501
        %v553 = vpack.c.b16 %v504, %v503
        %v554 = vpack.c.b16 %v506, %v505
        %v555 = vpack.c.b16 %v508, %v507
        %v556 = vpack.c.b16 %v510, %v509
        %v557 = vpack.c.b16 %v512, %v511
        %v558 = vpack.c.b16 %v514, %v513
        %v559 = vpack.c.b16 %v516, %v515
        %v560 = vpack.c.b16 %v518, %v517
        %v561 = vpack.c.b16 %v520, %v519
        %v562 = vpack.c.b16 %v522, %v521
        %v563 = vpack.c.b16 %v524, %v523
        %v564 = vpack.c.b16 %v526, %v525
        %v565 = vpack.c.b16 %v528, %v527
        %v566 = vpack.c.b16 %v530, %v529
        %v567 = vpack.c.b16 %v532, %v531
        %v568 = vpack.c.b16 %v534, %v533
        %v569 = vpack.c.b16 %v536, %v535
        %v570 = vpack.c.b16 %v538, %v537
        %603 = vmatpush.bf16.msra.mxu0 %v546
        %604 = vmatpush.bf16.msra.mxu0 %v545
        %605 = vmatpush.bf16.msra.mxu0 %v544
        %606 = vmatpush.bf16.msra.mxu0 %v543
        %607 = vmatpush.bf16.msra.mxu0 %v542
        %608 = vmatpush.bf16.msra.mxu0 %v541
        %609 = vmatpush.bf16.msra.mxu0 %v540
        %610 = vmatpush.bf16.msra.mxu0 %v539
        %611 = vmatmul.bf16.gmra.mxu0 %v395
        %v612 = vpop.f32.mrf.mxu0
        %v613 = vadd.f32 0.0, %v612
        %v614 = vpop.f32.mrf.mxu0
        %v615 = vadd.f32 0.0, %v614
        %616 = vmatmul.bf16.gmra.mxu0 %v399
        %v617 = vpop.f32.mrf.mxu0
        %v618 = vadd.f32 0.0, %v617
        %v619 = vpop.f32.mrf.mxu0
        %v620 = vadd.f32 0.0, %v619
        %621 = vdwg.mxu0
        %622 = vmatpush.bf16.msra.mxu0 %v554
        %623 = vmatpush.bf16.msra.mxu0 %v553
        %624 = vmatpush.bf16.msra.mxu0 %v552
        %625 = vmatpush.bf16.msra.mxu0 %v551
        %626 = vmatpush.bf16.msra.mxu0 %v550
        %627 = vmatpush.bf16.msra.mxu0 %v549
        %628 = vmatpush.bf16.msra.mxu0 %v548
        %629 = vmatpush.bf16.msra.mxu0 %v547
        %630 = vmatmul.bf16.gmra.mxu0 %v396
        %v631 = vpop.f32.mrf.mxu0
        %v632 = vadd.f32 %v613, %v631
        %v633 = vpop.f32.mrf.mxu0
        %v634 = vadd.f32 %v615, %v633
        %635 = vmatmul.bf16.gmra.mxu0 %v400
        %v636 = vpop.f32.mrf.mxu0
        %v637 = vadd.f32 %v618, %v636
        %v638 = vpop.f32.mrf.mxu0
        %v639 = vadd.f32 %v620, %v638
        %640 = vdwg.mxu0
        %641 = vmatpush.bf16.msra.mxu0 %v562
        %642 = vmatpush.bf16.msra.mxu0 %v561
        %643 = vmatpush.bf16.msra.mxu0 %v560
        %644 = vmatpush.bf16.msra.mxu0 %v559
        %645 = vmatpush.bf16.msra.mxu0 %v558
        %646 = vmatpush.bf16.msra.mxu0 %v557
        %647 = vmatpush.bf16.msra.mxu0 %v556
        %648 = vmatpush.bf16.msra.mxu0 %v555
        %649 = vmatmul.bf16.gmra.mxu0 %v397
        %v650 = vpop.f32.mrf.mxu0
        %v651 = vadd.f32 %v632, %v650
        %v652 = vpop.f32.mrf.mxu0
        %v653 = vadd.f32 %v634, %v652
        %654 = vmatmul.bf16.gmra.mxu0 %v401
        %v655 = vpop.f32.mrf.mxu0
        %v656 = vadd.f32 %v637, %v655
        %v657 = vpop.f32.mrf.mxu0
        %v658 = vadd.f32 %v639, %v657
        %659 = vdwg.mxu0
        %660 = vmatpush.bf16.msra.mxu0 %v570
        %661 = vmatpush.bf16.msra.mxu0 %v569
        %662 = vmatpush.bf16.msra.mxu0 %v568
        %663 = vmatpush.bf16.msra.mxu0 %v567
        %664 = vmatpush.bf16.msra.mxu0 %v566
        %665 = vmatpush.bf16.msra.mxu0 %v565
        %666 = vmatpush.bf16.msra.mxu0 %v564
        %667 = vmatpush.bf16.msra.mxu0 %v563
        %668 = vmatmul.bf16.gmra.mxu0 %v398
        %v669 = vpop.f32.mrf.mxu0
        %v670 = vadd.f32 %v651, %v669
        %v671 = vpop.f32.mrf.mxu0
        %v672 = vadd.f32 %v653, %v671
        %673 = vmatmul.bf16.gmra.mxu0 %v402
        %v674 = vpop.f32.mrf.mxu0
        %v675 = vadd.f32 %v656, %v674
        %v676 = vpop.f32.mrf.mxu0
        %v677 = vadd.f32 %v658, %v676
        %678 = vdwg.mxu0
        %v679 = vadd.f32 %v303, %v670
        %v680 = vadd.f32 %v304, %v672
        %v681 = vadd.f32 %v305, %v675
        %v682 = vadd.f32 %v306, %v677
        %683 = vst [vmem:[#allocation2] sm:$0xff] %v679
        %684 = vst [vmem:[#allocation2 + $0x8] sm:$0xff] %v680
        %685 = vst [vmem:[#allocation2 + $0x10] sm:$0xff] %v681
        %686 = vst [vmem:[#allocation2 + $0x18] sm:$0xff] %v682
        %p687 = scmp.eq.s32.totalorder %s21, 3
        // Predicated region
        $region60: #{vqvae_forward.20} parent=50 // pred_check
          %p688 = pneg %p687
        $region61: #{vqvae_forward.20} parent=50 // pred_check_branch
          %690 = sbr.rel (%p688) target = $region63
        $region62: #{vqvae_forward.20} parent=50 // pred_region
          %v691 = vld [vmem:[#allocation2] sm:$0xff]
          %v692 = vld [vmem:[#allocation2 + $0x8] sm:$0xff]
          %v693 = vld [vmem:[#allocation2 + $0x10] sm:$0xff]
          %v694 = vld [vmem:[#allocation2 + $0x18] sm:$0xff]
          %v695 = vld [vmem:[%s277] sm:$0x1]
          %v697 = vperm.slane %v695, 0
          %v699 = vadd.f32 %v691, %v697
          %v700 = vadd.f32 %v692, %v697
          %v701 = vadd.f32 %v693, %v697
          %v702 = vadd.f32 %v694, %v697
          %v703 = vmax.f32 %v699, 0.0
          %v704 = vmax.f32 %v700, 0.0
          %v705 = vmax.f32 %v701, 0.0
          %v706 = vmax.f32 %v702, 0.0
          %707 = vst [vmem:[%s285] sm:$0xff] %v703
          %708 = vst [vmem:[%s285 + $0x8] sm:$0xff] %v704
          %709 = vst [vmem:[%s285 + $0x10] sm:$0xff] %v705
          %710 = vst [vmem:[%s285 + $0x18] sm:$0xff] %v706
        $region63: #{vqvae_forward.20} parent=50 // pred_fallthru
          _
        %s711 = smul.u32 4, %s19
        %p712 = scmp.lt.s32.totalorder %s711, 3
        %s713 = scalar_select %p712, %s711, 3
        %p714 = scmp.lt.s32.totalorder %s20, 0
        %s715 = scalar_select %p714, %s20, 0
        %s716 = sadd.s32 %s715, %s713
        %s717 = smul.addr %s716, 8
        %s718 = scalar_lea.vmem %s3, %s717
        // Predicated region
        $region64: #{vqvae_forward.20} parent=50 // pred_check
          %p719 = pneg %p135
        $region65: #{vqvae_forward.20} parent=50 // pred_check_branch
          %721 = sbr.rel (%p719) target = $region67
        $region66: #{vqvae_forward.20} parent=50 // pred_region
          %s722 = smul.u32 4, %s19
        $region67: #{vqvae_forward.20} parent=50 // pred_fallthru
          _
        // Predicated region
        $region68: #{vqvae_forward.20} parent=50 // pred_check
          %p723 = pneg %p135
        $region69: #{vqvae_forward.20} parent=50 // pred_check_branch
          %725 = sbr.rel (%p723) target = $region71
        $region70: #{vqvae_forward.20} parent=50 // pred_region
          %s726 = smul.u32 4, %s19
          %p727 = scmp.lt.s32.totalorder %s726, 3
          %s728 = scalar_select %p727, %s726, 3
          %p729 = scmp.lt.s32.totalorder %s20, 0
          %s730 = scalar_select %p729, %s20, 0
          %s731 = sadd.s32 %s730, %s728
          %s732 = smul.addr %s731, 8
          %s733 = scalar_lea.vmem %s3, %s732
        $region71: #{vqvae_forward.20} parent=50 // pred_fallthru
          _
      $region51: #{vqvae_forward.20} parent=5 // pred_fallthru
        _
      %p734 = scmp.le.s32.totalorder 2, %s9
      // Predicated region
      $region72: #{vqvae_forward.20} parent=5 // pred_check
        %p735 = pneg %p734
      $region73: #{vqvae_forward.20} parent=5 // pred_check_branch
        %737 = sbr.rel (%p735) target = $region75
      $region74: #{vqvae_forward.20} parent=5 // pred_region
        %s738 = ssub.s32 %s9, 2
      $region75: #{vqvae_forward.20} parent=5 // pred_fallthru
        _
    $region6: #{vqvae_forward.20} parent=1 // loop_footer
      %s13 = sadd.s32 1, %s9
    $region7: #{vqvae_forward.20} parent=1 // loop_footer_branch
      %8 = sbr.rel target = $region3
    $region8: #{vqvae_forward.20} parent=1 // loop_exit
      _

// kernel: vqvae_forward.21
$region0: #{vqvae_forward.21}
  #allocation0 [shape = 'u32[]', space=smem, size = 0x4, offset = 0x4, fixed_abs, tag = 'smem constant byte address 0x4 - core index']
  #allocation1 [shape = 'u32[72,128]{1,0:T(1,128)}', space=vmem, size = 0x9000, scoped, tag = 'internal scratch']
  #allocation2 [shape = 'f32[32,128]{1,0:T(8,128)}', space=vmem, size = 0x4000, scoped, tag = 'scratch operand']
  %s0 = inlined_call_operand.vmem [shape: bf16[32,1152], index: 0, kind: input, shape index: {}]
  %s1 = inlined_call_operand.vmem [shape: bf16[1152,128], index: 1, kind: input, shape index: {}]
  %s2 = inlined_call_operand.vmem [shape: f32[1,128], index: 2, kind: input, shape index: {}]
  %s3 = inlined_call_operand.vmem [shape: f32[32,128], index: 3, kind: output, shape index: {}]
  %s4 = sld [smem:[#allocation0]]
  $region79: #{vqvae_forward.21} parent=0
    _
  %s6 = ssub.s32 1, %s4
  %s7 = scalar_select 0, %s6, %s4
  $region1: #{vqvae_forward.21} parent=0
    #allocation3 [shape = 'u8[49152]{0}', space=vmem, size = 0xc000, scoped, tag = 'input window, operand 0']
    loop: start=0, step=1, limit=5
    $region2: #{vqvae_forward.21} parent=1 // loop_pre_header
      _
    $region3: #{vqvae_forward.21} parent=1 // loop_header
      %s9 = sphi 0, %s13
      %p10 = scmp.ge.s32.totalorder %s9, 5
      %s16 = sphi 0, %s35
      %s17 = sphi 0, %s31
      %s18 = sphi 0, %s27
      %s19 = sphi 0, %s16
      %s20 = sphi 0, %s17
      %s21 = sphi 0, %s18
      %s22 = sphi 0, %s19
      %s23 = sphi 0, %s20
      %s24 = sphi 0, %s21
      %s40 = sphi 0, %s42
      %s43 = sphi 0, %s40
      %s44 = sphi 0, %s43
      %s60 = sphi 0, %s44
      %s68 = sphi 0, %s70
      %s71 = sphi 0, %s68
      %s72 = sphi 0, %s71
      %s88 = sphi 0, %s72
      %s94 = sphi 0, %s96
      %s97 = sphi 0, %s94
      %s98 = sphi 0, %s97
      %s114 = sphi 0, %s98
      %s122 = sphi 0, %s124
      %s125 = sphi 0, %s122
      %s126 = sphi 0, %s125
      %s142 = sphi 0, %s126
    $region4: #{vqvae_forward.21} parent=1 // loop_header_branch
      %12 = sbr.rel (%p10) target = $region8
    $region5: #{vqvae_forward.21} parent=1 // loop_body
      %s14 = ssub.s32 %s9, 1
      %s15 = ssub.s32 %s9, 2
      %s25 = sadd.s32 1, %s18
      %p26 = scmp.ge.s32.totalorder %s25, 3
      %s27 = scalar_select %p26, 0, %s25
      %s28 = sadd.s32 1, %s17
      %s29 = scalar_select %p26, %s28, %s17
      %p30 = scmp.ge.s32.totalorder %s29, 1
      %s31 = scalar_select %p30, 0, %s29
      %s32 = sadd.s32 1, %s16
      %s33 = scalar_select %p30, %s32, %s16
      %p34 = scmp.ge.s32.totalorder %s33, 1
      %s35 = scalar_select %p34, 0, %s33
      %s36 = ssub.s32 %s16, %s35
      %s37 = ssub.s32 %s18, %s27
      %s38 = sor.u32 %s36, %s37
      %p39 = scmp.eq.s32.totalorder %s38, 0
      %s41 = sadd.s32 %s40, 1
      %s42 = scalar_select %p39, %s40, %s41
      %p45 = pneg %p39
      %p46 = scmp.eq.s32.totalorder %s9, 2
      %p47 = por %p45, %p46
      %p48 = scmp.ne.s32.totalorder %s40, %s43
      %p49 = scmp.eq.s32.totalorder %s9, 0
      %p50 = por %p48, %p49
      %p51 = scmp.ne.s32.totalorder %s40, %s43
      %p52 = scmp.eq.s32.totalorder %s14, 2
      %p53 = por %p51, %p52
      %p54 = scmp.ne.s32.totalorder %s43, %s44
      %p55 = scmp.eq.s32.totalorder %s14, 0
      %p56 = por %p54, %p55
      %p57 = scmp.ne.s32.totalorder %s43, %s44
      %p58 = scmp.eq.s32.totalorder %s15, 2
      %p59 = por %p57, %p58
      %p61 = scmp.ne.s32.totalorder %s44, %s60
      %p62 = scmp.eq.s32.totalorder %s15, 0
      %p63 = por %p61, %p62
      %s64 = ssub.s32 %s18, %s27
      %s65 = ssub.s32 %s17, %s31
      %s66 = sor.u32 %s64, %s65
      %p67 = scmp.eq.s32.totalorder %s66, 0
      %s69 = sadd.s32 %s68, 1
      %s70 = scalar_select %p67, %s68, %s69
      %p73 = pneg %p67
      %p74 = scmp.eq.s32.totalorder %s9, 2
      %p75 = por %p73, %p74
      %p76 = scmp.ne.s32.totalorder %s68, %s71
      %p77 = scmp.eq.s32.totalorder %s9, 0
      %p78 = por %p76, %p77
      %p79 = scmp.ne.s32.totalorder %s68, %s71
      %p80 = scmp.eq.s32.totalorder %s14, 2
      %p81 = por %p79, %p80
      %p82 = scmp.ne.s32.totalorder %s71, %s72
      %p83 = scmp.eq.s32.totalorder %s14, 0
      %p84 = por %p82, %p83
      %p85 = scmp.ne.s32.totalorder %s71, %s72
      %p86 = scmp.eq.s32.totalorder %s15, 2
      %p87 = por %p85, %p86
      %p89 = scmp.ne.s32.totalorder %s72, %s88
      %p90 = scmp.eq.s32.totalorder %s15, 0
      %p91 = por %p89, %p90
      %s92 = ssub.s32 %s17, %s31
      %p93 = scmp.eq.s32.totalorder %s92, 0
      %s95 = sadd.s32 %s94, 1
      %s96 = scalar_select %p93, %s94, %s95
      %p99 = pneg %p93
      %p100 = scmp.eq.s32.totalorder %s9, 2
      %p101 = por %p99, %p100
      %p102 = scmp.ne.s32.totalorder %s94, %s97
      %p103 = scmp.eq.s32.totalorder %s9, 0
      %p104 = por %p102, %p103
      %p105 = scmp.ne.s32.totalorder %s94, %s97
      %p106 = scmp.eq.s32.totalorder %s14, 2
      %p107 = por %p105, %p106
      %p108 = scmp.ne.s32.totalorder %s97, %s98
      %p109 = scmp.eq.s32.totalorder %s14, 0
      %p110 = por %p108, %p109
      %p111 = scmp.ne.s32.totalorder %s97, %s98
      %p112 = scmp.eq.s32.totalorder %s15, 2
      %p113 = por %p111, %p112
      %p115 = scmp.ne.s32.totalorder %s98, %s114
      %p116 = scmp.eq.s32.totalorder %s15, 0
      %p117 = por %p115, %p116
      %s118 = ssub.s32 %s16, %s35
      %s119 = ssub.s32 %s17, %s31
      %s120 = sor.u32 %s118, %s119
      %p121 = scmp.eq.s32.totalorder %s120, 0
      %s123 = sadd.s32 %s122, 1
      %s124 = scalar_select %p121, %s122, %s123
      %p127 = pneg %p121
      %p128 = scmp.eq.s32.totalorder %s9, 2
      %p129 = por %p127, %p128
      %p130 = scmp.ne.s32.totalorder %s122, %s125
      %p131 = scmp.eq.s32.totalorder %s9, 0
      %p132 = por %p130, %p131
      %p133 = scmp.ne.s32.totalorder %s122, %s125
      %p134 = scmp.eq.s32.totalorder %s14, 2
      %p135 = por %p133, %p134
      %p136 = scmp.ne.s32.totalorder %s125, %s126
      %p137 = scmp.eq.s32.totalorder %s14, 0
      %p138 = por %p136, %p137
      %p139 = scmp.ne.s32.totalorder %s125, %s126
      %p140 = scmp.eq.s32.totalorder %s15, 2
      %p141 = por %p139, %p140
      %p143 = scmp.ne.s32.totalorder %s126, %s142
      %p144 = scmp.eq.s32.totalorder %s15, 0
      %p145 = por %p143, %p144
      %p146 = scmp.le.s32.totalorder 1, %s9
      %p147 = scmp.lt.s32.totalorder %s9, 4
      %p148 = pnand %p146, %p147
      %p149 = pneg %p148
      // Predicated region
      $region9: #{vqvae_forward.21} parent=5 // pred_check
        _
      $region10: #{vqvae_forward.21} parent=5 // pred_check_branch
        %151 = sbr.rel (%p148) target = $region12
      $region11: #{vqvae_forward.21} parent=5 // pred_region
        %s152 = ssub.s32 %s9, 1
        // Predicated region
        $region13: #{vqvae_forward.21} parent=11 // pred_check
          %p153 = pneg %p110
        $region14: #{vqvae_forward.21} parent=11 // pred_check_branch
          %155 = sbr.rel (%p153) target = $region16
        $region15: #{vqvae_forward.21} parent=11 // pred_region
          %p156 = scmp.lt.s32.totalorder %s20, 0
          %s157 = scalar_select %p156, %s20, 0
          %s158 = scalar_lea.vmem %s2, %s157
        $region16: #{vqvae_forward.21} parent=11 // pred_fallthru
          _
      $region12: #{vqvae_forward.21} parent=5 // pred_fallthru
        _
      %p159 = scmp.lt.s32.totalorder %s9, 3
      // Predicated region
      $region17: #{vqvae_forward.21} parent=5 // pred_check
        %p160 = pneg %p159
      $region18: #{vqvae_forward.21} parent=5 // pred_check_branch
        %162 = sbr.rel (%p160) target = $region20
      $region19: #{vqvae_forward.21} parent=5 // pred_region
        // Predicated region
        $region21: #{vqvae_forward.21} parent=19 // pred_check
          %p163 = pneg %p50
        $region22: #{vqvae_forward.21} parent=19 // pred_check_branch
          %165 = sbr.rel (%p163) target = $region24
        $region23: #{vqvae_forward.21} parent=19 // pred_region
          %s166 = sand.u32 %s40, 1
          %s167 = sand.u32 %s40, 1
          %s168 = smul.addr %s167, 48
          %s169 = scalar_lea.vmem [#allocation3], %s168
          %s170 = smul.u32 4, %s16
          %s171 = smul.u32 3, %s18
          %s172 = smul.addr %s170, 9
          %s173 = sadd.s32 %s171, %s172
          %s174 = smul.addr %s173, 4
          %s175 = scalar_lea.vmem %s0, %s174
          // Predicated region
          $region25: #{vqvae_forward.21} parent=23 // pred_check
            _
          $region26: #{vqvae_forward.21} parent=23 // pred_check_branch
            %177 = sbr.rel (0) target = $region28
          $region27: #{vqvae_forward.21} parent=23 // pred_region
            // Predicated region
            $region29: #{vqvae_forward.21} parent=27 // pred_check
              _
            $region30: #{vqvae_forward.21} parent=27 // pred_check_branch
              %179 = sbr.rel (0) target = $region32
            $region31: #{vqvae_forward.21} parent=27 // pred_region
              %s180 = scalar_lea.vmem %s175, 8
              %s181 = scalar_lea.vmem %s169, 8 [#allocation3]
              loop: start=0, step=1, limit=1
              $region33: #{vqvae_forward.21} parent=31 // loop_pre_header
                _
              $region34: #{vqvae_forward.21} parent=31 // loop_header
                %s183 = sphi 0, %s187
                %p184 = scmp.ge.s32.totalorder %s183, 1
                %s188 = sphi %s175, %s175
                %s189 = sphi %s169, %s169
              $region35: #{vqvae_forward.21} parent=31 // loop_header_branch
                %186 = sbr.rel (%p184) target = $region39
              $region36: #{vqvae_forward.21} parent=31 // loop_body
                %v190 = vld [vmem:[%s188] sm:$0xff]
                %191 = vst [vmem:[%s189] sm:$0xff] %v190
                %v192 = vld [vmem:[%s188 + $0x24] sm:$0xff]
                %193 = vst [vmem:[%s189 + $0xc] sm:$0xff] %v192
                %v194 = vld [vmem:[%s188 + $0x48] sm:$0xff]
                %195 = vst [vmem:[%s189 + $0x18] sm:$0xff] %v194
                %v196 = vld [vmem:[%s188 + $0x6c] sm:$0xff]
                %197 = vst [vmem:[%s189 + $0x24] sm:$0xff] %v196
              $region37: #{vqvae_forward.21} parent=31 // loop_footer
                %s187 = sadd.s32 1, %s183
              $region38: #{vqvae_forward.21} parent=31 // loop_footer_branch
                %182 = sbr.rel target = $region34
              $region39: #{vqvae_forward.21} parent=31 // loop_exit
                _
              %s199 = ssub.s32 16, 1
              loop: start=0, step=1, limit=1
              $region40: #{vqvae_forward.21} parent=31 // loop_pre_header
                _
              $region41: #{vqvae_forward.21} parent=31 // loop_header
                %s201 = sphi 0, %s205
                %p202 = scmp.ge.s32.totalorder %s201, 1
                %s206 = sphi %s180, %s180
                %s207 = sphi %s181, %s181
              $region42: #{vqvae_forward.21} parent=31 // loop_header_branch
                %204 = sbr.rel (%p202) target = $region46
              $region43: #{vqvae_forward.21} parent=31 // loop_body
                %v208 = vld [vmem:[%s206] sm:%s199]
                %209 = vst [vmem:[%s207] sm:%s199] %v208
                %v210 = vld [vmem:[%s206 + $0x24] sm:%s199]
                %211 = vst [vmem:[%s207 + $0xc] sm:%s199] %v210
                %v212 = vld [vmem:[%s206 + $0x48] sm:%s199]
                %213 = vst [vmem:[%s207 + $0x18] sm:%s199] %v212
                %v214 = vld [vmem:[%s206 + $0x6c] sm:%s199]
                %215 = vst [vmem:[%s207 + $0x24] sm:%s199] %v214
              $region44: #{vqvae_forward.21} parent=31 // loop_footer
                %s205 = sadd.s32 1, %s201
              $region45: #{vqvae_forward.21} parent=31 // loop_footer_branch
                %200 = sbr.rel target = $region41
              $region46: #{vqvae_forward.21} parent=31 // loop_exit
                _
            $region32: #{vqvae_forward.21} parent=27 // pred_fallthru
              _
          $region28: #{vqvae_forward.21} parent=23 // pred_fallthru
            _
          %216 = vnop
        $region24: #{vqvae_forward.21} parent=19 // pred_fallthru
          _
        // Predicated region
        $region47: #{vqvae_forward.21} parent=19 // pred_check
          %p217 = pneg %p78
        $region48: #{vqvae_forward.21} parent=19 // pred_check_branch
          %219 = sbr.rel (%p217) target = $region50
        $region49: #{vqvae_forward.21} parent=19 // pred_region
          %s220 = smul.u32 48, %s18
          %p221 = scmp.lt.s32.totalorder %s220, 143
          %s222 = scalar_select %p221, %s220, 143
          %p223 = scmp.lt.s32.totalorder %s17, 0
          %s224 = scalar_select %p223, %s17, 0
          %s225 = sadd.s32 %s224, %s222
          %s226 = smul.addr %s225, 4
          %s227 = scalar_lea.vmem %s1, %s226
          %s228 = smul.u32 48, %s18
        $region50: #{vqvae_forward.21} parent=19 // pred_fallthru
          _
      $region20: #{vqvae_forward.21} parent=5 // pred_fallthru
        _
      %p229 = scmp.le.s32.totalorder 1, %s9
      %p230 = scmp.lt.s32.totalorder %s9, 4
      %p231 = pnand %p229, %p230
      %p232 = pneg %p231
      // Predicated region
      $region51: #{vqvae_forward.21} parent=5 // pred_check
        _
      $region52: #{vqvae_forward.21} parent=5 // pred_check_branch
        %234 = sbr.rel (%p231) target = $region54
      $region53: #{vqvae_forward.21} parent=5 // pred_region
        %s235 = ssub.s32 %s9, 1
        %s236 = sand.u32 %s43, 1
        %s237 = sand.u32 %s43, 1
        %s238 = smul.addr %s237, 48
        %s239 = scalar_lea.vmem [#allocation3], %s238
        // Predicated region
        $region55: #{vqvae_forward.21} parent=53 // pred_check
          %p240 = pneg %p56
        $region56: #{vqvae_forward.21} parent=53 // pred_check_branch
          %242 = sbr.rel (%p240) target = $region58
        $region57: #{vqvae_forward.21} parent=53 // pred_region
          _
        $region58: #{vqvae_forward.21} parent=53 // pred_fallthru
          _
        %s243 = sand.u32 %s43, 1
        %s244 = sand.u32 %s43, 1
        %s245 = smul.addr %s244, 48
        %s246 = scalar_lea.vmem [#allocation3], %s245
        %p247 = pneg %p56
        %p248 = pneg %p53
        %s249 = smul.u32 48, %s21
        %p250 = scmp.lt.s32.totalorder %s249, 143
        %s251 = scalar_select %p250, %s249, 143
        %p252 = scmp.lt.s32.totalorder %s20, 0
        %s253 = scalar_select %p252, %s20, 0
        %s254 = sadd.s32 %s253, %s251
        %s255 = smul.addr %s254, 4
        %s256 = scalar_lea.vmem %s1, %s255
        %p257 = pneg %p84
        %p258 = pneg %p81
        %p259 = scmp.lt.s32.totalorder %s20, 0
        %s260 = scalar_select %p259, %s20, 0
        %s261 = scalar_lea.vmem %s2, %s260
        %p262 = pneg %p110
        %p263 = pneg %p107
        %p264 = pneg %p138
        %p265 = pneg %p135
        %s266 = smul.u32 4, %s19
        %p267 = scmp.lt.s32.totalorder %s266, 3
        %s268 = scalar_select %p267, %s266, 3
        %p269 = scmp.lt.s32.totalorder %s20, 0
        %s270 = scalar_select %p269, %s20, 0
        %s271 = sadd.s32 %s270, %s268
        %s272 = smul.addr %s271, 8
        %s273 = scalar_lea.vmem %s3, %s272
        %s274 = smul.u32 4, %s19
        %s275 = smul.u32 3, %s21
        %s276 = smul.u32 48, %s21
        %p277 = scmp.lt.s32.totalorder %s276, 143
        %s278 = scalar_select %p277, %s276, 143
        %p279 = scmp.lt.s32.totalorder %s20, 0
        %s280 = scalar_select %p279, %s20, 0
        %s281 = sadd.s32 %s280, %s278
        %s282 = smul.addr %s281, 4
        %s283 = scalar_lea.vmem %s1, %s282
        %s284 = smul.u32 48, %s21
        %p285 = scmp.lt.s32.totalorder %s20, 0
        %s286 = scalar_select %p285, %s20, 0
        %s287 = scalar_lea.vmem %s2, %s286
        %s288 = smul.u32 4, %s19
        %p289 = scmp.lt.s32.totalorder %s288, 3
        %s290 = scalar_select %p289, %s288, 3
        %p291 = scmp.lt.s32.totalorder %s20, 0
        %s292 = scalar_select %p291, %s20, 0
        %s293 = sadd.s32 %s292, %s290
        %s294 = smul.addr %s293, 8
        %s295 = scalar_lea.vmem %s3, %s294
        %s296 = smul.u32 4, %s19
        %p297 = scmp.eq.s32.totalorder %s21, 0
        // Predicated region
        $region59: #{vqvae_forward.21} parent=53 // pred_check
          %p298 = pneg %p297
        $region60: #{vqvae_forward.21} parent=53 // pred_check_branch
          %300 = sbr.rel (%p298) target = $region62
        $region61: #{vqvae_forward.21} parent=53 // pred_region
          %301 = vst [vmem:[#allocation2] sm:$0xff] 0.0
          %302 = vst [vmem:[#allocation2 + $0x8] sm:$0xff] 0.0
          %303 = vst [vmem:[#allocation2 + $0x10] sm:$0xff] 0.0
          %304 = vst [vmem:[#allocation2 + $0x18] sm:$0xff] 0.0
        $region62: #{vqvae_forward.21} parent=53 // pred_fallthru
          _
        %v305 = vld [vmem:[%s239] sm:$0xff]
        %v306 = vld [vmem:[%s239 + $0x8] sm:$0xf]
        %v307 = vld [vmem:[%s239 + $0xc] sm:$0xff]
        %v308 = vld [vmem:[%s239 + $0x14] sm:$0xf]
        %v309 = vld [vmem:[%s239 + $0x18] sm:$0xff]
        %v310 = vld [vmem:[%s239 + $0x20] sm:$0xf]
        %v311 = vld [vmem:[%s239 + $0x24] sm:$0xff]
        %v312 = vld [vmem:[%s239 + $0x2c] sm:$0xf]
        %v313 = vld [vmem:[#allocation2] sm:$0xff]
        %v314 = vld [vmem:[#allocation2 + $0x8] sm:$0xff]
        %v315 = vld [vmem:[#allocation2 + $0x10] sm:$0xff]
        %v316 = vld [vmem:[#allocation2 + $0x18] sm:$0xff]
        %v317 = vld [vmem:[%s283] sm:$0xf]
        %v318 = vld [vmem:[%s283 + $0x4] sm:$0xf]
        %v319 = vld [vmem:[%s283 + $0x8] sm:$0xf]
        %v320 = vld [vmem:[%s283 + $0xc] sm:$0xf]
        %v321 = vld [vmem:[%s283 + $0x10] sm:$0xf]
        %v322 = vld [vmem:[%s283 + $0x14] sm:$0xf]
        %v323 = vld [vmem:[%s283 + $0x18] sm:$0xf]
        %v324 = vld [vmem:[%s283 + $0x1c] sm:$0xf]
        %v325 = vld [vmem:[%s283 + $0x20] sm:$0xf]
        %v326 = vld [vmem:[%s283 + $0x24] sm:$0xf]
        %v327 = vld [vmem:[%s283 + $0x28] sm:$0xf]
        %v328 = vld [vmem:[%s283 + $0x2c] sm:$0xf]
        %v329 = vld [vmem:[%s283 + $0x30] sm:$0xf]
        %v330 = vld [vmem:[%s283 + $0x34] sm:$0xf]
        %v331 = vld [vmem:[%s283 + $0x38] sm:$0xf]
        %v332 = vld [vmem:[%s283 + $0x3c] sm:$0xf]
        %v333 = vld [vmem:[%s283 + $0x40] sm:$0xf]
        %v334 = vld [vmem:[%s283 + $0x44] sm:$0xf]
        %v335 = vld [vmem:[%s283 + $0x48] sm:$0xf]
        %v336 = vld [vmem:[%s283 + $0x4c] sm:$0xf]
        %v337 = vld [vmem:[%s283 + $0x50] sm:$0xf]
        %v338 = vld [vmem:[%s283 + $0x54] sm:$0xf]
        %v339 = vld [vmem:[%s283 + $0x58] sm:$0xf]
        %v340 = vld [vmem:[%s283 + $0x5c] sm:$0xf]
        %v341 = vld [vmem:[%s283 + $0x60] sm:$0xf]
        %v342 = vld [vmem:[%s283 + $0x64] sm:$0xf]
        %v343 = vld [vmem:[%s283 + $0x68] sm:$0xf]
        %v344 = vld [vmem:[%s283 + $0x6c] sm:$0xf]
        %v345 = vld [vmem:[%s283 + $0x70] sm:$0xf]
        %v346 = vld [vmem:[%s283 + $0x74] sm:$0xf]
        %v347 = vld [vmem:[%s283 + $0x78] sm:$0xf]
        %v348 = vld [vmem:[%s283 + $0x7c] sm:$0xf]
        %v349 = vld [vmem:[%s283 + $0x80] sm:$0xf]
        %v350 = vld [vmem:[%s283 + $0x84] sm:$0xf]
        %v351 = vld [vmem:[%s283 + $0x88] sm:$0xf]
        %v352 = vld [vmem:[%s283 + $0x8c] sm:$0xf]
        %v353 = vld [vmem:[%s283 + $0x90] sm:$0xf]
        %v354 = vld [vmem:[%s283 + $0x94] sm:$0xf]
        %v355 = vld [vmem:[%s283 + $0x98] sm:$0xf]
        %v356 = vld [vmem:[%s283 + $0x9c] sm:$0xf]
        %v357 = vld [vmem:[%s283 + $0xa0] sm:$0xf]
        %v358 = vld [vmem:[%s283 + $0xa4] sm:$0xf]
        %v359 = vld [vmem:[%s283 + $0xa8] sm:$0xf]
        %v360 = vld [vmem:[%s283 + $0xac] sm:$0xf]
        %v361 = vld [vmem:[%s283 + $0xb0] sm:$0xf]
        %v362 = vld [vmem:[%s283 + $0xb4] sm:$0xf]
        %v363 = vld [vmem:[%s283 + $0xb8] sm:$0xf]
        %v364 = vld [vmem:[%s283 + $0xbc] sm:$0xf]
        %v373 = vunpack.c.l.b16 %v305
        %v374 = vunpack.c.h.b16 %v305
        %v375 = vunpack.c.l.b16 %v306
        %v376 = vunpack.c.l.b16 %v307
        %v377 = vunpack.c.h.b16 %v307
        %v378 = vunpack.c.l.b16 %v308
        %v379 = vunpack.c.l.b16 %v309
        %v380 = vunpack.c.h.b16 %v309
        %v381 = vunpack.c.l.b16 %v310
        %v382 = vunpack.c.l.b16 %v311
        %v383 = vunpack.c.h.b16 %v311
        %v384 = vunpack.c.l.b16 %v312
        %v385 = vpack.c.b16 %v376, %v373
        %v386 = vpack.c.b16 %v377, %v374
        %v387 = vpack.c.b16 %v378, %v375
        %v388 = vpack.c.b16 %v382, %v379
        %v389 = vpack.c.b16 %v383, %v380
        %v390 = vpack.c.b16 %v384, %v381
        %v445 = vunpack.c.l.b16 %v317
        %v446 = vunpack.c.l.b16 %v318
        %v447 = vunpack.c.l.b16 %v319
        %v448 = vunpack.c.l.b16 %v320
        %v449 = vunpack.c.l.b16 %v321
        %v450 = vunpack.c.l.b16 %v322
        %v451 = vunpack.c.l.b16 %v323
        %v452 = vunpack.c.l.b16 %v324
        %v453 = vunpack.c.l.b16 %v325
        %v454 = vunpack.c.l.b16 %v326
        %v455 = vunpack.c.l.b16 %v327
        %v456 = vunpack.c.l.b16 %v328
        %v457 = vunpack.c.l.b16 %v329
        %v458 = vunpack.c.l.b16 %v330
        %v459 = vunpack.c.l.b16 %v331
        %v460 = vunpack.c.l.b16 %v332
        %v461 = vunpack.c.l.b16 %v333
        %v462 = vunpack.c.l.b16 %v334
        %v463 = vunpack.c.l.b16 %v335
        %v464 = vunpack.c.l.b16 %v336
        %v465 = vunpack.c.l.b16 %v337
        %v466 = vunpack.c.l.b16 %v338
        %v467 = vunpack.c.l.b16 %v339
        %v468 = vunpack.c.l.b16 %v340
        %v469 = vunpack.c.l.b16 %v341
        %v470 = vunpack.c.l.b16 %v342
        %v471 = vunpack.c.l.b16 %v343
        %v472 = vunpack.c.l.b16 %v344
        %v473 = vunpack.c.l.b16 %v345
        %v474 = vunpack.c.l.b16 %v346
        %v475 = vunpack.c.l.b16 %v347
        %v476 = vunpack.c.l.b16 %v348
        %v477 = vunpack.c.l.b16 %v349
        %v478 = vunpack.c.l.b16 %v350
        %v479 = vunpack.c.l.b16 %v351
        %v480 = vunpack.c.l.b16 %v352
        %v481 = vunpack.c.l.b16 %v353
        %v482 = vunpack.c.l.b16 %v354
        %v483 = vunpack.c.l.b16 %v355
        %v484 = vunpack.c.l.b16 %v356
        %v485 = vunpack.c.l.b16 %v357
        %v486 = vunpack.c.l.b16 %v358
        %v487 = vunpack.c.l.b16 %v359
        %v488 = vunpack.c.l.b16 %v360
        %v489 = vunpack.c.l.b16 %v361
        %v490 = vunpack.c.l.b16 %v362
        %v491 = vunpack.c.l.b16 %v363
        %v492 = vunpack.c.l.b16 %v364
        %v493 = vpack.c.b16 %v446, %v445
        %v494 = vpack.c.b16 %v448, %v447
        %v495 = vpack.c.b16 %v450, %v449
        %v496 = vpack.c.b16 %v452, %v451
        %v497 = vpack.c.b16 %v454, %v453
        %v498 = vpack.c.b16 %v456, %v455
        %v499 = vpack.c.b16 %v458, %v457
        %v500 = vpack.c.b16 %v460, %v459
        %v501 = vpack.c.b16 %v462, %v461
        %v502 = vpack.c.b16 %v464, %v463
        %v503 = vpack.c.b16 %v466, %v465
        %v504 = vpack.c.b16 %v468, %v467
        %v505 = vpack.c.b16 %v470, %v469
        %v506 = vpack.c.b16 %v472, %v471
        %v507 = vpack.c.b16 %v474, %v473
        %v508 = vpack.c.b16 %v476, %v475
        %v509 = vpack.c.b16 %v478, %v477
        %v510 = vpack.c.b16 %v480, %v479
        %v511 = vpack.c.b16 %v482, %v481
        %v512 = vpack.c.b16 %v484, %v483
        %v513 = vpack.c.b16 %v486, %v485
        %v514 = vpack.c.b16 %v488, %v487
        %v515 = vpack.c.b16 %v490, %v489
        %v516 = vpack.c.b16 %v492, %v491
        %541 = vmatpush.bf16.msra.mxu0 %v500
        %542 = vmatpush.bf16.msra.mxu0 %v499
        %543 = vmatpush.bf16.msra.mxu0 %v498
        %544 = vmatpush.bf16.msra.mxu0 %v497
        %545 = vmatpush.bf16.msra.mxu0 %v496
        %546 = vmatpush.bf16.msra.mxu0 %v495
        %547 = vmatpush.bf16.msra.mxu0 %v494
        %548 = vmatpush.bf16.msra.mxu0 %v493
        %549 = vmatmul.bf16.gmra.mxu0 %v385
        %v550 = vpop.f32.mrf.mxu0
        %v551 = vadd.f32 0.0, %v550
        %v552 = vpop.f32.mrf.mxu0
        %v553 = vadd.f32 0.0, %v552
        %554 = vmatmul.bf16.gmra.mxu0 %v388
        %v555 = vpop.f32.mrf.mxu0
        %v556 = vadd.f32 0.0, %v555
        %v557 = vpop.f32.mrf.mxu0
        %v558 = vadd.f32 0.0, %v557
        %559 = vdwg.mxu0
        %560 = vmatpush.bf16.msra.mxu0 %v508
        %561 = vmatpush.bf16.msra.mxu0 %v507
        %562 = vmatpush.bf16.msra.mxu0 %v506
        %563 = vmatpush.bf16.msra.mxu0 %v505
        %564 = vmatpush.bf16.msra.mxu0 %v504
        %565 = vmatpush.bf16.msra.mxu0 %v503
        %566 = vmatpush.bf16.msra.mxu0 %v502
        %567 = vmatpush.bf16.msra.mxu0 %v501
        %568 = vmatmul.bf16.gmra.mxu0 %v386
        %v569 = vpop.f32.mrf.mxu0
        %v570 = vadd.f32 %v551, %v569
        %v571 = vpop.f32.mrf.mxu0
        %v572 = vadd.f32 %v553, %v571
        %573 = vmatmul.bf16.gmra.mxu0 %v389
        %v574 = vpop.f32.mrf.mxu0
        %v575 = vadd.f32 %v556, %v574
        %v576 = vpop.f32.mrf.mxu0
        %v577 = vadd.f32 %v558, %v576
        %578 = vdwg.mxu0
        %579 = vmatpush.bf16.msra.mxu0 %v516
        %580 = vmatpush.bf16.msra.mxu0 %v515
        %581 = vmatpush.bf16.msra.mxu0 %v514
        %582 = vmatpush.bf16.msra.mxu0 %v513
        %583 = vmatpush.bf16.msra.mxu0 %v512
        %584 = vmatpush.bf16.msra.mxu0 %v511
        %585 = vmatpush.bf16.msra.mxu0 %v510
        %586 = vmatpush.bf16.msra.mxu0 %v509
        %587 = vmatmul.bf16.gmra.mxu0 %v387
        %v588 = vpop.f32.mrf.mxu0
        %v589 = vadd.f32 %v570, %v588
        %v590 = vpop.f32.mrf.mxu0
        %v591 = vadd.f32 %v572, %v590
        %592 = vmatmul.bf16.gmra.mxu0 %v390
        %v593 = vpop.f32.mrf.mxu0
        %v594 = vadd.f32 %v575, %v593
        %v595 = vpop.f32.mrf.mxu0
        %v596 = vadd.f32 %v577, %v595
        %597 = vdwg.mxu0
        %v598 = vadd.f32 %v313, %v589
        %v599 = vadd.f32 %v314, %v591
        %v600 = vadd.f32 %v315, %v594
        %v601 = vadd.f32 %v316, %v596
        %602 = vst [vmem:[#allocation2] sm:$0xff] %v598
        %603 = vst [vmem:[#allocation2 + $0x8] sm:$0xff] %v599
        %604 = vst [vmem:[#allocation2 + $0x10] sm:$0xff] %v600
        %605 = vst [vmem:[#allocation2 + $0x18] sm:$0xff] %v601
        %p606 = scmp.eq.s32.totalorder %s21, 2
        // Predicated region
        $region63: #{vqvae_forward.21} parent=53 // pred_check
          %p607 = pneg %p606
        $region64: #{vqvae_forward.21} parent=53 // pred_check_branch
          %609 = sbr.rel (%p607) target = $region66
        $region65: #{vqvae_forward.21} parent=53 // pred_region
          %v610 = vld [vmem:[#allocation2] sm:$0xff]
          %v611 = vld [vmem:[#allocation2 + $0x8] sm:$0xff]
          %v612 = vld [vmem:[#allocation2 + $0x10] sm:$0xff]
          %v613 = vld [vmem:[#allocation2 + $0x18] sm:$0xff]
          %v614 = vld [vmem:[%s287] sm:$0x1]
          %v616 = vperm.slane %v614, 0
          %v618 = vadd.f32 %v610, %v616
          %v619 = vadd.f32 %v611, %v616
          %v620 = vadd.f32 %v612, %v616
          %v621 = vadd.f32 %v613, %v616
          %622 = vst [vmem:[%s295] sm:$0xff] %v618
          %623 = vst [vmem:[%s295 + $0x8] sm:$0xff] %v619
          %624 = vst [vmem:[%s295 + $0x10] sm:$0xff] %v620
          %625 = vst [vmem:[%s295 + $0x18] sm:$0xff] %v621
        $region66: #{vqvae_forward.21} parent=53 // pred_fallthru
          _
        %s626 = smul.u32 4, %s19
        %p627 = scmp.lt.s32.totalorder %s626, 3
        %s628 = scalar_select %p627, %s626, 3
        %p629 = scmp.lt.s32.totalorder %s20, 0
        %s630 = scalar_select %p629, %s20, 0
        %s631 = sadd.s32 %s630, %s628
        %s632 = smul.addr %s631, 8
        %s633 = scalar_lea.vmem %s3, %s632
        // Predicated region
        $region67: #{vqvae_forward.21} parent=53 // pred_check
          %p634 = pneg %p135
        $region68: #{vqvae_forward.21} parent=53 // pred_check_branch
          %636 = sbr.rel (%p634) target = $region70
        $region69: #{vqvae_forward.21} parent=53 // pred_region
          %s637 = smul.u32 4, %s19
        $region70: #{vqvae_forward.21} parent=53 // pred_fallthru
          _
        // Predicated region
        $region71: #{vqvae_forward.21} parent=53 // pred_check
          %p638 = pneg %p135
        $region72: #{vqvae_forward.21} parent=53 // pred_check_branch
          %640 = sbr.rel (%p638) target = $region74
        $region73: #{vqvae_forward.21} parent=53 // pred_region
          %s641 = smul.u32 4, %s19
          %p642 = scmp.lt.s32.totalorder %s641, 3
          %s643 = scalar_select %p642, %s641, 3
          %p644 = scmp.lt.s32.totalorder %s20, 0
          %s645 = scalar_select %p644, %s20, 0
          %s646 = sadd.s32 %s645, %s643
          %s647 = smul.addr %s646, 8
          %s648 = scalar_lea.vmem %s3, %s647
        $region74: #{vqvae_forward.21} parent=53 // pred_fallthru
          _
      $region54: #{vqvae_forward.21} parent=5 // pred_fallthru
        _
      %p649 = scmp.le.s32.totalorder 2, %s9
      // Predicated region
      $region75: #{vqvae_forward.21} parent=5 // pred_check
        %p650 = pneg %p649
      $region76: #{vqvae_forward.21} parent=5 // pred_check_branch
        %652 = sbr.rel (%p650) target = $region78
      $region77: #{vqvae_forward.21} parent=5 // pred_region
        %s653 = ssub.s32 %s9, 2
      $region78: #{vqvae_forward.21} parent=5 // pred_fallthru
        _
    $region6: #{vqvae_forward.21} parent=1 // loop_footer
      %s13 = sadd.s32 1, %s9
    $region7: #{vqvae_forward.21} parent=1 // loop_footer_branch
      %8 = sbr.rel target = $region3
    $region8: #{vqvae_forward.21} parent=1 // loop_exit
      _

// kernel: vqvae_forward.22
$region0: #{vqvae_forward.22}
  #allocation0 [shape = 'u32[]', space=smem, size = 0x4, offset = 0x4, fixed_abs, tag = 'smem constant byte address 0x4 - core index']
  #allocation1 [shape = 'u32[72,128]{1,0:T(1,128)}', space=vmem, size = 0x9000, scoped, tag = 'internal scratch']
  #allocation2 [shape = 'f32[32,128]{1,0:T(8,128)}', space=vmem, size = 0x4000, scoped, tag = 'scratch operand']
  %s0 = inlined_call_operand.vmem [shape: bf16[32,1152], index: 0, kind: input, shape index: {}]
  %s1 = inlined_call_operand.vmem [shape: bf16[1152,128], index: 1, kind: input, shape index: {}]
  %s2 = inlined_call_operand.vmem [shape: f32[1,128], index: 2, kind: input, shape index: {}]
  %s3 = inlined_call_operand.vmem [shape: f32[32,128], index: 3, kind: output, shape index: {}]
  %s4 = sld [smem:[#allocation0]]
  $region79: #{vqvae_forward.22} parent=0
    _
  %s6 = ssub.s32 1, %s4
  %s7 = scalar_select 0, %s6, %s4
  $region1: #{vqvae_forward.22} parent=0
    #allocation3 [shape = 'u8[49152]{0}', space=vmem, size = 0xc000, scoped, tag = 'input window, operand 0']
    loop: start=0, step=1, limit=5
    $region2: #{vqvae_forward.22} parent=1 // loop_pre_header
      _
    $region3: #{vqvae_forward.22} parent=1 // loop_header
      %s9 = sphi 0, %s13
      %p10 = scmp.ge.s32.totalorder %s9, 5
      %s16 = sphi 0, %s35
      %s17 = sphi 0, %s31
      %s18 = sphi 0, %s27
      %s19 = sphi 0, %s16
      %s20 = sphi 0, %s17
      %s21 = sphi 0, %s18
      %s22 = sphi 0, %s19
      %s23 = sphi 0, %s20
      %s24 = sphi 0, %s21
      %s40 = sphi 0, %s42
      %s43 = sphi 0, %s40
      %s44 = sphi 0, %s43
      %s60 = sphi 0, %s44
      %s68 = sphi 0, %s70
      %s71 = sphi 0, %s68
      %s72 = sphi 0, %s71
      %s88 = sphi 0, %s72
      %s94 = sphi 0, %s96
      %s97 = sphi 0, %s94
      %s98 = sphi 0, %s97
      %s114 = sphi 0, %s98
      %s122 = sphi 0, %s124
      %s125 = sphi 0, %s122
      %s126 = sphi 0, %s125
      %s142 = sphi 0, %s126
    $region4: #{vqvae_forward.22} parent=1 // loop_header_branch
      %12 = sbr.rel (%p10) target = $region8
    $region5: #{vqvae_forward.22} parent=1 // loop_body
      %s14 = ssub.s32 %s9, 1
      %s15 = ssub.s32 %s9, 2
      %s25 = sadd.s32 1, %s18
      %p26 = scmp.ge.s32.totalorder %s25, 3
      %s27 = scalar_select %p26, 0, %s25
      %s28 = sadd.s32 1, %s17
      %s29 = scalar_select %p26, %s28, %s17
      %p30 = scmp.ge.s32.totalorder %s29, 1
      %s31 = scalar_select %p30, 0, %s29
      %s32 = sadd.s32 1, %s16
      %s33 = scalar_select %p30, %s32, %s16
      %p34 = scmp.ge.s32.totalorder %s33, 1
      %s35 = scalar_select %p34, 0, %s33
      %s36 = ssub.s32 %s16, %s35
      %s37 = ssub.s32 %s18, %s27
      %s38 = sor.u32 %s36, %s37
      %p39 = scmp.eq.s32.totalorder %s38, 0
      %s41 = sadd.s32 %s40, 1
      %s42 = scalar_select %p39, %s40, %s41
      %p45 = pneg %p39
      %p46 = scmp.eq.s32.totalorder %s9, 2
      %p47 = por %p45, %p46
      %p48 = scmp.ne.s32.totalorder %s40, %s43
      %p49 = scmp.eq.s32.totalorder %s9, 0
      %p50 = por %p48, %p49
      %p51 = scmp.ne.s32.totalorder %s40, %s43
      %p52 = scmp.eq.s32.totalorder %s14, 2
      %p53 = por %p51, %p52
      %p54 = scmp.ne.s32.totalorder %s43, %s44
      %p55 = scmp.eq.s32.totalorder %s14, 0
      %p56 = por %p54, %p55
      %p57 = scmp.ne.s32.totalorder %s43, %s44
      %p58 = scmp.eq.s32.totalorder %s15, 2
      %p59 = por %p57, %p58
      %p61 = scmp.ne.s32.totalorder %s44, %s60
      %p62 = scmp.eq.s32.totalorder %s15, 0
      %p63 = por %p61, %p62
      %s64 = ssub.s32 %s18, %s27
      %s65 = ssub.s32 %s17, %s31
      %s66 = sor.u32 %s64, %s65
      %p67 = scmp.eq.s32.totalorder %s66, 0
      %s69 = sadd.s32 %s68, 1
      %s70 = scalar_select %p67, %s68, %s69
      %p73 = pneg %p67
      %p74 = scmp.eq.s32.totalorder %s9, 2
      %p75 = por %p73, %p74
      %p76 = scmp.ne.s32.totalorder %s68, %s71
      %p77 = scmp.eq.s32.totalorder %s9, 0
      %p78 = por %p76, %p77
      %p79 = scmp.ne.s32.totalorder %s68, %s71
      %p80 = scmp.eq.s32.totalorder %s14, 2
      %p81 = por %p79, %p80
      %p82 = scmp.ne.s32.totalorder %s71, %s72
      %p83 = scmp.eq.s32.totalorder %s14, 0
      %p84 = por %p82, %p83
      %p85 = scmp.ne.s32.totalorder %s71, %s72
      %p86 = scmp.eq.s32.totalorder %s15, 2
      %p87 = por %p85, %p86
      %p89 = scmp.ne.s32.totalorder %s72, %s88
      %p90 = scmp.eq.s32.totalorder %s15, 0
      %p91 = por %p89, %p90
      %s92 = ssub.s32 %s17, %s31
      %p93 = scmp.eq.s32.totalorder %s92, 0
      %s95 = sadd.s32 %s94, 1
      %s96 = scalar_select %p93, %s94, %s95
      %p99 = pneg %p93
      %p100 = scmp.eq.s32.totalorder %s9, 2
      %p101 = por %p99, %p100
      %p102 = scmp.ne.s32.totalorder %s94, %s97
      %p103 = scmp.eq.s32.totalorder %s9, 0
      %p104 = por %p102, %p103
      %p105 = scmp.ne.s32.totalorder %s94, %s97
      %p106 = scmp.eq.s32.totalorder %s14, 2
      %p107 = por %p105, %p106
      %p108 = scmp.ne.s32.totalorder %s97, %s98
      %p109 = scmp.eq.s32.totalorder %s14, 0
      %p110 = por %p108, %p109
      %p111 = scmp.ne.s32.totalorder %s97, %s98
      %p112 = scmp.eq.s32.totalorder %s15, 2
      %p113 = por %p111, %p112
      %p115 = scmp.ne.s32.totalorder %s98, %s114
      %p116 = scmp.eq.s32.totalorder %s15, 0
      %p117 = por %p115, %p116
      %s118 = ssub.s32 %s16, %s35
      %s119 = ssub.s32 %s17, %s31
      %s120 = sor.u32 %s118, %s119
      %p121 = scmp.eq.s32.totalorder %s120, 0
      %s123 = sadd.s32 %s122, 1
      %s124 = scalar_select %p121, %s122, %s123
      %p127 = pneg %p121
      %p128 = scmp.eq.s32.totalorder %s9, 2
      %p129 = por %p127, %p128
      %p130 = scmp.ne.s32.totalorder %s122, %s125
      %p131 = scmp.eq.s32.totalorder %s9, 0
      %p132 = por %p130, %p131
      %p133 = scmp.ne.s32.totalorder %s122, %s125
      %p134 = scmp.eq.s32.totalorder %s14, 2
      %p135 = por %p133, %p134
      %p136 = scmp.ne.s32.totalorder %s125, %s126
      %p137 = scmp.eq.s32.totalorder %s14, 0
      %p138 = por %p136, %p137
      %p139 = scmp.ne.s32.totalorder %s125, %s126
      %p140 = scmp.eq.s32.totalorder %s15, 2
      %p141 = por %p139, %p140
      %p143 = scmp.ne.s32.totalorder %s126, %s142
      %p144 = scmp.eq.s32.totalorder %s15, 0
      %p145 = por %p143, %p144
      %p146 = scmp.le.s32.totalorder 1, %s9
      %p147 = scmp.lt.s32.totalorder %s9, 4
      %p148 = pnand %p146, %p147
      %p149 = pneg %p148
      // Predicated region
      $region9: #{vqvae_forward.22} parent=5 // pred_check
        _
      $region10: #{vqvae_forward.22} parent=5 // pred_check_branch
        %151 = sbr.rel (%p148) target = $region12
      $region11: #{vqvae_forward.22} parent=5 // pred_region
        %s152 = ssub.s32 %s9, 1
        // Predicated region
        $region13: #{vqvae_forward.22} parent=11 // pred_check
          %p153 = pneg %p110
        $region14: #{vqvae_forward.22} parent=11 // pred_check_branch
          %155 = sbr.rel (%p153) target = $region16
        $region15: #{vqvae_forward.22} parent=11 // pred_region
          %p156 = scmp.lt.s32.totalorder %s20, 0
          %s157 = scalar_select %p156, %s20, 0
          %s158 = scalar_lea.vmem %s2, %s157
        $region16: #{vqvae_forward.22} parent=11 // pred_fallthru
          _
      $region12: #{vqvae_forward.22} parent=5 // pred_fallthru
        _
      %p159 = scmp.lt.s32.totalorder %s9, 3
      // Predicated region
      $region17: #{vqvae_forward.22} parent=5 // pred_check
        %p160 = pneg %p159
      $region18: #{vqvae_forward.22} parent=5 // pred_check_branch
        %162 = sbr.rel (%p160) target = $region20
      $region19: #{vqvae_forward.22} parent=5 // pred_region
        // Predicated region
        $region21: #{vqvae_forward.22} parent=19 // pred_check
          %p163 = pneg %p50
        $region22: #{vqvae_forward.22} parent=19 // pred_check_branch
          %165 = sbr.rel (%p163) target = $region24
        $region23: #{vqvae_forward.22} parent=19 // pred_region
          %s166 = sand.u32 %s40, 1
          %s167 = sand.u32 %s40, 1
          %s168 = smul.addr %s167, 48
          %s169 = scalar_lea.vmem [#allocation3], %s168
          %s170 = smul.u32 4, %s16
          %s171 = smul.u32 3, %s18
          %s172 = smul.addr %s170, 9
          %s173 = sadd.s32 %s171, %s172
          %s174 = smul.addr %s173, 4
          %s175 = scalar_lea.vmem %s0, %s174
          // Predicated region
          $region25: #{vqvae_forward.22} parent=23 // pred_check
            _
          $region26: #{vqvae_forward.22} parent=23 // pred_check_branch
            %177 = sbr.rel (0) target = $region28
          $region27: #{vqvae_forward.22} parent=23 // pred_region
            // Predicated region
            $region29: #{vqvae_forward.22} parent=27 // pred_check
              _
            $region30: #{vqvae_forward.22} parent=27 // pred_check_branch
              %179 = sbr.rel (0) target = $region32
            $region31: #{vqvae_forward.22} parent=27 // pred_region
              %s180 = scalar_lea.vmem %s175, 8
              %s181 = scalar_lea.vmem %s169, 8 [#allocation3]
              loop: start=0, step=1, limit=1
              $region33: #{vqvae_forward.22} parent=31 // loop_pre_header
                _
              $region34: #{vqvae_forward.22} parent=31 // loop_header
                %s183 = sphi 0, %s187
                %p184 = scmp.ge.s32.totalorder %s183, 1
                %s188 = sphi %s175, %s175
                %s189 = sphi %s169, %s169
              $region35: #{vqvae_forward.22} parent=31 // loop_header_branch
                %186 = sbr.rel (%p184) target = $region39
              $region36: #{vqvae_forward.22} parent=31 // loop_body
                %v190 = vld [vmem:[%s188] sm:$0xff]
                %191 = vst [vmem:[%s189] sm:$0xff] %v190
                %v192 = vld [vmem:[%s188 + $0x24] sm:$0xff]
                %193 = vst [vmem:[%s189 + $0xc] sm:$0xff] %v192
                %v194 = vld [vmem:[%s188 + $0x48] sm:$0xff]
                %195 = vst [vmem:[%s189 + $0x18] sm:$0xff] %v194
                %v196 = vld [vmem:[%s188 + $0x6c] sm:$0xff]
                %197 = vst [vmem:[%s189 + $0x24] sm:$0xff] %v196
              $region37: #{vqvae_forward.22} parent=31 // loop_footer
                %s187 = sadd.s32 1, %s183
              $region38: #{vqvae_forward.22} parent=31 // loop_footer_branch
                %182 = sbr.rel target = $region34
              $region39: #{vqvae_forward.22} parent=31 // loop_exit
                _
              %s199 = ssub.s32 16, 1
              loop: start=0, step=1, limit=1
              $region40: #{vqvae_forward.22} parent=31 // loop_pre_header
                _
              $region41: #{vqvae_forward.22} parent=31 // loop_header
                %s201 = sphi 0, %s205
                %p202 = scmp.ge.s32.totalorder %s201, 1
                %s206 = sphi %s180, %s180
                %s207 = sphi %s181, %s181
              $region42: #{vqvae_forward.22} parent=31 // loop_header_branch
                %204 = sbr.rel (%p202) target = $region46
              $region43: #{vqvae_forward.22} parent=31 // loop_body
                %v208 = vld [vmem:[%s206] sm:%s199]
                %209 = vst [vmem:[%s207] sm:%s199] %v208
                %v210 = vld [vmem:[%s206 + $0x24] sm:%s199]
                %211 = vst [vmem:[%s207 + $0xc] sm:%s199] %v210
                %v212 = vld [vmem:[%s206 + $0x48] sm:%s199]
                %213 = vst [vmem:[%s207 + $0x18] sm:%s199] %v212
                %v214 = vld [vmem:[%s206 + $0x6c] sm:%s199]
                %215 = vst [vmem:[%s207 + $0x24] sm:%s199] %v214
              $region44: #{vqvae_forward.22} parent=31 // loop_footer
                %s205 = sadd.s32 1, %s201
              $region45: #{vqvae_forward.22} parent=31 // loop_footer_branch
                %200 = sbr.rel target = $region41
              $region46: #{vqvae_forward.22} parent=31 // loop_exit
                _
            $region32: #{vqvae_forward.22} parent=27 // pred_fallthru
              _
          $region28: #{vqvae_forward.22} parent=23 // pred_fallthru
            _
          %216 = vnop
        $region24: #{vqvae_forward.22} parent=19 // pred_fallthru
          _
        // Predicated region
        $region47: #{vqvae_forward.22} parent=19 // pred_check
          %p217 = pneg %p78
        $region48: #{vqvae_forward.22} parent=19 // pred_check_branch
          %219 = sbr.rel (%p217) target = $region50
        $region49: #{vqvae_forward.22} parent=19 // pred_region
          %s220 = smul.u32 48, %s18
          %p221 = scmp.lt.s32.totalorder %s220, 143
          %s222 = scalar_select %p221, %s220, 143
          %p223 = scmp.lt.s32.totalorder %s17, 0
          %s224 = scalar_select %p223, %s17, 0
          %s225 = sadd.s32 %s224, %s222
          %s226 = smul.addr %s225, 4
          %s227 = scalar_lea.vmem %s1, %s226
          %s228 = smul.u32 48, %s18
        $region50: #{vqvae_forward.22} parent=19 // pred_fallthru
          _
      $region20: #{vqvae_forward.22} parent=5 // pred_fallthru
        _
      %p229 = scmp.le.s32.totalorder 1, %s9
      %p230 = scmp.lt.s32.totalorder %s9, 4
      %p231 = pnand %p229, %p230
      %p232 = pneg %p231
      // Predicated region
      $region51: #{vqvae_forward.22} parent=5 // pred_check
        _
      $region52: #{vqvae_forward.22} parent=5 // pred_check_branch
        %234 = sbr.rel (%p231) target = $region54
      $region53: #{vqvae_forward.22} parent=5 // pred_region
        %s235 = ssub.s32 %s9, 1
        %s236 = sand.u32 %s43, 1
        %s237 = sand.u32 %s43, 1
        %s238 = smul.addr %s237, 48
        %s239 = scalar_lea.vmem [#allocation3], %s238
        // Predicated region
        $region55: #{vqvae_forward.22} parent=53 // pred_check
          %p240 = pneg %p56
        $region56: #{vqvae_forward.22} parent=53 // pred_check_branch
          %242 = sbr.rel (%p240) target = $region58
        $region57: #{vqvae_forward.22} parent=53 // pred_region
          _
        $region58: #{vqvae_forward.22} parent=53 // pred_fallthru
          _
        %s243 = sand.u32 %s43, 1
        %s244 = sand.u32 %s43, 1
        %s245 = smul.addr %s244, 48
        %s246 = scalar_lea.vmem [#allocation3], %s245
        %p247 = pneg %p56
        %p248 = pneg %p53
        %s249 = smul.u32 48, %s21
        %p250 = scmp.lt.s32.totalorder %s249, 143
        %s251 = scalar_select %p250, %s249, 143
        %p252 = scmp.lt.s32.totalorder %s20, 0
        %s253 = scalar_select %p252, %s20, 0
        %s254 = sadd.s32 %s253, %s251
        %s255 = smul.addr %s254, 4
        %s256 = scalar_lea.vmem %s1, %s255
        %p257 = pneg %p84
        %p258 = pneg %p81
        %p259 = scmp.lt.s32.totalorder %s20, 0
        %s260 = scalar_select %p259, %s20, 0
        %s261 = scalar_lea.vmem %s2, %s260
        %p262 = pneg %p110
        %p263 = pneg %p107
        %p264 = pneg %p138
        %p265 = pneg %p135
        %s266 = smul.u32 4, %s19
        %p267 = scmp.lt.s32.totalorder %s266, 3
        %s268 = scalar_select %p267, %s266, 3
        %p269 = scmp.lt.s32.totalorder %s20, 0
        %s270 = scalar_select %p269, %s20, 0
        %s271 = sadd.s32 %s270, %s268
        %s272 = smul.addr %s271, 8
        %s273 = scalar_lea.vmem %s3, %s272
        %s274 = smul.u32 4, %s19
        %s275 = smul.u32 3, %s21
        %s276 = smul.u32 48, %s21
        %p277 = scmp.lt.s32.totalorder %s276, 143
        %s278 = scalar_select %p277, %s276, 143
        %p279 = scmp.lt.s32.totalorder %s20, 0
        %s280 = scalar_select %p279, %s20, 0
        %s281 = sadd.s32 %s280, %s278
        %s282 = smul.addr %s281, 4
        %s283 = scalar_lea.vmem %s1, %s282
        %s284 = smul.u32 48, %s21
        %p285 = scmp.lt.s32.totalorder %s20, 0
        %s286 = scalar_select %p285, %s20, 0
        %s287 = scalar_lea.vmem %s2, %s286
        %s288 = smul.u32 4, %s19
        %p289 = scmp.lt.s32.totalorder %s288, 3
        %s290 = scalar_select %p289, %s288, 3
        %p291 = scmp.lt.s32.totalorder %s20, 0
        %s292 = scalar_select %p291, %s20, 0
        %s293 = sadd.s32 %s292, %s290
        %s294 = smul.addr %s293, 8
        %s295 = scalar_lea.vmem %s3, %s294
        %s296 = smul.u32 4, %s19
        %p297 = scmp.eq.s32.totalorder %s21, 0
        // Predicated region
        $region59: #{vqvae_forward.22} parent=53 // pred_check
          %p298 = pneg %p297
        $region60: #{vqvae_forward.22} parent=53 // pred_check_branch
          %300 = sbr.rel (%p298) target = $region62
        $region61: #{vqvae_forward.22} parent=53 // pred_region
          %301 = vst [vmem:[#allocation2] sm:$0xff] 0.0
          %302 = vst [vmem:[#allocation2 + $0x8] sm:$0xff] 0.0
          %303 = vst [vmem:[#allocation2 + $0x10] sm:$0xff] 0.0
          %304 = vst [vmem:[#allocation2 + $0x18] sm:$0xff] 0.0
        $region62: #{vqvae_forward.22} parent=53 // pred_fallthru
          _
        %v305 = vld [vmem:[%s239] sm:$0xff]
        %v306 = vld [vmem:[%s239 + $0x8] sm:$0xf]
        %v307 = vld [vmem:[%s239 + $0xc] sm:$0xff]
        %v308 = vld [vmem:[%s239 + $0x14] sm:$0xf]
        %v309 = vld [vmem:[%s239 + $0x18] sm:$0xff]
        %v310 = vld [vmem:[%s239 + $0x20] sm:$0xf]
        %v311 = vld [vmem:[%s239 + $0x24] sm:$0xff]
        %v312 = vld [vmem:[%s239 + $0x2c] sm:$0xf]
        %v313 = vunpack.c.l.bf16 %v305
        %v314 = vunpack.c.h.bf16 %v305
        %v315 = vunpack.c.l.bf16 %v306
        %v316 = vunpack.c.l.bf16 %v307
        %v317 = vunpack.c.h.bf16 %v307
        %v318 = vunpack.c.l.bf16 %v308
        %v319 = vunpack.c.l.bf16 %v309
        %v320 = vunpack.c.h.bf16 %v309
        %v321 = vunpack.c.l.bf16 %v310
        %v322 = vunpack.c.l.bf16 %v311
        %v323 = vunpack.c.h.bf16 %v311
        %v324 = vunpack.c.l.bf16 %v312
        %v325 = vmax.f32 %v313, 0.0
        %v326 = vmax.f32 %v314, 0.0
        %v327 = vmax.f32 %v315, 0.0
        %v328 = vmax.f32 %v316, 0.0
        %v329 = vmax.f32 %v317, 0.0
        %v330 = vmax.f32 %v318, 0.0
        %v331 = vmax.f32 %v319, 0.0
        %v332 = vmax.f32 %v320, 0.0
        %v333 = vmax.f32 %v321, 0.0
        %v334 = vmax.f32 %v322, 0.0
        %v335 = vmax.f32 %v323, 0.0
        %v336 = vmax.f32 %v324, 0.0
        %v337 = vpack.c.bf16 %v328, %v325
        %v338 = vpack.c.bf16 %v329, %v326
        %v339 = vpack.c.bf16 %v330, %v327
        %v340 = vpack.c.bf16 %v334, %v331
        %v341 = vpack.c.bf16 %v335, %v332
        %v342 = vpack.c.bf16 %v336, %v333
        %v343 = vld [vmem:[#allocation2] sm:$0xff]
        %v344 = vld [vmem:[#allocation2 + $0x8] sm:$0xff]
        %v345 = vld [vmem:[#allocation2 + $0x10] sm:$0xff]
        %v346 = vld [vmem:[#allocation2 + $0x18] sm:$0xff]
        %v347 = vld [vmem:[%s283] sm:$0xf]
        %v348 = vld [vmem:[%s283 + $0x4] sm:$0xf]
        %v349 = vld [vmem:[%s283 + $0x8] sm:$0xf]
        %v350 = vld [vmem:[%s283 + $0xc] sm:$0xf]
        %v351 = vld [vmem:[%s283 + $0x10] sm:$0xf]
        %v352 = vld [vmem:[%s283 + $0x14] sm:$0xf]
        %v353 = vld [vmem:[%s283 + $0x18] sm:$0xf]
        %v354 = vld [vmem:[%s283 + $0x1c] sm:$0xf]
        %v355 = vld [vmem:[%s283 + $0x20] sm:$0xf]
        %v356 = vld [vmem:[%s283 + $0x24] sm:$0xf]
        %v357 = vld [vmem:[%s283 + $0x28] sm:$0xf]
        %v358 = vld [vmem:[%s283 + $0x2c] sm:$0xf]
        %v359 = vld [vmem:[%s283 + $0x30] sm:$0xf]
        %v360 = vld [vmem:[%s283 + $0x34] sm:$0xf]
        %v361 = vld [vmem:[%s283 + $0x38] sm:$0xf]
        %v362 = vld [vmem:[%s283 + $0x3c] sm:$0xf]
        %v363 = vld [vmem:[%s283 + $0x40] sm:$0xf]
        %v364 = vld [vmem:[%s283 + $0x44] sm:$0xf]
        %v365 = vld [vmem:[%s283 + $0x48] sm:$0xf]
        %v366 = vld [vmem:[%s283 + $0x4c] sm:$0xf]
        %v367 = vld [vmem:[%s283 + $0x50] sm:$0xf]
        %v368 = vld [vmem:[%s283 + $0x54] sm:$0xf]
        %v369 = vld [vmem:[%s283 + $0x58] sm:$0xf]
        %v370 = vld [vmem:[%s283 + $0x5c] sm:$0xf]
        %v371 = vld [vmem:[%s283 + $0x60] sm:$0xf]
        %v372 = vld [vmem:[%s283 + $0x64] sm:$0xf]
        %v373 = vld [vmem:[%s283 + $0x68] sm:$0xf]
        %v374 = vld [vmem:[%s283 + $0x6c] sm:$0xf]
        %v375 = vld [vmem:[%s283 + $0x70] sm:$0xf]
        %v376 = vld [vmem:[%s283 + $0x74] sm:$0xf]
        %v377 = vld [vmem:[%s283 + $0x78] sm:$0xf]
        %v378 = vld [vmem:[%s283 + $0x7c] sm:$0xf]
        %v379 = vld [vmem:[%s283 + $0x80] sm:$0xf]
        %v380 = vld [vmem:[%s283 + $0x84] sm:$0xf]
        %v381 = vld [vmem:[%s283 + $0x88] sm:$0xf]
        %v382 = vld [vmem:[%s283 + $0x8c] sm:$0xf]
        %v383 = vld [vmem:[%s283 + $0x90] sm:$0xf]
        %v384 = vld [vmem:[%s283 + $0x94] sm:$0xf]
        %v385 = vld [vmem:[%s283 + $0x98] sm:$0xf]
        %v386 = vld [vmem:[%s283 + $0x9c] sm:$0xf]
        %v387 = vld [vmem:[%s283 + $0xa0] sm:$0xf]
        %v388 = vld [vmem:[%s283 + $0xa4] sm:$0xf]
        %v389 = vld [vmem:[%s283 + $0xa8] sm:$0xf]
        %v390 = vld [vmem:[%s283 + $0xac] sm:$0xf]
        %v391 = vld [vmem:[%s283 + $0xb0] sm:$0xf]
        %v392 = vld [vmem:[%s283 + $0xb4] sm:$0xf]
        %v393 = vld [vmem:[%s283 + $0xb8] sm:$0xf]
        %v394 = vld [vmem:[%s283 + $0xbc] sm:$0xf]
        %v443 = vunpack.c.l.b16 %v347
        %v444 = vunpack.c.l.b16 %v348
        %v445 = vunpack.c.l.b16 %v349
        %v446 = vunpack.c.l.b16 %v350
        %v447 = vunpack.c.l.b16 %v351
        %v448 = vunpack.c.l.b16 %v352
        %v449 = vunpack.c.l.b16 %v353
        %v450 = vunpack.c.l.b16 %v354
        %v451 = vunpack.c.l.b16 %v355
        %v452 = vunpack.c.l.b16 %v356
        %v453 = vunpack.c.l.b16 %v357
        %v454 = vunpack.c.l.b16 %v358
        %v455 = vunpack.c.l.b16 %v359
        %v456 = vunpack.c.l.b16 %v360
        %v457 = vunpack.c.l.b16 %v361
        %v458 = vunpack.c.l.b16 %v362
        %v459 = vunpack.c.l.b16 %v363
        %v460 = vunpack.c.l.b16 %v364
        %v461 = vunpack.c.l.b16 %v365
        %v462 = vunpack.c.l.b16 %v366
        %v463 = vunpack.c.l.b16 %v367
        %v464 = vunpack.c.l.b16 %v368
        %v465 = vunpack.c.l.b16 %v369
        %v466 = vunpack.c.l.b16 %v370
        %v467 = vunpack.c.l.b16 %v371
        %v468 = vunpack.c.l.b16 %v372
        %v469 = vunpack.c.l.b16 %v373
        %v470 = vunpack.c.l.b16 %v374
        %v471 = vunpack.c.l.b16 %v375
        %v472 = vunpack.c.l.b16 %v376
        %v473 = vunpack.c.l.b16 %v377
        %v474 = vunpack.c.l.b16 %v378
        %v475 = vunpack.c.l.b16 %v379
        %v476 = vunpack.c.l.b16 %v380
        %v477 = vunpack.c.l.b16 %v381
        %v478 = vunpack.c.l.b16 %v382
        %v479 = vunpack.c.l.b16 %v383
        %v480 = vunpack.c.l.b16 %v384
        %v481 = vunpack.c.l.b16 %v385
        %v482 = vunpack.c.l.b16 %v386
        %v483 = vunpack.c.l.b16 %v387
        %v484 = vunpack.c.l.b16 %v388
        %v485 = vunpack.c.l.b16 %v389
        %v486 = vunpack.c.l.b16 %v390
        %v487 = vunpack.c.l.b16 %v391
        %v488 = vunpack.c.l.b16 %v392
        %v489 = vunpack.c.l.b16 %v393
        %v490 = vunpack.c.l.b16 %v394
        %v491 = vpack.c.b16 %v444, %v443
        %v492 = vpack.c.b16 %v446, %v445
        %v493 = vpack.c.b16 %v448, %v447
        %v494 = vpack.c.b16 %v450, %v449
        %v495 = vpack.c.b16 %v452, %v451
        %v496 = vpack.c.b16 %v454, %v453
        %v497 = vpack.c.b16 %v456, %v455
        %v498 = vpack.c.b16 %v458, %v457
        %v499 = vpack.c.b16 %v460, %v459
        %v500 = vpack.c.b16 %v462, %v461
        %v501 = vpack.c.b16 %v464, %v463
        %v502 = vpack.c.b16 %v466, %v465
        %v503 = vpack.c.b16 %v468, %v467
        %v504 = vpack.c.b16 %v470, %v469
        %v505 = vpack.c.b16 %v472, %v471
        %v506 = vpack.c.b16 %v474, %v473
        %v507 = vpack.c.b16 %v476, %v475
        %v508 = vpack.c.b16 %v478, %v477
        %v509 = vpack.c.b16 %v480, %v479
        %v510 = vpack.c.b16 %v482, %v481
        %v511 = vpack.c.b16 %v484, %v483
        %v512 = vpack.c.b16 %v486, %v485
        %v513 = vpack.c.b16 %v488, %v487
        %v514 = vpack.c.b16 %v490, %v489
        %539 = vmatpush.bf16.msra.mxu0 %v498
        %540 = vmatpush.bf16.msra.mxu0 %v497
        %541 = vmatpush.bf16.msra.mxu0 %v496
        %542 = vmatpush.bf16.msra.mxu0 %v495
        %543 = vmatpush.bf16.msra.mxu0 %v494
        %544 = vmatpush.bf16.msra.mxu0 %v493
        %545 = vmatpush.bf16.msra.mxu0 %v492
        %546 = vmatpush.bf16.msra.mxu0 %v491
        %547 = vmatmul.bf16.gmra.mxu0 %v337
        %v548 = vpop.f32.mrf.mxu0
        %v549 = vadd.f32 0.0, %v548
        %v550 = vpop.f32.mrf.mxu0
        %v551 = vadd.f32 0.0, %v550
        %552 = vmatmul.bf16.gmra.mxu0 %v340
        %v553 = vpop.f32.mrf.mxu0
        %v554 = vadd.f32 0.0, %v553
        %v555 = vpop.f32.mrf.mxu0
        %v556 = vadd.f32 0.0, %v555
        %557 = vdwg.mxu0
        %558 = vmatpush.bf16.msra.mxu0 %v506
        %559 = vmatpush.bf16.msra.mxu0 %v505
        %560 = vmatpush.bf16.msra.mxu0 %v504
        %561 = vmatpush.bf16.msra.mxu0 %v503
        %562 = vmatpush.bf16.msra.mxu0 %v502
        %563 = vmatpush.bf16.msra.mxu0 %v501
        %564 = vmatpush.bf16.msra.mxu0 %v500
        %565 = vmatpush.bf16.msra.mxu0 %v499
        %566 = vmatmul.bf16.gmra.mxu0 %v338
        %v567 = vpop.f32.mrf.mxu0
        %v568 = vadd.f32 %v549, %v567
        %v569 = vpop.f32.mrf.mxu0
        %v570 = vadd.f32 %v551, %v569
        %571 = vmatmul.bf16.gmra.mxu0 %v341
        %v572 = vpop.f32.mrf.mxu0
        %v573 = vadd.f32 %v554, %v572
        %v574 = vpop.f32.mrf.mxu0
        %v575 = vadd.f32 %v556, %v574
        %576 = vdwg.mxu0
        %577 = vmatpush.bf16.msra.mxu0 %v514
        %578 = vmatpush.bf16.msra.mxu0 %v513
        %579 = vmatpush.bf16.msra.mxu0 %v512
        %580 = vmatpush.bf16.msra.mxu0 %v511
        %581 = vmatpush.bf16.msra.mxu0 %v510
        %582 = vmatpush.bf16.msra.mxu0 %v509
        %583 = vmatpush.bf16.msra.mxu0 %v508
        %584 = vmatpush.bf16.msra.mxu0 %v507
        %585 = vmatmul.bf16.gmra.mxu0 %v339
        %v586 = vpop.f32.mrf.mxu0
        %v587 = vadd.f32 %v568, %v586
        %v588 = vpop.f32.mrf.mxu0
        %v589 = vadd.f32 %v570, %v588
        %590 = vmatmul.bf16.gmra.mxu0 %v342
        %v591 = vpop.f32.mrf.mxu0
        %v592 = vadd.f32 %v573, %v591
        %v593 = vpop.f32.mrf.mxu0
        %v594 = vadd.f32 %v575, %v593
        %595 = vdwg.mxu0
        %v596 = vadd.f32 %v343, %v587
        %v597 = vadd.f32 %v344, %v589
        %v598 = vadd.f32 %v345, %v592
        %v599 = vadd.f32 %v346, %v594
        %600 = vst [vmem:[#allocation2] sm:$0xff] %v596
        %601 = vst [vmem:[#allocation2 + $0x8] sm:$0xff] %v597
        %602 = vst [vmem:[#allocation2 + $0x10] sm:$0xff] %v598
        %603 = vst [vmem:[#allocation2 + $0x18] sm:$0xff] %v599
        %p604 = scmp.eq.s32.totalorder %s21, 2
        // Predicated region
        $region63: #{vqvae_forward.22} parent=53 // pred_check
          %p605 = pneg %p604
        $region64: #{vqvae_forward.22} parent=53 // pred_check_branch
          %607 = sbr.rel (%p605) target = $region66
        $region65: #{vqvae_forward.22} parent=53 // pred_region
          %v608 = vld [vmem:[#allocation2] sm:$0xff]
          %v609 = vld [vmem:[#allocation2 + $0x8] sm:$0xff]
          %v610 = vld [vmem:[#allocation2 + $0x10] sm:$0xff]
          %v611 = vld [vmem:[#allocation2 + $0x18] sm:$0xff]
          %v612 = vld [vmem:[%s287] sm:$0x1]
          %v614 = vperm.slane %v612, 0
          %v616 = vadd.f32 %v608, %v614
          %v617 = vadd.f32 %v609, %v614
          %v618 = vadd.f32 %v610, %v614
          %v619 = vadd.f32 %v611, %v614
          %v620 = vmax.f32 %v616, 0.0
          %v621 = vmax.f32 %v617, 0.0
          %v622 = vmax.f32 %v618, 0.0
          %v623 = vmax.f32 %v619, 0.0
          %624 = vst [vmem:[%s295] sm:$0xff] %v620
          %625 = vst [vmem:[%s295 + $0x8] sm:$0xff] %v621
          %626 = vst [vmem:[%s295 + $0x10] sm:$0xff] %v622
          %627 = vst [vmem:[%s295 + $0x18] sm:$0xff] %v623
        $region66: #{vqvae_forward.22} parent=53 // pred_fallthru
          _
        %s628 = smul.u32 4, %s19
        %p629 = scmp.lt.s32.totalorder %s628, 3
        %s630 = scalar_select %p629, %s628, 3
        %p631 = scmp.lt.s32.totalorder %s20, 0
        %s632 = scalar_select %p631, %s20, 0
        %s633 = sadd.s32 %s632, %s630
        %s634 = smul.addr %s633, 8
        %s635 = scalar_lea.vmem %s3, %s634
        // Predicated region
        $region67: #{vqvae_forward.22} parent=53 // pred_check
          %p636 = pneg %p135
        $region68: #{vqvae_forward.22} parent=53 // pred_check_branch
          %638 = sbr.rel (%p636) target = $region70
        $region69: #{vqvae_forward.22} parent=53 // pred_region
          %s639 = smul.u32 4, %s19
        $region70: #{vqvae_forward.22} parent=53 // pred_fallthru
          _
        // Predicated region
        $region71: #{vqvae_forward.22} parent=53 // pred_check
          %p640 = pneg %p135
        $region72: #{vqvae_forward.22} parent=53 // pred_check_branch
          %642 = sbr.rel (%p640) target = $region74
        $region73: #{vqvae_forward.22} parent=53 // pred_region
          %s643 = smul.u32 4, %s19
          %p644 = scmp.lt.s32.totalorder %s643, 3
          %s645 = scalar_select %p644, %s643, 3
          %p646 = scmp.lt.s32.totalorder %s20, 0
          %s647 = scalar_select %p646, %s20, 0
          %s648 = sadd.s32 %s647, %s645
          %s649 = smul.addr %s648, 8
          %s650 = scalar_lea.vmem %s3, %s649
        $region74: #{vqvae_forward.22} parent=53 // pred_fallthru
          _
      $region54: #{vqvae_forward.22} parent=5 // pred_fallthru
        _
      %p651 = scmp.le.s32.totalorder 2, %s9
      // Predicated region
      $region75: #{vqvae_forward.22} parent=5 // pred_check
        %p652 = pneg %p651
      $region76: #{vqvae_forward.22} parent=5 // pred_check_branch
        %654 = sbr.rel (%p652) target = $region78
      $region77: #{vqvae_forward.22} parent=5 // pred_region
        %s655 = ssub.s32 %s9, 2
      $region78: #{vqvae_forward.22} parent=5 // pred_fallthru
        _
    $region6: #{vqvae_forward.22} parent=1 // loop_footer
      %s13 = sadd.s32 1, %s9
    $region7: #{vqvae_forward.22} parent=1 // loop_footer_branch
      %8 = sbr.rel target = $region3
    $region8: #{vqvae_forward.22} parent=1 // loop_exit
      _

// kernel: vqvae_forward.23
$region0: #{vqvae_forward.23}
  #allocation0 [shape = 'u32[]', space=smem, size = 0x4, offset = 0x4, fixed_abs, tag = 'smem constant byte address 0x4 - core index']
  #allocation1 [shape = 'u32[72,128]{1,0:T(1,128)}', space=vmem, size = 0x9000, scoped, tag = 'internal scratch']
  #allocation2 [shape = 'f32[32,128]{1,0:T(8,128)}', space=vmem, size = 0x4000, scoped, tag = 'scratch operand']
  %s0 = inlined_call_operand.vmem [shape: bf16[32,128], index: 0, kind: input, shape index: {}]
  %s1 = inlined_call_operand.vmem [shape: bf16[128,128], index: 1, kind: input, shape index: {}]
  %s2 = inlined_call_operand.vmem [shape: f32[1,128], index: 2, kind: input, shape index: {}]
  %s3 = inlined_call_operand.vmem [shape: f32[32,128], index: 3, kind: input, shape index: {}]
  %s4 = inlined_call_operand.vmem [shape: f32[32,128], index: 4, kind: output, shape index: {}]
  %s5 = sld [smem:[#allocation0]]
  $region34: #{vqvae_forward.23} parent=0
    _
  %s7 = ssub.s32 1, %s5
  %s8 = scalar_select 0, %s7, %s5
  // Predicated region
  $region2: #{vqvae_forward.23} parent=0 // pred_check
    _
  $region3: #{vqvae_forward.23} parent=0 // pred_check_branch
    %10 = sbr.rel (0) target = $region5
  $region4: #{vqvae_forward.23} parent=0 // pred_region
    _
  $region5: #{vqvae_forward.23} parent=0 // pred_fallthru
    _
  // Predicated region
  $region6: #{vqvae_forward.23} parent=0 // pred_check
    _
  $region7: #{vqvae_forward.23} parent=0 // pred_check_branch
    %12 = sbr.rel (0) target = $region9
  $region8: #{vqvae_forward.23} parent=0 // pred_region
    _
  $region9: #{vqvae_forward.23} parent=0 // pred_fallthru
    _
  // Predicated region
  $region10: #{vqvae_forward.23} parent=0 // pred_check
    _
  $region11: #{vqvae_forward.23} parent=0 // pred_check_branch
    %14 = sbr.rel (0) target = $region13
  $region12: #{vqvae_forward.23} parent=0 // pred_region
    _
  $region13: #{vqvae_forward.23} parent=0 // pred_fallthru
    _
  // Predicated region
  $region14: #{vqvae_forward.23} parent=0 // pred_check
    _
  $region15: #{vqvae_forward.23} parent=0 // pred_check_branch
    %16 = sbr.rel (0) target = $region17
  $region16: #{vqvae_forward.23} parent=0 // pred_region
    _
  $region17: #{vqvae_forward.23} parent=0 // pred_fallthru
    _
  %p17 = scmp.eq.s32.totalorder 0, 0
  // Predicated region
  $region18: #{vqvae_forward.23} parent=0 // pred_check
    %p18 = pneg %p17
  $region19: #{vqvae_forward.23} parent=0 // pred_check_branch
    %20 = sbr.rel (%p18) target = $region21
  $region20: #{vqvae_forward.23} parent=0 // pred_region
    %21 = vst [vmem:[#allocation2] sm:$0xff] 0.0
    %22 = vst [vmem:[#allocation2 + $0x8] sm:$0xff] 0.0
    %23 = vst [vmem:[#allocation2 + $0x10] sm:$0xff] 0.0
    %24 = vst [vmem:[#allocation2 + $0x18] sm:$0xff] 0.0
  $region21: #{vqvae_forward.23} parent=0 // pred_fallthru
    _
  %v25 = vld [vmem:[%s0] sm:$0xf]
  %v26 = vld [vmem:[%s0 + $0x4] sm:$0xf]
  %v27 = vld [vmem:[%s0 + $0x8] sm:$0xf]
  %v28 = vld [vmem:[%s0 + $0xc] sm:$0xf]
  %v29 = vld [vmem:[#allocation2] sm:$0xff]
  %v30 = vld [vmem:[#allocation2 + $0x8] sm:$0xff]
  %v31 = vld [vmem:[#allocation2 + $0x10] sm:$0xff]
  %v32 = vld [vmem:[#allocation2 + $0x18] sm:$0xff]
  %v33 = vld [vmem:[%s1] sm:$0xf]
  %v34 = vld [vmem:[%s1 + $0x4] sm:$0xf]
  %v35 = vld [vmem:[%s1 + $0x8] sm:$0xf]
  %v36 = vld [vmem:[%s1 + $0xc] sm:$0xf]
  %v37 = vld [vmem:[%s1 + $0x10] sm:$0xf]
  %v38 = vld [vmem:[%s1 + $0x14] sm:$0xf]
  %v39 = vld [vmem:[%s1 + $0x18] sm:$0xf]
  %v40 = vld [vmem:[%s1 + $0x1c] sm:$0xf]
  %v41 = vld [vmem:[%s1 + $0x20] sm:$0xf]
  %v42 = vld [vmem:[%s1 + $0x24] sm:$0xf]
  %v43 = vld [vmem:[%s1 + $0x28] sm:$0xf]
  %v44 = vld [vmem:[%s1 + $0x2c] sm:$0xf]
  %v45 = vld [vmem:[%s1 + $0x30] sm:$0xf]
  %v46 = vld [vmem:[%s1 + $0x34] sm:$0xf]
  %v47 = vld [vmem:[%s1 + $0x38] sm:$0xf]
  %v48 = vld [vmem:[%s1 + $0x3c] sm:$0xf]
  %v53 = vunpack.c.l.b16 %v25
  %v54 = vunpack.c.l.b16 %v26
  %v55 = vunpack.c.l.b16 %v27
  %v56 = vunpack.c.l.b16 %v28
  %v57 = vpack.c.b16 %v54, %v53
  %v58 = vpack.c.b16 %v56, %v55
  %v77 = vunpack.c.l.b16 %v33
  %v78 = vunpack.c.l.b16 %v34
  %v79 = vunpack.c.l.b16 %v35
  %v80 = vunpack.c.l.b16 %v36
  %v81 = vunpack.c.l.b16 %v37
  %v82 = vunpack.c.l.b16 %v38
  %v83 = vunpack.c.l.b16 %v39
  %v84 = vunpack.c.l.b16 %v40
  %v85 = vunpack.c.l.b16 %v41
  %v86 = vunpack.c.l.b16 %v42
  %v87 = vunpack.c.l.b16 %v43
  %v88 = vunpack.c.l.b16 %v44
  %v89 = vunpack.c.l.b16 %v45
  %v90 = vunpack.c.l.b16 %v46
  %v91 = vunpack.c.l.b16 %v47
  %v92 = vunpack.c.l.b16 %v48
  %v93 = vpack.c.b16 %v78, %v77
  %v94 = vpack.c.b16 %v80, %v79
  %v95 = vpack.c.b16 %v82, %v81
  %v96 = vpack.c.b16 %v84, %v83
  %v97 = vpack.c.b16 %v86, %v85
  %v98 = vpack.c.b16 %v88, %v87
  %v99 = vpack.c.b16 %v90, %v89
  %v100 = vpack.c.b16 %v92, %v91
  %109 = vmatpush.bf16.msra.mxu0 %v100
  %110 = vmatpush.bf16.msra.mxu0 %v99
  %111 = vmatpush.bf16.msra.mxu0 %v98
  %112 = vmatpush.bf16.msra.mxu0 %v97
  %113 = vmatpush.bf16.msra.mxu0 %v96
  %114 = vmatpush.bf16.msra.mxu0 %v95
  %115 = vmatpush.bf16.msra.mxu0 %v94
  %116 = vmatpush.bf16.msra.mxu0 %v93
  %117 = vmatmul.bf16.gmra.mxu0 %v57
  %v118 = vpop.f32.mrf.mxu0
  %v119 = vadd.f32 0.0, %v118
  %v120 = vpop.f32.mrf.mxu0
  %v121 = vadd.f32 0.0, %v120
  %122 = vmatmul.bf16.gmra.mxu0 %v58
  %v123 = vpop.f32.mrf.mxu0
  %v124 = vadd.f32 0.0, %v123
  %v125 = vpop.f32.mrf.mxu0
  %v126 = vadd.f32 0.0, %v125
  %127 = vdwg.mxu0
  %v128 = vadd.f32 %v29, %v119
  %v129 = vadd.f32 %v30, %v121
  %v130 = vadd.f32 %v31, %v124
  %v131 = vadd.f32 %v32, %v126
  %132 = vst [vmem:[#allocation2] sm:$0xff] %v128
  %133 = vst [vmem:[#allocation2 + $0x8] sm:$0xff] %v129
  %134 = vst [vmem:[#allocation2 + $0x10] sm:$0xff] %v130
  %135 = vst [vmem:[#allocation2 + $0x18] sm:$0xff] %v131
  // Predicated region
  $region22: #{vqvae_forward.23} parent=0 // pred_check
    %p136 = pneg %p17
  $region23: #{vqvae_forward.23} parent=0 // pred_check_branch
    %138 = sbr.rel (%p136) target = $region25
  $region24: #{vqvae_forward.23} parent=0 // pred_region
    %v139 = vld [vmem:[#allocation2] sm:$0xff]
    %v140 = vld [vmem:[#allocation2 + $0x8] sm:$0xff]
    %v141 = vld [vmem:[#allocation2 + $0x10] sm:$0xff]
    %v142 = vld [vmem:[#allocation2 + $0x18] sm:$0xff]
    %v143 = vld [vmem:[%s2] sm:$0x1]
    %v145 = vperm.slane %v143, 0
    %v147 = vadd.f32 %v139, %v145
    %v148 = vadd.f32 %v140, %v145
    %v149 = vadd.f32 %v141, %v145
    %v150 = vadd.f32 %v142, %v145
    %v151 = vld [vmem:[%s3] sm:$0xff]
    %v152 = vld [vmem:[%s3 + $0x8] sm:$0xff]
    %v153 = vld [vmem:[%s3 + $0x10] sm:$0xff]
    %v154 = vld [vmem:[%s3 + $0x18] sm:$0xff]
    %v155 = vadd.f32 %v147, %v151
    %v156 = vadd.f32 %v148, %v152
    %v157 = vadd.f32 %v149, %v153
    %v158 = vadd.f32 %v150, %v154
    %159 = vst [vmem:[%s4] sm:$0xff] %v155
    %160 = vst [vmem:[%s4 + $0x8] sm:$0xff] %v156
    %161 = vst [vmem:[%s4 + $0x10] sm:$0xff] %v157
    %162 = vst [vmem:[%s4 + $0x18] sm:$0xff] %v158
  $region25: #{vqvae_forward.23} parent=0 // pred_fallthru
    _
  // Predicated region
  $region26: #{vqvae_forward.23} parent=0 // pred_check
    _
  $region27: #{vqvae_forward.23} parent=0 // pred_check_branch
    %164 = sbr.rel (0) target = $region29
  $region28: #{vqvae_forward.23} parent=0 // pred_region
    _
  $region29: #{vqvae_forward.23} parent=0 // pred_fallthru
    _
  // Predicated region
  $region30: #{vqvae_forward.23} parent=0 // pred_check
    _
  $region31: #{vqvae_forward.23} parent=0 // pred_check_branch
    %166 = sbr.rel (0) target = $region33
  $region32: #{vqvae_forward.23} parent=0 // pred_region
    _
  $region33: #{vqvae_forward.23} parent=0 // pred_fallthru
    _

// kernel: vqvae_forward.26
$region0: #{vqvae_forward.26}
  #allocation0 [shape = 'u32[]', space=smem, size = 0x4, offset = 0x4, fixed_abs, tag = 'smem constant byte address 0x4 - core index']
  #allocation1 [shape = 'u32[72,128]{1,0:T(1,128)}', space=vmem, size = 0x9000, scoped, tag = 'internal scratch']
  #allocation2 [shape = 'f32[32,128]{1,0:T(8,128)}', space=vmem, size = 0x4000, scoped, tag = 'scratch operand']
  %s0 = inlined_call_operand.vmem [shape: bf16[32,128], index: 0, kind: input, shape index: {}]
  %s1 = inlined_call_operand.vmem [shape: bf16[128,128], index: 1, kind: input, shape index: {}]
  %s2 = inlined_call_operand.vmem [shape: f32[1,128], index: 2, kind: input, shape index: {}]
  %s3 = inlined_call_operand.vmem [shape: f32[32,128], index: 3, kind: output, shape index: {}]
  %s4 = sld [smem:[#allocation0]]
  $region30: #{vqvae_forward.26} parent=0
    _
  %s6 = ssub.s32 1, %s4
  %s7 = scalar_select 0, %s6, %s4
  // Predicated region
  $region2: #{vqvae_forward.26} parent=0 // pred_check
    _
  $region3: #{vqvae_forward.26} parent=0 // pred_check_branch
    %9 = sbr.rel (0) target = $region5
  $region4: #{vqvae_forward.26} parent=0 // pred_region
    _
  $region5: #{vqvae_forward.26} parent=0 // pred_fallthru
    _
  // Predicated region
  $region6: #{vqvae_forward.26} parent=0 // pred_check
    _
  $region7: #{vqvae_forward.26} parent=0 // pred_check_branch
    %11 = sbr.rel (0) target = $region9
  $region8: #{vqvae_forward.26} parent=0 // pred_region
    _
  $region9: #{vqvae_forward.26} parent=0 // pred_fallthru
    _
  // Predicated region
  $region10: #{vqvae_forward.26} parent=0 // pred_check
    _
  $region11: #{vqvae_forward.26} parent=0 // pred_check_branch
    %13 = sbr.rel (0) target = $region13
  $region12: #{vqvae_forward.26} parent=0 // pred_region
    _
  $region13: #{vqvae_forward.26} parent=0 // pred_fallthru
    _
  %p14 = scmp.eq.s32.totalorder 0, 0
  // Predicated region
  $region14: #{vqvae_forward.26} parent=0 // pred_check
    %p15 = pneg %p14
  $region15: #{vqvae_forward.26} parent=0 // pred_check_branch
    %17 = sbr.rel (%p15) target = $region17
  $region16: #{vqvae_forward.26} parent=0 // pred_region
    %18 = vst [vmem:[#allocation2] sm:$0xff] 0.0
    %19 = vst [vmem:[#allocation2 + $0x8] sm:$0xff] 0.0
    %20 = vst [vmem:[#allocation2 + $0x10] sm:$0xff] 0.0
    %21 = vst [vmem:[#allocation2 + $0x18] sm:$0xff] 0.0
  $region17: #{vqvae_forward.26} parent=0 // pred_fallthru
    _
  %v22 = vld [vmem:[%s0] sm:$0xf]
  %v23 = vld [vmem:[%s0 + $0x4] sm:$0xf]
  %v24 = vld [vmem:[%s0 + $0x8] sm:$0xf]
  %v25 = vld [vmem:[%s0 + $0xc] sm:$0xf]
  %v26 = vunpack.c.l.bf16 %v22
  %v27 = vunpack.c.l.bf16 %v23
  %v28 = vunpack.c.l.bf16 %v24
  %v29 = vunpack.c.l.bf16 %v25
  %v30 = vmax.f32 %v26, 0.0
  %v31 = vmax.f32 %v27, 0.0
  %v32 = vmax.f32 %v28, 0.0
  %v33 = vmax.f32 %v29, 0.0
  %v34 = vpack.c.bf16 %v31, %v30
  %v35 = vpack.c.bf16 %v33, %v32
  %v36 = vld [vmem:[#allocation2] sm:$0xff]
  %v37 = vld [vmem:[#allocation2 + $0x8] sm:$0xff]
  %v38 = vld [vmem:[#allocation2 + $0x10] sm:$0xff]
  %v39 = vld [vmem:[#allocation2 + $0x18] sm:$0xff]
  %v40 = vld [vmem:[%s1] sm:$0xf]
  %v41 = vld [vmem:[%s1 + $0x4] sm:$0xf]
  %v42 = vld [vmem:[%s1 + $0x8] sm:$0xf]
  %v43 = vld [vmem:[%s1 + $0xc] sm:$0xf]
  %v44 = vld [vmem:[%s1 + $0x10] sm:$0xf]
  %v45 = vld [vmem:[%s1 + $0x14] sm:$0xf]
  %v46 = vld [vmem:[%s1 + $0x18] sm:$0xf]
  %v47 = vld [vmem:[%s1 + $0x1c] sm:$0xf]
  %v48 = vld [vmem:[%s1 + $0x20] sm:$0xf]
  %v49 = vld [vmem:[%s1 + $0x24] sm:$0xf]
  %v50 = vld [vmem:[%s1 + $0x28] sm:$0xf]
  %v51 = vld [vmem:[%s1 + $0x2c] sm:$0xf]
  %v52 = vld [vmem:[%s1 + $0x30] sm:$0xf]
  %v53 = vld [vmem:[%s1 + $0x34] sm:$0xf]
  %v54 = vld [vmem:[%s1 + $0x38] sm:$0xf]
  %v55 = vld [vmem:[%s1 + $0x3c] sm:$0xf]
  %v72 = vunpack.c.l.b16 %v40
  %v73 = vunpack.c.l.b16 %v41
  %v74 = vunpack.c.l.b16 %v42
  %v75 = vunpack.c.l.b16 %v43
  %v76 = vunpack.c.l.b16 %v44
  %v77 = vunpack.c.l.b16 %v45
  %v78 = vunpack.c.l.b16 %v46
  %v79 = vunpack.c.l.b16 %v47
  %v80 = vunpack.c.l.b16 %v48
  %v81 = vunpack.c.l.b16 %v49
  %v82 = vunpack.c.l.b16 %v50
  %v83 = vunpack.c.l.b16 %v51
  %v84 = vunpack.c.l.b16 %v52
  %v85 = vunpack.c.l.b16 %v53
  %v86 = vunpack.c.l.b16 %v54
  %v87 = vunpack.c.l.b16 %v55
  %v88 = vpack.c.b16 %v73, %v72
  %v89 = vpack.c.b16 %v75, %v74
  %v90 = vpack.c.b16 %v77, %v76
  %v91 = vpack.c.b16 %v79, %v78
  %v92 = vpack.c.b16 %v81, %v80
  %v93 = vpack.c.b16 %v83, %v82
  %v94 = vpack.c.b16 %v85, %v84
  %v95 = vpack.c.b16 %v87, %v86
  %104 = vmatpush.bf16.msra.mxu0 %v95
  %105 = vmatpush.bf16.msra.mxu0 %v94
  %106 = vmatpush.bf16.msra.mxu0 %v93
  %107 = vmatpush.bf16.msra.mxu0 %v92
  %108 = vmatpush.bf16.msra.mxu0 %v91
  %109 = vmatpush.bf16.msra.mxu0 %v90
  %110 = vmatpush.bf16.msra.mxu0 %v89
  %111 = vmatpush.bf16.msra.mxu0 %v88
  %112 = vmatmul.bf16.gmra.mxu0 %v34
  %v113 = vpop.f32.mrf.mxu0
  %v114 = vadd.f32 0.0, %v113
  %v115 = vpop.f32.mrf.mxu0
  %v116 = vadd.f32 0.0, %v115
  %117 = vmatmul.bf16.gmra.mxu0 %v35
  %v118 = vpop.f32.mrf.mxu0
  %v119 = vadd.f32 0.0, %v118
  %v120 = vpop.f32.mrf.mxu0
  %v121 = vadd.f32 0.0, %v120
  %122 = vdwg.mxu0
  %v123 = vadd.f32 %v36, %v114
  %v124 = vadd.f32 %v37, %v116
  %v125 = vadd.f32 %v38, %v119
  %v126 = vadd.f32 %v39, %v121
  %127 = vst [vmem:[#allocation2] sm:$0xff] %v123
  %128 = vst [vmem:[#allocation2 + $0x8] sm:$0xff] %v124
  %129 = vst [vmem:[#allocation2 + $0x10] sm:$0xff] %v125
  %130 = vst [vmem:[#allocation2 + $0x18] sm:$0xff] %v126
  // Predicated region
  $region18: #{vqvae_forward.26} parent=0 // pred_check
    %p131 = pneg %p14
  $region19: #{vqvae_forward.26} parent=0 // pred_check_branch
    %133 = sbr.rel (%p131) target = $region21
  $region20: #{vqvae_forward.26} parent=0 // pred_region
    %v134 = vld [vmem:[#allocation2] sm:$0xff]
    %v135 = vld [vmem:[#allocation2 + $0x8] sm:$0xff]
    %v136 = vld [vmem:[#allocation2 + $0x10] sm:$0xff]
    %v137 = vld [vmem:[#allocation2 + $0x18] sm:$0xff]
    %v138 = vld [vmem:[%s2] sm:$0x1]
    %v140 = vperm.slane %v138, 0
    %v142 = vadd.f32 %v134, %v140
    %v143 = vadd.f32 %v135, %v140
    %v144 = vadd.f32 %v136, %v140
    %v145 = vadd.f32 %v137, %v140
    %146 = vst [vmem:[%s3] sm:$0xff] %v142
    %147 = vst [vmem:[%s3 + $0x8] sm:$0xff] %v143
    %148 = vst [vmem:[%s3 + $0x10] sm:$0xff] %v144
    %149 = vst [vmem:[%s3 + $0x18] sm:$0xff] %v145
  $region21: #{vqvae_forward.26} parent=0 // pred_fallthru
    _
  // Predicated region
  $region22: #{vqvae_forward.26} parent=0 // pred_check
    _
  $region23: #{vqvae_forward.26} parent=0 // pred_check_branch
    %151 = sbr.rel (0) target = $region25
  $region24: #{vqvae_forward.26} parent=0 // pred_region
    _
  $region25: #{vqvae_forward.26} parent=0 // pred_fallthru
    _
  // Predicated region
  $region26: #{vqvae_forward.26} parent=0 // pred_check
    _
  $region27: #{vqvae_forward.26} parent=0 // pred_check_branch
    %153 = sbr.rel (0) target = $region29
  $region28: #{vqvae_forward.26} parent=0 // pred_region
    _
  $region29: #{vqvae_forward.26} parent=0 // pred_fallthru
    _

// kernel: vqvae_forward.27
$region0: #{vqvae_forward.27}
  #allocation0 [shape = 'u32[]', space=smem, size = 0x4, offset = 0x4, fixed_abs, tag = 'smem constant byte address 0x4 - core index']
  #allocation1 [shape = 'u32[72,128]{1,0:T(1,128)}', space=vmem, size = 0x9000, scoped, tag = 'internal scratch']
  %s0 = inlined_call_operand.vmem [shape: f32[32,128], index: 0, kind: input, shape index: {}]
  %s1 = inlined_call_operand.vmem [shape: f32[128,128], index: 1, kind: input, shape index: {}]
  %s2 = inlined_call_operand.vmem [shape: f32[1,128], index: 2, kind: input, shape index: {}]
  %s3 = inlined_call_operand.hbm [shape: s32[32,1], index: 3, kind: output, shape index: {0}]
  %s4 = inlined_call_operand.vmem [shape: f32[32,128], index: 4, kind: output, shape index: {1}]
  %5 = xla_tuple %s3, %s4
  %s6 = sld [smem:[#allocation0]]
  $region30: #{vqvae_forward.27} parent=0
    _
  %s8 = ssub.s32 1, %s6
  %s9 = scalar_select 0, %s8, %s6
  $region1: #{vqvae_forward.27} parent=0
    #allocation2 [shape = 'u8[16384]{0}', space=vmem, size = 0x4000, scoped, tag = 'output window, operand 0, single buffered']
    #allocation3 [shape = 's32[1]{0}', space=sflag, size = 0x4, scoped, tag = 'scoped memory for vqvae_forward.27']
    %10 = vsyncpa [#allocation3], 0
    // Predicated region
    $region2: #{vqvae_forward.27} parent=1 // pred_check
      _
    $region3: #{vqvae_forward.27} parent=1 // pred_check_branch
      %12 = sbr.rel (0) target = $region5
    $region4: #{vqvae_forward.27} parent=1 // pred_region
      _
    $region5: #{vqvae_forward.27} parent=1 // pred_fallthru
      _
    // Predicated region
    $region6: #{vqvae_forward.27} parent=1 // pred_check
      _
    $region7: #{vqvae_forward.27} parent=1 // pred_check_branch
      %14 = sbr.rel (0) target = $region9
    $region8: #{vqvae_forward.27} parent=1 // pred_region
      _
    $region9: #{vqvae_forward.27} parent=1 // pred_fallthru
      _
    // Predicated region
    $region10: #{vqvae_forward.27} parent=1 // pred_check
      _
    $region11: #{vqvae_forward.27} parent=1 // pred_check_branch
      %16 = sbr.rel (0) target = $region13
    $region12: #{vqvae_forward.27} parent=1 // pred_region
      _
    $region13: #{vqvae_forward.27} parent=1 // pred_fallthru
      _
    %v17 = vld [vmem:[%s0] sm:$0xff]
    %v18 = vld [vmem:[%s0 + $0x8] sm:$0xff]
    %v19 = vld [vmem:[%s0 + $0x10] sm:$0xff]
    %v20 = vld [vmem:[%s0 + $0x18] sm:$0xff]
    %v21 = vld [vmem:[%s1] sm:$0xff]
    %v22 = vld [vmem:[%s1 + $0x8] sm:$0xff]
    %v23 = vld [vmem:[%s1 + $0x10] sm:$0xff]
    %v24 = vld [vmem:[%s1 + $0x18] sm:$0xff]
    %v25 = vld [vmem:[%s1 + $0x20] sm:$0xff]
    %v26 = vld [vmem:[%s1 + $0x28] sm:$0xff]
    %v27 = vld [vmem:[%s1 + $0x30] sm:$0xff]
    %v28 = vld [vmem:[%s1 + $0x38] sm:$0xff]
    %v29 = vld [vmem:[%s1 + $0x40] sm:$0xff]
    %v30 = vld [vmem:[%s1 + $0x48] sm:$0xff]
    %v31 = vld [vmem:[%s1 + $0x50] sm:$0xff]
    %v32 = vld [vmem:[%s1 + $0x58] sm:$0xff]
    %v33 = vld [vmem:[%s1 + $0x60] sm:$0xff]
    %v34 = vld [vmem:[%s1 + $0x68] sm:$0xff]
    %v35 = vld [vmem:[%s1 + $0x70] sm:$0xff]
    %v36 = vld [vmem:[%s1 + $0x78] sm:$0xff]
    %37 = vmatpush.xpose.msra.mxu0 %v36
    %38 = vmatpush.xpose.msra.mxu0 %v35
    %39 = vmatpush.xpose.msra.mxu0 %v34
    %40 = vmatpush.xpose.msra.mxu0 %v33
    %41 = vmatpush.xpose.msra.mxu0 %v32
    %42 = vmatpush.xpose.msra.mxu0 %v31
    %43 = vmatpush.xpose.msra.mxu0 %v30
    %44 = vmatpush.xpose.msra.mxu0 %v29
    %45 = vmatpush.xpose.msra.mxu0 %v28
    %46 = vmatpush.xpose.msra.mxu0 %v27
    %47 = vmatpush.xpose.msra.mxu0 %v26
    %48 = vmatpush.xpose.msra.mxu0 %v25
    %49 = vmatpush.xpose.msra.mxu0 %v24
    %50 = vmatpush.xpose.msra.mxu0 %v23
    %51 = vmatpush.xpose.msra.mxu0 %v22
    %52 = vmatpush.xpose.msra.mxu0 %v21
    %53 = vmatmul.f32.gmra.mxu0 %v17
    %v54 = vpop.f32.mrf.mxu0
    %v55 = vadd.f32 0.0, %v54
    %56 = vmatmul.f32.gmra.mxu0 %v18
    %v57 = vpop.f32.mrf.mxu0
    %v58 = vadd.f32 0.0, %v57
    %59 = vmatmul.f32.gmra.mxu0 %v19
    %v60 = vpop.f32.mrf.mxu0
    %v61 = vadd.f32 0.0, %v60
    %62 = vmatmul.f32.gmra.mxu0 %v20
    %v63 = vpop.f32.mrf.mxu0
    %v64 = vadd.f32 0.0, %v63
    %65 = vdwg.mxu0
    %v66 = vmul.f32 %v17, %v17
    %v67 = vmul.f32 %v18, %v18
    %v68 = vmul.f32 %v19, %v19
    %v69 = vmul.f32 %v20, %v20
    %70 = vadd.xlane.f32.xlu0 %v66
    %v71 = vpop.xlane.xlu0 %70
    %72 = vadd.xlane.f32.xlu0 %v67
    %v73 = vpop.xlane.xlu0 %72
    %74 = vadd.xlane.f32.xlu0 %v68
    %v75 = vpop.xlane.xlu0 %74
    %76 = vadd.xlane.f32.xlu0 %v69
    %v77 = vpop.xlane.xlu0 %76
    %v78 = vld [vmem:[%s2] sm:$0x1]
    %v80 = vperm.slane %v78, 0
    %v82 = vadd.f32 %v71, %v80
    %v83 = vadd.f32 %v73, %v80
    %v84 = vadd.f32 %v75, %v80
    %v85 = vadd.f32 %v77, %v80
    %v86 = vmul.f32 %v55, 2.0
    %v87 = vmul.f32 %v58, 2.0
    %v88 = vmul.f32 %v61, 2.0
    %v89 = vmul.f32 %v64, 2.0
    %v90 = vsub.f32 %v82, %v86
    %v91 = vsub.f32 %v83, %v87
    %v92 = vsub.f32 %v84, %v88
    %v93 = vsub.f32 %v85, %v89
    %v94 = vlaneseq
    %v95 = vand.u32 %v94, 127
    %vm96 = vcmp.lt.s32.totalorder %v95, 64
    %v97 = vsel %vm96, %v90, inf
    %v98 = vsel %vm96, %v91, inf
    %v99 = vsel %vm96, %v92, inf
    %v100 = vsel %vm96, %v93, inf
    %101 = vmin.xlane.f32.xlu0 %v97
    %v102 = vpop.xlane.xlu0 %101
    %103 = vmin.xlane.f32.xlu0 %v98
    %v104 = vpop.xlane.xlu0 %103
    %105 = vmin.xlane.f32.xlu0 %v99
    %v106 = vpop.xlane.xlu0 %105
    %107 = vmin.xlane.f32.xlu0 %v100
    %v108 = vpop.xlane.xlu0 %107
    %vm109 = vcmp.le.f32.partialorder %v97, %v102
    %vm110 = vcmp.le.f32.partialorder %v98, %v104
    %vm111 = vcmp.le.f32.partialorder %v99, %v106
    %vm112 = vcmp.le.f32.partialorder %v100, %v108
    %v113 = vsel %vm109, %v95, 64
    %v114 = vsel %vm110, %v95, 64
    %v115 = vsel %vm111, %v95, 64
    %v116 = vsel %vm112, %v95, 64
    %v117 = vand.u32 %v113, 65535
    %v118 = vshra.s32 %v113, 16
    %v119 = vcvt.s32.f32 %v117
    %v120 = vcvt.s32.f32 %v118
    %121 = vmin.xlane.f32.xlu0 %v120
    %v122 = vpop.xlane.xlu0 %121
    %vm123 = vcmp.eq.f32.partialorder %v120, %v122
    %v124 = vsel %vm123, %v119, inf
    %125 = vmin.xlane.f32.xlu0 %v124
    %v126 = vpop.xlane.xlu0 %125
    %v127 = vcvt.f32.s32 %v126
    %v128 = vcvt.f32.s32 %v122
    %v129 = vshll.u32 %v128, 16
    %v130 = vadd.s32 %v129, %v127
    %v131 = vand.u32 %v114, 65535
    %v132 = vshra.s32 %v114, 16
    %v133 = vcvt.s32.f32 %v131
    %v134 = vcvt.s32.f32 %v132
    %135 = vmin.xlane.f32.xlu0 %v134
    %v136 = vpop.xlane.xlu0 %135
    %vm137 = vcmp.eq.f32.partialorder %v134, %v136
    %v138 = vsel %vm137, %v133, inf
    %139 = vmin.xlane.f32.xlu0 %v138
    %v140 = vpop.xlane.xlu0 %139
    %v141 = vcvt.f32.s32 %v140
    %v142 = vcvt.f32.s32 %v136
    %v143 = vshll.u32 %v142, 16
    %v144 = vadd.s32 %v143, %v141
    %v145 = vand.u32 %v115, 65535
    %v146 = vshra.s32 %v115, 16
    %v147 = vcvt.s32.f32 %v145
    %v148 = vcvt.s32.f32 %v146
    %149 = vmin.xlane.f32.xlu0 %v148
    %v150 = vpop.xlane.xlu0 %149
    %vm151 = vcmp.eq.f32.partialorder %v148, %v150
    %v152 = vsel %vm151, %v147, inf
    %153 = vmin.xlane.f32.xlu0 %v152
    %v154 = vpop.xlane.xlu0 %153
    %v155 = vcvt.f32.s32 %v154
    %v156 = vcvt.f32.s32 %v150
    %v157 = vshll.u32 %v156, 16
    %v158 = vadd.s32 %v157, %v155
    %v159 = vand.u32 %v116, 65535
    %v160 = vshra.s32 %v116, 16
    %v161 = vcvt.s32.f32 %v159
    %v162 = vcvt.s32.f32 %v160
    %163 = vmin.xlane.f32.xlu0 %v162
    %v164 = vpop.xlane.xlu0 %163
    %vm165 = vcmp.eq.f32.partialorder %v162, %v164
    %v166 = vsel %vm165, %v161, inf
    %167 = vmin.xlane.f32.xlu0 %v166
    %v168 = vpop.xlane.xlu0 %167
    %v169 = vcvt.f32.s32 %v168
    %v170 = vcvt.f32.s32 %v164
    %v171 = vshll.u32 %v170, 16
    %v172 = vadd.s32 %v171, %v169
    %vm173 = vcmask 7168
    %174 = vst.msk [vmem:[#allocation2] sm:$0xff] %vm173, %v130
    %175 = vst.msk [vmem:[#allocation2 + $0x8] sm:$0xff] %vm173, %v144
    %176 = vst.msk [vmem:[#allocation2 + $0x10] sm:$0xff] %vm173, %v158
    %177 = vst.msk [vmem:[#allocation2 + $0x18] sm:$0xff] %vm173, %v172
    %vm178 = vcmp.eq.s32.totalorder %v95, %v130
    %vm179 = vcmp.eq.s32.totalorder %v95, %v144
    %vm180 = vcmp.eq.s32.totalorder %v95, %v158
    %vm181 = vcmp.eq.s32.totalorder %v95, %v172
    %v182 = vsel %vm178, 1, 0
    %v183 = vsel %vm179, 1, 0
    %v184 = vsel %vm180, 1, 0
    %v185 = vsel %vm181, 1, 0
    %v186 = vcvt.s32.f32 %v182
    %v187 = vcvt.s32.f32 %v183
    %v188 = vcvt.s32.f32 %v184
    %v189 = vcvt.s32.f32 %v185
    %190 = vmatpush.msra.mxu0 %v36
    %191 = vmatpush.msra.mxu0 %v35
    %192 = vmatpush.msra.mxu0 %v34
    %193 = vmatpush.msra.mxu0 %v33
    %194 = vmatpush.msra.mxu0 %v32
    %195 = vmatpush.msra.mxu0 %v31
    %196 = vmatpush.msra.mxu0 %v30
    %197 = vmatpush.msra.mxu0 %v29
    %198 = vmatpush.msra.mxu0 %v28
    %199 = vmatpush.msra.mxu0 %v27
    %200 = vmatpush.msra.mxu0 %v26
    %201 = vmatpush.msra.mxu0 %v25
    %202 = vmatpush.msra.mxu0 %v24
    %203 = vmatpush.msra.mxu0 %v23
    %204 = vmatpush.msra.mxu0 %v22
    %205 = vmatpush.msra.mxu0 %v21
    %206 = vmatmul.f32.gmra.mxu0 %v186
    %v207 = vpop.f32.mrf.mxu0
    %v208 = vadd.f32 0.0, %v207
    %209 = vmatmul.f32.gmra.mxu0 %v187
    %v210 = vpop.f32.mrf.mxu0
    %v211 = vadd.f32 0.0, %v210
    %212 = vmatmul.f32.gmra.mxu0 %v188
    %v213 = vpop.f32.mrf.mxu0
    %v214 = vadd.f32 0.0, %v213
    %215 = vmatmul.f32.gmra.mxu0 %v189
    %v216 = vpop.f32.mrf.mxu0
    %v217 = vadd.f32 0.0, %v216
    %218 = vdwg.mxu0
    %219 = vst [vmem:[%s4] sm:$0xff] %v208
    %220 = vst [vmem:[%s4 + $0x8] sm:$0xff] %v211
    %221 = vst [vmem:[%s4 + $0x10] sm:$0xff] %v214
    %222 = vst [vmem:[%s4 + $0x18] sm:$0xff] %v217
    // Predicated region
    $region14: #{vqvae_forward.27} parent=1 // pred_check
      _
    $region15: #{vqvae_forward.27} parent=1 // pred_check_branch
      %224 = sbr.rel (0) target = $region17
    $region16: #{vqvae_forward.27} parent=1 // pred_region
      %226 = vsyncadd [#allocation3], 0
      %s227 = sshll.u32 [#allocation2], 4
      %s228 = int_to_ptr.vmem [resolvable:$true] %s227
      %s229 = sshll.u32 %s3, 4
      %s230 = int_to_ptr.hbm [resolvable:$true] %s229
      %235 = dma.vmem_to_hbm [thread:$0]  %s228, 512, %s230, [#allocation3], 128, 128, 8
    $region17: #{vqvae_forward.27} parent=1 // pred_fallthru
      _
    // Predicated region
    $region18: #{vqvae_forward.27} parent=1 // pred_check
      _
    $region19: #{vqvae_forward.27} parent=1 // pred_check_branch
      %237 = sbr.rel (0) target = $region21
    $region20: #{vqvae_forward.27} parent=1 // pred_region
      _
    $region21: #{vqvae_forward.27} parent=1 // pred_fallthru
      _
    // Predicated region
    $region22: #{vqvae_forward.27} parent=1 // pred_check
      _
    $region23: #{vqvae_forward.27} parent=1 // pred_check_branch
      %239 = sbr.rel (0) target = $region25
    $region24: #{vqvae_forward.27} parent=1 // pred_region
      %241 = dma.done [#allocation3], 512
    $region25: #{vqvae_forward.27} parent=1 // pred_fallthru
      _
    // Predicated region
    $region26: #{vqvae_forward.27} parent=1 // pred_check
      _
    $region27: #{vqvae_forward.27} parent=1 // pred_check_branch
      %243 = sbr.rel (0) target = $region29
    $region28: #{vqvae_forward.27} parent=1 // pred_region
      _
    $region29: #{vqvae_forward.27} parent=1 // pred_fallthru
      _
    %244 = vsyncpa [#allocation3], 1

// kernel: tile.13
$region0: #{tile.13}
  #allocation0 [shape = 's32[1]{0}', space=sflag, size = 0x4, scoped, tag = 'scoped memory for tile.13']
  %s0 = inlined_call_operand.vmem [shape: f32[128], index: 0, kind: input, shape index: {}]
  %s1 = inlined_call_operand.vmem [shape: f32[4,128], index: 1, kind: output, shape index: {}]
  // Predicated region
  $region2: #{tile.13} parent=0 // pred_check
    _
  $region3: #{tile.13} parent=0 // pred_check_branch
    %3 = sbr.rel (0) target = $region5
  $region4: #{tile.13} parent=0 // pred_region
    _
  $region5: #{tile.13} parent=0 // pred_fallthru
    _
  %v4 = vld [vmem:[%s0] ss:$0 sm:$0xff]
  %5 = vst [vmem:[%s1] sm:$0xf] %v4

// kernel: vqvae_forward.35
$region0: #{vqvae_forward.35}
  #allocation0 [shape = 'u32[]', space=smem, size = 0x4, offset = 0x4, fixed_abs, tag = 'smem constant byte address 0x4 - core index']
  #allocation1 [shape = 'u32[72,128]{1,0:T(1,128)}', space=vmem, size = 0x9000, scoped, tag = 'internal scratch']
  #allocation2 [shape = 'f32[32,256]{1,0:T(8,128)}', space=vmem, size = 0x8000, scoped, tag = 'scratch operand']
  %s0 = inlined_call_operand.vmem [shape: bf16[32,1152], index: 0, kind: input, shape index: {}]
  %s1 = inlined_call_operand.vmem [shape: bf16[1152,512], index: 1, kind: input, shape index: {}]
  %s2 = inlined_call_operand.vmem [shape: f32[1,512], index: 2, kind: input, shape index: {}]
  %s3 = inlined_call_operand.vmem [shape: f32[32,512], index: 3, kind: output, shape index: {}]
  %s4 = sld [smem:[#allocation0]]
  $region136: #{vqvae_forward.35} parent=0
    _
  %s6 = ssub.s32 1, %s4
  %s7 = scalar_select 0, %s6, %s4
  $region1: #{vqvae_forward.35} parent=0
    #allocation3 [shape = 'u8[49152]{0}', space=vmem, size = 0xc000, scoped, tag = 'input window, operand 0']
    #allocation4 [shape = 'u8[393216]{0}', space=vmem, size = 0x60000, scoped, tag = 'input window, operand 1']
    #allocation5 [shape = 'u8[65536]{0}', space=vmem, size = 0x10000, scoped, tag = 'output window, operand 0']
    loop: start=0, step=1, limit=8
    $region2: #{vqvae_forward.35} parent=1 // loop_pre_header
      _
    $region3: #{vqvae_forward.35} parent=1 // loop_header
      %s9 = sphi 0, %s13
      %p10 = scmp.ge.s32.totalorder %s9, 8
      %s16 = sphi 0, %s35
      %s17 = sphi 0, %s31
      %s18 = sphi 0, %s27
      %s19 = sphi 0, %s16
      %s20 = sphi 0, %s17
      %s21 = sphi 0, %s18
      %s22 = sphi 0, %s19
      %s23 = sphi 0, %s20
      %s24 = sphi 0, %s21
      %s40 = sphi 0, %s42
      %s43 = sphi 0, %s40
      %s44 = sphi 0, %s43
      %s60 = sphi 0, %s44
      %s68 = sphi 0, %s70
      %s71 = sphi 0, %s68
      %s72 = sphi 0, %s71
      %s88 = sphi 0, %s72
      %s94 = sphi 0, %s96
      %s97 = sphi 0, %s94
      %s98 = sphi 0, %s97
      %s114 = sphi 0, %s98
      %s122 = sphi 0, %s124
      %s125 = sphi 0, %s122
      %s126 = sphi 0, %s125
      %s142 = sphi 0, %s126
    $region4: #{vqvae_forward.35} parent=1 // loop_header_branch
      %12 = sbr.rel (%p10) target = $region8
    $region5: #{vqvae_forward.35} parent=1 // loop_body
      %s14 = ssub.s32 %s9, 1
      %s15 = ssub.s32 %s9, 2
      %s25 = sadd.s32 1, %s18
      %p26 = scmp.ge.s32.totalorder %s25, 3
      %s27 = scalar_select %p26, 0, %s25
      %s28 = sadd.s32 1, %s17
      %s29 = scalar_select %p26, %s28, %s17
      %p30 = scmp.ge.s32.totalorder %s29, 2
      %s31 = scalar_select %p30, 0, %s29
      %s32 = sadd.s32 1, %s16
      %s33 = scalar_select %p30, %s32, %s16
      %p34 = scmp.ge.s32.totalorder %s33, 1
      %s35 = scalar_select %p34, 0, %s33
      %s36 = ssub.s32 %s16, %s35
      %s37 = ssub.s32 %s18, %s27
      %s38 = sor.u32 %s36, %s37
      %p39 = scmp.eq.s32.totalorder %s38, 0
      %s41 = sadd.s32 %s40, 1
      %s42 = scalar_select %p39, %s40, %s41
      %p45 = pneg %p39
      %p46 = scmp.eq.s32.totalorder %s9, 5
      %p47 = por %p45, %p46
      %p48 = scmp.ne.s32.totalorder %s40, %s43
      %p49 = scmp.eq.s32.totalorder %s9, 0
      %p50 = por %p48, %p49
      %p51 = scmp.ne.s32.totalorder %s40, %s43
      %p52 = scmp.eq.s32.totalorder %s14, 5
      %p53 = por %p51, %p52
      %p54 = scmp.ne.s32.totalorder %s43, %s44
      %p55 = scmp.eq.s32.totalorder %s14, 0
      %p56 = por %p54, %p55
      %p57 = scmp.ne.s32.totalorder %s43, %s44
      %p58 = scmp.eq.s32.totalorder %s15, 5
      %p59 = por %p57, %p58
      %p61 = scmp.ne.s32.totalorder %s44, %s60
      %p62 = scmp.eq.s32.totalorder %s15, 0
      %p63 = por %p61, %p62
      %s64 = ssub.s32 %s18, %s27
      %s65 = ssub.s32 %s17, %s31
      %s66 = sor.u32 %s64, %s65
      %p67 = scmp.eq.s32.totalorder %s66, 0
      %s69 = sadd.s32 %s68, 1
      %s70 = scalar_select %p67, %s68, %s69
      %p73 = pneg %p67
      %p74 = scmp.eq.s32.totalorder %s9, 5
      %p75 = por %p73, %p74
      %p76 = scmp.ne.s32.totalorder %s68, %s71
      %p77 = scmp.eq.s32.totalorder %s9, 0
      %p78 = por %p76, %p77
      %p79 = scmp.ne.s32.totalorder %s68, %s71
      %p80 = scmp.eq.s32.totalorder %s14, 5
      %p81 = por %p79, %p80
      %p82 = scmp.ne.s32.totalorder %s71, %s72
      %p83 = scmp.eq.s32.totalorder %s14, 0
      %p84 = por %p82, %p83
      %p85 = scmp.ne.s32.totalorder %s71, %s72
      %p86 = scmp.eq.s32.totalorder %s15, 5
      %p87 = por %p85, %p86
      %p89 = scmp.ne.s32.totalorder %s72, %s88
      %p90 = scmp.eq.s32.totalorder %s15, 0
      %p91 = por %p89, %p90
      %s92 = ssub.s32 %s17, %s31
      %p93 = scmp.eq.s32.totalorder %s92, 0
      %s95 = sadd.s32 %s94, 1
      %s96 = scalar_select %p93, %s94, %s95
      %p99 = pneg %p93
      %p100 = scmp.eq.s32.totalorder %s9, 5
      %p101 = por %p99, %p100
      %p102 = scmp.ne.s32.totalorder %s94, %s97
      %p103 = scmp.eq.s32.totalorder %s9, 0
      %p104 = por %p102, %p103
      %p105 = scmp.ne.s32.totalorder %s94, %s97
      %p106 = scmp.eq.s32.totalorder %s14, 5
      %p107 = por %p105, %p106
      %p108 = scmp.ne.s32.totalorder %s97, %s98
      %p109 = scmp.eq.s32.totalorder %s14, 0
      %p110 = por %p108, %p109
      %p111 = scmp.ne.s32.totalorder %s97, %s98
      %p112 = scmp.eq.s32.totalorder %s15, 5
      %p113 = por %p111, %p112
      %p115 = scmp.ne.s32.totalorder %s98, %s114
      %p116 = scmp.eq.s32.totalorder %s15, 0
      %p117 = por %p115, %p116
      %s118 = ssub.s32 %s16, %s35
      %s119 = ssub.s32 %s17, %s31
      %s120 = sor.u32 %s118, %s119
      %p121 = scmp.eq.s32.totalorder %s120, 0
      %s123 = sadd.s32 %s122, 1
      %s124 = scalar_select %p121, %s122, %s123
      %p127 = pneg %p121
      %p128 = scmp.eq.s32.totalorder %s9, 5
      %p129 = por %p127, %p128
      %p130 = scmp.ne.s32.totalorder %s122, %s125
      %p131 = scmp.eq.s32.totalorder %s9, 0
      %p132 = por %p130, %p131
      %p133 = scmp.ne.s32.totalorder %s122, %s125
      %p134 = scmp.eq.s32.totalorder %s14, 5
      %p135 = por %p133, %p134
      %p136 = scmp.ne.s32.totalorder %s125, %s126
      %p137 = scmp.eq.s32.totalorder %s14, 0
      %p138 = por %p136, %p137
      %p139 = scmp.ne.s32.totalorder %s125, %s126
      %p140 = scmp.eq.s32.totalorder %s15, 5
      %p141 = por %p139, %p140
      %p143 = scmp.ne.s32.totalorder %s126, %s142
      %p144 = scmp.eq.s32.totalorder %s15, 0
      %p145 = por %p143, %p144
      %p146 = scmp.le.s32.totalorder 1, %s9
      %p147 = scmp.lt.s32.totalorder %s9, 7
      %p148 = pnand %p146, %p147
      %p149 = pneg %p148
      // Predicated region
      $region9: #{vqvae_forward.35} parent=5 // pred_check
        _
      $region10: #{vqvae_forward.35} parent=5 // pred_check_branch
        %151 = sbr.rel (%p148) target = $region12
      $region11: #{vqvae_forward.35} parent=5 // pred_region
        %s152 = ssub.s32 %s9, 1
      $region12: #{vqvae_forward.35} parent=5 // pred_fallthru
        _
      %p153 = scmp.lt.s32.totalorder %s9, 6
      // Predicated region
      $region13: #{vqvae_forward.35} parent=5 // pred_check
        %p154 = pneg %p153
      $region14: #{vqvae_forward.35} parent=5 // pred_check_branch
        %156 = sbr.rel (%p154) target = $region16
      $region15: #{vqvae_forward.35} parent=5 // pred_region
        // Predicated region
        $region17: #{vqvae_forward.35} parent=15 // pred_check
          %p157 = pneg %p50
        $region18: #{vqvae_forward.35} parent=15 // pred_check_branch
          %159 = sbr.rel (%p157) target = $region20
        $region19: #{vqvae_forward.35} parent=15 // pred_region
          %s160 = sand.u32 %s40, 1
          %s161 = sand.u32 %s40, 1
          %s162 = smul.addr %s161, 48
          %s163 = scalar_lea.vmem [#allocation3], %s162
          %s164 = smul.u32 4, %s16
          %s165 = smul.u32 3, %s18
          %s166 = smul.addr %s164, 9
          %s167 = sadd.s32 %s165, %s166
          %s168 = smul.addr %s167, 4
          %s169 = scalar_lea.vmem %s0, %s168
          // Predicated region
          $region21: #{vqvae_forward.35} parent=19 // pred_check
            _
          $region22: #{vqvae_forward.35} parent=19 // pred_check_branch
            %171 = sbr.rel (0) target = $region24
          $region23: #{vqvae_forward.35} parent=19 // pred_region
            // Predicated region
            $region25: #{vqvae_forward.35} parent=23 // pred_check
              _
            $region26: #{vqvae_forward.35} parent=23 // pred_check_branch
              %173 = sbr.rel (0) target = $region28
            $region27: #{vqvae_forward.35} parent=23 // pred_region
              %s174 = scalar_lea.vmem %s169, 8
              %s175 = scalar_lea.vmem %s163, 8 [#allocation3]
              loop: start=0, step=1, limit=1
              $region29: #{vqvae_forward.35} parent=27 // loop_pre_header
                _
              $region30: #{vqvae_forward.35} parent=27 // loop_header
                %s177 = sphi 0, %s181
                %p178 = scmp.ge.s32.totalorder %s177, 1
                %s182 = sphi %s169, %s169
                %s183 = sphi %s163, %s163
              $region31: #{vqvae_forward.35} parent=27 // loop_header_branch
                %180 = sbr.rel (%p178) target = $region35
              $region32: #{vqvae_forward.35} parent=27 // loop_body
                %v184 = vld [vmem:[%s182] sm:$0xff]
                %185 = vst [vmem:[%s183] sm:$0xff] %v184
                %v186 = vld [vmem:[%s182 + $0x24] sm:$0xff]
                %187 = vst [vmem:[%s183 + $0xc] sm:$0xff] %v186
                %v188 = vld [vmem:[%s182 + $0x48] sm:$0xff]
                %189 = vst [vmem:[%s183 + $0x18] sm:$0xff] %v188
                %v190 = vld [vmem:[%s182 + $0x6c] sm:$0xff]
                %191 = vst [vmem:[%s183 + $0x24] sm:$0xff] %v190
              $region33: #{vqvae_forward.35} parent=27 // loop_footer
                %s181 = sadd.s32 1, %s177
              $region34: #{vqvae_forward.35} parent=27 // loop_footer_branch
                %176 = sbr.rel target = $region30
              $region35: #{vqvae_forward.35} parent=27 // loop_exit
                _
              %s193 = ssub.s32 16, 1
              loop: start=0, step=1, limit=1
              $region36: #{vqvae_forward.35} parent=27 // loop_pre_header
                _
              $region37: #{vqvae_forward.35} parent=27 // loop_header
                %s195 = sphi 0, %s199
                %p196 = scmp.ge.s32.totalorder %s195, 1
                %s200 = sphi %s174, %s174
                %s201 = sphi %s175, %s175
              $region38: #{vqvae_forward.35} parent=27 // loop_header_branch
                %198 = sbr.rel (%p196) target = $region42
              $region39: #{vqvae_forward.35} parent=27 // loop_body
                %v202 = vld [vmem:[%s200] sm:%s193]
                %203 = vst [vmem:[%s201] sm:%s193] %v202
                %v204 = vld [vmem:[%s200 + $0x24] sm:%s193]
                %205 = vst [vmem:[%s201 + $0xc] sm:%s193] %v204
                %v206 = vld [vmem:[%s200 + $0x48] sm:%s193]
                %207 = vst [vmem:[%s201 + $0x18] sm:%s193] %v206
                %v208 = vld [vmem:[%s200 + $0x6c] sm:%s193]
                %209 = vst [vmem:[%s201 + $0x24] sm:%s193] %v208
              $region40: #{vqvae_forward.35} parent=27 // loop_footer
                %s199 = sadd.s32 1, %s195
              $region41: #{vqvae_forward.35} parent=27 // loop_footer_branch
                %194 = sbr.rel target = $region37
              $region42: #{vqvae_forward.35} parent=27 // loop_exit
                _
            $region28: #{vqvae_forward.35} parent=23 // pred_fallthru
              _
          $region24: #{vqvae_forward.35} parent=19 // pred_fallthru
            _
          %210 = vnop
        $region20: #{vqvae_forward.35} parent=15 // pred_fallthru
          _
        // Predicated region
        $region43: #{vqvae_forward.35} parent=15 // pred_check
          %p211 = pneg %p78
        $region44: #{vqvae_forward.35} parent=15 // pred_check_branch
          %213 = sbr.rel (%p211) target = $region46
        $region45: #{vqvae_forward.35} parent=15 // pred_region
          %s214 = sand.u32 %s68, 1
          %s215 = sand.u32 %s68, 1
          %s216 = smul.addr %s215, 384
          %s217 = scalar_lea.vmem [#allocation4], %s216
          %s218 = smul.u32 48, %s18
          %s219 = smul.u32 2, %s17
          %s220 = smul.addr %s218, 4
          %s221 = sadd.s32 %s219, %s220
          %s222 = smul.addr %s221, 4
          %s223 = scalar_lea.vmem %s1, %s222
          // Predicated region
          $region47: #{vqvae_forward.35} parent=45 // pred_check
            _
          $region48: #{vqvae_forward.35} parent=45 // pred_check_branch
            %225 = sbr.rel (0) target = $region50
          $region49: #{vqvae_forward.35} parent=45 // pred_region
            // Predicated region
            $region51: #{vqvae_forward.35} parent=49 // pred_check
              _
            $region52: #{vqvae_forward.35} parent=49 // pred_check_branch
              %227 = sbr.rel (0) target = $region54
            $region53: #{vqvae_forward.35} parent=49 // pred_region
              // Predicated region
              $region66: #{vqvae_forward.35} parent=53 // pred_check
                _
              $region67: #{vqvae_forward.35} parent=53 // pred_check_branch
                %337 = sbr.rel (0) target = $region69
              $region68: #{vqvae_forward.35} parent=53 // pred_region
                loop: start=0, step=1, limit=1
                $region70: #{vqvae_forward.35} parent=68 // loop_pre_header
                  _
                $region71: #{vqvae_forward.35} parent=68 // loop_header
                  %s339 = sphi 0, %s343
                  %p340 = scmp.ge.s32.totalorder %s339, 1
                  %s344 = sphi %s223, %s223
                  %s345 = sphi %s217, %s217
                $region72: #{vqvae_forward.35} parent=68 // loop_header_branch
                  %342 = sbr.rel (%p340) target = $region76
                $region73: #{vqvae_forward.35} parent=68 // loop_body
                  %v346 = vld [vmem:[%s344] sm:$0xff]
                  %347 = vst [vmem:[%s345] sm:$0xff] %v346
                  %v348 = vld [vmem:[%s344 + $0x10] sm:$0xff]
                  %349 = vst [vmem:[%s345 + $0x8] sm:$0xff] %v348
                  %v350 = vld [vmem:[%s344 + $0x20] sm:$0xff]
                  %351 = vst [vmem:[%s345 + $0x10] sm:$0xff] %v350
                  %v352 = vld [vmem:[%s344 + $0x30] sm:$0xff]
                  %353 = vst [vmem:[%s345 + $0x18] sm:$0xff] %v352
                  %v354 = vld [vmem:[%s344 + $0x40] sm:$0xff]
                  %355 = vst [vmem:[%s345 + $0x20] sm:$0xff] %v354
                  %v356 = vld [vmem:[%s344 + $0x50] sm:$0xff]
                  %357 = vst [vmem:[%s345 + $0x28] sm:$0xff] %v356
                  %v358 = vld [vmem:[%s344 + $0x60] sm:$0xff]
                  %359 = vst [vmem:[%s345 + $0x30] sm:$0xff] %v358
                  %v360 = vld [vmem:[%s344 + $0x70] sm:$0xff]
                  %361 = vst [vmem:[%s345 + $0x38] sm:$0xff] %v360
                  %v362 = vld [vmem:[%s344 + $0x80] sm:$0xff]
                  %363 = vst [vmem:[%s345 + $0x40] sm:$0xff] %v362
                  %v364 = vld [vmem:[%s344 + $0x90] sm:$0xff]
                  %365 = vst [vmem:[%s345 + $0x48] sm:$0xff] %v364
                  %v366 = vld [vmem:[%s344 + $0xa0] sm:$0xff]
                  %367 = vst [vmem:[%s345 + $0x50] sm:$0xff] %v366
                  %v368 = vld [vmem:[%s344 + $0xb0] sm:$0xff]
                  %369 = vst [vmem:[%s345 + $0x58] sm:$0xff] %v368
                  %v370 = vld [vmem:[%s344 + $0xc0] sm:$0xff]
                  %371 = vst [vmem:[%s345 + $0x60] sm:$0xff] %v370
                  %v372 = vld [vmem:[%s344 + $0xd0] sm:$0xff]
                  %373 = vst [vmem:[%s345 + $0x68] sm:$0xff] %v372
                  %v374 = vld [vmem:[%s344 + $0xe0] sm:$0xff]
                  %375 = vst [vmem:[%s345 + $0x70] sm:$0xff] %v374
                  %v376 = vld [vmem:[%s344 + $0xf0] sm:$0xff]
                  %377 = vst [vmem:[%s345 + $0x78] sm:$0xff] %v376
                  %v378 = vld [vmem:[%s344 + $0x100] sm:$0xff]
                  %379 = vst [vmem:[%s345 + $0x80] sm:$0xff] %v378
                  %v380 = vld [vmem:[%s344 + $0x110] sm:$0xff]
                  %381 = vst [vmem:[%s345 + $0x88] sm:$0xff] %v380
                  %v382 = vld [vmem:[%s344 + $0x120] sm:$0xff]
                  %383 = vst [vmem:[%s345 + $0x90] sm:$0xff] %v382
                  %v384 = vld [vmem:[%s344 + $0x130] sm:$0xff]
                  %385 = vst [vmem:[%s345 + $0x98] sm:$0xff] %v384
                  %v386 = vld [vmem:[%s344 + $0x140] sm:$0xff]
                  %387 = vst [vmem:[%s345 + $0xa0] sm:$0xff] %v386
                  %v388 = vld [vmem:[%s344 + $0x150] sm:$0xff]
                  %389 = vst [vmem:[%s345 + $0xa8] sm:$0xff] %v388
                  %v390 = vld [vmem:[%s344 + $0x160] sm:$0xff]
                  %391 = vst [vmem:[%s345 + $0xb0] sm:$0xff] %v390
                  %v392 = vld [vmem:[%s344 + $0x170] sm:$0xff]
                  %393 = vst [vmem:[%s345 + $0xb8] sm:$0xff] %v392
                  %v394 = vld [vmem:[%s344 + $0x180] sm:$0xff]
                  %395 = vst [vmem:[%s345 + $0xc0] sm:$0xff] %v394
                  %v396 = vld [vmem:[%s344 + $0x190] sm:$0xff]
                  %397 = vst [vmem:[%s345 + $0xc8] sm:$0xff] %v396
                  %v398 = vld [vmem:[%s344 + $0x1a0] sm:$0xff]
                  %399 = vst [vmem:[%s345 + $0xd0] sm:$0xff] %v398
                  %v400 = vld [vmem:[%s344 + $0x1b0] sm:$0xff]
                  %401 = vst [vmem:[%s345 + $0xd8] sm:$0xff] %v400
                  %v402 = vld [vmem:[%s344 + $0x1c0] sm:$0xff]
                  %403 = vst [vmem:[%s345 + $0xe0] sm:$0xff] %v402
                  %v404 = vld [vmem:[%s344 + $0x1d0] sm:$0xff]
                  %405 = vst [vmem:[%s345 + $0xe8] sm:$0xff] %v404
                  %v406 = vld [vmem:[%s344 + $0x1e0] sm:$0xff]
                  %407 = vst [vmem:[%s345 + $0xf0] sm:$0xff] %v406
                  %v408 = vld [vmem:[%s344 + $0x1f0] sm:$0xff]
                  %409 = vst [vmem:[%s345 + $0xf8] sm:$0xff] %v408
                  %v410 = vld [vmem:[%s344 + $0x200] sm:$0xff]
                  %411 = vst [vmem:[%s345 + $0x100] sm:$0xff] %v410
                  %v412 = vld [vmem:[%s344 + $0x210] sm:$0xff]
                  %413 = vst [vmem:[%s345 + $0x108] sm:$0xff] %v412
                  %v414 = vld [vmem:[%s344 + $0x220] sm:$0xff]
                  %415 = vst [vmem:[%s345 + $0x110] sm:$0xff] %v414
                  %v416 = vld [vmem:[%s344 + $0x230] sm:$0xff]
                  %417 = vst [vmem:[%s345 + $0x118] sm:$0xff] %v416
                  %v418 = vld [vmem:[%s344 + $0x240] sm:$0xff]
                  %419 = vst [vmem:[%s345 + $0x120] sm:$0xff] %v418
                  %v420 = vld [vmem:[%s344 + $0x250] sm:$0xff]
                  %421 = vst [vmem:[%s345 + $0x128] sm:$0xff] %v420
                  %v422 = vld [vmem:[%s344 + $0x260] sm:$0xff]
                  %423 = vst [vmem:[%s345 + $0x130] sm:$0xff] %v422
                  %v424 = vld [vmem:[%s344 + $0x270] sm:$0xff]
                  %425 = vst [vmem:[%s345 + $0x138] sm:$0xff] %v424
                  %v426 = vld [vmem:[%s344 + $0x280] sm:$0xff]
                  %427 = vst [vmem:[%s345 + $0x140] sm:$0xff] %v426
                  %v428 = vld [vmem:[%s344 + $0x290] sm:$0xff]
                  %429 = vst [vmem:[%s345 + $0x148] sm:$0xff] %v428
                  %v430 = vld [vmem:[%s344 + $0x2a0] sm:$0xff]
                  %431 = vst [vmem:[%s345 + $0x150] sm:$0xff] %v430
                  %v432 = vld [vmem:[%s344 + $0x2b0] sm:$0xff]
                  %433 = vst [vmem:[%s345 + $0x158] sm:$0xff] %v432
                  %v434 = vld [vmem:[%s344 + $0x2c0] sm:$0xff]
                  %435 = vst [vmem:[%s345 + $0x160] sm:$0xff] %v434
                  %v436 = vld [vmem:[%s344 + $0x2d0] sm:$0xff]
                  %437 = vst [vmem:[%s345 + $0x168] sm:$0xff] %v436
                  %v438 = vld [vmem:[%s344 + $0x2e0] sm:$0xff]
                  %439 = vst [vmem:[%s345 + $0x170] sm:$0xff] %v438
                  %v440 = vld [vmem:[%s344 + $0x2f0] sm:$0xff]
                  %441 = vst [vmem:[%s345 + $0x178] sm:$0xff] %v440
                $region74: #{vqvae_forward.35} parent=68 // loop_footer
                  %s343 = sadd.s32 1, %s339
                $region75: #{vqvae_forward.35} parent=68 // loop_footer_branch
                  %338 = sbr.rel target = $region71
                $region76: #{vqvae_forward.35} parent=68 // loop_exit
                  _
              $region69: #{vqvae_forward.35} parent=53 // pred_fallthru
                _
              // Predicated region
              $region77: #{vqvae_forward.35} parent=53 // pred_check
                _
              $region78: #{vqvae_forward.35} parent=53 // pred_check_branch
                %443 = sbr.rel target = $region80
              $region79: #{vqvae_forward.35} parent=53 // pred_region
                _
              $region80: #{vqvae_forward.35} parent=53 // pred_fallthru
                _
            $region54: #{vqvae_forward.35} parent=49 // pred_fallthru
              _
            // Predicated region
            $region55: #{vqvae_forward.35} parent=49 // pred_check
              _
            $region56: #{vqvae_forward.35} parent=49 // pred_check_branch
              %229 = sbr.rel target = $region58
            $region57: #{vqvae_forward.35} parent=49 // pred_region
              %s231 = ssub.s32 256, 1
              loop: start=0, step=1, limit=1
              $region59: #{vqvae_forward.35} parent=57 // loop_pre_header
                _
              $region60: #{vqvae_forward.35} parent=57 // loop_header
                %s233 = sphi 0, %s237
                %p234 = scmp.ge.s32.totalorder %s233, 1
                %s238 = sphi %s223, %s223
                %s239 = sphi %s217, %s217
              $region61: #{vqvae_forward.35} parent=57 // loop_header_branch
                %236 = sbr.rel (%p234) target = $region65
              $region62: #{vqvae_forward.35} parent=57 // loop_body
                %v240 = vld [vmem:[%s238] sm:%s231]
                %241 = vst [vmem:[%s239] sm:%s231] %v240
                %v242 = vld [vmem:[%s238 + $0x10] sm:%s231]
                %243 = vst [vmem:[%s239 + $0x8] sm:%s231] %v242
                %v244 = vld [vmem:[%s238 + $0x20] sm:%s231]
                %245 = vst [vmem:[%s239 + $0x10] sm:%s231] %v244
                %v246 = vld [vmem:[%s238 + $0x30] sm:%s231]
                %247 = vst [vmem:[%s239 + $0x18] sm:%s231] %v246
                %v248 = vld [vmem:[%s238 + $0x40] sm:%s231]
                %249 = vst [vmem:[%s239 + $0x20] sm:%s231] %v248
                %v250 = vld [vmem:[%s238 + $0x50] sm:%s231]
                %251 = vst [vmem:[%s239 + $0x28] sm:%s231] %v250
                %v252 = vld [vmem:[%s238 + $0x60] sm:%s231]
                %253 = vst [vmem:[%s239 + $0x30] sm:%s231] %v252
                %v254 = vld [vmem:[%s238 + $0x70] sm:%s231]
                %255 = vst [vmem:[%s239 + $0x38] sm:%s231] %v254
                %v256 = vld [vmem:[%s238 + $0x80] sm:%s231]
                %257 = vst [vmem:[%s239 + $0x40] sm:%s231] %v256
                %v258 = vld [vmem:[%s238 + $0x90] sm:%s231]
                %259 = vst [vmem:[%s239 + $0x48] sm:%s231] %v258
                %v260 = vld [vmem:[%s238 + $0xa0] sm:%s231]
                %261 = vst [vmem:[%s239 + $0x50] sm:%s231] %v260
                %v262 = vld [vmem:[%s238 + $0xb0] sm:%s231]
                %263 = vst [vmem:[%s239 + $0x58] sm:%s231] %v262
                %v264 = vld [vmem:[%s238 + $0xc0] sm:%s231]
                %265 = vst [vmem:[%s239 + $0x60] sm:%s231] %v264
                %v266 = vld [vmem:[%s238 + $0xd0] sm:%s231]
                %267 = vst [vmem:[%s239 + $0x68] sm:%s231] %v266
                %v268 = vld [vmem:[%s238 + $0xe0] sm:%s231]
                %269 = vst [vmem:[%s239 + $0x70] sm:%s231] %v268
                %v270 = vld [vmem:[%s238 + $0xf0] sm:%s231]
                %271 = vst [vmem:[%s239 + $0x78] sm:%s231] %v270
                %v272 = vld [vmem:[%s238 + $0x100] sm:%s231]
                %273 = vst [vmem:[%s239 + $0x80] sm:%s231] %v272
                %v274 = vld [vmem:[%s238 + $0x110] sm:%s231]
                %275 = vst [vmem:[%s239 + $0x88] sm:%s231] %v274
                %v276 = vld [vmem:[%s238 + $0x120] sm:%s231]
                %277 = vst [vmem:[%s239 + $0x90] sm:%s231] %v276
                %v278 = vld [vmem:[%s238 + $0x130] sm:%s231]
                %279 = vst [vmem:[%s239 + $0x98] sm:%s231] %v278
                %v280 = vld [vmem:[%s238 + $0x140] sm:%s231]
                %281 = vst [vmem:[%s239 + $0xa0] sm:%s231] %v280
                %v282 = vld [vmem:[%s238 + $0x150] sm:%s231]
                %283 = vst [vmem:[%s239 + $0xa8] sm:%s231] %v282
                %v284 = vld [vmem:[%s238 + $0x160] sm:%s231]
                %285 = vst [vmem:[%s239 + $0xb0] sm:%s231] %v284
                %v286 = vld [vmem:[%s238 + $0x170] sm:%s231]
                %287 = vst [vmem:[%s239 + $0xb8] sm:%s231] %v286
                %v288 = vld [vmem:[%s238 + $0x180] sm:%s231]
                %289 = vst [vmem:[%s239 + $0xc0] sm:%s231] %v288
                %v290 = vld [vmem:[%s238 + $0x190] sm:%s231]
                %291 = vst [vmem:[%s239 + $0xc8] sm:%s231] %v290
                %v292 = vld [vmem:[%s238 + $0x1a0] sm:%s231]
                %293 = vst [vmem:[%s239 + $0xd0] sm:%s231] %v292
                %v294 = vld [vmem:[%s238 + $0x1b0] sm:%s231]
                %295 = vst [vmem:[%s239 + $0xd8] sm:%s231] %v294
                %v296 = vld [vmem:[%s238 + $0x1c0] sm:%s231]
                %297 = vst [vmem:[%s239 + $0xe0] sm:%s231] %v296
                %v298 = vld [vmem:[%s238 + $0x1d0] sm:%s231]
                %299 = vst [vmem:[%s239 + $0xe8] sm:%s231] %v298
                %v300 = vld [vmem:[%s238 + $0x1e0] sm:%s231]
                %301 = vst [vmem:[%s239 + $0xf0] sm:%s231] %v300
                %v302 = vld [vmem:[%s238 + $0x1f0] sm:%s231]
                %303 = vst [vmem:[%s239 + $0xf8] sm:%s231] %v302
                %v304 = vld [vmem:[%s238 + $0x200] sm:%s231]
                %305 = vst [vmem:[%s239 + $0x100] sm:%s231] %v304
                %v306 = vld [vmem:[%s238 + $0x210] sm:%s231]
                %307 = vst [vmem:[%s239 + $0x108] sm:%s231] %v306
                %v308 = vld [vmem:[%s238 + $0x220] sm:%s231]
                %309 = vst [vmem:[%s239 + $0x110] sm:%s231] %v308
                %v310 = vld [vmem:[%s238 + $0x230] sm:%s231]
                %311 = vst [vmem:[%s239 + $0x118] sm:%s231] %v310
                %v312 = vld [vmem:[%s238 + $0x240] sm:%s231]
                %313 = vst [vmem:[%s239 + $0x120] sm:%s231] %v312
                %v314 = vld [vmem:[%s238 + $0x250] sm:%s231]
                %315 = vst [vmem:[%s239 + $0x128] sm:%s231] %v314
                %v316 = vld [vmem:[%s238 + $0x260] sm:%s231]
                %317 = vst [vmem:[%s239 + $0x130] sm:%s231] %v316
                %v318 = vld [vmem:[%s238 + $0x270] sm:%s231]
                %319 = vst [vmem:[%s239 + $0x138] sm:%s231] %v318
                %v320 = vld [vmem:[%s238 + $0x280] sm:%s231]
                %321 = vst [vmem:[%s239 + $0x140] sm:%s231] %v320
                %v322 = vld [vmem:[%s238 + $0x290] sm:%s231]
                %323 = vst [vmem:[%s239 + $0x148] sm:%s231] %v322
                %v324 = vld [vmem:[%s238 + $0x2a0] sm:%s231]
                %325 = vst [vmem:[%s239 + $0x150] sm:%s231] %v324
                %v326 = vld [vmem:[%s238 + $0x2b0] sm:%s231]
                %327 = vst [vmem:[%s239 + $0x158] sm:%s231] %v326
                %v328 = vld [vmem:[%s238 + $0x2c0] sm:%s231]
                %329 = vst [vmem:[%s239 + $0x160] sm:%s231] %v328
                %v330 = vld [vmem:[%s238 + $0x2d0] sm:%s231]
                %331 = vst [vmem:[%s239 + $0x168] sm:%s231] %v330
                %v332 = vld [vmem:[%s238 + $0x2e0] sm:%s231]
                %333 = vst [vmem:[%s239 + $0x170] sm:%s231] %v332
                %v334 = vld [vmem:[%s238 + $0x2f0] sm:%s231]
                %335 = vst [vmem:[%s239 + $0x178] sm:%s231] %v334
              $region63: #{vqvae_forward.35} parent=57 // loop_footer
                %s237 = sadd.s32 1, %s233
              $region64: #{vqvae_forward.35} parent=57 // loop_footer_branch
                %232 = sbr.rel target = $region60
              $region65: #{vqvae_forward.35} parent=57 // loop_exit
                _
            $region58: #{vqvae_forward.35} parent=49 // pred_fallthru
              _
          $region50: #{vqvae_forward.35} parent=45 // pred_fallthru
            _
          %444 = vnop
        $region46: #{vqvae_forward.35} parent=15 // pred_fallthru
          _
        // Predicated region
        $region81: #{vqvae_forward.35} parent=15 // pred_check
          %p445 = pneg %p104
        $region82: #{vqvae_forward.35} parent=15 // pred_check_branch
          %447 = sbr.rel (%p445) target = $region84
        $region83: #{vqvae_forward.35} parent=15 // pred_region
          %s448 = smul.u32 2, %s17
          %p449 = scmp.lt.s32.totalorder %s448, 3
          %s450 = scalar_select %p449, %s448, 3
          %s451 = scalar_lea.vmem %s2, %s450
          %s452 = smul.u32 2, %s17
        $region84: #{vqvae_forward.35} parent=15 // pred_fallthru
          _
      $region16: #{vqvae_forward.35} parent=5 // pred_fallthru
        _
      %p453 = scmp.le.s32.totalorder 1, %s9
      %p454 = scmp.lt.s32.totalorder %s9, 7
      %p455 = pnand %p453, %p454
      %p456 = pneg %p455
      // Predicated region
      $region85: #{vqvae_forward.35} parent=5 // pred_check
        _
      $region86: #{vqvae_forward.35} parent=5 // pred_check_branch
        %458 = sbr.rel (%p455) target = $region88
      $region87: #{vqvae_forward.35} parent=5 // pred_region
        %s459 = ssub.s32 %s9, 1
        %s460 = sand.u32 %s43, 1
        %s461 = sand.u32 %s43, 1
        %s462 = smul.addr %s461, 48
        %s463 = scalar_lea.vmem [#allocation3], %s462
        // Predicated region
        $region89: #{vqvae_forward.35} parent=87 // pred_check
          %p464 = pneg %p56
        $region90: #{vqvae_forward.35} parent=87 // pred_check_branch
          %466 = sbr.rel (%p464) target = $region92
        $region91: #{vqvae_forward.35} parent=87 // pred_region
          _
        $region92: #{vqvae_forward.35} parent=87 // pred_fallthru
          _
        %s467 = sand.u32 %s71, 1
        %s468 = sand.u32 %s71, 1
        %s469 = smul.addr %s468, 384
        %s470 = scalar_lea.vmem [#allocation4], %s469
        // Predicated region
        $region93: #{vqvae_forward.35} parent=87 // pred_check
          %p471 = pneg %p84
        $region94: #{vqvae_forward.35} parent=87 // pred_check_branch
          %473 = sbr.rel (%p471) target = $region96
        $region95: #{vqvae_forward.35} parent=87 // pred_region
          _
        $region96: #{vqvae_forward.35} parent=87 // pred_fallthru
          _
        %s474 = sand.u32 %s43, 1
        %s475 = sand.u32 %s43, 1
        %s476 = smul.addr %s475, 48
        %s477 = scalar_lea.vmem [#allocation3], %s476
        %p478 = pneg %p56
        %p479 = pneg %p53
        %s480 = sand.u32 %s71, 1
        %s481 = sand.u32 %s71, 1
        %s482 = smul.addr %s481, 384
        %s483 = scalar_lea.vmem [#allocation4], %s482
        %p484 = pneg %p84
        %p485 = pneg %p81
        %s486 = smul.u32 2, %s20
        %p487 = scmp.lt.s32.totalorder %s486, 3
        %s488 = scalar_select %p487, %s486, 3
        %s489 = scalar_lea.vmem %s2, %s488
        %p490 = pneg %p110
        %p491 = pneg %p107
        %p492 = pneg %p138
        %p493 = pneg %p135
        %s494 = sand.u32 %s125, 1
        %s495 = sand.u32 %s125, 1
        %s496 = smul.addr %s495, 64
        %s497 = scalar_lea.vmem [#allocation5], %s496
        %s498 = smul.u32 4, %s19
        %s499 = smul.u32 3, %s21
        %s500 = smul.u32 48, %s21
        %s501 = smul.u32 2, %s20
        %s502 = smul.u32 2, %s20
        %p503 = scmp.lt.s32.totalorder %s502, 3
        %s504 = scalar_select %p503, %s502, 3
        %s505 = scalar_lea.vmem %s2, %s504
        %s506 = smul.u32 2, %s20
        %s507 = smul.u32 4, %s19
        %s508 = smul.u32 2, %s20
        %p509 = scmp.eq.s32.totalorder %s21, 0
        // Predicated region
        $region97: #{vqvae_forward.35} parent=87 // pred_check
          %p510 = pneg %p509
        $region98: #{vqvae_forward.35} parent=87 // pred_check_branch
          %512 = sbr.rel (%p510) target = $region100
        $region99: #{vqvae_forward.35} parent=87 // pred_region
          %513 = vst [vmem:[#allocation2] sm:$0xff] 0.0
          %514 = vst [vmem:[#allocation2 + $0x8] sm:$0xff] 0.0
          %515 = vst [vmem:[#allocation2 + $0x10] sm:$0xff] 0.0
          %516 = vst [vmem:[#allocation2 + $0x18] sm:$0xff] 0.0
          %517 = vst [vmem:[#allocation2 + $0x20] sm:$0xff] 0.0
          %518 = vst [vmem:[#allocation2 + $0x28] sm:$0xff] 0.0
          %519 = vst [vmem:[#allocation2 + $0x30] sm:$0xff] 0.0
          %520 = vst [vmem:[#allocation2 + $0x38] sm:$0xff] 0.0
        $region100: #{vqvae_forward.35} parent=87 // pred_fallthru
          _
        %v521 = vld [vmem:[%s463] sm:$0xff]
        %v522 = vld [vmem:[%s463 + $0x8] sm:$0xf]
        %v523 = vld [vmem:[%s463 + $0xc] sm:$0xff]
        %v524 = vld [vmem:[%s463 + $0x14] sm:$0xf]
        %v525 = vld [vmem:[%s463 + $0x18] sm:$0xff]
        %v526 = vld [vmem:[%s463 + $0x20] sm:$0xf]
        %v527 = vld [vmem:[%s463 + $0x24] sm:$0xff]
        %v528 = vld [vmem:[%s463 + $0x2c] sm:$0xf]
        %v529 = vunpack.c.l.bf16 %v521
        %v530 = vunpack.c.h.bf16 %v521
        %v531 = vunpack.c.l.bf16 %v522
        %v532 = vunpack.c.l.bf16 %v523
        %v533 = vunpack.c.h.bf16 %v523
        %v534 = vunpack.c.l.bf16 %v524
        %v535 = vunpack.c.l.bf16 %v525
        %v536 = vunpack.c.h.bf16 %v525
        %v537 = vunpack.c.l.bf16 %v526
        %v538 = vunpack.c.l.bf16 %v527
        %v539 = vunpack.c.h.bf16 %v527
        %v540 = vunpack.c.l.bf16 %v528
        %v541 = vmax.f32 %v529, 0.0
        %v542 = vmax.f32 %v530, 0.0
        %v543 = vmax.f32 %v531, 0.0
        %v544 = vmax.f32 %v532, 0.0
        %v545 = vmax.f32 %v533, 0.0
        %v546 = vmax.f32 %v534, 0.0
        %v547 = vmax.f32 %v535, 0.0
        %v548 = vmax.f32 %v536, 0.0
        %v549 = vmax.f32 %v537, 0.0
        %v550 = vmax.f32 %v538, 0.0
        %v551 = vmax.f32 %v539, 0.0
        %v552 = vmax.f32 %v540, 0.0
        %v553 = vpack.c.bf16 %v544, %v541
        %v554 = vpack.c.bf16 %v545, %v542
        %v555 = vpack.c.bf16 %v546, %v543
        %v556 = vpack.c.bf16 %v550, %v547
        %v557 = vpack.c.bf16 %v551, %v548
        %v558 = vpack.c.bf16 %v552, %v549
        %v559 = vld [vmem:[#allocation2] sm:$0xff]
        %v560 = vld [vmem:[#allocation2 + $0x8] sm:$0xff]
        %v561 = vld [vmem:[#allocation2 + $0x10] sm:$0xff]
        %v562 = vld [vmem:[#allocation2 + $0x18] sm:$0xff]
        %v563 = vld [vmem:[#allocation2 + $0x20] sm:$0xff]
        %v564 = vld [vmem:[#allocation2 + $0x28] sm:$0xff]
        %v565 = vld [vmem:[#allocation2 + $0x30] sm:$0xff]
        %v566 = vld [vmem:[#allocation2 + $0x38] sm:$0xff]
        %v567 = vld [vmem:[%s470] sm:$0xff]
        %v568 = vld [vmem:[%s470 + $0x8] sm:$0xff]
        %v569 = vld [vmem:[%s470 + $0x10] sm:$0xff]
        %v570 = vld [vmem:[%s470 + $0x18] sm:$0xff]
        %v571 = vld [vmem:[%s470 + $0x20] sm:$0xff]
        %v572 = vld [vmem:[%s470 + $0x28] sm:$0xff]
        %v573 = vld [vmem:[%s470 + $0x30] sm:$0xff]
        %v574 = vld [vmem:[%s470 + $0x38] sm:$0xff]
        %v575 = vld [vmem:[%s470 + $0x40] sm:$0xff]
        %v576 = vld [vmem:[%s470 + $0x48] sm:$0xff]
        %v577 = vld [vmem:[%s470 + $0x50] sm:$0xff]
        %v578 = vld [vmem:[%s470 + $0x58] sm:$0xff]
        %v579 = vld [vmem:[%s470 + $0x60] sm:$0xff]
        %v580 = vld [vmem:[%s470 + $0x68] sm:$0xff]
        %v581 = vld [vmem:[%s470 + $0x70] sm:$0xff]
        %v582 = vld [vmem:[%s470 + $0x78] sm:$0xff]
        %v583 = vld [vmem:[%s470 + $0x80] sm:$0xff]
        %v584 = vld [vmem:[%s470 + $0x88] sm:$0xff]
        %v585 = vld [vmem:[%s470 + $0x90] sm:$0xff]
        %v586 = vld [vmem:[%s470 + $0x98] sm:$0xff]
        %v587 = vld [vmem:[%s470 + $0xa0] sm:$0xff]
        %v588 = vld [vmem:[%s470 + $0xa8] sm:$0xff]
        %v589 = vld [vmem:[%s470 + $0xb0] sm:$0xff]
        %v590 = vld [vmem:[%s470 + $0xb8] sm:$0xff]
        %v591 = vld [vmem:[%s470 + $0xc0] sm:$0xff]
        %v592 = vld [vmem:[%s470 + $0xc8] sm:$0xff]
        %v593 = vld [vmem:[%s470 + $0xd0] sm:$0xff]
        %v594 = vld [vmem:[%s470 + $0xd8] sm:$0xff]
        %v595 = vld [vmem:[%s470 + $0xe0] sm:$0xff]
        %v596 = vld [vmem:[%s470 + $0xe8] sm:$0xff]
        %v597 = vld [vmem:[%s470 + $0xf0] sm:$0xff]
        %v598 = vld [vmem:[%s470 + $0xf8] sm:$0xff]
        %v599 = vld [vmem:[%s470 + $0x100] sm:$0xff]
        %v600 = vld [vmem:[%s470 + $0x108] sm:$0xff]
        %v601 = vld [vmem:[%s470 + $0x110] sm:$0xff]
        %v602 = vld [vmem:[%s470 + $0x118] sm:$0xff]
        %v603 = vld [vmem:[%s470 + $0x120] sm:$0xff]
        %v604 = vld [vmem:[%s470 + $0x128] sm:$0xff]
        %v605 = vld [vmem:[%s470 + $0x130] sm:$0xff]
        %v606 = vld [vmem:[%s470 + $0x138] sm:$0xff]
        %v607 = vld [vmem:[%s470 + $0x140] sm:$0xff]
        %v608 = vld [vmem:[%s470 + $0x148] sm:$0xff]
        %v609 = vld [vmem:[%s470 + $0x150] sm:$0xff]
        %v610 = vld [vmem:[%s470 + $0x158] sm:$0xff]
        %v611 = vld [vmem:[%s470 + $0x160] sm:$0xff]
        %v612 = vld [vmem:[%s470 + $0x168] sm:$0xff]
        %v613 = vld [vmem:[%s470 + $0x170] sm:$0xff]
        %v614 = vld [vmem:[%s470 + $0x178] sm:$0xff]
        %v663 = vunpack.c.l.b16 %v567
        %v664 = vunpack.c.h.b16 %v567
        %v665 = vunpack.c.l.b16 %v568
        %v666 = vunpack.c.h.b16 %v568
        %v667 = vunpack.c.l.b16 %v569
        %v668 = vunpack.c.h.b16 %v569
        %v669 = vunpack.c.l.b16 %v570
        %v670 = vunpack.c.h.b16 %v570
        %v671 = vunpack.c.l.b16 %v571
        %v672 = vunpack.c.h.b16 %v571
        %v673 = vunpack.c.l.b16 %v572
        %v674 = vunpack.c.h.b16 %v572
        %v675 = vunpack.c.l.b16 %v573
        %v676 = vunpack.c.h.b16 %v573
        %v677 = vunpack.c.l.b16 %v574
        %v678 = vunpack.c.h.b16 %v574
        %v679 = vunpack.c.l.b16 %v575
        %v680 = vunpack.c.h.b16 %v575
        %v681 = vunpack.c.l.b16 %v576
        %v682 = vunpack.c.h.b16 %v576
        %v683 = vunpack.c.l.b16 %v577
        %v684 = vunpack.c.h.b16 %v577
        %v685 = vunpack.c.l.b16 %v578
        %v686 = vunpack.c.h.b16 %v578
        %v687 = vunpack.c.l.b16 %v579
        %v688 = vunpack.c.h.b16 %v579
        %v689 = vunpack.c.l.b16 %v580
        %v690 = vunpack.c.h.b16 %v580
        %v691 = vunpack.c.l.b16 %v581
        %v692 = vunpack.c.h.b16 %v581
        %v693 = vunpack.c.l.b16 %v582
        %v694 = vunpack.c.h.b16 %v582
        %v695 = vunpack.c.l.b16 %v583
        %v696 = vunpack.c.h.b16 %v583
        %v697 = vunpack.c.l.b16 %v584
        %v698 = vunpack.c.h.b16 %v584
        %v699 = vunpack.c.l.b16 %v585
        %v700 = vunpack.c.h.b16 %v585
        %v701 = vunpack.c.l.b16 %v586
        %v702 = vunpack.c.h.b16 %v586
        %v703 = vunpack.c.l.b16 %v587
        %v704 = vunpack.c.h.b16 %v587
        %v705 = vunpack.c.l.b16 %v588
        %v706 = vunpack.c.h.b16 %v588
        %v707 = vunpack.c.l.b16 %v589
        %v708 = vunpack.c.h.b16 %v589
        %v709 = vunpack.c.l.b16 %v590
        %v710 = vunpack.c.h.b16 %v590
        %v711 = vunpack.c.l.b16 %v591
        %v712 = vunpack.c.h.b16 %v591
        %v713 = vunpack.c.l.b16 %v592
        %v714 = vunpack.c.h.b16 %v592
        %v715 = vunpack.c.l.b16 %v593
        %v716 = vunpack.c.h.b16 %v593
        %v717 = vunpack.c.l.b16 %v594
        %v718 = vunpack.c.h.b16 %v594
        %v719 = vunpack.c.l.b16 %v595
        %v720 = vunpack.c.h.b16 %v595
        %v721 = vunpack.c.l.b16 %v596
        %v722 = vunpack.c.h.b16 %v596
        %v723 = vunpack.c.l.b16 %v597
        %v724 = vunpack.c.h.b16 %v597
        %v725 = vunpack.c.l.b16 %v598
        %v726 = vunpack.c.h.b16 %v598
        %v727 = vunpack.c.l.b16 %v599
        %v728 = vunpack.c.h.b16 %v599
        %v729 = vunpack.c.l.b16 %v600
        %v730 = vunpack.c.h.b16 %v600
        %v731 = vunpack.c.l.b16 %v601
        %v732 = vunpack.c.h.b16 %v601
        %v733 = vunpack.c.l.b16 %v602
        %v734 = vunpack.c.h.b16 %v602
        %v735 = vunpack.c.l.b16 %v603
        %v736 = vunpack.c.h.b16 %v603
        %v737 = vunpack.c.l.b16 %v604
        %v738 = vunpack.c.h.b16 %v604
        %v739 = vunpack.c.l.b16 %v605
        %v740 = vunpack.c.h.b16 %v605
        %v741 = vunpack.c.l.b16 %v606
        %v742 = vunpack.c.h.b16 %v606
        %v743 = vunpack.c.l.b16 %v607
        %v744 = vunpack.c.h.b16 %v607
        %v745 = vunpack.c.l.b16 %v608
        %v746 = vunpack.c.h.b16 %v608
        %v747 = vunpack.c.l.b16 %v609
        %v748 = vunpack.c.h.b16 %v609
        %v749 = vunpack.c.l.b16 %v610
        %v750 = vunpack.c.h.b16 %v610
        %v751 = vunpack.c.l.b16 %v611
        %v752 = vunpack.c.h.b16 %v611
        %v753 = vunpack.c.l.b16 %v612
        %v754 = vunpack.c.h.b16 %v612
        %v755 = vunpack.c.l.b16 %v613
        %v756 = vunpack.c.h.b16 %v613
        %v757 = vunpack.c.l.b16 %v614
        %v758 = vunpack.c.h.b16 %v614
        %v759 = vpack.c.b16 %v665, %v663
        %v760 = vpack.c.b16 %v666, %v664
        %v761 = vpack.c.b16 %v669, %v667
        %v762 = vpack.c.b16 %v670, %v668
        %v763 = vpack.c.b16 %v673, %v671
        %v764 = vpack.c.b16 %v674, %v672
        %v765 = vpack.c.b16 %v677, %v675
        %v766 = vpack.c.b16 %v678, %v676
        %v767 = vpack.c.b16 %v681, %v679
        %v768 = vpack.c.b16 %v682, %v680
        %v769 = vpack.c.b16 %v685, %v683
        %v770 = vpack.c.b16 %v686, %v684
        %v771 = vpack.c.b16 %v689, %v687
        %v772 = vpack.c.b16 %v690, %v688
        %v773 = vpack.c.b16 %v693, %v691
        %v774 = vpack.c.b16 %v694, %v692
        %v775 = vpack.c.b16 %v697, %v695
        %v776 = vpack.c.b16 %v698, %v696
        %v777 = vpack.c.b16 %v701, %v699
        %v778 = vpack.c.b16 %v702, %v700
        %v779 = vpack.c.b16 %v705, %v703
        %v780 = vpack.c.b16 %v706, %v704
        %v781 = vpack.c.b16 %v709, %v707
        %v782 = vpack.c.b16 %v710, %v708
        %v783 = vpack.c.b16 %v713, %v711
        %v784 = vpack.c.b16 %v714, %v712
        %v785 = vpack.c.b16 %v717, %v715
        %v786 = vpack.c.b16 %v718, %v716
        %v787 = vpack.c.b16 %v721, %v719
        %v788 = vpack.c.b16 %v722, %v720
        %v789 = vpack.c.b16 %v725, %v723
        %v790 = vpack.c.b16 %v726, %v724
        %v791 = vpack.c.b16 %v729, %v727
        %v792 = vpack.c.b16 %v730, %v728
        %v793 = vpack.c.b16 %v733, %v731
        %v794 = vpack.c.b16 %v734, %v732
        %v795 = vpack.c.b16 %v737, %v735
        %v796 = vpack.c.b16 %v738, %v736
        %v797 = vpack.c.b16 %v741, %v739
        %v798 = vpack.c.b16 %v742, %v740
        %v799 = vpack.c.b16 %v745, %v743
        %v800 = vpack.c.b16 %v746, %v744
        %v801 = vpack.c.b16 %v749, %v747
        %v802 = vpack.c.b16 %v750, %v748
        %v803 = vpack.c.b16 %v753, %v751
        %v804 = vpack.c.b16 %v754, %v752
        %v805 = vpack.c.b16 %v757, %v755
        %v806 = vpack.c.b16 %v758, %v756
        %855 = vmatpush.bf16.msra.mxu0 %v773
        %856 = vmatpush.bf16.msra.mxu0 %v771
        %857 = vmatpush.bf16.msra.mxu0 %v769
        %858 = vmatpush.bf16.msra.mxu0 %v767
        %859 = vmatpush.bf16.msra.mxu0 %v765
        %860 = vmatpush.bf16.msra.mxu0 %v763
        %861 = vmatpush.bf16.msra.mxu0 %v761
        %862 = vmatpush.bf16.msra.mxu0 %v759
        %863 = vmatmul.bf16.gmra.mxu0 %v553
        %v864 = vpop.f32.mrf.mxu0
        %v865 = vadd.f32 0.0, %v864
        %v866 = vpop.f32.mrf.mxu0
        %v867 = vadd.f32 0.0, %v866
        %868 = vmatmul.bf16.gmra.mxu0 %v556
        %v869 = vpop.f32.mrf.mxu0
        %v870 = vadd.f32 0.0, %v869
        %v871 = vpop.f32.mrf.mxu0
        %v872 = vadd.f32 0.0, %v871
        %873 = vdwg.mxu0
        %874 = vmatpush.bf16.msra.mxu0 %v789
        %875 = vmatpush.bf16.msra.mxu0 %v787
        %876 = vmatpush.bf16.msra.mxu0 %v785
        %877 = vmatpush.bf16.msra.mxu0 %v783
        %878 = vmatpush.bf16.msra.mxu0 %v781
        %879 = vmatpush.bf16.msra.mxu0 %v779
        %880 = vmatpush.bf16.msra.mxu0 %v777
        %881 = vmatpush.bf16.msra.mxu0 %v775
        %882 = vmatmul.bf16.gmra.mxu0 %v554
        %v883 = vpop.f32.mrf.mxu0
        %v884 = vadd.f32 %v865, %v883
        %v885 = vpop.f32.mrf.mxu0
        %v886 = vadd.f32 %v867, %v885
        %887 = vmatmul.bf16.gmra.mxu0 %v557
        %v888 = vpop.f32.mrf.mxu0
        %v889 = vadd.f32 %v870, %v888
        %v890 = vpop.f32.mrf.mxu0
        %v891 = vadd.f32 %v872, %v890
        %892 = vdwg.mxu0
        %893 = vmatpush.bf16.msra.mxu0 %v805
        %894 = vmatpush.bf16.msra.mxu0 %v803
        %895 = vmatpush.bf16.msra.mxu0 %v801
        %896 = vmatpush.bf16.msra.mxu0 %v799
        %897 = vmatpush.bf16.msra.mxu0 %v797
        %898 = vmatpush.bf16.msra.mxu0 %v795
        %899 = vmatpush.bf16.msra.mxu0 %v793
        %900 = vmatpush.bf16.msra.mxu0 %v791
        %901 = vmatmul.bf16.gmra.mxu0 %v555
        %v902 = vpop.f32.mrf.mxu0
        %v903 = vadd.f32 %v884, %v902
        %v904 = vpop.f32.mrf.mxu0
        %v905 = vadd.f32 %v886, %v904
        %906 = vmatmul.bf16.gmra.mxu0 %v558
        %v907 = vpop.f32.mrf.mxu0
        %v908 = vadd.f32 %v889, %v907
        %v909 = vpop.f32.mrf.mxu0
        %v910 = vadd.f32 %v891, %v909
        %911 = vdwg.mxu0
        %912 = vmatpush.bf16.msra.mxu0 %v774
        %913 = vmatpush.bf16.msra.mxu0 %v772
        %914 = vmatpush.bf16.msra.mxu0 %v770
        %915 = vmatpush.bf16.msra.mxu0 %v768
        %916 = vmatpush.bf16.msra.mxu0 %v766
        %917 = vmatpush.bf16.msra.mxu0 %v764
        %918 = vmatpush.bf16.msra.mxu0 %v762
        %919 = vmatpush.bf16.msra.mxu0 %v760
        %920 = vmatmul.bf16.gmra.mxu0 %v553
        %v921 = vpop.f32.mrf.mxu0
        %v922 = vadd.f32 0.0, %v921
        %v923 = vpop.f32.mrf.mxu0
        %v924 = vadd.f32 0.0, %v923
        %925 = vmatmul.bf16.gmra.mxu0 %v556
        %v926 = vpop.f32.mrf.mxu0
        %v927 = vadd.f32 0.0, %v926
        %v928 = vpop.f32.mrf.mxu0
        %v929 = vadd.f32 0.0, %v928
        %930 = vdwg.mxu0
        %931 = vmatpush.bf16.msra.mxu0 %v790
        %932 = vmatpush.bf16.msra.mxu0 %v788
        %933 = vmatpush.bf16.msra.mxu0 %v786
        %934 = vmatpush.bf16.msra.mxu0 %v784
        %935 = vmatpush.bf16.msra.mxu0 %v782
        %936 = vmatpush.bf16.msra.mxu0 %v780
        %937 = vmatpush.bf16.msra.mxu0 %v778
        %938 = vmatpush.bf16.msra.mxu0 %v776
        %939 = vmatmul.bf16.gmra.mxu0 %v554
        %v940 = vpop.f32.mrf.mxu0
        %v941 = vadd.f32 %v922, %v940
        %v942 = vpop.f32.mrf.mxu0
        %v943 = vadd.f32 %v924, %v942
        %944 = vmatmul.bf16.gmra.mxu0 %v557
        %v945 = vpop.f32.mrf.mxu0
        %v946 = vadd.f32 %v927, %v945
        %v947 = vpop.f32.mrf.mxu0
        %v948 = vadd.f32 %v929, %v947
        %949 = vdwg.mxu0
        %950 = vmatpush.bf16.msra.mxu0 %v806
        %951 = vmatpush.bf16.msra.mxu0 %v804
        %952 = vmatpush.bf16.msra.mxu0 %v802
        %953 = vmatpush.bf16.msra.mxu0 %v800
        %954 = vmatpush.bf16.msra.mxu0 %v798
        %955 = vmatpush.bf16.msra.mxu0 %v796
        %956 = vmatpush.bf16.msra.mxu0 %v794
        %957 = vmatpush.bf16.msra.mxu0 %v792
        %958 = vmatmul.bf16.gmra.mxu0 %v555
        %v959 = vpop.f32.mrf.mxu0
        %v960 = vadd.f32 %v941, %v959
        %v961 = vpop.f32.mrf.mxu0
        %v962 = vadd.f32 %v943, %v961
        %963 = vmatmul.bf16.gmra.mxu0 %v558
        %v964 = vpop.f32.mrf.mxu0
        %v965 = vadd.f32 %v946, %v964
        %v966 = vpop.f32.mrf.mxu0
        %v967 = vadd.f32 %v948, %v966
        %968 = vdwg.mxu0
        %v969 = vadd.f32 %v559, %v903
        %v970 = vadd.f32 %v560, %v960
        %v971 = vadd.f32 %v561, %v905
        %v972 = vadd.f32 %v562, %v962
        %v973 = vadd.f32 %v563, %v908
        %v974 = vadd.f32 %v564, %v965
        %v975 = vadd.f32 %v565, %v910
        %v976 = vadd.f32 %v566, %v967
        %977 = vst [vmem:[#allocation2] sm:$0xff] %v969
        %978 = vst [vmem:[#allocation2 + $0x8] sm:$0xff] %v970
        %979 = vst [vmem:[#allocation2 + $0x10] sm:$0xff] %v971
        %980 = vst [vmem:[#allocation2 + $0x18] sm:$0xff] %v972
        %981 = vst [vmem:[#allocation2 + $0x20] sm:$0xff] %v973
        %982 = vst [vmem:[#allocation2 + $0x28] sm:$0xff] %v974
        %983 = vst [vmem:[#allocation2 + $0x30] sm:$0xff] %v975
        %984 = vst [vmem:[#allocation2 + $0x38] sm:$0xff] %v976
        %p985 = scmp.eq.s32.totalorder %s21, 2
        // Predicated region
        $region101: #{vqvae_forward.35} parent=87 // pred_check
          %p986 = pneg %p985
        $region102: #{vqvae_forward.35} parent=87 // pred_check_branch
          %988 = sbr.rel (%p986) target = $region104
        $region103: #{vqvae_forward.35} parent=87 // pred_region
          %v989 = vld [vmem:[#allocation2] sm:$0xff]
          %v990 = vld [vmem:[#allocation2 + $0x8] sm:$0xff]
          %v991 = vld [vmem:[#allocation2 + $0x10] sm:$0xff]
          %v992 = vld [vmem:[#allocation2 + $0x18] sm:$0xff]
          %v993 = vld [vmem:[#allocation2 + $0x20] sm:$0xff]
          %v994 = vld [vmem:[#allocation2 + $0x28] sm:$0xff]
          %v995 = vld [vmem:[#allocation2 + $0x30] sm:$0xff]
          %v996 = vld [vmem:[#allocation2 + $0x38] sm:$0xff]
          %v997 = vld [vmem:[%s505] sm:$0x3]
          %v999 = vperm.slane %v997, 0
          %v1000 = vperm.slane %v997, 1
          %v1003 = vadd.f32 %v989, %v999
          %v1004 = vadd.f32 %v990, %v1000
          %v1005 = vadd.f32 %v991, %v999
          %v1006 = vadd.f32 %v992, %v1000
          %v1007 = vadd.f32 %v993, %v999
          %v1008 = vadd.f32 %v994, %v1000
          %v1009 = vadd.f32 %v995, %v999
          %v1010 = vadd.f32 %v996, %v1000
          %v1011 = vmax.f32 %v1003, 0.0
          %v1012 = vmax.f32 %v1004, 0.0
          %v1013 = vmax.f32 %v1005, 0.0
          %v1014 = vmax.f32 %v1006, 0.0
          %v1015 = vmax.f32 %v1007, 0.0
          %v1016 = vmax.f32 %v1008, 0.0
          %v1017 = vmax.f32 %v1009, 0.0
          %v1018 = vmax.f32 %v1010, 0.0
          %1019 = vst [vmem:[%s497] sm:$0xff] %v1011
          %1020 = vst [vmem:[%s497 + $0x8] sm:$0xff] %v1012
          %1021 = vst [vmem:[%s497 + $0x10] sm:$0xff] %v1013
          %1022 = vst [vmem:[%s497 + $0x18] sm:$0xff] %v1014
          %1023 = vst [vmem:[%s497 + $0x20] sm:$0xff] %v1015
          %1024 = vst [vmem:[%s497 + $0x28] sm:$0xff] %v1016
          %1025 = vst [vmem:[%s497 + $0x30] sm:$0xff] %v1017
          %1026 = vst [vmem:[%s497 + $0x38] sm:$0xff] %v1018
        $region104: #{vqvae_forward.35} parent=87 // pred_fallthru
          _
        %s1027 = sand.u32 %s125, 1
        %s1028 = sand.u32 %s125, 1
        %s1029 = smul.addr %s1028, 64
        %s1030 = scalar_lea.vmem [#allocation5], %s1029
        // Predicated region
        $region105: #{vqvae_forward.35} parent=87 // pred_check
          %p1031 = pneg %p135
        $region106: #{vqvae_forward.35} parent=87 // pred_check_branch
          %1033 = sbr.rel (%p1031) target = $region108
        $region107: #{vqvae_forward.35} parent=87 // pred_region
          %s1034 = smul.u32 4, %s19
          %s1035 = smul.u32 2, %s20
          %s1036 = smul.addr %s1034, 4
          %s1037 = sadd.s32 %s1035, %s1036
          %s1038 = smul.addr %s1037, 8
          %s1039 = scalar_lea.vmem %s3, %s1038
          // Predicated region
          $region109: #{vqvae_forward.35} parent=107 // pred_check
            _
          $region110: #{vqvae_forward.35} parent=107 // pred_check_branch
            %1041 = sbr.rel (0) target = $region112
          $region111: #{vqvae_forward.35} parent=107 // pred_region
            // Predicated region
            $region113: #{vqvae_forward.35} parent=111 // pred_check
              _
            $region114: #{vqvae_forward.35} parent=111 // pred_check_branch
              %1043 = sbr.rel (0) target = $region116
            $region115: #{vqvae_forward.35} parent=111 // pred_region
              loop: start=0, step=1, limit=1
              $region117: #{vqvae_forward.35} parent=115 // loop_pre_header
                _
              $region118: #{vqvae_forward.35} parent=115 // loop_header
                %s1045 = sphi 0, %s1049
                %p1046 = scmp.ge.s32.totalorder %s1045, 1
                %s1050 = sphi %s1030, %s1030
                %s1051 = sphi %s1039, %s1039
              $region119: #{vqvae_forward.35} parent=115 // loop_header_branch
                %1048 = sbr.rel (%p1046) target = $region123
              $region120: #{vqvae_forward.35} parent=115 // loop_body
                %v1052 = vld [vmem:[%s1050] sm:$0xff]
                %1053 = vst [vmem:[%s1051] sm:$0xff] %v1052
                %v1054 = vld [vmem:[%s1050 + $0x8] sm:$0xff]
                %1055 = vst [vmem:[%s1051 + $0x8] sm:$0xff] %v1054
                %v1056 = vld [vmem:[%s1050 + $0x10] sm:$0xff]
                %1057 = vst [vmem:[%s1051 + $0x20] sm:$0xff] %v1056
                %v1058 = vld [vmem:[%s1050 + $0x18] sm:$0xff]
                %1059 = vst [vmem:[%s1051 + $0x28] sm:$0xff] %v1058
                %v1060 = vld [vmem:[%s1050 + $0x20] sm:$0xff]
                %1061 = vst [vmem:[%s1051 + $0x40] sm:$0xff] %v1060
                %v1062 = vld [vmem:[%s1050 + $0x28] sm:$0xff]
                %1063 = vst [vmem:[%s1051 + $0x48] sm:$0xff] %v1062
                %v1064 = vld [vmem:[%s1050 + $0x30] sm:$0xff]
                %1065 = vst [vmem:[%s1051 + $0x60] sm:$0xff] %v1064
                %v1066 = vld [vmem:[%s1050 + $0x38] sm:$0xff]
                %1067 = vst [vmem:[%s1051 + $0x68] sm:$0xff] %v1066
              $region121: #{vqvae_forward.35} parent=115 // loop_footer
                %s1049 = sadd.s32 1, %s1045
              $region122: #{vqvae_forward.35} parent=115 // loop_footer_branch
                %1044 = sbr.rel target = $region118
              $region123: #{vqvae_forward.35} parent=115 // loop_exit
                _
            $region116: #{vqvae_forward.35} parent=111 // pred_fallthru
              _
            // Predicated region
            $region124: #{vqvae_forward.35} parent=111 // pred_check
              _
            $region125: #{vqvae_forward.35} parent=111 // pred_check_branch
              %1069 = sbr.rel target = $region127
            $region126: #{vqvae_forward.35} parent=111 // pred_region
              _
            $region127: #{vqvae_forward.35} parent=111 // pred_fallthru
              _
          $region112: #{vqvae_forward.35} parent=107 // pred_fallthru
            _
          %1070 = vnop
        $region108: #{vqvae_forward.35} parent=87 // pred_fallthru
          _
      $region88: #{vqvae_forward.35} parent=5 // pred_fallthru
        _
      %p1071 = scmp.le.s32.totalorder 2, %s9
      // Predicated region
      $region128: #{vqvae_forward.35} parent=5 // pred_check
        %p1072 = pneg %p1071
      $region129: #{vqvae_forward.35} parent=5 // pred_check_branch
        %1074 = sbr.rel (%p1072) target = $region131
      $region130: #{vqvae_forward.35} parent=5 // pred_region
        %s1075 = ssub.s32 %s9, 2
        // Predicated region
        $region132: #{vqvae_forward.35} parent=130 // pred_check
          %p1076 = pneg %p141
        $region133: #{vqvae_forward.35} parent=130 // pred_check_branch
          %1078 = sbr.rel (%p1076) target = $region135
        $region134: #{vqvae_forward.35} parent=130 // pred_region
          %s1079 = sand.u32 %s126, 1
          %s1080 = sand.u32 %s126, 1
          %s1081 = smul.addr %s1080, 64
          %s1082 = scalar_lea.vmem [#allocation5], %s1081
        $region135: #{vqvae_forward.35} parent=130 // pred_fallthru
          _
      $region131: #{vqvae_forward.35} parent=5 // pred_fallthru
        _
    $region6: #{vqvae_forward.35} parent=1 // loop_footer
      %s13 = sadd.s32 1, %s9
    $region7: #{vqvae_forward.35} parent=1 // loop_footer_branch
      %8 = sbr.rel target = $region3
    $region8: #{vqvae_forward.35} parent=1 // loop_exit
      _

// kernel: vqvae_forward.37
$region0: #{vqvae_forward.37}
  #allocation0 [shape = 'u32[]', space=smem, size = 0x4, offset = 0x4, fixed_abs, tag = 'smem constant byte address 0x4 - core index']
  #allocation1 [shape = 'u32[72,128]{1,0:T(1,128)}', space=vmem, size = 0x9000, scoped, tag = 'internal scratch']
  #allocation2 [shape = 'f32[1,1]{1,0:T(1,128)}', space=vmem, size = 0x200, scoped, tag = 'scratch operand']
  %s0 = inlined_call_operand.vmem [shape: f32[512,128], index: 0, kind: input, shape index: {}]
  %s1 = inlined_call_operand.vmem [shape: f32[512,128], index: 1, kind: input, shape index: {}]
  %s2 = inlined_call_operand.hbm [shape: f32[1,1], index: 2, kind: output, shape index: {}]
  %s3 = sld [smem:[#allocation0]]
  $region26: #{vqvae_forward.37} parent=0
    _
  %s5 = ssub.s32 1, %s3
  %s6 = scalar_select 0, %s5, %s3
  $region1: #{vqvae_forward.37} parent=0
    #allocation3 [shape = 'u8[512]{0}', space=vmem, size = 0x400, scoped, tag = 'output window, operand 0, single buffered']
    #allocation4 [shape = 's32[1]{0}', space=sflag, size = 0x4, scoped, tag = 'scoped memory for vqvae_forward.37']
    %7 = vsyncpa [#allocation4], 0
    // Predicated region
    $region2: #{vqvae_forward.37} parent=1 // pred_check
      _
    $region3: #{vqvae_forward.37} parent=1 // pred_check_branch
      %9 = sbr.rel (0) target = $region5
    $region4: #{vqvae_forward.37} parent=1 // pred_region
      _
    $region5: #{vqvae_forward.37} parent=1 // pred_fallthru
      _
    // Predicated region
    $region6: #{vqvae_forward.37} parent=1 // pred_check
      _
    $region7: #{vqvae_forward.37} parent=1 // pred_check_branch
      %11 = sbr.rel (0) target = $region9
    $region8: #{vqvae_forward.37} parent=1 // pred_region
      _
    $region9: #{vqvae_forward.37} parent=1 // pred_fallthru
      _
    %p12 = scmp.eq.s32.totalorder 0, 0
    // Predicated region
    $region10: #{vqvae_forward.37} parent=1 // pred_check
      %p13 = pneg %p12
    $region11: #{vqvae_forward.37} parent=1 // pred_check_branch
      %15 = sbr.rel (%p13) target = $region13
    $region12: #{vqvae_forward.37} parent=1 // pred_region
      %vm16 = vcmask 0
      %17 = vst.msk [vmem:[#allocation2] sm:$0x1] %vm16, 0.0
    $region13: #{vqvae_forward.37} parent=1 // pred_fallthru
      _
    %v18 = vld [vmem:[%s0] sm:$0xff]
    %v19 = vld [vmem:[%s0 + $0x8] sm:$0xff]
    %v20 = vld [vmem:[%s0 + $0x10] sm:$0xff]
    %v21 = vld [vmem:[%s0 + $0x18] sm:$0xff]
    %v22 = vld [vmem:[%s0 + $0x20] sm:$0xff]
    %v23 = vld [vmem:[%s0 + $0x28] sm:$0xff]
    %v24 = vld [vmem:[%s0 + $0x30] sm:$0xff]
    %v25 = vld [vmem:[%s0 + $0x38] sm:$0xff]
    %v26 = vld [vmem:[%s0 + $0x40] sm:$0xff]
    %v27 = vld [vmem:[%s0 + $0x48] sm:$0xff]
    %v28 = vld [vmem:[%s0 + $0x50] sm:$0xff]
    %v29 = vld [vmem:[%s0 + $0x58] sm:$0xff]
    %v30 = vld [vmem:[%s0 + $0x60] sm:$0xff]
    %v31 = vld [vmem:[%s0 + $0x68] sm:$0xff]
    %v32 = vld [vmem:[%s0 + $0x70] sm:$0xff]
    %v33 = vld [vmem:[%s0 + $0x78] sm:$0xff]
    %v34 = vld [vmem:[%s0 + $0x80] sm:$0xff]
    %v35 = vld [vmem:[%s0 + $0x88] sm:$0xff]
    %v36 = vld [vmem:[%s0 + $0x90] sm:$0xff]
    %v37 = vld [vmem:[%s0 + $0x98] sm:$0xff]
    %v38 = vld [vmem:[%s0 + $0xa0] sm:$0xff]
    %v39 = vld [vmem:[%s0 + $0xa8] sm:$0xff]
    %v40 = vld [vmem:[%s0 + $0xb0] sm:$0xff]
    %v41 = vld [vmem:[%s0 + $0xb8] sm:$0xff]
    %v42 = vld [vmem:[%s0 + $0xc0] sm:$0xff]
    %v43 = vld [vmem:[%s0 + $0xc8] sm:$0xff]
    %v44 = vld [vmem:[%s0 + $0xd0] sm:$0xff]
    %v45 = vld [vmem:[%s0 + $0xd8] sm:$0xff]
    %v46 = vld [vmem:[%s0 + $0xe0] sm:$0xff]
    %v47 = vld [vmem:[%s0 + $0xe8] sm:$0xff]
    %v48 = vld [vmem:[%s0 + $0xf0] sm:$0xff]
    %v49 = vld [vmem:[%s0 + $0xf8] sm:$0xff]
    %v50 = vld [vmem:[%s0 + $0x100] sm:$0xff]
    %v51 = vld [vmem:[%s0 + $0x108] sm:$0xff]
    %v52 = vld [vmem:[%s0 + $0x110] sm:$0xff]
    %v53 = vld [vmem:[%s0 + $0x118] sm:$0xff]
    %v54 = vld [vmem:[%s0 + $0x120] sm:$0xff]
    %v55 = vld [vmem:[%s0 + $0x128] sm:$0xff]
    %v56 = vld [vmem:[%s0 + $0x130] sm:$0xff]
    %v57 = vld [vmem:[%s0 + $0x138] sm:$0xff]
    %v58 = vld [vmem:[%s0 + $0x140] sm:$0xff]
    %v59 = vld [vmem:[%s0 + $0x148] sm:$0xff]
    %v60 = vld [vmem:[%s0 + $0x150] sm:$0xff]
    %v61 = vld [vmem:[%s0 + $0x158] sm:$0xff]
    %v62 = vld [vmem:[%s0 + $0x160] sm:$0xff]
    %v63 = vld [vmem:[%s0 + $0x168] sm:$0xff]
    %v64 = vld [vmem:[%s0 + $0x170] sm:$0xff]
    %v65 = vld [vmem:[%s0 + $0x178] sm:$0xff]
    %v66 = vld [vmem:[%s0 + $0x180] sm:$0xff]
    %v67 = vld [vmem:[%s0 + $0x188] sm:$0xff]
    %v68 = vld [vmem:[%s0 + $0x190] sm:$0xff]
    %v69 = vld [vmem:[%s0 + $0x198] sm:$0xff]
    %v70 = vld [vmem:[%s0 + $0x1a0] sm:$0xff]
    %v71 = vld [vmem:[%s0 + $0x1a8] sm:$0xff]
    %v72 = vld [vmem:[%s0 + $0x1b0] sm:$0xff]
    %v73 = vld [vmem:[%s0 + $0x1b8] sm:$0xff]
    %v74 = vld [vmem:[%s0 + $0x1c0] sm:$0xff]
    %v75 = vld [vmem:[%s0 + $0x1c8] sm:$0xff]
    %v76 = vld [vmem:[%s0 + $0x1d0] sm:$0xff]
    %v77 = vld [vmem:[%s0 + $0x1d8] sm:$0xff]
    %v78 = vld [vmem:[%s0 + $0x1e0] sm:$0xff]
    %v79 = vld [vmem:[%s0 + $0x1e8] sm:$0xff]
    %v80 = vld [vmem:[%s0 + $0x1f0] sm:$0xff]
    %v81 = vld [vmem:[%s0 + $0x1f8] sm:$0xff]
    %v82 = vld [vmem:[%s1] sm:$0xff]
    %v83 = vld [vmem:[%s1 + $0x8] sm:$0xff]
    %v84 = vld [vmem:[%s1 + $0x10] sm:$0xff]
    %v85 = vld [vmem:[%s1 + $0x18] sm:$0xff]
    %v86 = vld [vmem:[%s1 + $0x20] sm:$0xff]
    %v87 = vld [vmem:[%s1 + $0x28] sm:$0xff]
    %v88 = vld [vmem:[%s1 + $0x30] sm:$0xff]
    %v89 = vld [vmem:[%s1 + $0x38] sm:$0xff]
    %v90 = vld [vmem:[%s1 + $0x40] sm:$0xff]
    %v91 = vld [vmem:[%s1 + $0x48] sm:$0xff]
    %v92 = vld [vmem:[%s1 + $0x50] sm:$0xff]
    %v93 = vld [vmem:[%s1 + $0x58] sm:$0xff]
    %v94 = vld [vmem:[%s1 + $0x60] sm:$0xff]
    %v95 = vld [vmem:[%s1 + $0x68] sm:$0xff]
    %v96 = vld [vmem:[%s1 + $0x70] sm:$0xff]
    %v97 = vld [vmem:[%s1 + $0x78] sm:$0xff]
    %v98 = vld [vmem:[%s1 + $0x80] sm:$0xff]
    %v99 = vld [vmem:[%s1 + $0x88] sm:$0xff]
    %v100 = vld [vmem:[%s1 + $0x90] sm:$0xff]
    %v101 = vld [vmem:[%s1 + $0x98] sm:$0xff]
    %v102 = vld [vmem:[%s1 + $0xa0] sm:$0xff]
    %v103 = vld [vmem:[%s1 + $0xa8] sm:$0xff]
    %v104 = vld [vmem:[%s1 + $0xb0] sm:$0xff]
    %v105 = vld [vmem:[%s1 + $0xb8] sm:$0xff]
    %v106 = vld [vmem:[%s1 + $0xc0] sm:$0xff]
    %v107 = vld [vmem:[%s1 + $0xc8] sm:$0xff]
    %v108 = vld [vmem:[%s1 + $0xd0] sm:$0xff]
    %v109 = vld [vmem:[%s1 + $0xd8] sm:$0xff]
    %v110 = vld [vmem:[%s1 + $0xe0] sm:$0xff]
    %v111 = vld [vmem:[%s1 + $0xe8] sm:$0xff]
    %v112 = vld [vmem:[%s1 + $0xf0] sm:$0xff]
    %v113 = vld [vmem:[%s1 + $0xf8] sm:$0xff]
    %v114 = vld [vmem:[%s1 + $0x100] sm:$0xff]
    %v115 = vld [vmem:[%s1 + $0x108] sm:$0xff]
    %v116 = vld [vmem:[%s1 + $0x110] sm:$0xff]
    %v117 = vld [vmem:[%s1 + $0x118] sm:$0xff]
    %v118 = vld [vmem:[%s1 + $0x120] sm:$0xff]
    %v119 = vld [vmem:[%s1 + $0x128] sm:$0xff]
    %v120 = vld [vmem:[%s1 + $0x130] sm:$0xff]
    %v121 = vld [vmem:[%s1 + $0x138] sm:$0xff]
    %v122 = vld [vmem:[%s1 + $0x140] sm:$0xff]
    %v123 = vld [vmem:[%s1 + $0x148] sm:$0xff]
    %v124 = vld [vmem:[%s1 + $0x150] sm:$0xff]
    %v125 = vld [vmem:[%s1 + $0x158] sm:$0xff]
    %v126 = vld [vmem:[%s1 + $0x160] sm:$0xff]
    %v127 = vld [vmem:[%s1 + $0x168] sm:$0xff]
    %v128 = vld [vmem:[%s1 + $0x170] sm:$0xff]
    %v129 = vld [vmem:[%s1 + $0x178] sm:$0xff]
    %v130 = vld [vmem:[%s1 + $0x180] sm:$0xff]
    %v131 = vld [vmem:[%s1 + $0x188] sm:$0xff]
    %v132 = vld [vmem:[%s1 + $0x190] sm:$0xff]
    %v133 = vld [vmem:[%s1 + $0x198] sm:$0xff]
    %v134 = vld [vmem:[%s1 + $0x1a0] sm:$0xff]
    %v135 = vld [vmem:[%s1 + $0x1a8] sm:$0xff]
    %v136 = vld [vmem:[%s1 + $0x1b0] sm:$0xff]
    %v137 = vld [vmem:[%s1 + $0x1b8] sm:$0xff]
    %v138 = vld [vmem:[%s1 + $0x1c0] sm:$0xff]
    %v139 = vld [vmem:[%s1 + $0x1c8] sm:$0xff]
    %v140 = vld [vmem:[%s1 + $0x1d0] sm:$0xff]
    %v141 = vld [vmem:[%s1 + $0x1d8] sm:$0xff]
    %v142 = vld [vmem:[%s1 + $0x1e0] sm:$0xff]
    %v143 = vld [vmem:[%s1 + $0x1e8] sm:$0xff]
    %v144 = vld [vmem:[%s1 + $0x1f0] sm:$0xff]
    %v145 = vld [vmem:[%s1 + $0x1f8] sm:$0xff]
    %v146 = vsub.f32 %v18, %v82
    %v147 = vsub.f32 %v19, %v83
    %v148 = vsub.f32 %v20, %v84
    %v149 = vsub.f32 %v21, %v85
    %v150 = vsub.f32 %v22, %v86
    %v151 = vsub.f32 %v23, %v87
    %v152 = vsub.f32 %v24, %v88
    %v153 = vsub.f32 %v25, %v89
    %v154 = vsub.f32 %v26, %v90
    %v155 = vsub.f32 %v27, %v91
    %v156 = vsub.f32 %v28, %v92
    %v157 = vsub.f32 %v29, %v93
    %v158 = vsub.f32 %v30, %v94
    %v159 = vsub.f32 %v31, %v95
    %v160 = vsub.f32 %v32, %v96
    %v161 = vsub.f32 %v33, %v97
    %v162 = vsub.f32 %v34, %v98
    %v163 = vsub.f32 %v35, %v99
    %v164 = vsub.f32 %v36, %v100
    %v165 = vsub.f32 %v37, %v101
    %v166 = vsub.f32 %v38, %v102
    %v167 = vsub.f32 %v39, %v103
    %v168 = vsub.f32 %v40, %v104
    %v169 = vsub.f32 %v41, %v105
    %v170 = vsub.f32 %v42, %v106
    %v171 = vsub.f32 %v43, %v107
    %v172 = vsub.f32 %v44, %v108
    %v173 = vsub.f32 %v45, %v109
    %v174 = vsub.f32 %v46, %v110
    %v175 = vsub.f32 %v47, %v111
    %v176 = vsub.f32 %v48, %v112
    %v177 = vsub.f32 %v49, %v113
    %v178 = vsub.f32 %v50, %v114
    %v179 = vsub.f32 %v51, %v115
    %v180 = vsub.f32 %v52, %v116
    %v181 = vsub.f32 %v53, %v117
    %v182 = vsub.f32 %v54, %v118
    %v183 = vsub.f32 %v55, %v119
    %v184 = vsub.f32 %v56, %v120
    %v185 = vsub.f32 %v57, %v121
    %v186 = vsub.f32 %v58, %v122
    %v187 = vsub.f32 %v59, %v123
    %v188 = vsub.f32 %v60, %v124
    %v189 = vsub.f32 %v61, %v125
    %v190 = vsub.f32 %v62, %v126
    %v191 = vsub.f32 %v63, %v127
    %v192 = vsub.f32 %v64, %v128
    %v193 = vsub.f32 %v65, %v129
    %v194 = vsub.f32 %v66, %v130
    %v195 = vsub.f32 %v67, %v131
    %v196 = vsub.f32 %v68, %v132
    %v197 = vsub.f32 %v69, %v133
    %v198 = vsub.f32 %v70, %v134
    %v199 = vsub.f32 %v71, %v135
    %v200 = vsub.f32 %v72, %v136
    %v201 = vsub.f32 %v73, %v137
    %v202 = vsub.f32 %v74, %v138
    %v203 = vsub.f32 %v75, %v139
    %v204 = vsub.f32 %v76, %v140
    %v205 = vsub.f32 %v77, %v141
    %v206 = vsub.f32 %v78, %v142
    %v207 = vsub.f32 %v79, %v143
    %v208 = vsub.f32 %v80, %v144
    %v209 = vsub.f32 %v81, %v145
    %v210 = vld [vmem:[#allocation2] sm:$0x1]
    %v211 = vmul.f32 %v146, %v146
    %v212 = vmul.f32 %v147, %v147
    %v213 = vmul.f32 %v148, %v148
    %v214 = vmul.f32 %v149, %v149
    %v215 = vmul.f32 %v150, %v150
    %v216 = vmul.f32 %v151, %v151
    %v217 = vmul.f32 %v152, %v152
    %v218 = vmul.f32 %v153, %v153
    %v219 = vmul.f32 %v154, %v154
    %v220 = vmul.f32 %v155, %v155
    %v221 = vmul.f32 %v156, %v156
    %v222 = vmul.f32 %v157, %v157
    %v223 = vmul.f32 %v158, %v158
    %v224 = vmul.f32 %v159, %v159
    %v225 = vmul.f32 %v160, %v160
    %v226 = vmul.f32 %v161, %v161
    %v227 = vmul.f32 %v162, %v162
    %v228 = vmul.f32 %v163, %v163
    %v229 = vmul.f32 %v164, %v164
    %v230 = vmul.f32 %v165, %v165
    %v231 = vmul.f32 %v166, %v166
    %v232 = vmul.f32 %v167, %v167
    %v233 = vmul.f32 %v168, %v168
    %v234 = vmul.f32 %v169, %v169
    %v235 = vmul.f32 %v170, %v170
    %v236 = vmul.f32 %v171, %v171
    %v237 = vmul.f32 %v172, %v172
    %v238 = vmul.f32 %v173, %v173
    %v239 = vmul.f32 %v174, %v174
    %v240 = vmul.f32 %v175, %v175
    %v241 = vmul.f32 %v176, %v176
    %v242 = vmul.f32 %v177, %v177
    %v243 = vmul.f32 %v178, %v178
    %v244 = vmul.f32 %v179, %v179
    %v245 = vmul.f32 %v180, %v180
    %v246 = vmul.f32 %v181, %v181
    %v247 = vmul.f32 %v182, %v182
    %v248 = vmul.f32 %v183, %v183
    %v249 = vmul.f32 %v184, %v184
    %v250 = vmul.f32 %v185, %v185
    %v251 = vmul.f32 %v186, %v186
    %v252 = vmul.f32 %v187, %v187
    %v253 = vmul.f32 %v188, %v188
    %v254 = vmul.f32 %v189, %v189
    %v255 = vmul.f32 %v190, %v190
    %v256 = vmul.f32 %v191, %v191
    %v257 = vmul.f32 %v192, %v192
    %v258 = vmul.f32 %v193, %v193
    %v259 = vmul.f32 %v194, %v194
    %v260 = vmul.f32 %v195, %v195
    %v261 = vmul.f32 %v196, %v196
    %v262 = vmul.f32 %v197, %v197
    %v263 = vmul.f32 %v198, %v198
    %v264 = vmul.f32 %v199, %v199
    %v265 = vmul.f32 %v200, %v200
    %v266 = vmul.f32 %v201, %v201
    %v267 = vmul.f32 %v202, %v202
    %v268 = vmul.f32 %v203, %v203
    %v269 = vmul.f32 %v204, %v204
    %v270 = vmul.f32 %v205, %v205
    %v271 = vmul.f32 %v206, %v206
    %v272 = vmul.f32 %v207, %v207
    %v273 = vmul.f32 %v208, %v208
    %v274 = vmul.f32 %v209, %v209
    %v275 = vadd.f32 %v211, %v212
    %v276 = vadd.f32 %v275, %v213
    %v277 = vadd.f32 %v276, %v214
    %v278 = vadd.f32 %v277, %v215
    %v279 = vadd.f32 %v278, %v216
    %v280 = vadd.f32 %v279, %v217
    %v281 = vadd.f32 %v280, %v218
    %v282 = vadd.f32 %v281, %v219
    %v283 = vadd.f32 %v282, %v220
    %v284 = vadd.f32 %v283, %v221
    %v285 = vadd.f32 %v284, %v222
    %v286 = vadd.f32 %v285, %v223
    %v287 = vadd.f32 %v286, %v224
    %v288 = vadd.f32 %v287, %v225
    %v289 = vadd.f32 %v288, %v226
    %v290 = vadd.f32 %v289, %v227
    %v291 = vadd.f32 %v290, %v228
    %v292 = vadd.f32 %v291, %v229
    %v293 = vadd.f32 %v292, %v230
    %v294 = vadd.f32 %v293, %v231
    %v295 = vadd.f32 %v294, %v232
    %v296 = vadd.f32 %v295, %v233
    %v297 = vadd.f32 %v296, %v234
    %v298 = vadd.f32 %v297, %v235
    %v299 = vadd.f32 %v298, %v236
    %v300 = vadd.f32 %v299, %v237
    %v301 = vadd.f32 %v300, %v238
    %v302 = vadd.f32 %v301, %v239
    %v303 = vadd.f32 %v302, %v240
    %v304 = vadd.f32 %v303, %v241
    %v305 = vadd.f32 %v304, %v242
    %v306 = vadd.f32 %v305, %v243
    %v307 = vadd.f32 %v306, %v244
    %v308 = vadd.f32 %v307, %v245
    %v309 = vadd.f32 %v308, %v246
    %v310 = vadd.f32 %v309, %v247
    %v311 = vadd.f32 %v310, %v248
    %v312 = vadd.f32 %v311, %v249
    %v313 = vadd.f32 %v312, %v250
    %v314 = vadd.f32 %v313, %v251
    %v315 = vadd.f32 %v314, %v252
    %v316 = vadd.f32 %v315, %v253
    %v317 = vadd.f32 %v316, %v254
    %v318 = vadd.f32 %v317, %v255
    %v319 = vadd.f32 %v318, %v256
    %v320 = vadd.f32 %v319, %v257
    %v321 = vadd.f32 %v320, %v258
    %v322 = vadd.f32 %v321, %v259
    %v323 = vadd.f32 %v322, %v260
    %v324 = vadd.f32 %v323, %v261
    %v325 = vadd.f32 %v324, %v262
    %v326 = vadd.f32 %v325, %v263
    %v327 = vadd.f32 %v326, %v264
    %v328 = vadd.f32 %v327, %v265
    %v329 = vadd.f32 %v328, %v266
    %v330 = vadd.f32 %v329, %v267
    %v331 = vadd.f32 %v330, %v268
    %v332 = vadd.f32 %v331, %v269
    %v333 = vadd.f32 %v332, %v270
    %v334 = vadd.f32 %v333, %v271
    %v335 = vadd.f32 %v334, %v272
    %v336 = vadd.f32 %v335, %v273
    %v337 = vadd.f32 %v336, %v274
    %338 = vadd.xlane.f32.xlu0 %v337
    %v339 = vpop.xlane.xlu0 %338
    %v340 = vrot.slane %v339, 4
    %v341 = vadd.f32 %v339, %v340
    %v342 = vrot.slane %v341, 2
    %v343 = vadd.f32 %v341, %v342
    %v344 = vrot.slane %v343, 1
    %v345 = vadd.f32 %v343, %v344
    %s346 = vtos %v345
    %v347 = vstv %s346
    %v348 = vadd.f32 %v210, %v347
    %vm349 = vcmask 0
    %350 = vst.msk [vmem:[#allocation2] sm:$0x1] %vm349, %v348
    // Predicated region
    $region14: #{vqvae_forward.37} parent=1 // pred_check
      %p351 = pneg %p12
    $region15: #{vqvae_forward.37} parent=1 // pred_check_branch
      %353 = sbr.rel (%p351) target = $region17
    $region16: #{vqvae_forward.37} parent=1 // pred_region
      %v354 = vld [vmem:[#allocation2] sm:$0x1]
      %v355 = vmul.f32 %v354, 0.0006510417
      %356 = vst.msk [vmem:[#allocation3] sm:$0x1] %vm349, %v355
    $region17: #{vqvae_forward.37} parent=1 // pred_fallthru
      _
    // Predicated region
    $region18: #{vqvae_forward.37} parent=1 // pred_check
      _
    $region19: #{vqvae_forward.37} parent=1 // pred_check_branch
      %358 = sbr.rel (0) target = $region21
    $region20: #{vqvae_forward.37} parent=1 // pred_region
      %360 = vsyncadd [#allocation4], 0
      %s362 = sshll.u32 [#allocation3], 4
      %s363 = int_to_ptr.vmem [resolvable:$true] %s362
      %s364 = sshll.u32 %s2, 4
      %s365 = int_to_ptr.hbm [resolvable:$true] %s364
      %367 = dma.vmem_to_hbm [thread:$0]  %s363, 16, %s365, [#allocation4]
    $region21: #{vqvae_forward.37} parent=1 // pred_fallthru
      _
    // Predicated region
    $region22: #{vqvae_forward.37} parent=1 // pred_check
      _
    $region23: #{vqvae_forward.37} parent=1 // pred_check_branch
      %369 = sbr.rel (0) target = $region25
    $region24: #{vqvae_forward.37} parent=1 // pred_region
      %371 = dma.done [#allocation4], 16
    $region25: #{vqvae_forward.37} parent=1 // pred_fallthru
      _
    %372 = vsyncpa [#allocation4], 1

// kernel: vqvae_forward.36
$region0: #{vqvae_forward.36}
  #allocation0 [shape = 'u32[]', space=smem, size = 0x4, offset = 0x4, fixed_abs, tag = 'smem constant byte address 0x4 - core index']
  #allocation1 [shape = 'u32[72,128]{1,0:T(1,128)}', space=vmem, size = 0x9000, scoped, tag = 'internal scratch']
  #allocation2 [shape = 'f32[128,256]{1,0:T(8,128)}', space=vmem, size = 0x20000, scoped, tag = 'scratch operand']
  %s0 = inlined_call_operand.vmem [shape: bf16[128,1152], index: 0, kind: input, shape index: {}]
  %s1 = inlined_call_operand.vmem [shape: bf16[1152,512], index: 1, kind: input, shape index: {}]
  %s2 = inlined_call_operand.vmem [shape: f32[1,512], index: 2, kind: input, shape index: {}]
  %s3 = inlined_call_operand.vmem [shape: f32[128,512], index: 3, kind: output, shape index: {}]
  %s4 = sld [smem:[#allocation0]]
  $region136: #{vqvae_forward.36} parent=0
    _
  %s6 = ssub.s32 1, %s4
  %s7 = scalar_select 0, %s6, %s4
  $region1: #{vqvae_forward.36} parent=0
    #allocation3 [shape = 'u8[196608]{0}', space=vmem, size = 0x30000, scoped, tag = 'input window, operand 0']
    #allocation4 [shape = 'u8[393216]{0}', space=vmem, size = 0x60000, scoped, tag = 'input window, operand 1']
    #allocation5 [shape = 'u8[262144]{0}', space=vmem, size = 0x40000, scoped, tag = 'output window, operand 0']
    loop: start=0, step=1, limit=8
    $region2: #{vqvae_forward.36} parent=1 // loop_pre_header
      _
    $region3: #{vqvae_forward.36} parent=1 // loop_header
      %s9 = sphi 0, %s13
      %p10 = scmp.ge.s32.totalorder %s9, 8
      %s16 = sphi 0, %s35
      %s17 = sphi 0, %s31
      %s18 = sphi 0, %s27
      %s19 = sphi 0, %s16
      %s20 = sphi 0, %s17
      %s21 = sphi 0, %s18
      %s22 = sphi 0, %s19
      %s23 = sphi 0, %s20
      %s24 = sphi 0, %s21
      %s40 = sphi 0, %s42
      %s43 = sphi 0, %s40
      %s44 = sphi 0, %s43
      %s60 = sphi 0, %s44
      %s68 = sphi 0, %s70
      %s71 = sphi 0, %s68
      %s72 = sphi 0, %s71
      %s88 = sphi 0, %s72
      %s94 = sphi 0, %s96
      %s97 = sphi 0, %s94
      %s98 = sphi 0, %s97
      %s114 = sphi 0, %s98
      %s122 = sphi 0, %s124
      %s125 = sphi 0, %s122
      %s126 = sphi 0, %s125
      %s142 = sphi 0, %s126
    $region4: #{vqvae_forward.36} parent=1 // loop_header_branch
      %12 = sbr.rel (%p10) target = $region8
    $region5: #{vqvae_forward.36} parent=1 // loop_body
      %s14 = ssub.s32 %s9, 1
      %s15 = ssub.s32 %s9, 2
      %s25 = sadd.s32 1, %s18
      %p26 = scmp.ge.s32.totalorder %s25, 3
      %s27 = scalar_select %p26, 0, %s25
      %s28 = sadd.s32 1, %s17
      %s29 = scalar_select %p26, %s28, %s17
      %p30 = scmp.ge.s32.totalorder %s29, 2
      %s31 = scalar_select %p30, 0, %s29
      %s32 = sadd.s32 1, %s16
      %s33 = scalar_select %p30, %s32, %s16
      %p34 = scmp.ge.s32.totalorder %s33, 1
      %s35 = scalar_select %p34, 0, %s33
      %s36 = ssub.s32 %s16, %s35
      %s37 = ssub.s32 %s18, %s27
      %s38 = sor.u32 %s36, %s37
      %p39 = scmp.eq.s32.totalorder %s38, 0
      %s41 = sadd.s32 %s40, 1
      %s42 = scalar_select %p39, %s40, %s41
      %p45 = pneg %p39
      %p46 = scmp.eq.s32.totalorder %s9, 5
      %p47 = por %p45, %p46
      %p48 = scmp.ne.s32.totalorder %s40, %s43
      %p49 = scmp.eq.s32.totalorder %s9, 0
      %p50 = por %p48, %p49
      %p51 = scmp.ne.s32.totalorder %s40, %s43
      %p52 = scmp.eq.s32.totalorder %s14, 5
      %p53 = por %p51, %p52
      %p54 = scmp.ne.s32.totalorder %s43, %s44
      %p55 = scmp.eq.s32.totalorder %s14, 0
      %p56 = por %p54, %p55
      %p57 = scmp.ne.s32.totalorder %s43, %s44
      %p58 = scmp.eq.s32.totalorder %s15, 5
      %p59 = por %p57, %p58
      %p61 = scmp.ne.s32.totalorder %s44, %s60
      %p62 = scmp.eq.s32.totalorder %s15, 0
      %p63 = por %p61, %p62
      %s64 = ssub.s32 %s18, %s27
      %s65 = ssub.s32 %s17, %s31
      %s66 = sor.u32 %s64, %s65
      %p67 = scmp.eq.s32.totalorder %s66, 0
      %s69 = sadd.s32 %s68, 1
      %s70 = scalar_select %p67, %s68, %s69
      %p73 = pneg %p67
      %p74 = scmp.eq.s32.totalorder %s9, 5
      %p75 = por %p73, %p74
      %p76 = scmp.ne.s32.totalorder %s68, %s71
      %p77 = scmp.eq.s32.totalorder %s9, 0
      %p78 = por %p76, %p77
      %p79 = scmp.ne.s32.totalorder %s68, %s71
      %p80 = scmp.eq.s32.totalorder %s14, 5
      %p81 = por %p79, %p80
      %p82 = scmp.ne.s32.totalorder %s71, %s72
      %p83 = scmp.eq.s32.totalorder %s14, 0
      %p84 = por %p82, %p83
      %p85 = scmp.ne.s32.totalorder %s71, %s72
      %p86 = scmp.eq.s32.totalorder %s15, 5
      %p87 = por %p85, %p86
      %p89 = scmp.ne.s32.totalorder %s72, %s88
      %p90 = scmp.eq.s32.totalorder %s15, 0
      %p91 = por %p89, %p90
      %s92 = ssub.s32 %s17, %s31
      %p93 = scmp.eq.s32.totalorder %s92, 0
      %s95 = sadd.s32 %s94, 1
      %s96 = scalar_select %p93, %s94, %s95
      %p99 = pneg %p93
      %p100 = scmp.eq.s32.totalorder %s9, 5
      %p101 = por %p99, %p100
      %p102 = scmp.ne.s32.totalorder %s94, %s97
      %p103 = scmp.eq.s32.totalorder %s9, 0
      %p104 = por %p102, %p103
      %p105 = scmp.ne.s32.totalorder %s94, %s97
      %p106 = scmp.eq.s32.totalorder %s14, 5
      %p107 = por %p105, %p106
      %p108 = scmp.ne.s32.totalorder %s97, %s98
      %p109 = scmp.eq.s32.totalorder %s14, 0
      %p110 = por %p108, %p109
      %p111 = scmp.ne.s32.totalorder %s97, %s98
      %p112 = scmp.eq.s32.totalorder %s15, 5
      %p113 = por %p111, %p112
      %p115 = scmp.ne.s32.totalorder %s98, %s114
      %p116 = scmp.eq.s32.totalorder %s15, 0
      %p117 = por %p115, %p116
      %s118 = ssub.s32 %s16, %s35
      %s119 = ssub.s32 %s17, %s31
      %s120 = sor.u32 %s118, %s119
      %p121 = scmp.eq.s32.totalorder %s120, 0
      %s123 = sadd.s32 %s122, 1
      %s124 = scalar_select %p121, %s122, %s123
      %p127 = pneg %p121
      %p128 = scmp.eq.s32.totalorder %s9, 5
      %p129 = por %p127, %p128
      %p130 = scmp.ne.s32.totalorder %s122, %s125
      %p131 = scmp.eq.s32.totalorder %s9, 0
      %p132 = por %p130, %p131
      %p133 = scmp.ne.s32.totalorder %s122, %s125
      %p134 = scmp.eq.s32.totalorder %s14, 5
      %p135 = por %p133, %p134
      %p136 = scmp.ne.s32.totalorder %s125, %s126
      %p137 = scmp.eq.s32.totalorder %s14, 0
      %p138 = por %p136, %p137
      %p139 = scmp.ne.s32.totalorder %s125, %s126
      %p140 = scmp.eq.s32.totalorder %s15, 5
      %p141 = por %p139, %p140
      %p143 = scmp.ne.s32.totalorder %s126, %s142
      %p144 = scmp.eq.s32.totalorder %s15, 0
      %p145 = por %p143, %p144
      %p146 = scmp.le.s32.totalorder 1, %s9
      %p147 = scmp.lt.s32.totalorder %s9, 7
      %p148 = pnand %p146, %p147
      %p149 = pneg %p148
      // Predicated region
      $region9: #{vqvae_forward.36} parent=5 // pred_check
        _
      $region10: #{vqvae_forward.36} parent=5 // pred_check_branch
        %151 = sbr.rel (%p148) target = $region12
      $region11: #{vqvae_forward.36} parent=5 // pred_region
        %s152 = ssub.s32 %s9, 1
      $region12: #{vqvae_forward.36} parent=5 // pred_fallthru
        _
      %p153 = scmp.lt.s32.totalorder %s9, 6
      // Predicated region
      $region13: #{vqvae_forward.36} parent=5 // pred_check
        %p154 = pneg %p153
      $region14: #{vqvae_forward.36} parent=5 // pred_check_branch
        %156 = sbr.rel (%p154) target = $region16
      $region15: #{vqvae_forward.36} parent=5 // pred_region
        // Predicated region
        $region17: #{vqvae_forward.36} parent=15 // pred_check
          %p157 = pneg %p50
        $region18: #{vqvae_forward.36} parent=15 // pred_check_branch
          %159 = sbr.rel (%p157) target = $region20
        $region19: #{vqvae_forward.36} parent=15 // pred_region
          %s160 = sand.u32 %s40, 1
          %s161 = sand.u32 %s40, 1
          %s162 = smul.addr %s161, 192
          %s163 = scalar_lea.vmem [#allocation3], %s162
          %s164 = smul.u32 16, %s16
          %s165 = smul.u32 3, %s18
          %s166 = smul.addr %s164, 9
          %s167 = sadd.s32 %s165, %s166
          %s168 = smul.addr %s167, 4
          %s169 = scalar_lea.vmem %s0, %s168
          // Predicated region
          $region21: #{vqvae_forward.36} parent=19 // pred_check
            _
          $region22: #{vqvae_forward.36} parent=19 // pred_check_branch
            %171 = sbr.rel (0) target = $region24
          $region23: #{vqvae_forward.36} parent=19 // pred_region
            // Predicated region
            $region25: #{vqvae_forward.36} parent=23 // pred_check
              _
            $region26: #{vqvae_forward.36} parent=23 // pred_check_branch
              %173 = sbr.rel (0) target = $region28
            $region27: #{vqvae_forward.36} parent=23 // pred_region
              %s174 = scalar_lea.vmem %s169, 8
              %s175 = scalar_lea.vmem %s163, 8 [#allocation3]
              loop: start=0, step=1, limit=1
              $region29: #{vqvae_forward.36} parent=27 // loop_pre_header
                _
              $region30: #{vqvae_forward.36} parent=27 // loop_header
                %s177 = sphi 0, %s181
                %p178 = scmp.ge.s32.totalorder %s177, 1
                %s182 = sphi %s169, %s169
                %s183 = sphi %s163, %s163
              $region31: #{vqvae_forward.36} parent=27 // loop_header_branch
                %180 = sbr.rel (%p178) target = $region35
              $region32: #{vqvae_forward.36} parent=27 // loop_body
                %v184 = vld [vmem:[%s182] sm:$0xff]
                %185 = vst [vmem:[%s183] sm:$0xff] %v184
                %v186 = vld [vmem:[%s182 + $0x24] sm:$0xff]
                %187 = vst [vmem:[%s183 + $0xc] sm:$0xff] %v186
                %v188 = vld [vmem:[%s182 + $0x48] sm:$0xff]
                %189 = vst [vmem:[%s183 + $0x18] sm:$0xff] %v188
                %v190 = vld [vmem:[%s182 + $0x6c] sm:$0xff]
                %191 = vst [vmem:[%s183 + $0x24] sm:$0xff] %v190
                %v192 = vld [vmem:[%s182 + $0x90] sm:$0xff]
                %193 = vst [vmem:[%s183 + $0x30] sm:$0xff] %v192
                %v194 = vld [vmem:[%s182 + $0xb4] sm:$0xff]
                %195 = vst [vmem:[%s183 + $0x3c] sm:$0xff] %v194
                %v196 = vld [vmem:[%s182 + $0xd8] sm:$0xff]
                %197 = vst [vmem:[%s183 + $0x48] sm:$0xff] %v196
                %v198 = vld [vmem:[%s182 + $0xfc] sm:$0xff]
                %199 = vst [vmem:[%s183 + $0x54] sm:$0xff] %v198
                %v200 = vld [vmem:[%s182 + $0x120] sm:$0xff]
                %201 = vst [vmem:[%s183 + $0x60] sm:$0xff] %v200
                %v202 = vld [vmem:[%s182 + $0x144] sm:$0xff]
                %203 = vst [vmem:[%s183 + $0x6c] sm:$0xff] %v202
                %v204 = vld [vmem:[%s182 + $0x168] sm:$0xff]
                %205 = vst [vmem:[%s183 + $0x78] sm:$0xff] %v204
                %v206 = vld [vmem:[%s182 + $0x18c] sm:$0xff]
                %207 = vst [vmem:[%s183 + $0x84] sm:$0xff] %v206
                %v208 = vld [vmem:[%s182 + $0x1b0] sm:$0xff]
                %209 = vst [vmem:[%s183 + $0x90] sm:$0xff] %v208
                %v210 = vld [vmem:[%s182 + $0x1d4] sm:$0xff]
                %211 = vst [vmem:[%s183 + $0x9c] sm:$0xff] %v210
                %v212 = vld [vmem:[%s182 + $0x1f8] sm:$0xff]
                %213 = vst [vmem:[%s183 + $0xa8] sm:$0xff] %v212
                %v214 = vld [vmem:[%s182 + $0x21c] sm:$0xff]
                %215 = vst [vmem:[%s183 + $0xb4] sm:$0xff] %v214
              $region33: #{vqvae_forward.36} parent=27 // loop_footer
                %s181 = sadd.s32 1, %s177
              $region34: #{vqvae_forward.36} parent=27 // loop_footer_branch
                %176 = sbr.rel target = $region30
              $region35: #{vqvae_forward.36} parent=27 // loop_exit
                _
              %s217 = ssub.s32 16, 1
              loop: start=0, step=1, limit=1
              $region36: #{vqvae_forward.36} parent=27 // loop_pre_header
                _
              $region37: #{vqvae_forward.36} parent=27 // loop_header
                %s219 = sphi 0, %s223
                %p220 = scmp.ge.s32.totalorder %s219, 1
                %s224 = sphi %s174, %s174
                %s225 = sphi %s175, %s175
              $region38: #{vqvae_forward.36} parent=27 // loop_header_branch
                %222 = sbr.rel (%p220) target = $region42
              $region39: #{vqvae_forward.36} parent=27 // loop_body
                %v226 = vld [vmem:[%s224] sm:%s217]
                %227 = vst [vmem:[%s225] sm:%s217] %v226
                %v228 = vld [vmem:[%s224 + $0x24] sm:%s217]
                %229 = vst [vmem:[%s225 + $0xc] sm:%s217] %v228
                %v230 = vld [vmem:[%s224 + $0x48] sm:%s217]
                %231 = vst [vmem:[%s225 + $0x18] sm:%s217] %v230
                %v232 = vld [vmem:[%s224 + $0x6c] sm:%s217]
                %233 = vst [vmem:[%s225 + $0x24] sm:%s217] %v232
                %v234 = vld [vmem:[%s224 + $0x90] sm:%s217]
                %235 = vst [vmem:[%s225 + $0x30] sm:%s217] %v234
                %v236 = vld [vmem:[%s224 + $0xb4] sm:%s217]
                %237 = vst [vmem:[%s225 + $0x3c] sm:%s217] %v236
                %v238 = vld [vmem:[%s224 + $0xd8] sm:%s217]
                %239 = vst [vmem:[%s225 + $0x48] sm:%s217] %v238
                %v240 = vld [vmem:[%s224 + $0xfc] sm:%s217]
                %241 = vst [vmem:[%s225 + $0x54] sm:%s217] %v240
                %v242 = vld [vmem:[%s224 + $0x120] sm:%s217]
                %243 = vst [vmem:[%s225 + $0x60] sm:%s217] %v242
                %v244 = vld [vmem:[%s224 + $0x144] sm:%s217]
                %245 = vst [vmem:[%s225 + $0x6c] sm:%s217] %v244
                %v246 = vld [vmem:[%s224 + $0x168] sm:%s217]
                %247 = vst [vmem:[%s225 + $0x78] sm:%s217] %v246
                %v248 = vld [vmem:[%s224 + $0x18c] sm:%s217]
                %249 = vst [vmem:[%s225 + $0x84] sm:%s217] %v248
                %v250 = vld [vmem:[%s224 + $0x1b0] sm:%s217]
                %251 = vst [vmem:[%s225 + $0x90] sm:%s217] %v250
                %v252 = vld [vmem:[%s224 + $0x1d4] sm:%s217]
                %253 = vst [vmem:[%s225 + $0x9c] sm:%s217] %v252
                %v254 = vld [vmem:[%s224 + $0x1f8] sm:%s217]
                %255 = vst [vmem:[%s225 + $0xa8] sm:%s217] %v254
                %v256 = vld [vmem:[%s224 + $0x21c] sm:%s217]
                %257 = vst [vmem:[%s225 + $0xb4] sm:%s217] %v256
              $region40: #{vqvae_forward.36} parent=27 // loop_footer
                %s223 = sadd.s32 1, %s219
              $region41: #{vqvae_forward.36} parent=27 // loop_footer_branch
                %218 = sbr.rel target = $region37
              $region42: #{vqvae_forward.36} parent=27 // loop_exit
                _
            $region28: #{vqvae_forward.36} parent=23 // pred_fallthru
              _
          $region24: #{vqvae_forward.36} parent=19 // pred_fallthru
            _
          %258 = vnop
        $region20: #{vqvae_forward.36} parent=15 // pred_fallthru
          _
        // Predicated region
        $region43: #{vqvae_forward.36} parent=15 // pred_check
          %p259 = pneg %p78
        $region44: #{vqvae_forward.36} parent=15 // pred_check_branch
          %261 = sbr.rel (%p259) target = $region46
        $region45: #{vqvae_forward.36} parent=15 // pred_region
          %s262 = sand.u32 %s68, 1
          %s263 = sand.u32 %s68, 1
          %s264 = smul.addr %s263, 384
          %s265 = scalar_lea.vmem [#allocation4], %s264
          %s266 = smul.u32 48, %s18
          %s267 = smul.u32 2, %s17
          %s268 = smul.addr %s266, 4
          %s269 = sadd.s32 %s267, %s268
          %s270 = smul.addr %s269, 4
          %s271 = scalar_lea.vmem %s1, %s270
          // Predicated region
          $region47: #{vqvae_forward.36} parent=45 // pred_check
            _
          $region48: #{vqvae_forward.36} parent=45 // pred_check_branch
            %273 = sbr.rel (0) target = $region50
          $region49: #{vqvae_forward.36} parent=45 // pred_region
            // Predicated region
            $region51: #{vqvae_forward.36} parent=49 // pred_check
              _
            $region52: #{vqvae_forward.36} parent=49 // pred_check_branch
              %275 = sbr.rel (0) target = $region54
            $region53: #{vqvae_forward.36} parent=49 // pred_region
              // Predicated region
              $region66: #{vqvae_forward.36} parent=53 // pred_check
                _
              $region67: #{vqvae_forward.36} parent=53 // pred_check_branch
                %385 = sbr.rel (0) target = $region69
              $region68: #{vqvae_forward.36} parent=53 // pred_region
                loop: start=0, step=1, limit=1
                $region70: #{vqvae_forward.36} parent=68 // loop_pre_header
                  _
                $region71: #{vqvae_forward.36} parent=68 // loop_header
                  %s387 = sphi 0, %s391
                  %p388 = scmp.ge.s32.totalorder %s387, 1
                  %s392 = sphi %s271, %s271
                  %s393 = sphi %s265, %s265
                $region72: #{vqvae_forward.36} parent=68 // loop_header_branch
                  %390 = sbr.rel (%p388) target = $region76
                $region73: #{vqvae_forward.36} parent=68 // loop_body
                  %v394 = vld [vmem:[%s392] sm:$0xff]
                  %395 = vst [vmem:[%s393] sm:$0xff] %v394
                  %v396 = vld [vmem:[%s392 + $0x10] sm:$0xff]
                  %397 = vst [vmem:[%s393 + $0x8] sm:$0xff] %v396
                  %v398 = vld [vmem:[%s392 + $0x20] sm:$0xff]
                  %399 = vst [vmem:[%s393 + $0x10] sm:$0xff] %v398
                  %v400 = vld [vmem:[%s392 + $0x30] sm:$0xff]
                  %401 = vst [vmem:[%s393 + $0x18] sm:$0xff] %v400
                  %v402 = vld [vmem:[%s392 + $0x40] sm:$0xff]
                  %403 = vst [vmem:[%s393 + $0x20] sm:$0xff] %v402
                  %v404 = vld [vmem:[%s392 + $0x50] sm:$0xff]
                  %405 = vst [vmem:[%s393 + $0x28] sm:$0xff] %v404
                  %v406 = vld [vmem:[%s392 + $0x60] sm:$0xff]
                  %407 = vst [vmem:[%s393 + $0x30] sm:$0xff] %v406
                  %v408 = vld [vmem:[%s392 + $0x70] sm:$0xff]
                  %409 = vst [vmem:[%s393 + $0x38] sm:$0xff] %v408
                  %v410 = vld [vmem:[%s392 + $0x80] sm:$0xff]
                  %411 = vst [vmem:[%s393 + $0x40] sm:$0xff] %v410
                  %v412 = vld [vmem:[%s392 + $0x90] sm:$0xff]
                  %413 = vst [vmem:[%s393 + $0x48] sm:$0xff] %v412
                  %v414 = vld [vmem:[%s392 + $0xa0] sm:$0xff]
                  %415 = vst [vmem:[%s393 + $0x50] sm:$0xff] %v414
                  %v416 = vld [vmem:[%s392 + $0xb0] sm:$0xff]
                  %417 = vst [vmem:[%s393 + $0x58] sm:$0xff] %v416
                  %v418 = vld [vmem:[%s392 + $0xc0] sm:$0xff]
                  %419 = vst [vmem:[%s393 + $0x60] sm:$0xff] %v418
                  %v420 = vld [vmem:[%s392 + $0xd0] sm:$0xff]
                  %421 = vst [vmem:[%s393 + $0x68] sm:$0xff] %v420
                  %v422 = vld [vmem:[%s392 + $0xe0] sm:$0xff]
                  %423 = vst [vmem:[%s393 + $0x70] sm:$0xff] %v422
                  %v424 = vld [vmem:[%s392 + $0xf0] sm:$0xff]
                  %425 = vst [vmem:[%s393 + $0x78] sm:$0xff] %v424
                  %v426 = vld [vmem:[%s392 + $0x100] sm:$0xff]
                  %427 = vst [vmem:[%s393 + $0x80] sm:$0xff] %v426
                  %v428 = vld [vmem:[%s392 + $0x110] sm:$0xff]
                  %429 = vst [vmem:[%s393 + $0x88] sm:$0xff] %v428
                  %v430 = vld [vmem:[%s392 + $0x120] sm:$0xff]
                  %431 = vst [vmem:[%s393 + $0x90] sm:$0xff] %v430
                  %v432 = vld [vmem:[%s392 + $0x130] sm:$0xff]
                  %433 = vst [vmem:[%s393 + $0x98] sm:$0xff] %v432
                  %v434 = vld [vmem:[%s392 + $0x140] sm:$0xff]
                  %435 = vst [vmem:[%s393 + $0xa0] sm:$0xff] %v434
                  %v436 = vld [vmem:[%s392 + $0x150] sm:$0xff]
                  %437 = vst [vmem:[%s393 + $0xa8] sm:$0xff] %v436
                  %v438 = vld [vmem:[%s392 + $0x160] sm:$0xff]
                  %439 = vst [vmem:[%s393 + $0xb0] sm:$0xff] %v438
                  %v440 = vld [vmem:[%s392 + $0x170] sm:$0xff]
                  %441 = vst [vmem:[%s393 + $0xb8] sm:$0xff] %v440
                  %v442 = vld [vmem:[%s392 + $0x180] sm:$0xff]
                  %443 = vst [vmem:[%s393 + $0xc0] sm:$0xff] %v442
                  %v444 = vld [vmem:[%s392 + $0x190] sm:$0xff]
                  %445 = vst [vmem:[%s393 + $0xc8] sm:$0xff] %v444
                  %v446 = vld [vmem:[%s392 + $0x1a0] sm:$0xff]
                  %447 = vst [vmem:[%s393 + $0xd0] sm:$0xff] %v446
                  %v448 = vld [vmem:[%s392 + $0x1b0] sm:$0xff]
                  %449 = vst [vmem:[%s393 + $0xd8] sm:$0xff] %v448
                  %v450 = vld [vmem:[%s392 + $0x1c0] sm:$0xff]
                  %451 = vst [vmem:[%s393 + $0xe0] sm:$0xff] %v450
                  %v452 = vld [vmem:[%s392 + $0x1d0] sm:$0xff]
                  %453 = vst [vmem:[%s393 + $0xe8] sm:$0xff] %v452
                  %v454 = vld [vmem:[%s392 + $0x1e0] sm:$0xff]
                  %455 = vst [vmem:[%s393 + $0xf0] sm:$0xff] %v454
                  %v456 = vld [vmem:[%s392 + $0x1f0] sm:$0xff]
                  %457 = vst [vmem:[%s393 + $0xf8] sm:$0xff] %v456
                  %v458 = vld [vmem:[%s392 + $0x200] sm:$0xff]
                  %459 = vst [vmem:[%s393 + $0x100] sm:$0xff] %v458
                  %v460 = vld [vmem:[%s392 + $0x210] sm:$0xff]
                  %461 = vst [vmem:[%s393 + $0x108] sm:$0xff] %v460
                  %v462 = vld [vmem:[%s392 + $0x220] sm:$0xff]
                  %463 = vst [vmem:[%s393 + $0x110] sm:$0xff] %v462
                  %v464 = vld [vmem:[%s392 + $0x230] sm:$0xff]
                  %465 = vst [vmem:[%s393 + $0x118] sm:$0xff] %v464
                  %v466 = vld [vmem:[%s392 + $0x240] sm:$0xff]
                  %467 = vst [vmem:[%s393 + $0x120] sm:$0xff] %v466
                  %v468 = vld [vmem:[%s392 + $0x250] sm:$0xff]
                  %469 = vst [vmem:[%s393 + $0x128] sm:$0xff] %v468
                  %v470 = vld [vmem:[%s392 + $0x260] sm:$0xff]
                  %471 = vst [vmem:[%s393 + $0x130] sm:$0xff] %v470
                  %v472 = vld [vmem:[%s392 + $0x270] sm:$0xff]
                  %473 = vst [vmem:[%s393 + $0x138] sm:$0xff] %v472
                  %v474 = vld [vmem:[%s392 + $0x280] sm:$0xff]
                  %475 = vst [vmem:[%s393 + $0x140] sm:$0xff] %v474
                  %v476 = vld [vmem:[%s392 + $0x290] sm:$0xff]
                  %477 = vst [vmem:[%s393 + $0x148] sm:$0xff] %v476
                  %v478 = vld [vmem:[%s392 + $0x2a0] sm:$0xff]
                  %479 = vst [vmem:[%s393 + $0x150] sm:$0xff] %v478
                  %v480 = vld [vmem:[%s392 + $0x2b0] sm:$0xff]
                  %481 = vst [vmem:[%s393 + $0x158] sm:$0xff] %v480
                  %v482 = vld [vmem:[%s392 + $0x2c0] sm:$0xff]
                  %483 = vst [vmem:[%s393 + $0x160] sm:$0xff] %v482
                  %v484 = vld [vmem:[%s392 + $0x2d0] sm:$0xff]
                  %485 = vst [vmem:[%s393 + $0x168] sm:$0xff] %v484
                  %v486 = vld [vmem:[%s392 + $0x2e0] sm:$0xff]
                  %487 = vst [vmem:[%s393 + $0x170] sm:$0xff] %v486
                  %v488 = vld [vmem:[%s392 + $0x2f0] sm:$0xff]
                  %489 = vst [vmem:[%s393 + $0x178] sm:$0xff] %v488
                $region74: #{vqvae_forward.36} parent=68 // loop_footer
                  %s391 = sadd.s32 1, %s387
                $region75: #{vqvae_forward.36} parent=68 // loop_footer_branch
                  %386 = sbr.rel target = $region71
                $region76: #{vqvae_forward.36} parent=68 // loop_exit
                  _
              $region69: #{vqvae_forward.36} parent=53 // pred_fallthru
                _
              // Predicated region
              $region77: #{vqvae_forward.36} parent=53 // pred_check
                _
              $region78: #{vqvae_forward.36} parent=53 // pred_check_branch
                %491 = sbr.rel target = $region80
              $region79: #{vqvae_forward.36} parent=53 // pred_region
                _
              $region80: #{vqvae_forward.36} parent=53 // pred_fallthru
                _
            $region54: #{vqvae_forward.36} parent=49 // pred_fallthru
              _
            // Predicated region
            $region55: #{vqvae_forward.36} parent=49 // pred_check
              _
            $region56: #{vqvae_forward.36} parent=49 // pred_check_branch
              %277 = sbr.rel target = $region58
            $region57: #{vqvae_forward.36} parent=49 // pred_region
              %s279 = ssub.s32 256, 1
              loop: start=0, step=1, limit=1
              $region59: #{vqvae_forward.36} parent=57 // loop_pre_header
                _
              $region60: #{vqvae_forward.36} parent=57 // loop_header
                %s281 = sphi 0, %s285
                %p282 = scmp.ge.s32.totalorder %s281, 1
                %s286 = sphi %s271, %s271
                %s287 = sphi %s265, %s265
              $region61: #{vqvae_forward.36} parent=57 // loop_header_branch
                %284 = sbr.rel (%p282) target = $region65
              $region62: #{vqvae_forward.36} parent=57 // loop_body
                %v288 = vld [vmem:[%s286] sm:%s279]
                %289 = vst [vmem:[%s287] sm:%s279] %v288
                %v290 = vld [vmem:[%s286 + $0x10] sm:%s279]
                %291 = vst [vmem:[%s287 + $0x8] sm:%s279] %v290
                %v292 = vld [vmem:[%s286 + $0x20] sm:%s279]
                %293 = vst [vmem:[%s287 + $0x10] sm:%s279] %v292
                %v294 = vld [vmem:[%s286 + $0x30] sm:%s279]
                %295 = vst [vmem:[%s287 + $0x18] sm:%s279] %v294
                %v296 = vld [vmem:[%s286 + $0x40] sm:%s279]
                %297 = vst [vmem:[%s287 + $0x20] sm:%s279] %v296
                %v298 = vld [vmem:[%s286 + $0x50] sm:%s279]
                %299 = vst [vmem:[%s287 + $0x28] sm:%s279] %v298
                %v300 = vld [vmem:[%s286 + $0x60] sm:%s279]
                %301 = vst [vmem:[%s287 + $0x30] sm:%s279] %v300
                %v302 = vld [vmem:[%s286 + $0x70] sm:%s279]
                %303 = vst [vmem:[%s287 + $0x38] sm:%s279] %v302
                %v304 = vld [vmem:[%s286 + $0x80] sm:%s279]
                %305 = vst [vmem:[%s287 + $0x40] sm:%s279] %v304
                %v306 = vld [vmem:[%s286 + $0x90] sm:%s279]
                %307 = vst [vmem:[%s287 + $0x48] sm:%s279] %v306
                %v308 = vld [vmem:[%s286 + $0xa0] sm:%s279]
                %309 = vst [vmem:[%s287 + $0x50] sm:%s279] %v308
                %v310 = vld [vmem:[%s286 + $0xb0] sm:%s279]
                %311 = vst [vmem:[%s287 + $0x58] sm:%s279] %v310
                %v312 = vld [vmem:[%s286 + $0xc0] sm:%s279]
                %313 = vst [vmem:[%s287 + $0x60] sm:%s279] %v312
                %v314 = vld [vmem:[%s286 + $0xd0] sm:%s279]
                %315 = vst [vmem:[%s287 + $0x68] sm:%s279] %v314
                %v316 = vld [vmem:[%s286 + $0xe0] sm:%s279]
                %317 = vst [vmem:[%s287 + $0x70] sm:%s279] %v316
                %v318 = vld [vmem:[%s286 + $0xf0] sm:%s279]
                %319 = vst [vmem:[%s287 + $0x78] sm:%s279] %v318
                %v320 = vld [vmem:[%s286 + $0x100] sm:%s279]
                %321 = vst [vmem:[%s287 + $0x80] sm:%s279] %v320
                %v322 = vld [vmem:[%s286 + $0x110] sm:%s279]
                %323 = vst [vmem:[%s287 + $0x88] sm:%s279] %v322
                %v324 = vld [vmem:[%s286 + $0x120] sm:%s279]
                %325 = vst [vmem:[%s287 + $0x90] sm:%s279] %v324
                %v326 = vld [vmem:[%s286 + $0x130] sm:%s279]
                %327 = vst [vmem:[%s287 + $0x98] sm:%s279] %v326
                %v328 = vld [vmem:[%s286 + $0x140] sm:%s279]
                %329 = vst [vmem:[%s287 + $0xa0] sm:%s279] %v328
                %v330 = vld [vmem:[%s286 + $0x150] sm:%s279]
                %331 = vst [vmem:[%s287 + $0xa8] sm:%s279] %v330
                %v332 = vld [vmem:[%s286 + $0x160] sm:%s279]
                %333 = vst [vmem:[%s287 + $0xb0] sm:%s279] %v332
                %v334 = vld [vmem:[%s286 + $0x170] sm:%s279]
                %335 = vst [vmem:[%s287 + $0xb8] sm:%s279] %v334
                %v336 = vld [vmem:[%s286 + $0x180] sm:%s279]
                %337 = vst [vmem:[%s287 + $0xc0] sm:%s279] %v336
                %v338 = vld [vmem:[%s286 + $0x190] sm:%s279]
                %339 = vst [vmem:[%s287 + $0xc8] sm:%s279] %v338
                %v340 = vld [vmem:[%s286 + $0x1a0] sm:%s279]
                %341 = vst [vmem:[%s287 + $0xd0] sm:%s279] %v340
                %v342 = vld [vmem:[%s286 + $0x1b0] sm:%s279]
                %343 = vst [vmem:[%s287 + $0xd8] sm:%s279] %v342
                %v344 = vld [vmem:[%s286 + $0x1c0] sm:%s279]
                %345 = vst [vmem:[%s287 + $0xe0] sm:%s279] %v344
                %v346 = vld [vmem:[%s286 + $0x1d0] sm:%s279]
                %347 = vst [vmem:[%s287 + $0xe8] sm:%s279] %v346
                %v348 = vld [vmem:[%s286 + $0x1e0] sm:%s279]
                %349 = vst [vmem:[%s287 + $0xf0] sm:%s279] %v348
                %v350 = vld [vmem:[%s286 + $0x1f0] sm:%s279]
                %351 = vst [vmem:[%s287 + $0xf8] sm:%s279] %v350
                %v352 = vld [vmem:[%s286 + $0x200] sm:%s279]
                %353 = vst [vmem:[%s287 + $0x100] sm:%s279] %v352
                %v354 = vld [vmem:[%s286 + $0x210] sm:%s279]
                %355 = vst [vmem:[%s287 + $0x108] sm:%s279] %v354
                %v356 = vld [vmem:[%s286 + $0x220] sm:%s279]
                %357 = vst [vmem:[%s287 + $0x110] sm:%s279] %v356
                %v358 = vld [vmem:[%s286 + $0x230] sm:%s279]
                %359 = vst [vmem:[%s287 + $0x118] sm:%s279] %v358
                %v360 = vld [vmem:[%s286 + $0x240] sm:%s279]
                %361 = vst [vmem:[%s287 + $0x120] sm:%s279] %v360
                %v362 = vld [vmem:[%s286 + $0x250] sm:%s279]
                %363 = vst [vmem:[%s287 + $0x128] sm:%s279] %v362
                %v364 = vld [vmem:[%s286 + $0x260] sm:%s279]
                %365 = vst [vmem:[%s287 + $0x130] sm:%s279] %v364
                %v366 = vld [vmem:[%s286 + $0x270] sm:%s279]
                %367 = vst [vmem:[%s287 + $0x138] sm:%s279] %v366
                %v368 = vld [vmem:[%s286 + $0x280] sm:%s279]
                %369 = vst [vmem:[%s287 + $0x140] sm:%s279] %v368
                %v370 = vld [vmem:[%s286 + $0x290] sm:%s279]
                %371 = vst [vmem:[%s287 + $0x148] sm:%s279] %v370
                %v372 = vld [vmem:[%s286 + $0x2a0] sm:%s279]
                %373 = vst [vmem:[%s287 + $0x150] sm:%s279] %v372
                %v374 = vld [vmem:[%s286 + $0x2b0] sm:%s279]
                %375 = vst [vmem:[%s287 + $0x158] sm:%s279] %v374
                %v376 = vld [vmem:[%s286 + $0x2c0] sm:%s279]
                %377 = vst [vmem:[%s287 + $0x160] sm:%s279] %v376
                %v378 = vld [vmem:[%s286 + $0x2d0] sm:%s279]
                %379 = vst [vmem:[%s287 + $0x168] sm:%s279] %v378
                %v380 = vld [vmem:[%s286 + $0x2e0] sm:%s279]
                %381 = vst [vmem:[%s287 + $0x170] sm:%s279] %v380
                %v382 = vld [vmem:[%s286 + $0x2f0] sm:%s279]
                %383 = vst [vmem:[%s287 + $0x178] sm:%s279] %v382
              $region63: #{vqvae_forward.36} parent=57 // loop_footer
                %s285 = sadd.s32 1, %s281
              $region64: #{vqvae_forward.36} parent=57 // loop_footer_branch
                %280 = sbr.rel target = $region60
              $region65: #{vqvae_forward.36} parent=57 // loop_exit
                _
            $region58: #{vqvae_forward.36} parent=49 // pred_fallthru
              _
          $region50: #{vqvae_forward.36} parent=45 // pred_fallthru
            _
          %492 = vnop
        $region46: #{vqvae_forward.36} parent=15 // pred_fallthru
          _
        // Predicated region
        $region81: #{vqvae_forward.36} parent=15 // pred_check
          %p493 = pneg %p104
        $region82: #{vqvae_forward.36} parent=15 // pred_check_branch
          %495 = sbr.rel (%p493) target = $region84
        $region83: #{vqvae_forward.36} parent=15 // pred_region
          %s496 = smul.u32 2, %s17
          %p497 = scmp.lt.s32.totalorder %s496, 3
          %s498 = scalar_select %p497, %s496, 3
          %s499 = scalar_lea.vmem %s2, %s498
          %s500 = smul.u32 2, %s17
        $region84: #{vqvae_forward.36} parent=15 // pred_fallthru
          _
      $region16: #{vqvae_forward.36} parent=5 // pred_fallthru
        _
      %p501 = scmp.le.s32.totalorder 1, %s9
      %p502 = scmp.lt.s32.totalorder %s9, 7
      %p503 = pnand %p501, %p502
      %p504 = pneg %p503
      // Predicated region
      $region85: #{vqvae_forward.36} parent=5 // pred_check
        _
      $region86: #{vqvae_forward.36} parent=5 // pred_check_branch
        %506 = sbr.rel (%p503) target = $region88
      $region87: #{vqvae_forward.36} parent=5 // pred_region
        %s507 = ssub.s32 %s9, 1
        %s508 = sand.u32 %s43, 1
        %s509 = sand.u32 %s43, 1
        %s510 = smul.addr %s509, 192
        %s511 = scalar_lea.vmem [#allocation3], %s510
        // Predicated region
        $region89: #{vqvae_forward.36} parent=87 // pred_check
          %p512 = pneg %p56
        $region90: #{vqvae_forward.36} parent=87 // pred_check_branch
          %514 = sbr.rel (%p512) target = $region92
        $region91: #{vqvae_forward.36} parent=87 // pred_region
          _
        $region92: #{vqvae_forward.36} parent=87 // pred_fallthru
          _
        %s515 = sand.u32 %s71, 1
        %s516 = sand.u32 %s71, 1
        %s517 = smul.addr %s516, 384
        %s518 = scalar_lea.vmem [#allocation4], %s517
        // Predicated region
        $region93: #{vqvae_forward.36} parent=87 // pred_check
          %p519 = pneg %p84
        $region94: #{vqvae_forward.36} parent=87 // pred_check_branch
          %521 = sbr.rel (%p519) target = $region96
        $region95: #{vqvae_forward.36} parent=87 // pred_region
          _
        $region96: #{vqvae_forward.36} parent=87 // pred_fallthru
          _
        %s522 = sand.u32 %s43, 1
        %s523 = sand.u32 %s43, 1
        %s524 = smul.addr %s523, 192
        %s525 = scalar_lea.vmem [#allocation3], %s524
        %p526 = pneg %p56
        %p527 = pneg %p53
        %s528 = sand.u32 %s71, 1
        %s529 = sand.u32 %s71, 1
        %s530 = smul.addr %s529, 384
        %s531 = scalar_lea.vmem [#allocation4], %s530
        %p532 = pneg %p84
        %p533 = pneg %p81
        %s534 = smul.u32 2, %s20
        %p535 = scmp.lt.s32.totalorder %s534, 3
        %s536 = scalar_select %p535, %s534, 3
        %s537 = scalar_lea.vmem %s2, %s536
        %p538 = pneg %p110
        %p539 = pneg %p107
        %p540 = pneg %p138
        %p541 = pneg %p135
        %s542 = sand.u32 %s125, 1
        %s543 = sand.u32 %s125, 1
        %s544 = smul.addr %s543, 256
        %s545 = scalar_lea.vmem [#allocation5], %s544
        %s546 = smul.u32 16, %s19
        %s547 = smul.u32 3, %s21
        %s548 = smul.u32 48, %s21
        %s549 = smul.u32 2, %s20
        %s550 = smul.u32 2, %s20
        %p551 = scmp.lt.s32.totalorder %s550, 3
        %s552 = scalar_select %p551, %s550, 3
        %s553 = scalar_lea.vmem %s2, %s552
        %s554 = smul.u32 2, %s20
        %s555 = smul.u32 16, %s19
        %s556 = smul.u32 2, %s20
        %p557 = scmp.eq.s32.totalorder %s21, 0
        // Predicated region
        $region97: #{vqvae_forward.36} parent=87 // pred_check
          %p558 = pneg %p557
        $region98: #{vqvae_forward.36} parent=87 // pred_check_branch
          %560 = sbr.rel (%p558) target = $region100
        $region99: #{vqvae_forward.36} parent=87 // pred_region
          %561 = vst [vmem:[#allocation2] sm:$0xff] 0.0
          %562 = vst [vmem:[#allocation2 + $0x8] sm:$0xff] 0.0
          %563 = vst [vmem:[#allocation2 + $0x10] sm:$0xff] 0.0
          %564 = vst [vmem:[#allocation2 + $0x18] sm:$0xff] 0.0
          %565 = vst [vmem:[#allocation2 + $0x20] sm:$0xff] 0.0
          %566 = vst [vmem:[#allocation2 + $0x28] sm:$0xff] 0.0
          %567 = vst [vmem:[#allocation2 + $0x30] sm:$0xff] 0.0
          %568 = vst [vmem:[#allocation2 + $0x38] sm:$0xff] 0.0
          %569 = vst [vmem:[#allocation2 + $0x40] sm:$0xff] 0.0
          %570 = vst [vmem:[#allocation2 + $0x48] sm:$0xff] 0.0
          %571 = vst [vmem:[#allocation2 + $0x50] sm:$0xff] 0.0
          %572 = vst [vmem:[#allocation2 + $0x58] sm:$0xff] 0.0
          %573 = vst [vmem:[#allocation2 + $0x60] sm:$0xff] 0.0
          %574 = vst [vmem:[#allocation2 + $0x68] sm:$0xff] 0.0
          %575 = vst [vmem:[#allocation2 + $0x70] sm:$0xff] 0.0
          %576 = vst [vmem:[#allocation2 + $0x78] sm:$0xff] 0.0
          %577 = vst [vmem:[#allocation2 + $0x80] sm:$0xff] 0.0
          %578 = vst [vmem:[#allocation2 + $0x88] sm:$0xff] 0.0
          %579 = vst [vmem:[#allocation2 + $0x90] sm:$0xff] 0.0
          %580 = vst [vmem:[#allocation2 + $0x98] sm:$0xff] 0.0
          %581 = vst [vmem:[#allocation2 + $0xa0] sm:$0xff] 0.0
          %582 = vst [vmem:[#allocation2 + $0xa8] sm:$0xff] 0.0
          %583 = vst [vmem:[#allocation2 + $0xb0] sm:$0xff] 0.0
          %584 = vst [vmem:[#allocation2 + $0xb8] sm:$0xff] 0.0
          %585 = vst [vmem:[#allocation2 + $0xc0] sm:$0xff] 0.0
          %586 = vst [vmem:[#allocation2 + $0xc8] sm:$0xff] 0.0
          %587 = vst [vmem:[#allocation2 + $0xd0] sm:$0xff] 0.0
          %588 = vst [vmem:[#allocation2 + $0xd8] sm:$0xff] 0.0
          %589 = vst [vmem:[#allocation2 + $0xe0] sm:$0xff] 0.0
          %590 = vst [vmem:[#allocation2 + $0xe8] sm:$0xff] 0.0
          %591 = vst [vmem:[#allocation2 + $0xf0] sm:$0xff] 0.0
          %592 = vst [vmem:[#allocation2 + $0xf8] sm:$0xff] 0.0
        $region100: #{vqvae_forward.36} parent=87 // pred_fallthru
          _
        %v593 = vld [vmem:[%s511] sm:$0xff]
        %v594 = vld [vmem:[%s511 + $0x8] sm:$0xf]
        %v595 = vld [vmem:[%s511 + $0xc] sm:$0xff]
        %v596 = vld [vmem:[%s511 + $0x14] sm:$0xf]
        %v597 = vld [vmem:[%s511 + $0x18] sm:$0xff]
        %v598 = vld [vmem:[%s511 + $0x20] sm:$0xf]
        %v599 = vld [vmem:[%s511 + $0x24] sm:$0xff]
        %v600 = vld [vmem:[%s511 + $0x2c] sm:$0xf]
        %v601 = vld [vmem:[%s511 + $0x30] sm:$0xff]
        %v602 = vld [vmem:[%s511 + $0x38] sm:$0xf]
        %v603 = vld [vmem:[%s511 + $0x3c] sm:$0xff]
        %v604 = vld [vmem:[%s511 + $0x44] sm:$0xf]
        %v605 = vld [vmem:[%s511 + $0x48] sm:$0xff]
        %v606 = vld [vmem:[%s511 + $0x50] sm:$0xf]
        %v607 = vld [vmem:[%s511 + $0x54] sm:$0xff]
        %v608 = vld [vmem:[%s511 + $0x5c] sm:$0xf]
        %v609 = vld [vmem:[%s511 + $0x60] sm:$0xff]
        %v610 = vld [vmem:[%s511 + $0x68] sm:$0xf]
        %v611 = vld [vmem:[%s511 + $0x6c] sm:$0xff]
        %v612 = vld [vmem:[%s511 + $0x74] sm:$0xf]
        %v613 = vld [vmem:[%s511 + $0x78] sm:$0xff]
        %v614 = vld [vmem:[%s511 + $0x80] sm:$0xf]
        %v615 = vld [vmem:[%s511 + $0x84] sm:$0xff]
        %v616 = vld [vmem:[%s511 + $0x8c] sm:$0xf]
        %v617 = vld [vmem:[%s511 + $0x90] sm:$0xff]
        %v618 = vld [vmem:[%s511 + $0x98] sm:$0xf]
        %v619 = vld [vmem:[%s511 + $0x9c] sm:$0xff]
        %v620 = vld [vmem:[%s511 + $0xa4] sm:$0xf]
        %v621 = vld [vmem:[%s511 + $0xa8] sm:$0xff]
        %v622 = vld [vmem:[%s511 + $0xb0] sm:$0xf]
        %v623 = vld [vmem:[%s511 + $0xb4] sm:$0xff]
        %v624 = vld [vmem:[%s511 + $0xbc] sm:$0xf]
        %v625 = vld [vmem:[#allocation2] sm:$0xff]
        %v626 = vld [vmem:[#allocation2 + $0x8] sm:$0xff]
        %v627 = vld [vmem:[#allocation2 + $0x10] sm:$0xff]
        %v628 = vld [vmem:[#allocation2 + $0x18] sm:$0xff]
        %v629 = vld [vmem:[#allocation2 + $0x20] sm:$0xff]
        %v630 = vld [vmem:[#allocation2 + $0x28] sm:$0xff]
        %v631 = vld [vmem:[#allocation2 + $0x30] sm:$0xff]
        %v632 = vld [vmem:[#allocation2 + $0x38] sm:$0xff]
        %v633 = vld [vmem:[#allocation2 + $0x40] sm:$0xff]
        %v634 = vld [vmem:[#allocation2 + $0x48] sm:$0xff]
        %v635 = vld [vmem:[#allocation2 + $0x50] sm:$0xff]
        %v636 = vld [vmem:[#allocation2 + $0x58] sm:$0xff]
        %v637 = vld [vmem:[#allocation2 + $0x60] sm:$0xff]
        %v638 = vld [vmem:[#allocation2 + $0x68] sm:$0xff]
        %v639 = vld [vmem:[#allocation2 + $0x70] sm:$0xff]
        %v640 = vld [vmem:[#allocation2 + $0x78] sm:$0xff]
        %v641 = vld [vmem:[#allocation2 + $0x80] sm:$0xff]
        %v642 = vld [vmem:[#allocation2 + $0x88] sm:$0xff]
        %v643 = vld [vmem:[#allocation2 + $0x90] sm:$0xff]
        %v644 = vld [vmem:[#allocation2 + $0x98] sm:$0xff]
        %v645 = vld [vmem:[#allocation2 + $0xa0] sm:$0xff]
        %v646 = vld [vmem:[#allocation2 + $0xa8] sm:$0xff]
        %v647 = vld [vmem:[#allocation2 + $0xb0] sm:$0xff]
        %v648 = vld [vmem:[#allocation2 + $0xb8] sm:$0xff]
        %v649 = vld [vmem:[#allocation2 + $0xc0] sm:$0xff]
        %v650 = vld [vmem:[#allocation2 + $0xc8] sm:$0xff]
        %v651 = vld [vmem:[#allocation2 + $0xd0] sm:$0xff]
        %v652 = vld [vmem:[#allocation2 + $0xd8] sm:$0xff]
        %v653 = vld [vmem:[#allocation2 + $0xe0] sm:$0xff]
        %v654 = vld [vmem:[#allocation2 + $0xe8] sm:$0xff]
        %v655 = vld [vmem:[#allocation2 + $0xf0] sm:$0xff]
        %v656 = vld [vmem:[#allocation2 + $0xf8] sm:$0xff]
        %v657 = vld [vmem:[%s518] sm:$0xff]
        %v658 = vld [vmem:[%s518 + $0x8] sm:$0xff]
        %v659 = vld [vmem:[%s518 + $0x10] sm:$0xff]
        %v660 = vld [vmem:[%s518 + $0x18] sm:$0xff]
        %v661 = vld [vmem:[%s518 + $0x20] sm:$0xff]
        %v662 = vld [vmem:[%s518 + $0x28] sm:$0xff]
        %v663 = vld [vmem:[%s518 + $0x30] sm:$0xff]
        %v664 = vld [vmem:[%s518 + $0x38] sm:$0xff]
        %v665 = vld [vmem:[%s518 + $0x40] sm:$0xff]
        %v666 = vld [vmem:[%s518 + $0x48] sm:$0xff]
        %v667 = vld [vmem:[%s518 + $0x50] sm:$0xff]
        %v668 = vld [vmem:[%s518 + $0x58] sm:$0xff]
        %v669 = vld [vmem:[%s518 + $0x60] sm:$0xff]
        %v670 = vld [vmem:[%s518 + $0x68] sm:$0xff]
        %v671 = vld [vmem:[%s518 + $0x70] sm:$0xff]
        %v672 = vld [vmem:[%s518 + $0x78] sm:$0xff]
        %v673 = vld [vmem:[%s518 + $0x80] sm:$0xff]
        %v674 = vld [vmem:[%s518 + $0x88] sm:$0xff]
        %v675 = vld [vmem:[%s518 + $0x90] sm:$0xff]
        %v676 = vld [vmem:[%s518 + $0x98] sm:$0xff]
        %v677 = vld [vmem:[%s518 + $0xa0] sm:$0xff]
        %v678 = vld [vmem:[%s518 + $0xa8] sm:$0xff]
        %v679 = vld [vmem:[%s518 + $0xb0] sm:$0xff]
        %v680 = vld [vmem:[%s518 + $0xb8] sm:$0xff]
        %v681 = vld [vmem:[%s518 + $0xc0] sm:$0xff]
        %v682 = vld [vmem:[%s518 + $0xc8] sm:$0xff]
        %v683 = vld [vmem:[%s518 + $0xd0] sm:$0xff]
        %v684 = vld [vmem:[%s518 + $0xd8] sm:$0xff]
        %v685 = vld [vmem:[%s518 + $0xe0] sm:$0xff]
        %v686 = vld [vmem:[%s518 + $0xe8] sm:$0xff]
        %v687 = vld [vmem:[%s518 + $0xf0] sm:$0xff]
        %v688 = vld [vmem:[%s518 + $0xf8] sm:$0xff]
        %v689 = vld [vmem:[%s518 + $0x100] sm:$0xff]
        %v690 = vld [vmem:[%s518 + $0x108] sm:$0xff]
        %v691 = vld [vmem:[%s518 + $0x110] sm:$0xff]
        %v692 = vld [vmem:[%s518 + $0x118] sm:$0xff]
        %v693 = vld [vmem:[%s518 + $0x120] sm:$0xff]
        %v694 = vld [vmem:[%s518 + $0x128] sm:$0xff]
        %v695 = vld [vmem:[%s518 + $0x130] sm:$0xff]
        %v696 = vld [vmem:[%s518 + $0x138] sm:$0xff]
        %v697 = vld [vmem:[%s518 + $0x140] sm:$0xff]
        %v698 = vld [vmem:[%s518 + $0x148] sm:$0xff]
        %v699 = vld [vmem:[%s518 + $0x150] sm:$0xff]
        %v700 = vld [vmem:[%s518 + $0x158] sm:$0xff]
        %v701 = vld [vmem:[%s518 + $0x160] sm:$0xff]
        %v702 = vld [vmem:[%s518 + $0x168] sm:$0xff]
        %v703 = vld [vmem:[%s518 + $0x170] sm:$0xff]
        %v704 = vld [vmem:[%s518 + $0x178] sm:$0xff]
        %v737 = vunpack.c.l.b16 %v593
        %v738 = vunpack.c.h.b16 %v593
        %v739 = vunpack.c.l.b16 %v594
        %v740 = vunpack.c.l.b16 %v595
        %v741 = vunpack.c.h.b16 %v595
        %v742 = vunpack.c.l.b16 %v596
        %v743 = vunpack.c.l.b16 %v597
        %v744 = vunpack.c.h.b16 %v597
        %v745 = vunpack.c.l.b16 %v598
        %v746 = vunpack.c.l.b16 %v599
        %v747 = vunpack.c.h.b16 %v599
        %v748 = vunpack.c.l.b16 %v600
        %v749 = vunpack.c.l.b16 %v601
        %v750 = vunpack.c.h.b16 %v601
        %v751 = vunpack.c.l.b16 %v602
        %v752 = vunpack.c.l.b16 %v603
        %v753 = vunpack.c.h.b16 %v603
        %v754 = vunpack.c.l.b16 %v604
        %v755 = vunpack.c.l.b16 %v605
        %v756 = vunpack.c.h.b16 %v605
        %v757 = vunpack.c.l.b16 %v606
        %v758 = vunpack.c.l.b16 %v607
        %v759 = vunpack.c.h.b16 %v607
        %v760 = vunpack.c.l.b16 %v608
        %v761 = vunpack.c.l.b16 %v609
        %v762 = vunpack.c.h.b16 %v609
        %v763 = vunpack.c.l.b16 %v610
        %v764 = vunpack.c.l.b16 %v611
        %v765 = vunpack.c.h.b16 %v611
        %v766 = vunpack.c.l.b16 %v612
        %v767 = vunpack.c.l.b16 %v613
        %v768 = vunpack.c.h.b16 %v613
        %v769 = vunpack.c.l.b16 %v614
        %v770 = vunpack.c.l.b16 %v615
        %v771 = vunpack.c.h.b16 %v615
        %v772 = vunpack.c.l.b16 %v616
        %v773 = vunpack.c.l.b16 %v617
        %v774 = vunpack.c.h.b16 %v617
        %v775 = vunpack.c.l.b16 %v618
        %v776 = vunpack.c.l.b16 %v619
        %v777 = vunpack.c.h.b16 %v619
        %v778 = vunpack.c.l.b16 %v620
        %v779 = vunpack.c.l.b16 %v621
        %v780 = vunpack.c.h.b16 %v621
        %v781 = vunpack.c.l.b16 %v622
        %v782 = vunpack.c.l.b16 %v623
        %v783 = vunpack.c.h.b16 %v623
        %v784 = vunpack.c.l.b16 %v624
        %v785 = vpack.c.b16 %v740, %v737
        %v786 = vpack.c.b16 %v741, %v738
        %v787 = vpack.c.b16 %v742, %v739
        %v788 = vpack.c.b16 %v746, %v743
        %v789 = vpack.c.b16 %v747, %v744
        %v790 = vpack.c.b16 %v748, %v745
        %v791 = vpack.c.b16 %v752, %v749
        %v792 = vpack.c.b16 %v753, %v750
        %v793 = vpack.c.b16 %v754, %v751
        %v794 = vpack.c.b16 %v758, %v755
        %v795 = vpack.c.b16 %v759, %v756
        %v796 = vpack.c.b16 %v760, %v757
        %v797 = vpack.c.b16 %v764, %v761
        %v798 = vpack.c.b16 %v765, %v762
        %v799 = vpack.c.b16 %v766, %v763
        %v800 = vpack.c.b16 %v770, %v767
        %v801 = vpack.c.b16 %v771, %v768
        %v802 = vpack.c.b16 %v772, %v769
        %v803 = vpack.c.b16 %v776, %v773
        %v804 = vpack.c.b16 %v777, %v774
        %v805 = vpack.c.b16 %v778, %v775
        %v806 = vpack.c.b16 %v782, %v779
        %v807 = vpack.c.b16 %v783, %v780
        %v808 = vpack.c.b16 %v784, %v781
        %v881 = vunpack.c.l.b16 %v657
        %v882 = vunpack.c.h.b16 %v657
        %v883 = vunpack.c.l.b16 %v658
        %v884 = vunpack.c.h.b16 %v658
        %v885 = vunpack.c.l.b16 %v659
        %v886 = vunpack.c.h.b16 %v659
        %v887 = vunpack.c.l.b16 %v660
        %v888 = vunpack.c.h.b16 %v660
        %v889 = vunpack.c.l.b16 %v661
        %v890 = vunpack.c.h.b16 %v661
        %v891 = vunpack.c.l.b16 %v662
        %v892 = vunpack.c.h.b16 %v662
        %v893 = vunpack.c.l.b16 %v663
        %v894 = vunpack.c.h.b16 %v663
        %v895 = vunpack.c.l.b16 %v664
        %v896 = vunpack.c.h.b16 %v664
        %v897 = vunpack.c.l.b16 %v665
        %v898 = vunpack.c.h.b16 %v665
        %v899 = vunpack.c.l.b16 %v666
        %v900 = vunpack.c.h.b16 %v666
        %v901 = vunpack.c.l.b16 %v667
        %v902 = vunpack.c.h.b16 %v667
        %v903 = vunpack.c.l.b16 %v668
        %v904 = vunpack.c.h.b16 %v668
        %v905 = vunpack.c.l.b16 %v669
        %v906 = vunpack.c.h.b16 %v669
        %v907 = vunpack.c.l.b16 %v670
        %v908 = vunpack.c.h.b16 %v670
        %v909 = vunpack.c.l.b16 %v671
        %v910 = vunpack.c.h.b16 %v671
        %v911 = vunpack.c.l.b16 %v672
        %v912 = vunpack.c.h.b16 %v672
        %v913 = vunpack.c.l.b16 %v673
        %v914 = vunpack.c.h.b16 %v673
        %v915 = vunpack.c.l.b16 %v674
        %v916 = vunpack.c.h.b16 %v674
        %v917 = vunpack.c.l.b16 %v675
        %v918 = vunpack.c.h.b16 %v675
        %v919 = vunpack.c.l.b16 %v676
        %v920 = vunpack.c.h.b16 %v676
        %v921 = vunpack.c.l.b16 %v677
        %v922 = vunpack.c.h.b16 %v677
        %v923 = vunpack.c.l.b16 %v678
        %v924 = vunpack.c.h.b16 %v678
        %v925 = vunpack.c.l.b16 %v679
        %v926 = vunpack.c.h.b16 %v679
        %v927 = vunpack.c.l.b16 %v680
        %v928 = vunpack.c.h.b16 %v680
        %v929 = vunpack.c.l.b16 %v681
        %v930 = vunpack.c.h.b16 %v681
        %v931 = vunpack.c.l.b16 %v682
        %v932 = vunpack.c.h.b16 %v682
        %v933 = vunpack.c.l.b16 %v683
        %v934 = vunpack.c.h.b16 %v683
        %v935 = vunpack.c.l.b16 %v684
        %v936 = vunpack.c.h.b16 %v684
        %v937 = vunpack.c.l.b16 %v685
        %v938 = vunpack.c.h.b16 %v685
        %v939 = vunpack.c.l.b16 %v686
        %v940 = vunpack.c.h.b16 %v686
        %v941 = vunpack.c.l.b16 %v687
        %v942 = vunpack.c.h.b16 %v687
        %v943 = vunpack.c.l.b16 %v688
        %v944 = vunpack.c.h.b16 %v688
        %v945 = vunpack.c.l.b16 %v689
        %v946 = vunpack.c.h.b16 %v689
        %v947 = vunpack.c.l.b16 %v690
        %v948 = vunpack.c.h.b16 %v690
        %v949 = vunpack.c.l.b16 %v691
        %v950 = vunpack.c.h.b16 %v691
        %v951 = vunpack.c.l.b16 %v692
        %v952 = vunpack.c.h.b16 %v692
        %v953 = vunpack.c.l.b16 %v693
        %v954 = vunpack.c.h.b16 %v693
        %v955 = vunpack.c.l.b16 %v694
        %v956 = vunpack.c.h.b16 %v694
        %v957 = vunpack.c.l.b16 %v695
        %v958 = vunpack.c.h.b16 %v695
        %v959 = vunpack.c.l.b16 %v696
        %v960 = vunpack.c.h.b16 %v696
        %v961 = vunpack.c.l.b16 %v697
        %v962 = vunpack.c.h.b16 %v697
        %v963 = vunpack.c.l.b16 %v698
        %v964 = vunpack.c.h.b16 %v698
        %v965 = vunpack.c.l.b16 %v699
        %v966 = vunpack.c.h.b16 %v699
        %v967 = vunpack.c.l.b16 %v700
        %v968 = vunpack.c.h.b16 %v700
        %v969 = vunpack.c.l.b16 %v701
        %v970 = vunpack.c.h.b16 %v701
        %v971 = vunpack.c.l.b16 %v702
        %v972 = vunpack.c.h.b16 %v702
        %v973 = vunpack.c.l.b16 %v703
        %v974 = vunpack.c.h.b16 %v703
        %v975 = vunpack.c.l.b16 %v704
        %v976 = vunpack.c.h.b16 %v704
        %v977 = vpack.c.b16 %v883, %v881
        %v978 = vpack.c.b16 %v884, %v882
        %v979 = vpack.c.b16 %v887, %v885
        %v980 = vpack.c.b16 %v888, %v886
        %v981 = vpack.c.b16 %v891, %v889
        %v982 = vpack.c.b16 %v892, %v890
        %v983 = vpack.c.b16 %v895, %v893
        %v984 = vpack.c.b16 %v896, %v894
        %v985 = vpack.c.b16 %v899, %v897
        %v986 = vpack.c.b16 %v900, %v898
        %v987 = vpack.c.b16 %v903, %v901
        %v988 = vpack.c.b16 %v904, %v902
        %v989 = vpack.c.b16 %v907, %v905
        %v990 = vpack.c.b16 %v908, %v906
        %v991 = vpack.c.b16 %v911, %v909
        %v992 = vpack.c.b16 %v912, %v910
        %v993 = vpack.c.b16 %v915, %v913
        %v994 = vpack.c.b16 %v916, %v914
        %v995 = vpack.c.b16 %v919, %v917
        %v996 = vpack.c.b16 %v920, %v918
        %v997 = vpack.c.b16 %v923, %v921
        %v998 = vpack.c.b16 %v924, %v922
        %v999 = vpack.c.b16 %v927, %v925
        %v1000 = vpack.c.b16 %v928, %v926
        %v1001 = vpack.c.b16 %v931, %v929
        %v1002 = vpack.c.b16 %v932, %v930
        %v1003 = vpack.c.b16 %v935, %v933
        %v1004 = vpack.c.b16 %v936, %v934
        %v1005 = vpack.c.b16 %v939, %v937
        %v1006 = vpack.c.b16 %v940, %v938
        %v1007 = vpack.c.b16 %v943, %v941
        %v1008 = vpack.c.b16 %v944, %v942
        %v1009 = vpack.c.b16 %v947, %v945
        %v1010 = vpack.c.b16 %v948, %v946
        %v1011 = vpack.c.b16 %v951, %v949
        %v1012 = vpack.c.b16 %v952, %v950
        %v1013 = vpack.c.b16 %v955, %v953
        %v1014 = vpack.c.b16 %v956, %v954
        %v1015 = vpack.c.b16 %v959, %v957
        %v1016 = vpack.c.b16 %v960, %v958
        %v1017 = vpack.c.b16 %v963, %v961
        %v1018 = vpack.c.b16 %v964, %v962
        %v1019 = vpack.c.b16 %v967, %v965
        %v1020 = vpack.c.b16 %v968, %v966
        %v1021 = vpack.c.b16 %v971, %v969
        %v1022 = vpack.c.b16 %v972, %v970
        %v1023 = vpack.c.b16 %v975, %v973
        %v1024 = vpack.c.b16 %v976, %v974
        %1073 = vmatpush.bf16.msra.mxu0 %v991
        %1074 = vmatpush.bf16.msra.mxu0 %v989
        %1075 = vmatpush.bf16.msra.mxu0 %v987
        %1076 = vmatpush.bf16.msra.mxu0 %v985
        %1077 = vmatpush.bf16.msra.mxu0 %v983
        %1078 = vmatpush.bf16.msra.mxu0 %v981
        %1079 = vmatpush.bf16.msra.mxu0 %v979
        %1080 = vmatpush.bf16.msra.mxu0 %v977
        %1081 = vmatmul.bf16.gmra.mxu0 %v785
        %v1082 = vpop.f32.mrf.mxu0
        %v1083 = vadd.f32 0.0, %v1082
        %v1084 = vpop.f32.mrf.mxu0
        %v1085 = vadd.f32 0.0, %v1084
        %1086 = vmatmul.bf16.gmra.mxu0 %v788
        %v1087 = vpop.f32.mrf.mxu0
        %v1088 = vadd.f32 0.0, %v1087
        %v1089 = vpop.f32.mrf.mxu0
        %v1090 = vadd.f32 0.0, %v1089
        %1091 = vmatmul.bf16.gmra.mxu0 %v791
        %v1092 = vpop.f32.mrf.mxu0
        %v1093 = vadd.f32 0.0, %v1092
        %v1094 = vpop.f32.mrf.mxu0
        %v1095 = vadd.f32 0.0, %v1094
        %1096 = vmatmul.bf16.gmra.mxu0 %v794
        %v1097 = vpop.f32.mrf.mxu0
        %v1098 = vadd.f32 0.0, %v1097
        %v1099 = vpop.f32.mrf.mxu0
        %v1100 = vadd.f32 0.0, %v1099
        %1101 = vmatmul.bf16.gmra.mxu0 %v797
        %v1102 = vpop.f32.mrf.mxu0
        %v1103 = vadd.f32 0.0, %v1102
        %v1104 = vpop.f32.mrf.mxu0
        %v1105 = vadd.f32 0.0, %v1104
        %1106 = vmatmul.bf16.gmra.mxu0 %v800
        %v1107 = vpop.f32.mrf.mxu0
        %v1108 = vadd.f32 0.0, %v1107
        %v1109 = vpop.f32.mrf.mxu0
        %v1110 = vadd.f32 0.0, %v1109
        %1111 = vmatmul.bf16.gmra.mxu0 %v803
        %v1112 = vpop.f32.mrf.mxu0
        %v1113 = vadd.f32 0.0, %v1112
        %v1114 = vpop.f32.mrf.mxu0
        %v1115 = vadd.f32 0.0, %v1114
        %1116 = vmatmul.bf16.gmra.mxu0 %v806
        %v1117 = vpop.f32.mrf.mxu0
        %v1118 = vadd.f32 0.0, %v1117
        %v1119 = vpop.f32.mrf.mxu0
        %v1120 = vadd.f32 0.0, %v1119
        %1121 = vdwg.mxu0
        %1122 = vmatpush.bf16.msra.mxu0 %v1007
        %1123 = vmatpush.bf16.msra.mxu0 %v1005
        %1124 = vmatpush.bf16.msra.mxu0 %v1003
        %1125 = vmatpush.bf16.msra.mxu0 %v1001
        %1126 = vmatpush.bf16.msra.mxu0 %v999
        %1127 = vmatpush.bf16.msra.mxu0 %v997
        %1128 = vmatpush.bf16.msra.mxu0 %v995
        %1129 = vmatpush.bf16.msra.mxu0 %v993
        %1130 = vmatmul.bf16.gmra.mxu0 %v786
        %v1131 = vpop.f32.mrf.mxu0
        %v1132 = vadd.f32 %v1083, %v1131
        %v1133 = vpop.f32.mrf.mxu0
        %v1134 = vadd.f32 %v1085, %v1133
        %1135 = vmatmul.bf16.gmra.mxu0 %v789
        %v1136 = vpop.f32.mrf.mxu0
        %v1137 = vadd.f32 %v1088, %v1136
        %v1138 = vpop.f32.mrf.mxu0
        %v1139 = vadd.f32 %v1090, %v1138
        %1140 = vmatmul.bf16.gmra.mxu0 %v792
        %v1141 = vpop.f32.mrf.mxu0
        %v1142 = vadd.f32 %v1093, %v1141
        %v1143 = vpop.f32.mrf.mxu0
        %v1144 = vadd.f32 %v1095, %v1143
        %1145 = vmatmul.bf16.gmra.mxu0 %v795
        %v1146 = vpop.f32.mrf.mxu0
        %v1147 = vadd.f32 %v1098, %v1146
        %v1148 = vpop.f32.mrf.mxu0
        %v1149 = vadd.f32 %v1100, %v1148
        %1150 = vmatmul.bf16.gmra.mxu0 %v798
        %v1151 = vpop.f32.mrf.mxu0
        %v1152 = vadd.f32 %v1103, %v1151
        %v1153 = vpop.f32.mrf.mxu0
        %v1154 = vadd.f32 %v1105, %v1153
        %1155 = vmatmul.bf16.gmra.mxu0 %v801
        %v1156 = vpop.f32.mrf.mxu0
        %v1157 = vadd.f32 %v1108, %v1156
        %v1158 = vpop.f32.mrf.mxu0
        %v1159 = vadd.f32 %v1110, %v1158
        %1160 = vmatmul.bf16.gmra.mxu0 %v804
        %v1161 = vpop.f32.mrf.mxu0
        %v1162 = vadd.f32 %v1113, %v1161
        %v1163 = vpop.f32.mrf.mxu0
        %v1164 = vadd.f32 %v1115, %v1163
        %1165 = vmatmul.bf16.gmra.mxu0 %v807
        %v1166 = vpop.f32.mrf.mxu0
        %v1167 = vadd.f32 %v1118, %v1166
        %v1168 = vpop.f32.mrf.mxu0
        %v1169 = vadd.f32 %v1120, %v1168
        %1170 = vdwg.mxu0
        %1171 = vmatpush.bf16.msra.mxu0 %v1023
        %1172 = vmatpush.bf16.msra.mxu0 %v1021
        %1173 = vmatpush.bf16.msra.mxu0 %v1019
        %1174 = vmatpush.bf16.msra.mxu0 %v1017
        %1175 = vmatpush.bf16.msra.mxu0 %v1015
        %1176 = vmatpush.bf16.msra.mxu0 %v1013
        %1177 = vmatpush.bf16.msra.mxu0 %v1011
        %1178 = vmatpush.bf16.msra.mxu0 %v1009
        %1179 = vmatmul.bf16.gmra.mxu0 %v787
        %v1180 = vpop.f32.mrf.mxu0
        %v1181 = vadd.f32 %v1132, %v1180
        %v1182 = vpop.f32.mrf.mxu0
        %v1183 = vadd.f32 %v1134, %v1182
        %1184 = vmatmul.bf16.gmra.mxu0 %v790
        %v1185 = vpop.f32.mrf.mxu0
        %v1186 = vadd.f32 %v1137, %v1185
        %v1187 = vpop.f32.mrf.mxu0
        %v1188 = vadd.f32 %v1139, %v1187
        %1189 = vmatmul.bf16.gmra.mxu0 %v793
        %v1190 = vpop.f32.mrf.mxu0
        %v1191 = vadd.f32 %v1142, %v1190
        %v1192 = vpop.f32.mrf.mxu0
        %v1193 = vadd.f32 %v1144, %v1192
        %1194 = vmatmul.bf16.gmra.mxu0 %v796
        %v1195 = vpop.f32.mrf.mxu0
        %v1196 = vadd.f32 %v1147, %v1195
        %v1197 = vpop.f32.mrf.mxu0
        %v1198 = vadd.f32 %v1149, %v1197
        %1199 = vmatmul.bf16.gmra.mxu0 %v799
        %v1200 = vpop.f32.mrf.mxu0
        %v1201 = vadd.f32 %v1152, %v1200
        %v1202 = vpop.f32.mrf.mxu0
        %v1203 = vadd.f32 %v1154, %v1202
        %1204 = vmatmul.bf16.gmra.mxu0 %v802
        %v1205 = vpop.f32.mrf.mxu0
        %v1206 = vadd.f32 %v1157, %v1205
        %v1207 = vpop.f32.mrf.mxu0
        %v1208 = vadd.f32 %v1159, %v1207
        %1209 = vmatmul.bf16.gmra.mxu0 %v805
        %v1210 = vpop.f32.mrf.mxu0
        %v1211 = vadd.f32 %v1162, %v1210
        %v1212 = vpop.f32.mrf.mxu0
        %v1213 = vadd.f32 %v1164, %v1212
        %1214 = vmatmul.bf16.gmra.mxu0 %v808
        %v1215 = vpop.f32.mrf.mxu0
        %v1216 = vadd.f32 %v1167, %v1215
        %v1217 = vpop.f32.mrf.mxu0
        %v1218 = vadd.f32 %v1169, %v1217
        %1219 = vdwg.mxu0
        %1220 = vmatpush.bf16.msra.mxu0 %v992
        %1221 = vmatpush.bf16.msra.mxu0 %v990
        %1222 = vmatpush.bf16.msra.mxu0 %v988
        %1223 = vmatpush.bf16.msra.mxu0 %v986
        %1224 = vmatpush.bf16.msra.mxu0 %v984
        %1225 = vmatpush.bf16.msra.mxu0 %v982
        %1226 = vmatpush.bf16.msra.mxu0 %v980
        %1227 = vmatpush.bf16.msra.mxu0 %v978
        %1228 = vmatmul.bf16.gmra.mxu0 %v785
        %v1229 = vpop.f32.mrf.mxu0
        %v1230 = vadd.f32 0.0, %v1229
        %v1231 = vpop.f32.mrf.mxu0
        %v1232 = vadd.f32 0.0, %v1231
        %1233 = vmatmul.bf16.gmra.mxu0 %v788
        %v1234 = vpop.f32.mrf.mxu0
        %v1235 = vadd.f32 0.0, %v1234
        %v1236 = vpop.f32.mrf.mxu0
        %v1237 = vadd.f32 0.0, %v1236
        %1238 = vmatmul.bf16.gmra.mxu0 %v791
        %v1239 = vpop.f32.mrf.mxu0
        %v1240 = vadd.f32 0.0, %v1239
        %v1241 = vpop.f32.mrf.mxu0
        %v1242 = vadd.f32 0.0, %v1241
        %1243 = vmatmul.bf16.gmra.mxu0 %v794
        %v1244 = vpop.f32.mrf.mxu0
        %v1245 = vadd.f32 0.0, %v1244
        %v1246 = vpop.f32.mrf.mxu0
        %v1247 = vadd.f32 0.0, %v1246
        %1248 = vmatmul.bf16.gmra.mxu0 %v797
        %v1249 = vpop.f32.mrf.mxu0
        %v1250 = vadd.f32 0.0, %v1249
        %v1251 = vpop.f32.mrf.mxu0
        %v1252 = vadd.f32 0.0, %v1251
        %1253 = vmatmul.bf16.gmra.mxu0 %v800
        %v1254 = vpop.f32.mrf.mxu0
        %v1255 = vadd.f32 0.0, %v1254
        %v1256 = vpop.f32.mrf.mxu0
        %v1257 = vadd.f32 0.0, %v1256
        %1258 = vmatmul.bf16.gmra.mxu0 %v803
        %v1259 = vpop.f32.mrf.mxu0
        %v1260 = vadd.f32 0.0, %v1259
        %v1261 = vpop.f32.mrf.mxu0
        %v1262 = vadd.f32 0.0, %v1261
        %1263 = vmatmul.bf16.gmra.mxu0 %v806
        %v1264 = vpop.f32.mrf.mxu0
        %v1265 = vadd.f32 0.0, %v1264
        %v1266 = vpop.f32.mrf.mxu0
        %v1267 = vadd.f32 0.0, %v1266
        %1268 = vdwg.mxu0
        %1269 = vmatpush.bf16.msra.mxu0 %v1008
        %1270 = vmatpush.bf16.msra.mxu0 %v1006
        %1271 = vmatpush.bf16.msra.mxu0 %v1004
        %1272 = vmatpush.bf16.msra.mxu0 %v1002
        %1273 = vmatpush.bf16.msra.mxu0 %v1000
        %1274 = vmatpush.bf16.msra.mxu0 %v998
        %1275 = vmatpush.bf16.msra.mxu0 %v996
        %1276 = vmatpush.bf16.msra.mxu0 %v994
        %1277 = vmatmul.bf16.gmra.mxu0 %v786
        %v1278 = vpop.f32.mrf.mxu0
        %v1279 = vadd.f32 %v1230, %v1278
        %v1280 = vpop.f32.mrf.mxu0
        %v1281 = vadd.f32 %v1232, %v1280
        %1282 = vmatmul.bf16.gmra.mxu0 %v789
        %v1283 = vpop.f32.mrf.mxu0
        %v1284 = vadd.f32 %v1235, %v1283
        %v1285 = vpop.f32.mrf.mxu0
        %v1286 = vadd.f32 %v1237, %v1285
        %1287 = vmatmul.bf16.gmra.mxu0 %v792
        %v1288 = vpop.f32.mrf.mxu0
        %v1289 = vadd.f32 %v1240, %v1288
        %v1290 = vpop.f32.mrf.mxu0
        %v1291 = vadd.f32 %v1242, %v1290
        %1292 = vmatmul.bf16.gmra.mxu0 %v795
        %v1293 = vpop.f32.mrf.mxu0
        %v1294 = vadd.f32 %v1245, %v1293
        %v1295 = vpop.f32.mrf.mxu0
        %v1296 = vadd.f32 %v1247, %v1295
        %1297 = vmatmul.bf16.gmra.mxu0 %v798
        %v1298 = vpop.f32.mrf.mxu0
        %v1299 = vadd.f32 %v1250, %v1298
        %v1300 = vpop.f32.mrf.mxu0
        %v1301 = vadd.f32 %v1252, %v1300
        %1302 = vmatmul.bf16.gmra.mxu0 %v801
        %v1303 = vpop.f32.mrf.mxu0
        %v1304 = vadd.f32 %v1255, %v1303
        %v1305 = vpop.f32.mrf.mxu0
        %v1306 = vadd.f32 %v1257, %v1305
        %1307 = vmatmul.bf16.gmra.mxu0 %v804
        %v1308 = vpop.f32.mrf.mxu0
        %v1309 = vadd.f32 %v1260, %v1308
        %v1310 = vpop.f32.mrf.mxu0
        %v1311 = vadd.f32 %v1262, %v1310
        %1312 = vmatmul.bf16.gmra.mxu0 %v807
        %v1313 = vpop.f32.mrf.mxu0
        %v1314 = vadd.f32 %v1265, %v1313
        %v1315 = vpop.f32.mrf.mxu0
        %v1316 = vadd.f32 %v1267, %v1315
        %1317 = vdwg.mxu0
        %1318 = vmatpush.bf16.msra.mxu0 %v1024
        %1319 = vmatpush.bf16.msra.mxu0 %v1022
        %1320 = vmatpush.bf16.msra.mxu0 %v1020
        %1321 = vmatpush.bf16.msra.mxu0 %v1018
        %1322 = vmatpush.bf16.msra.mxu0 %v1016
        %1323 = vmatpush.bf16.msra.mxu0 %v1014
        %1324 = vmatpush.bf16.msra.mxu0 %v1012
        %1325 = vmatpush.bf16.msra.mxu0 %v1010
        %1326 = vmatmul.bf16.gmra.mxu0 %v787
        %v1327 = vpop.f32.mrf.mxu0
        %v1328 = vadd.f32 %v1279, %v1327
        %v1329 = vpop.f32.mrf.mxu0
        %v1330 = vadd.f32 %v1281, %v1329
        %1331 = vmatmul.bf16.gmra.mxu0 %v790
        %v1332 = vpop.f32.mrf.mxu0
        %v1333 = vadd.f32 %v1284, %v1332
        %v1334 = vpop.f32.mrf.mxu0
        %v1335 = vadd.f32 %v1286, %v1334
        %1336 = vmatmul.bf16.gmra.mxu0 %v793
        %v1337 = vpop.f32.mrf.mxu0
        %v1338 = vadd.f32 %v1289, %v1337
        %v1339 = vpop.f32.mrf.mxu0
        %v1340 = vadd.f32 %v1291, %v1339
        %1341 = vmatmul.bf16.gmra.mxu0 %v796
        %v1342 = vpop.f32.mrf.mxu0
        %v1343 = vadd.f32 %v1294, %v1342
        %v1344 = vpop.f32.mrf.mxu0
        %v1345 = vadd.f32 %v1296, %v1344
        %1346 = vmatmul.bf16.gmra.mxu0 %v799
        %v1347 = vpop.f32.mrf.mxu0
        %v1348 = vadd.f32 %v1299, %v1347
        %v1349 = vpop.f32.mrf.mxu0
        %v1350 = vadd.f32 %v1301, %v1349
        %1351 = vmatmul.bf16.gmra.mxu0 %v802
        %v1352 = vpop.f32.mrf.mxu0
        %v1353 = vadd.f32 %v1304, %v1352
        %v1354 = vpop.f32.mrf.mxu0
        %v1355 = vadd.f32 %v1306, %v1354
        %1356 = vmatmul.bf16.gmra.mxu0 %v805
        %v1357 = vpop.f32.mrf.mxu0
        %v1358 = vadd.f32 %v1309, %v1357
        %v1359 = vpop.f32.mrf.mxu0
        %v1360 = vadd.f32 %v1311, %v1359
        %1361 = vmatmul.bf16.gmra.mxu0 %v808
        %v1362 = vpop.f32.mrf.mxu0
        %v1363 = vadd.f32 %v1314, %v1362
        %v1364 = vpop.f32.mrf.mxu0
        %v1365 = vadd.f32 %v1316, %v1364
        %1366 = vdwg.mxu0
        %v1367 = vadd.f32 %v625, %v1181
        %v1368 = vadd.f32 %v626, %v1328
        %v1369 = vadd.f32 %v627, %v1183
        %v1370 = vadd.f32 %v628, %v1330
        %v1371 = vadd.f32 %v629, %v1186
        %v1372 = vadd.f32 %v630, %v1333
        %v1373 = vadd.f32 %v631, %v1188
        %v1374 = vadd.f32 %v632, %v1335
        %v1375 = vadd.f32 %v633, %v1191
        %v1376 = vadd.f32 %v634, %v1338
        %v1377 = vadd.f32 %v635, %v1193
        %v1378 = vadd.f32 %v636, %v1340
        %v1379 = vadd.f32 %v637, %v1196
        %v1380 = vadd.f32 %v638, %v1343
        %v1381 = vadd.f32 %v639, %v1198
        %v1382 = vadd.f32 %v640, %v1345
        %v1383 = vadd.f32 %v641, %v1201
        %v1384 = vadd.f32 %v642, %v1348
        %v1385 = vadd.f32 %v643, %v1203
        %v1386 = vadd.f32 %v644, %v1350
        %v1387 = vadd.f32 %v645, %v1206
        %v1388 = vadd.f32 %v646, %v1353
        %v1389 = vadd.f32 %v647, %v1208
        %v1390 = vadd.f32 %v648, %v1355
        %v1391 = vadd.f32 %v649, %v1211
        %v1392 = vadd.f32 %v650, %v1358
        %v1393 = vadd.f32 %v651, %v1213
        %v1394 = vadd.f32 %v652, %v1360
        %v1395 = vadd.f32 %v653, %v1216
        %v1396 = vadd.f32 %v654, %v1363
        %v1397 = vadd.f32 %v655, %v1218
        %v1398 = vadd.f32 %v656, %v1365
        %1399 = vst [vmem:[#allocation2] sm:$0xff] %v1367
        %1400 = vst [vmem:[#allocation2 + $0x8] sm:$0xff] %v1368
        %1401 = vst [vmem:[#allocation2 + $0x10] sm:$0xff] %v1369
        %1402 = vst [vmem:[#allocation2 + $0x18] sm:$0xff] %v1370
        %1403 = vst [vmem:[#allocation2 + $0x20] sm:$0xff] %v1371
        %1404 = vst [vmem:[#allocation2 + $0x28] sm:$0xff] %v1372
        %1405 = vst [vmem:[#allocation2 + $0x30] sm:$0xff] %v1373
        %1406 = vst [vmem:[#allocation2 + $0x38] sm:$0xff] %v1374
        %1407 = vst [vmem:[#allocation2 + $0x40] sm:$0xff] %v1375
        %1408 = vst [vmem:[#allocation2 + $0x48] sm:$0xff] %v1376
        %1409 = vst [vmem:[#allocation2 + $0x50] sm:$0xff] %v1377
        %1410 = vst [vmem:[#allocation2 + $0x58] sm:$0xff] %v1378
        %1411 = vst [vmem:[#allocation2 + $0x60] sm:$0xff] %v1379
        %1412 = vst [vmem:[#allocation2 + $0x68] sm:$0xff] %v1380
        %1413 = vst [vmem:[#allocation2 + $0x70] sm:$0xff] %v1381
        %1414 = vst [vmem:[#allocation2 + $0x78] sm:$0xff] %v1382
        %1415 = vst [vmem:[#allocation2 + $0x80] sm:$0xff] %v1383
        %1416 = vst [vmem:[#allocation2 + $0x88] sm:$0xff] %v1384
        %1417 = vst [vmem:[#allocation2 + $0x90] sm:$0xff] %v1385
        %1418 = vst [vmem:[#allocation2 + $0x98] sm:$0xff] %v1386
        %1419 = vst [vmem:[#allocation2 + $0xa0] sm:$0xff] %v1387
        %1420 = vst [vmem:[#allocation2 + $0xa8] sm:$0xff] %v1388
        %1421 = vst [vmem:[#allocation2 + $0xb0] sm:$0xff] %v1389
        %1422 = vst [vmem:[#allocation2 + $0xb8] sm:$0xff] %v1390
        %1423 = vst [vmem:[#allocation2 + $0xc0] sm:$0xff] %v1391
        %1424 = vst [vmem:[#allocation2 + $0xc8] sm:$0xff] %v1392
        %1425 = vst [vmem:[#allocation2 + $0xd0] sm:$0xff] %v1393
        %1426 = vst [vmem:[#allocation2 + $0xd8] sm:$0xff] %v1394
        %1427 = vst [vmem:[#allocation2 + $0xe0] sm:$0xff] %v1395
        %1428 = vst [vmem:[#allocation2 + $0xe8] sm:$0xff] %v1396
        %1429 = vst [vmem:[#allocation2 + $0xf0] sm:$0xff] %v1397
        %1430 = vst [vmem:[#allocation2 + $0xf8] sm:$0xff] %v1398
        %p1431 = scmp.eq.s32.totalorder %s21, 2
        // Predicated region
        $region101: #{vqvae_forward.36} parent=87 // pred_check
          %p1432 = pneg %p1431
        $region102: #{vqvae_forward.36} parent=87 // pred_check_branch
          %1434 = sbr.rel (%p1432) target = $region104
        $region103: #{vqvae_forward.36} parent=87 // pred_region
          %v1435 = vld [vmem:[#allocation2] sm:$0xff]
          %v1436 = vld [vmem:[#allocation2 + $0x8] sm:$0xff]
          %v1437 = vld [vmem:[#allocation2 + $0x10] sm:$0xff]
          %v1438 = vld [vmem:[#allocation2 + $0x18] sm:$0xff]
          %v1439 = vld [vmem:[#allocation2 + $0x20] sm:$0xff]
          %v1440 = vld [vmem:[#allocation2 + $0x28] sm:$0xff]
          %v1441 = vld [vmem:[#allocation2 + $0x30] sm:$0xff]
          %v1442 = vld [vmem:[#allocation2 + $0x38] sm:$0xff]
          %v1443 = vld [vmem:[#allocation2 + $0x40] sm:$0xff]
          %v1444 = vld [vmem:[#allocation2 + $0x48] sm:$0xff]
          %v1445 = vld [vmem:[#allocation2 + $0x50] sm:$0xff]
          %v1446 = vld [vmem:[#allocation2 + $0x58] sm:$0xff]
          %v1447 = vld [vmem:[#allocation2 + $0x60] sm:$0xff]
          %v1448 = vld [vmem:[#allocation2 + $0x68] sm:$0xff]
          %v1449 = vld [vmem:[#allocation2 + $0x70] sm:$0xff]
          %v1450 = vld [vmem:[#allocation2 + $0x78] sm:$0xff]
          %v1451 = vld [vmem:[#allocation2 + $0x80] sm:$0xff]
          %v1452 = vld [vmem:[#allocation2 + $0x88] sm:$0xff]
          %v1453 = vld [vmem:[#allocation2 + $0x90] sm:$0xff]
          %v1454 = vld [vmem:[#allocation2 + $0x98] sm:$0xff]
          %v1455 = vld [vmem:[#allocation2 + $0xa0] sm:$0xff]
          %v1456 = vld [vmem:[#allocation2 + $0xa8] sm:$0xff]
          %v1457 = vld [vmem:[#allocation2 + $0xb0] sm:$0xff]
          %v1458 = vld [vmem:[#allocation2 + $0xb8] sm:$0xff]
          %v1459 = vld [vmem:[#allocation2 + $0xc0] sm:$0xff]
          %v1460 = vld [vmem:[#allocation2 + $0xc8] sm:$0xff]
          %v1461 = vld [vmem:[#allocation2 + $0xd0] sm:$0xff]
          %v1462 = vld [vmem:[#allocation2 + $0xd8] sm:$0xff]
          %v1463 = vld [vmem:[#allocation2 + $0xe0] sm:$0xff]
          %v1464 = vld [vmem:[#allocation2 + $0xe8] sm:$0xff]
          %v1465 = vld [vmem:[#allocation2 + $0xf0] sm:$0xff]
          %v1466 = vld [vmem:[#allocation2 + $0xf8] sm:$0xff]
          %v1467 = vld [vmem:[%s553] sm:$0x3]
          %v1469 = vperm.slane %v1467, 0
          %v1470 = vperm.slane %v1467, 1
          %v1473 = vadd.f32 %v1435, %v1469
          %v1474 = vadd.f32 %v1436, %v1470
          %v1475 = vadd.f32 %v1437, %v1469
          %v1476 = vadd.f32 %v1438, %v1470
          %v1477 = vadd.f32 %v1439, %v1469
          %v1478 = vadd.f32 %v1440, %v1470
          %v1479 = vadd.f32 %v1441, %v1469
          %v1480 = vadd.f32 %v1442, %v1470
          %v1481 = vadd.f32 %v1443, %v1469
          %v1482 = vadd.f32 %v1444, %v1470
          %v1483 = vadd.f32 %v1445, %v1469
          %v1484 = vadd.f32 %v1446, %v1470
          %v1485 = vadd.f32 %v1447, %v1469
          %v1486 = vadd.f32 %v1448, %v1470
          %v1487 = vadd.f32 %v1449, %v1469
          %v1488 = vadd.f32 %v1450, %v1470
          %v1489 = vadd.f32 %v1451, %v1469
          %v1490 = vadd.f32 %v1452, %v1470
          %v1491 = vadd.f32 %v1453, %v1469
          %v1492 = vadd.f32 %v1454, %v1470
          %v1493 = vadd.f32 %v1455, %v1469
          %v1494 = vadd.f32 %v1456, %v1470
          %v1495 = vadd.f32 %v1457, %v1469
          %v1496 = vadd.f32 %v1458, %v1470
          %v1497 = vadd.f32 %v1459, %v1469
          %v1498 = vadd.f32 %v1460, %v1470
          %v1499 = vadd.f32 %v1461, %v1469
          %v1500 = vadd.f32 %v1462, %v1470
          %v1501 = vadd.f32 %v1463, %v1469
          %v1502 = vadd.f32 %v1464, %v1470
          %v1503 = vadd.f32 %v1465, %v1469
          %v1504 = vadd.f32 %v1466, %v1470
          %1505 = vst [vmem:[%s545] sm:$0xff] %v1473
          %1506 = vst [vmem:[%s545 + $0x8] sm:$0xff] %v1474
          %1507 = vst [vmem:[%s545 + $0x10] sm:$0xff] %v1475
          %1508 = vst [vmem:[%s545 + $0x18] sm:$0xff] %v1476
          %1509 = vst [vmem:[%s545 + $0x20] sm:$0xff] %v1477
          %1510 = vst [vmem:[%s545 + $0x28] sm:$0xff] %v1478
          %1511 = vst [vmem:[%s545 + $0x30] sm:$0xff] %v1479
          %1512 = vst [vmem:[%s545 + $0x38] sm:$0xff] %v1480
          %1513 = vst [vmem:[%s545 + $0x40] sm:$0xff] %v1481
          %1514 = vst [vmem:[%s545 + $0x48] sm:$0xff] %v1482
          %1515 = vst [vmem:[%s545 + $0x50] sm:$0xff] %v1483
          %1516 = vst [vmem:[%s545 + $0x58] sm:$0xff] %v1484
          %1517 = vst [vmem:[%s545 + $0x60] sm:$0xff] %v1485
          %1518 = vst [vmem:[%s545 + $0x68] sm:$0xff] %v1486
          %1519 = vst [vmem:[%s545 + $0x70] sm:$0xff] %v1487
          %1520 = vst [vmem:[%s545 + $0x78] sm:$0xff] %v1488
          %1521 = vst [vmem:[%s545 + $0x80] sm:$0xff] %v1489
          %1522 = vst [vmem:[%s545 + $0x88] sm:$0xff] %v1490
          %1523 = vst [vmem:[%s545 + $0x90] sm:$0xff] %v1491
          %1524 = vst [vmem:[%s545 + $0x98] sm:$0xff] %v1492
          %1525 = vst [vmem:[%s545 + $0xa0] sm:$0xff] %v1493
          %1526 = vst [vmem:[%s545 + $0xa8] sm:$0xff] %v1494
          %1527 = vst [vmem:[%s545 + $0xb0] sm:$0xff] %v1495
          %1528 = vst [vmem:[%s545 + $0xb8] sm:$0xff] %v1496
          %1529 = vst [vmem:[%s545 + $0xc0] sm:$0xff] %v1497
          %1530 = vst [vmem:[%s545 + $0xc8] sm:$0xff] %v1498
          %1531 = vst [vmem:[%s545 + $0xd0] sm:$0xff] %v1499
          %1532 = vst [vmem:[%s545 + $0xd8] sm:$0xff] %v1500
          %1533 = vst [vmem:[%s545 + $0xe0] sm:$0xff] %v1501
          %1534 = vst [vmem:[%s545 + $0xe8] sm:$0xff] %v1502
          %1535 = vst [vmem:[%s545 + $0xf0] sm:$0xff] %v1503
          %1536 = vst [vmem:[%s545 + $0xf8] sm:$0xff] %v1504
        $region104: #{vqvae_forward.36} parent=87 // pred_fallthru
          _
        %s1537 = sand.u32 %s125, 1
        %s1538 = sand.u32 %s125, 1
        %s1539 = smul.addr %s1538, 256
        %s1540 = scalar_lea.vmem [#allocation5], %s1539
        // Predicated region
        $region105: #{vqvae_forward.36} parent=87 // pred_check
          %p1541 = pneg %p135
        $region106: #{vqvae_forward.36} parent=87 // pred_check_branch
          %1543 = sbr.rel (%p1541) target = $region108
        $region107: #{vqvae_forward.36} parent=87 // pred_region
          %s1544 = smul.u32 16, %s19
          %s1545 = smul.u32 2, %s20
          %s1546 = smul.addr %s1544, 4
          %s1547 = sadd.s32 %s1545, %s1546
          %s1548 = smul.addr %s1547, 8
          %s1549 = scalar_lea.vmem %s3, %s1548
          // Predicated region
          $region109: #{vqvae_forward.36} parent=107 // pred_check
            _
          $region110: #{vqvae_forward.36} parent=107 // pred_check_branch
            %1551 = sbr.rel (0) target = $region112
          $region111: #{vqvae_forward.36} parent=107 // pred_region
            // Predicated region
            $region113: #{vqvae_forward.36} parent=111 // pred_check
              _
            $region114: #{vqvae_forward.36} parent=111 // pred_check_branch
              %1553 = sbr.rel (0) target = $region116
            $region115: #{vqvae_forward.36} parent=111 // pred_region
              loop: start=0, step=1, limit=1
              $region117: #{vqvae_forward.36} parent=115 // loop_pre_header
                _
              $region118: #{vqvae_forward.36} parent=115 // loop_header
                %s1555 = sphi 0, %s1559
                %p1556 = scmp.ge.s32.totalorder %s1555, 1
                %s1560 = sphi %s1540, %s1540
                %s1561 = sphi %s1549, %s1549
              $region119: #{vqvae_forward.36} parent=115 // loop_header_branch
                %1558 = sbr.rel (%p1556) target = $region123
              $region120: #{vqvae_forward.36} parent=115 // loop_body
                %v1562 = vld [vmem:[%s1560] sm:$0xff]
                %1563 = vst [vmem:[%s1561] sm:$0xff] %v1562
                %v1564 = vld [vmem:[%s1560 + $0x8] sm:$0xff]
                %1565 = vst [vmem:[%s1561 + $0x8] sm:$0xff] %v1564
                %v1566 = vld [vmem:[%s1560 + $0x10] sm:$0xff]
                %1567 = vst [vmem:[%s1561 + $0x20] sm:$0xff] %v1566
                %v1568 = vld [vmem:[%s1560 + $0x18] sm:$0xff]
                %1569 = vst [vmem:[%s1561 + $0x28] sm:$0xff] %v1568
                %v1570 = vld [vmem:[%s1560 + $0x20] sm:$0xff]
                %1571 = vst [vmem:[%s1561 + $0x40] sm:$0xff] %v1570
                %v1572 = vld [vmem:[%s1560 + $0x28] sm:$0xff]
                %1573 = vst [vmem:[%s1561 + $0x48] sm:$0xff] %v1572
                %v1574 = vld [vmem:[%s1560 + $0x30] sm:$0xff]
                %1575 = vst [vmem:[%s1561 + $0x60] sm:$0xff] %v1574
                %v1576 = vld [vmem:[%s1560 + $0x38] sm:$0xff]
                %1577 = vst [vmem:[%s1561 + $0x68] sm:$0xff] %v1576
                %v1578 = vld [vmem:[%s1560 + $0x40] sm:$0xff]
                %1579 = vst [vmem:[%s1561 + $0x80] sm:$0xff] %v1578
                %v1580 = vld [vmem:[%s1560 + $0x48] sm:$0xff]
                %1581 = vst [vmem:[%s1561 + $0x88] sm:$0xff] %v1580
                %v1582 = vld [vmem:[%s1560 + $0x50] sm:$0xff]
                %1583 = vst [vmem:[%s1561 + $0xa0] sm:$0xff] %v1582
                %v1584 = vld [vmem:[%s1560 + $0x58] sm:$0xff]
                %1585 = vst [vmem:[%s1561 + $0xa8] sm:$0xff] %v1584
                %v1586 = vld [vmem:[%s1560 + $0x60] sm:$0xff]
                %1587 = vst [vmem:[%s1561 + $0xc0] sm:$0xff] %v1586
                %v1588 = vld [vmem:[%s1560 + $0x68] sm:$0xff]
                %1589 = vst [vmem:[%s1561 + $0xc8] sm:$0xff] %v1588
                %v1590 = vld [vmem:[%s1560 + $0x70] sm:$0xff]
                %1591 = vst [vmem:[%s1561 + $0xe0] sm:$0xff] %v1590
                %v1592 = vld [vmem:[%s1560 + $0x78] sm:$0xff]
                %1593 = vst [vmem:[%s1561 + $0xe8] sm:$0xff] %v1592
                %v1594 = vld [vmem:[%s1560 + $0x80] sm:$0xff]
                %1595 = vst [vmem:[%s1561 + $0x100] sm:$0xff] %v1594
                %v1596 = vld [vmem:[%s1560 + $0x88] sm:$0xff]
                %1597 = vst [vmem:[%s1561 + $0x108] sm:$0xff] %v1596
                %v1598 = vld [vmem:[%s1560 + $0x90] sm:$0xff]
                %1599 = vst [vmem:[%s1561 + $0x120] sm:$0xff] %v1598
                %v1600 = vld [vmem:[%s1560 + $0x98] sm:$0xff]
                %1601 = vst [vmem:[%s1561 + $0x128] sm:$0xff] %v1600
                %v1602 = vld [vmem:[%s1560 + $0xa0] sm:$0xff]
                %1603 = vst [vmem:[%s1561 + $0x140] sm:$0xff] %v1602
                %v1604 = vld [vmem:[%s1560 + $0xa8] sm:$0xff]
                %1605 = vst [vmem:[%s1561 + $0x148] sm:$0xff] %v1604
                %v1606 = vld [vmem:[%s1560 + $0xb0] sm:$0xff]
                %1607 = vst [vmem:[%s1561 + $0x160] sm:$0xff] %v1606
                %v1608 = vld [vmem:[%s1560 + $0xb8] sm:$0xff]
                %1609 = vst [vmem:[%s1561 + $0x168] sm:$0xff] %v1608
                %v1610 = vld [vmem:[%s1560 + $0xc0] sm:$0xff]
                %1611 = vst [vmem:[%s1561 + $0x180] sm:$0xff] %v1610
                %v1612 = vld [vmem:[%s1560 + $0xc8] sm:$0xff]
                %1613 = vst [vmem:[%s1561 + $0x188] sm:$0xff] %v1612
                %v1614 = vld [vmem:[%s1560 + $0xd0] sm:$0xff]
                %1615 = vst [vmem:[%s1561 + $0x1a0] sm:$0xff] %v1614
                %v1616 = vld [vmem:[%s1560 + $0xd8] sm:$0xff]
                %1617 = vst [vmem:[%s1561 + $0x1a8] sm:$0xff] %v1616
                %v1618 = vld [vmem:[%s1560 + $0xe0] sm:$0xff]
                %1619 = vst [vmem:[%s1561 + $0x1c0] sm:$0xff] %v1618
                %v1620 = vld [vmem:[%s1560 + $0xe8] sm:$0xff]
                %1621 = vst [vmem:[%s1561 + $0x1c8] sm:$0xff] %v1620
                %v1622 = vld [vmem:[%s1560 + $0xf0] sm:$0xff]
                %1623 = vst [vmem:[%s1561 + $0x1e0] sm:$0xff] %v1622
                %v1624 = vld [vmem:[%s1560 + $0xf8] sm:$0xff]
                %1625 = vst [vmem:[%s1561 + $0x1e8] sm:$0xff] %v1624
              $region121: #{vqvae_forward.36} parent=115 // loop_footer
                %s1559 = sadd.s32 1, %s1555
              $region122: #{vqvae_forward.36} parent=115 // loop_footer_branch
                %1554 = sbr.rel target = $region118
              $region123: #{vqvae_forward.36} parent=115 // loop_exit
                _
            $region116: #{vqvae_forward.36} parent=111 // pred_fallthru
              _
            // Predicated region
            $region124: #{vqvae_forward.36} parent=111 // pred_check
              _
            $region125: #{vqvae_forward.36} parent=111 // pred_check_branch
              %1627 = sbr.rel target = $region127
            $region126: #{vqvae_forward.36} parent=111 // pred_region
              _
            $region127: #{vqvae_forward.36} parent=111 // pred_fallthru
              _
          $region112: #{vqvae_forward.36} parent=107 // pred_fallthru
            _
          %1628 = vnop
        $region108: #{vqvae_forward.36} parent=87 // pred_fallthru
          _
      $region88: #{vqvae_forward.36} parent=5 // pred_fallthru
        _
      %p1629 = scmp.le.s32.totalorder 2, %s9
      // Predicated region
      $region128: #{vqvae_forward.36} parent=5 // pred_check
        %p1630 = pneg %p1629
      $region129: #{vqvae_forward.36} parent=5 // pred_check_branch
        %1632 = sbr.rel (%p1630) target = $region131
      $region130: #{vqvae_forward.36} parent=5 // pred_region
        %s1633 = ssub.s32 %s9, 2
        // Predicated region
        $region132: #{vqvae_forward.36} parent=130 // pred_check
          %p1634 = pneg %p141
        $region133: #{vqvae_forward.36} parent=130 // pred_check_branch
          %1636 = sbr.rel (%p1634) target = $region135
        $region134: #{vqvae_forward.36} parent=130 // pred_region
          %s1637 = sand.u32 %s126, 1
          %s1638 = sand.u32 %s126, 1
          %s1639 = smul.addr %s1638, 256
          %s1640 = scalar_lea.vmem [#allocation5], %s1639
        $region135: #{vqvae_forward.36} parent=130 // pred_fallthru
          _
      $region131: #{vqvae_forward.36} parent=5 // pred_fallthru
        _
    $region6: #{vqvae_forward.36} parent=1 // loop_footer
      %s13 = sadd.s32 1, %s9
    $region7: #{vqvae_forward.36} parent=1 // loop_footer_branch
      %8 = sbr.rel target = $region3
    $region8: #{vqvae_forward.36} parent=1 // loop_exit
      _

// kernel: vqvae_forward.29
$region0: #{vqvae_forward.29}
  #allocation0 [shape = 'u32[]', space=smem, size = 0x4, offset = 0x4, fixed_abs, tag = 'smem constant byte address 0x4 - core index']
  #allocation1 [shape = 'u32[72,128]{1,0:T(1,128)}', space=vmem, size = 0x9000, scoped, tag = 'internal scratch']
  #allocation2 [shape = 'f32[1,1]{1,0:T(1,128)}', space=vmem, size = 0x200, scoped, tag = 'scratch operand']
  %s0 = inlined_call_operand.vmem [shape: f32[32,128], index: 0, kind: input, shape index: {}]
  %s1 = inlined_call_operand.vmem [shape: f32[32,128], index: 1, kind: input, shape index: {}]
  %s2 = inlined_call_operand.hbm [shape: f32[1,1], index: 2, kind: output, shape index: {}]
  %s3 = sld [smem:[#allocation0]]
  $region26: #{vqvae_forward.29} parent=0
    _
  %s5 = ssub.s32 1, %s3
  %s6 = scalar_select 0, %s5, %s3
  $region1: #{vqvae_forward.29} parent=0
    #allocation3 [shape = 'u8[512]{0}', space=vmem, size = 0x400, scoped, tag = 'output window, operand 0, single buffered']
    #allocation4 [shape = 's32[1]{0}', space=sflag, size = 0x4, scoped, tag = 'scoped memory for vqvae_forward.29']
    %7 = vsyncpa [#allocation4], 0
    // Predicated region
    $region2: #{vqvae_forward.29} parent=1 // pred_check
      _
    $region3: #{vqvae_forward.29} parent=1 // pred_check_branch
      %9 = sbr.rel (0) target = $region5
    $region4: #{vqvae_forward.29} parent=1 // pred_region
      _
    $region5: #{vqvae_forward.29} parent=1 // pred_fallthru
      _
    // Predicated region
    $region6: #{vqvae_forward.29} parent=1 // pred_check
      _
    $region7: #{vqvae_forward.29} parent=1 // pred_check_branch
      %11 = sbr.rel (0) target = $region9
    $region8: #{vqvae_forward.29} parent=1 // pred_region
      _
    $region9: #{vqvae_forward.29} parent=1 // pred_fallthru
      _
    %p12 = scmp.eq.s32.totalorder 0, 0
    // Predicated region
    $region10: #{vqvae_forward.29} parent=1 // pred_check
      %p13 = pneg %p12
    $region11: #{vqvae_forward.29} parent=1 // pred_check_branch
      %15 = sbr.rel (%p13) target = $region13
    $region12: #{vqvae_forward.29} parent=1 // pred_region
      %vm16 = vcmask 0
      %17 = vst.msk [vmem:[#allocation2] sm:$0x1] %vm16, 0.0
    $region13: #{vqvae_forward.29} parent=1 // pred_fallthru
      _
    %v18 = vld [vmem:[%s0] sm:$0xff]
    %v19 = vld [vmem:[%s0 + $0x8] sm:$0xff]
    %v20 = vld [vmem:[%s0 + $0x10] sm:$0xff]
    %v21 = vld [vmem:[%s0 + $0x18] sm:$0xff]
    %v22 = vld [vmem:[%s1] sm:$0xff]
    %v23 = vld [vmem:[%s1 + $0x8] sm:$0xff]
    %v24 = vld [vmem:[%s1 + $0x10] sm:$0xff]
    %v25 = vld [vmem:[%s1 + $0x18] sm:$0xff]
    %v26 = vsub.f32 %v18, %v22
    %v27 = vsub.f32 %v19, %v23
    %v28 = vsub.f32 %v20, %v24
    %v29 = vsub.f32 %v21, %v25
    %v30 = vld [vmem:[#allocation2] sm:$0x1]
    %v31 = vmul.f32 %v26, %v26
    %v32 = vmul.f32 %v27, %v27
    %v33 = vmul.f32 %v28, %v28
    %v34 = vmul.f32 %v29, %v29
    %v35 = vadd.f32 %v31, %v32
    %v36 = vadd.f32 %v35, %v33
    %v37 = vadd.f32 %v36, %v34
    %38 = vadd.xlane.f32.xlu0 %v37
    %v39 = vpop.xlane.xlu0 %38
    %v40 = vrot.slane %v39, 4
    %v41 = vadd.f32 %v39, %v40
    %v42 = vrot.slane %v41, 2
    %v43 = vadd.f32 %v41, %v42
    %v44 = vrot.slane %v43, 1
    %v45 = vadd.f32 %v43, %v44
    %s46 = vtos %v45
    %v47 = vstv %s46
    %v48 = vadd.f32 %v30, %v47
    %vm49 = vcmask 0
    %50 = vst.msk [vmem:[#allocation2] sm:$0x1] %vm49, %v48
    // Predicated region
    $region14: #{vqvae_forward.29} parent=1 // pred_check
      %p51 = pneg %p12
    $region15: #{vqvae_forward.29} parent=1 // pred_check_branch
      %53 = sbr.rel (%p51) target = $region17
    $region16: #{vqvae_forward.29} parent=1 // pred_region
      %v54 = vld [vmem:[#allocation2] sm:$0x1]
      %v55 = vmul.f32 %v54, 0.001953125
      %56 = vst.msk [vmem:[#allocation3] sm:$0x1] %vm49, %v55
    $region17: #{vqvae_forward.29} parent=1 // pred_fallthru
      _
    // Predicated region
    $region18: #{vqvae_forward.29} parent=1 // pred_check
      _
    $region19: #{vqvae_forward.29} parent=1 // pred_check_branch
      %58 = sbr.rel (0) target = $region21
    $region20: #{vqvae_forward.29} parent=1 // pred_region
      %60 = vsyncadd [#allocation4], 0
      %s62 = sshll.u32 [#allocation3], 4
      %s63 = int_to_ptr.vmem [resolvable:$true] %s62
      %s64 = sshll.u32 %s2, 4
      %s65 = int_to_ptr.hbm [resolvable:$true] %s64
      %67 = dma.vmem_to_hbm [thread:$0]  %s63, 16, %s65, [#allocation4]
    $region21: #{vqvae_forward.29} parent=1 // pred_fallthru
      _
    // Predicated region
    $region22: #{vqvae_forward.29} parent=1 // pred_check
      _
    $region23: #{vqvae_forward.29} parent=1 // pred_check_branch
      %69 = sbr.rel (0) target = $region25
    $region24: #{vqvae_forward.29} parent=1 // pred_region
      %71 = dma.done [#allocation4], 16
    $region25: #{vqvae_forward.29} parent=1 // pred_fallthru
      _
    %72 = vsyncpa [#allocation4], 1

</llo_original>
